<compile_context>
chip_gen: v6e
topology: v6e:2x2x1
jax: 0.10.0
libtpu: 0.0.40
codegen_flags: <defaults>
</compile_context>

<pallas_src>
import jax
import jax.numpy as jnp
from jax.experimental import pallas as pl
from jax.experimental.pallas import tpu as pltpu

EPS = 1e-5
STRIP_H = 8          # rows per in-kernel conv strip (review: 8-32 rows)


def _strips(H):
    th = min(STRIP_H, H)
    return [(r0, min(th, H - r0)) for r0 in range(0, H, th)]


# ----------------------------------------------------------------------------
# In-kernel helpers
# ----------------------------------------------------------------------------
def _conv3x3_strip(src_ref, w_taps, r0, t, W, cin, cout):
    """3x3 'SAME' conv for output rows [r0, r0+t) as 9 accumulating MXU dots.

    src_ref : (1, H+2, W+2, cin) bf16 ref (spatially padded by 1, halo)
    w_taps  : list of 9 (cin, cout) bf16 values, tap order dy*3 + dx
    returns : (t*W, cout) f32
    """
    acc = jnp.zeros((t * W, cout), jnp.float32)
    for dy in range(3):
        for dx in range(3):
            lhs = src_ref[:, r0 + dy:r0 + dy + t, dx:dx + W, :]
            lhs = lhs.reshape(t * W, cin)
            acc = acc + jnp.dot(lhs, w_taps[dy * 3 + dx],
                                preferred_element_type=jnp.float32)
    return acc


# ----------------------------------------------------------------------------
# Kernels
# ----------------------------------------------------------------------------
def _conv1_kernel(xpad_ref, w_ref, y_ref, sum_ref, sq_ref):
    # xpad_ref: (1, H+2, W+2, Cin) bf16    w_ref: (9, Cin, Cout) bf16
    # y_ref   : (1, H, W, Cout)    bf16 (pre-BN conv1 output)
    # sum/sq  : (1, 1, Cout)       f32  per-image partial BN1 stats
    _, Hp, Wp, cin = xpad_ref.shape
    H, W = Hp - 2, Wp - 2
    c = y_ref.shape[-1]
    w_taps = [w_ref[i] for i in range(9)]          # hoisted weight loads

    s_acc = jnp.zeros((1, c), jnp.float32)
    q_acc = jnp.zeros((1, c), jnp.float32)
    for r0, t in _strips(H):
        y = _conv3x3_strip(xpad_ref, w_taps, r0, t, W, cin, c)   # (t*W, c) f32
        s_acc = s_acc + jnp.sum(y, axis=0, keepdims=True)
        q_acc = q_acc + jnp.sum(y * y, axis=0, keepdims=True)
        y_ref[:, r0:r0 + t, :, :] = y.reshape(1, t, W, c).astype(y_ref.dtype)
    sum_ref[...] = s_acc.reshape(1, 1, c)
    sq_ref[...] = q_acc.reshape(1, 1, c)


def _bn1_conv2_kernel(y1_ref, scale_ref, shift_ref, w_ref,
                      y2_ref, sum_ref, sq_ref, pad_ref):
    # y1_ref  : (1, H, W, C) bf16     scale/shift: (1, C) f32 (folded BN1)
    # w_ref   : (9, C, C)    bf16
    # y2_ref  : (1, H, W, C) bf16     sum/sq: (1, 1, C) f32
    # pad_ref : (1, H+2, W+2, C) bf16 VMEM scratch (conv2 halo)
    _, H, W, c = y1_ref.shape
    Hp, Wp = H + 2, W + 2
    scale = scale_ref[...]
    shift = shift_ref[...]
    w_taps = [w_ref[i] for i in range(9)]

    # Zero ONLY the 1-px halo border.  Re-done every grid step (cheap) so the
    # kernel stays correct when the "parallel" batch axis is split across the
    # two v7x TensorCores (each core has its own scratch instance).
    pad_ref[:, 0:1, :, :] = jnp.zeros((1, 1, Wp, c), pad_ref.dtype)
    pad_ref[:, Hp - 1:Hp, :, :] = jnp.zeros((1, 1, Wp, c), pad_ref.dtype)
    pad_ref[:, :, 0:1, :] = jnp.zeros((1, Hp, 1, c), pad_ref.dtype)
    pad_ref[:, :, Wp - 1:Wp, :] = jnp.zeros((1, Hp, 1, c), pad_ref.dtype)

    # BN1 + ReLU (f32 in vregs), stored bf16 into the halo-scratch interior,
    # strip by strip.
    for r0, t in _strips(H):
        a = y1_ref[:, r0:r0 + t, :, :].astype(jnp.float32).reshape(t * W, c)
        a = jnp.maximum(a * scale + shift, 0.0)
        pad_ref[:, r0 + 1:r0 + 1 + t, 1:W + 1, :] = (
            a.reshape(1, t, W, c).astype(pad_ref.dtype))

    # conv2, strip by strip, with one-pass BN2 partial stats.
    s_acc = jnp.zeros((1, c), jnp.float32)
    q_acc = jnp.zeros((1, c), jnp.float32)
    for r0, t in _strips(H):
        y = _conv3x3_strip(pad_ref, w_taps, r0, t, W, c, c)      # (t*W, c) f32
        s_acc = s_acc + jnp.sum(y, axis=0, keepdims=True)
        q_acc = q_acc + jnp.sum(y * y, axis=0, keepdims=True)
        y2_ref[:, r0:r0 + t, :, :] = y.reshape(1, t, W, c).astype(y2_ref.dtype)
    sum_ref[...] = s_acc.reshape(1, 1, c)
    sq_ref[...] = q_acc.reshape(1, 1, c)


def _bn2_relu_kernel(y2_ref, scale_ref, shift_ref, o_ref):
    # y2_ref: (1, H, W, C) bf16   scale/shift: (1, C) f32   o_ref: (1,H,W,C) f32
    _, H, W, c = y2_ref.shape
    o = jnp.maximum(
        y2_ref[...].astype(jnp.float32).reshape(H * W, c) * scale_ref[...]
        + shift_ref[...], 0.0)
    o_ref[...] = o.reshape(1, H, W, c).astype(o_ref.dtype)


# ----------------------------------------------------------------------------
# Wrapper
# ----------------------------------------------------------------------------
def _fold_bn(sum_nc, sq_nc, count, gamma, beta):
    """Reduce per-image partial sums -> folded per-channel (scale, shift).

    NOTE: E[x^2]-E[x]^2 in f32 can cancel badly for huge counts with large
    means; fine at this scale (training-mode / biased variance, as PyTorch).
    """
    s = jnp.sum(sum_nc, axis=(0, 1))                  # (C,)
    ss = jnp.sum(sq_nc, axis=(0, 1))
    mean = s / count
    var = jnp.maximum(ss / count - mean * mean, 0.0)
    inv = jax.lax.rsqrt(var + EPS)
    scale = gamma * inv
    shift = beta - mean * scale
    return (scale.reshape(1, -1).astype(jnp.float32),
            shift.reshape(1, -1).astype(jnp.float32))


def bottleneck_forward(x_nchw, params):
    """Pallas implementation of BottleNeck.forward.  x_nchw: (N, Cin, H, W)."""
    N, Cin, H, W = x_nchw.shape
    Cout = params["w1"].shape[0]
    count = float(N * H * W)

    # NCHW -> NHWC, spatial halo pad (+1), bf16 (MXU lhs dtype; halves DMA).
    x = jnp.transpose(x_nchw, (0, 2, 3, 1))
    xpad = jnp.pad(x, ((0, 0), (1, 1), (1, 1), (0, 0))).astype(jnp.bfloat16)

    # torch conv weight (Cout, Cin, 3, 3) -> tap-major (9, Cin, Cout) bf16.
    def prep_w(w):
        ci, co = w.shape[1], w.shape[0]
        return jnp.transpose(w, (2, 3, 1, 0)).reshape(9, ci, co).astype(jnp.bfloat16)

    w1 = prep_w(params["w1"])      # (9, Cin,  Cout)
    w2 = prep_w(params["w2"])      # (9, Cout, Cout)
    # conv biases b1/b2 are intentionally NOT used: training-mode BatchNorm
    # subtracts the per-channel mean, so a per-channel conv bias cancels.
    g1 = params["g1"].astype(jnp.float32)
    g2 = params["g2"].astype(jnp.float32)
    be1 = params["be1"].astype(jnp.float32)
    be2 = params["be2"].astype(jnp.float32)

    cparams = pltpu.CompilerParams(
        dimension_semantics=("parallel",))    # batch axis -> both v7x TCs

    # --- phase 1: conv1 (9 accumulating K=Cin dots) + BN1 partial stats -----
    y1, s1, q1 = pl.pallas_call(
        _conv1_kernel,
        grid=(N,),
        in_specs=[
            pl.BlockSpec((1, H + 2, W + 2, Cin), lambda n: (n, 0, 0, 0)),
            pl.BlockSpec((9, Cin, Cout), lambda n: (0, 0, 0)),
        ],
        out_specs=[
            pl.BlockSpec((1, H, W, Cout), lambda n: (n, 0, 0, 0)),
            pl.BlockSpec((1, 1, Cout), lambda n: (n, 0, 0)),
            pl.BlockSpec((1, 1, Cout), lambda n: (n, 0, 0)),
        ],
        out_shape=[
            jax.ShapeDtypeStruct((N, H, W, Cout), jnp.bfloat16),
            jax.ShapeDtypeStruct((N, 1, Cout), jnp.float32),
            jax.ShapeDtypeStruct((N, 1, Cout), jnp.float32),
        ],
        compiler_params=cparams,
    )(xpad, w1)

    scale1, shift1 = _fold_bn(s1, q1, count, g1, be1)

    # --- phase 2: BN1+ReLU + conv2 + BN2 partial stats ----------------------
    y2, s2, q2 = pl.pallas_call(
        _bn1_conv2_kernel,
        grid=(N,),
        in_specs=[
            pl.BlockSpec((1, H, W, Cout), lambda n: (n, 0, 0, 0)),
            pl.BlockSpec((1, Cout), lambda n: (0, 0)),
            pl.BlockSpec((1, Cout), lambda n: (0, 0)),
            pl.BlockSpec((9, Cout, Cout), lambda n: (0, 0, 0)),
        ],
        out_specs=[
            pl.BlockSpec((1, H, W, Cout), lambda n: (n, 0, 0, 0)),
            pl.BlockSpec((1, 1, Cout), lambda n: (n, 0, 0)),
            pl.BlockSpec((1, 1, Cout), lambda n: (n, 0, 0)),
        ],
        out_shape=[
            jax.ShapeDtypeStruct((N, H, W, Cout), jnp.bfloat16),
            jax.ShapeDtypeStruct((N, 1, Cout), jnp.float32),
            jax.ShapeDtypeStruct((N, 1, Cout), jnp.float32),
        ],
        scratch_shapes=[pltpu.VMEM((1, H + 2, W + 2, Cout), jnp.bfloat16)],
        compiler_params=cparams,
    )(y1, scale1, shift1, w2)

    scale2, shift2 = _fold_bn(s2, q2, count, g2, be2)

    # --- phase 3: BN2 + ReLU (cheap elementwise normalize) ------------------
    out_nhwc = pl.pallas_call(
        _bn2_relu_kernel,
        grid=(N,),
        in_specs=[
            pl.BlockSpec((1, H, W, Cout), lambda n: (n, 0, 0, 0)),
            pl.BlockSpec((1, Cout), lambda n: (0, 0)),
            pl.BlockSpec((1, Cout), lambda n: (0, 0)),
        ],
        out_specs=pl.BlockSpec((1, H, W, Cout), lambda n: (n, 0, 0, 0)),
        out_shape=jax.ShapeDtypeStruct((N, H, W, Cout), jnp.float32),
        compiler_params=cparams,
    )(y2, scale2, shift2)

    # back to NCHW for the PyTorch-convention caller (no channel padding to drop)
    return jnp.transpose(out_nhwc, (0, 3, 1, 2))


# ----------------------------------------------------------------------------
# Pure-JAX reference (PyTorch semantics, high precision)
# ----------------------------------------------------------------------------
def bottleneck_reference(x_nchw, params):
    def conv(x, w, b):
        y = jax.lax.conv_general_dilated(
            x, w, window_strides=(1, 1), padding="SAME",
            dimension_numbers=("NCHW", "OIHW", "NCHW"),
            precision=jax.lax.Precision.HIGHEST)
        return y + b[None, :, None, None]

    def bn_relu(y, g, be):
        mean = jnp.mean(y, axis=(0, 2, 3), keepdims=True)
        var = jnp.mean((y - mean) ** 2, axis=(0, 2, 3), keepdims=True)
        yhat = (y - mean) / jnp.sqrt(var + EPS)
        return jnp.maximum(
            yhat * g[None, :, None, None] + be[None, :, None, None], 0.0)

    a1 = bn_relu(conv(x_nchw, params["w1"], params["b1"]), params["g1"], params["be1"])
    a2 = bn_relu(conv(a1, params["w2"], params["b2"]), params["g2"], params["be2"])
    return a2


def init_params(key, in_channels, out_channels):
    ks = jax.random.split(key, 8)
    return {
        "w1": 0.1 * jax.random.normal(ks[0], (out_channels, in_channels, 3, 3), jnp.float32),
        "b1": 0.1 * jax.random.normal(ks[1], (out_channels,), jnp.float32),
        "w2": 0.1 * jax.random.normal(ks[2], (out_channels, out_channels, 3, 3), jnp.float32),
        "b2": 0.1 * jax.random.normal(ks[3], (out_channels,), jnp.float32),
        "g1": 1.0 + 0.1 * jax.random.normal(ks[4], (out_channels,), jnp.float32),
        "be1": 0.1 * jax.random.normal(ks[5], (out_channels,), jnp.float32),
        "g2": 1.0 + 0.1 * jax.random.normal(ks[6], (out_channels,), jnp.float32),
        "be2": 0.1 * jax.random.normal(ks[7], (out_channels,), jnp.float32),
    }


if __name__ == "__main__":
    key = jax.random.PRNGKey(0)
    k_x, k_p = jax.random.split(key)

    N, Cin, Cout, H, W = 2, 4, 8, 16, 16
    x = jax.random.normal(k_x, (N, Cin, H, W), jnp.float32)
    params = init_params(k_p, Cin, Cout)

    out = jax.block_until_ready(jax.jit(bottleneck_forward)(x, params))
    ref = jax.block_until_ready(bottleneck_reference(x, params))

    assert out.shape == (N, Cout, H, W)
    # bf16 MXU operands / bf16 intermediates vs an f32-HIGHEST reference.
    err = float(jnp.max(jnp.abs(out - ref)))
    assert err < 1e-1, f"max abs err {err}"

    print("KERNEL_OK")
</pallas_src>

<mosaic_0001>
module attributes {stable_mosaic.version = 11 : i64} {
  func.func @_conv1_kernel(%arg0: i32, %arg1: memref<1x18x18x4xbf16, #tpu.memory_space<vmem>>, %arg2: memref<9x4x8xbf16, #tpu.memory_space<vmem>>, %arg3: memref<1x16x16x8xbf16, #tpu.memory_space<vmem>>, %arg4: memref<1x1x8xf32, #tpu.memory_space<vmem>>, %arg5: memref<1x1x8xf32, #tpu.memory_space<vmem>>) attributes {dimension_semantics = [#tpu.dimension_semantics<parallel>], iteration_bounds = array<i64: 2>, scalar_prefetch = 0 : i64, scratch_operands = 0 : i64, tpu.core_type = #tpu.core_type<tc>, window_params = [{transform_indices = @transform_0, window_bounds = array<i64: 1, 18, 18, 4>}, {pipeline_mode = #tpu.pipeline_mode<synchronous>, transform_indices = @transform_1, window_bounds = array<i64: 9, 4, 8>}, {transform_indices = @transform_2, window_bounds = array<i64: 1, 16, 16, 8>}, {transform_indices = @transform_3, window_bounds = array<i64: 1, 1, 8>}, {transform_indices = @transform_4, window_bounds = array<i64: 1, 1, 8>}]} {
    %c0 = arith.constant 0 : index
    %c0_0 = arith.constant 0 : index
    %c0_1 = arith.constant 0 : index
    %0 = vector.load %arg2[%c0, %c0_0, %c0_1] : memref<9x4x8xbf16, #tpu.memory_space<vmem>>, vector<1x4x8xbf16>
    %1 = vector.shape_cast %0 : vector<1x4x8xbf16> to vector<4x8xbf16>
    %c1 = arith.constant 1 : index
    %c0_2 = arith.constant 0 : index
    %c0_3 = arith.constant 0 : index
    %2 = vector.load %arg2[%c1, %c0_2, %c0_3] : memref<9x4x8xbf16, #tpu.memory_space<vmem>>, vector<1x4x8xbf16>
    %3 = vector.shape_cast %2 : vector<1x4x8xbf16> to vector<4x8xbf16>
    %c2 = arith.constant 2 : index
    %c0_4 = arith.constant 0 : index
    %c0_5 = arith.constant 0 : index
    %4 = vector.load %arg2[%c2, %c0_4, %c0_5] : memref<9x4x8xbf16, #tpu.memory_space<vmem>>, vector<1x4x8xbf16>
    %5 = vector.shape_cast %4 : vector<1x4x8xbf16> to vector<4x8xbf16>
    %c3 = arith.constant 3 : index
    %c0_6 = arith.constant 0 : index
    %c0_7 = arith.constant 0 : index
    %6 = vector.load %arg2[%c3, %c0_6, %c0_7] : memref<9x4x8xbf16, #tpu.memory_space<vmem>>, vector<1x4x8xbf16>
    %7 = vector.shape_cast %6 : vector<1x4x8xbf16> to vector<4x8xbf16>
    %c4 = arith.constant 4 : index
    %c0_8 = arith.constant 0 : index
    %c0_9 = arith.constant 0 : index
    %8 = vector.load %arg2[%c4, %c0_8, %c0_9] : memref<9x4x8xbf16, #tpu.memory_space<vmem>>, vector<1x4x8xbf16>
    %9 = vector.shape_cast %8 : vector<1x4x8xbf16> to vector<4x8xbf16>
    %c5 = arith.constant 5 : index
    %c0_10 = arith.constant 0 : index
    %c0_11 = arith.constant 0 : index
    %10 = vector.load %arg2[%c5, %c0_10, %c0_11] : memref<9x4x8xbf16, #tpu.memory_space<vmem>>, vector<1x4x8xbf16>
    %11 = vector.shape_cast %10 : vector<1x4x8xbf16> to vector<4x8xbf16>
    %c6 = arith.constant 6 : index
    %c0_12 = arith.constant 0 : index
    %c0_13 = arith.constant 0 : index
    %12 = vector.load %arg2[%c6, %c0_12, %c0_13] : memref<9x4x8xbf16, #tpu.memory_space<vmem>>, vector<1x4x8xbf16>
    %13 = vector.shape_cast %12 : vector<1x4x8xbf16> to vector<4x8xbf16>
    %c7 = arith.constant 7 : index
    %c0_14 = arith.constant 0 : index
    %c0_15 = arith.constant 0 : index
    %14 = vector.load %arg2[%c7, %c0_14, %c0_15] : memref<9x4x8xbf16, #tpu.memory_space<vmem>>, vector<1x4x8xbf16>
    %15 = vector.shape_cast %14 : vector<1x4x8xbf16> to vector<4x8xbf16>
    %c8 = arith.constant 8 : index
    %c0_16 = arith.constant 0 : index
    %c0_17 = arith.constant 0 : index
    %16 = vector.load %arg2[%c8, %c0_16, %c0_17] : memref<9x4x8xbf16, #tpu.memory_space<vmem>>, vector<1x4x8xbf16>
    %17 = vector.shape_cast %16 : vector<1x4x8xbf16> to vector<4x8xbf16>
    %cst = arith.constant 0.000000e+00 : f32
    %18 = vector.broadcast %cst : f32 to vector<1x8xf32>
    %cst_18 = arith.constant 0.000000e+00 : f32
    %19 = vector.broadcast %cst_18 : f32 to vector<1x8xf32>
    %cst_19 = arith.constant 0.000000e+00 : f32
    %20 = vector.broadcast %cst_19 : f32 to vector<128x8xf32>
    %c0_20 = arith.constant 0 : index
    %c0_21 = arith.constant 0 : index
    %c0_22 = arith.constant 0 : index
    %c0_23 = arith.constant 0 : index
    %21 = vector.load %arg1[%c0_20, %c0_21, %c0_22, %c0_23] : memref<1x18x18x4xbf16, #tpu.memory_space<vmem>>, vector<1x8x16x4xbf16>
    %22 = vector.shape_cast %21 : vector<1x8x16x4xbf16> to vector<128x4xbf16>
    %cst_24 = arith.constant dense<0.000000e+00> : vector<128x8xf32>
    %23 = tpu.matmul %22, %1, %cst_24 {dimension_numbers = #tpu.dot_dimension_numbers<[1], [0], [0], [1], [0, 0, 1, 1], [], []>} : vector<128x4xbf16>, vector<4x8xbf16>, vector<128x8xf32> -> vector<128x8xf32>
    %24 = arith.addf %20, %23 : vector<128x8xf32>
    %c0_25 = arith.constant 0 : index
    %c0_26 = arith.constant 0 : index
    %c1_27 = arith.constant 1 : index
    %c0_28 = arith.constant 0 : index
    %25 = vector.load %arg1[%c0_25, %c0_26, %c1_27, %c0_28] : memref<1x18x18x4xbf16, #tpu.memory_space<vmem>>, vector<1x8x16x4xbf16>
    %26 = vector.shape_cast %25 : vector<1x8x16x4xbf16> to vector<128x4xbf16>
    %cst_29 = arith.constant dense<0.000000e+00> : vector<128x8xf32>
    %27 = tpu.matmul %26, %3, %cst_29 {dimension_numbers = #tpu.dot_dimension_numbers<[1], [0], [0], [1], [0, 0, 1, 1], [], []>} : vector<128x4xbf16>, vector<4x8xbf16>, vector<128x8xf32> -> vector<128x8xf32>
    %28 = arith.addf %24, %27 : vector<128x8xf32>
    %c0_30 = arith.constant 0 : index
    %c0_31 = arith.constant 0 : index
    %c2_32 = arith.constant 2 : index
    %c0_33 = arith.constant 0 : index
    %29 = vector.load %arg1[%c0_30, %c0_31, %c2_32, %c0_33] : memref<1x18x18x4xbf16, #tpu.memory_space<vmem>>, vector<1x8x16x4xbf16>
    %30 = vector.shape_cast %29 : vector<1x8x16x4xbf16> to vector<128x4xbf16>
    %cst_34 = arith.constant dense<0.000000e+00> : vector<128x8xf32>
    %31 = tpu.matmul %30, %5, %cst_34 {dimension_numbers = #tpu.dot_dimension_numbers<[1], [0], [0], [1], [0, 0, 1, 1], [], []>} : vector<128x4xbf16>, vector<4x8xbf16>, vector<128x8xf32> -> vector<128x8xf32>
    %32 = arith.addf %28, %31 : vector<128x8xf32>
    %c0_35 = arith.constant 0 : index
    %c1_36 = arith.constant 1 : index
    %c0_37 = arith.constant 0 : index
    %c0_38 = arith.constant 0 : index
    %33 = vector.load %arg1[%c0_35, %c1_36, %c0_37, %c0_38] : memref<1x18x18x4xbf16, #tpu.memory_space<vmem>>, vector<1x8x16x4xbf16>
    %34 = vector.shape_cast %33 : vector<1x8x16x4xbf16> to vector<128x4xbf16>
    %cst_39 = arith.constant dense<0.000000e+00> : vector<128x8xf32>
    %35 = tpu.matmul %34, %7, %cst_39 {dimension_numbers = #tpu.dot_dimension_numbers<[1], [0], [0], [1], [0, 0, 1, 1], [], []>} : vector<128x4xbf16>, vector<4x8xbf16>, vector<128x8xf32> -> vector<128x8xf32>
    %36 = arith.addf %32, %35 : vector<128x8xf32>
    %c0_40 = arith.constant 0 : index
    %c1_41 = arith.constant 1 : index
    %c1_42 = arith.constant 1 : index
    %c0_43 = arith.constant 0 : index
    %37 = vector.load %arg1[%c0_40, %c1_41, %c1_42, %c0_43] : memref<1x18x18x4xbf16, #tpu.memory_space<vmem>>, vector<1x8x16x4xbf16>
    %38 = vector.shape_cast %37 : vector<1x8x16x4xbf16> to vector<128x4xbf16>
    %cst_44 = arith.constant dense<0.000000e+00> : vector<128x8xf32>
    %39 = tpu.matmul %38, %9, %cst_44 {dimension_numbers = #tpu.dot_dimension_numbers<[1], [0], [0], [1], [0, 0, 1, 1], [], []>} : vector<128x4xbf16>, vector<4x8xbf16>, vector<128x8xf32> -> vector<128x8xf32>
    %40 = arith.addf %36, %39 : vector<128x8xf32>
    %c0_45 = arith.constant 0 : index
    %c1_46 = arith.constant 1 : index
    %c2_47 = arith.constant 2 : index
    %c0_48 = arith.constant 0 : index
    %41 = vector.load %arg1[%c0_45, %c1_46, %c2_47, %c0_48] : memref<1x18x18x4xbf16, #tpu.memory_space<vmem>>, vector<1x8x16x4xbf16>
    %42 = vector.shape_cast %41 : vector<1x8x16x4xbf16> to vector<128x4xbf16>
    %cst_49 = arith.constant dense<0.000000e+00> : vector<128x8xf32>
    %43 = tpu.matmul %42, %11, %cst_49 {dimension_numbers = #tpu.dot_dimension_numbers<[1], [0], [0], [1], [0, 0, 1, 1], [], []>} : vector<128x4xbf16>, vector<4x8xbf16>, vector<128x8xf32> -> vector<128x8xf32>
    %44 = arith.addf %40, %43 : vector<128x8xf32>
    %c0_50 = arith.constant 0 : index
    %c2_51 = arith.constant 2 : index
    %c0_52 = arith.constant 0 : index
    %c0_53 = arith.constant 0 : index
    %45 = vector.load %arg1[%c0_50, %c2_51, %c0_52, %c0_53] : memref<1x18x18x4xbf16, #tpu.memory_space<vmem>>, vector<1x8x16x4xbf16>
    %46 = vector.shape_cast %45 : vector<1x8x16x4xbf16> to vector<128x4xbf16>
    %cst_54 = arith.constant dense<0.000000e+00> : vector<128x8xf32>
    %47 = tpu.matmul %46, %13, %cst_54 {dimension_numbers = #tpu.dot_dimension_numbers<[1], [0], [0], [1], [0, 0, 1, 1], [], []>} : vector<128x4xbf16>, vector<4x8xbf16>, vector<128x8xf32> -> vector<128x8xf32>
    %48 = arith.addf %44, %47 : vector<128x8xf32>
    %c0_55 = arith.constant 0 : index
    %c2_56 = arith.constant 2 : index
    %c1_57 = arith.constant 1 : index
    %c0_58 = arith.constant 0 : index
    %49 = vector.load %arg1[%c0_55, %c2_56, %c1_57, %c0_58] : memref<1x18x18x4xbf16, #tpu.memory_space<vmem>>, vector<1x8x16x4xbf16>
    %50 = vector.shape_cast %49 : vector<1x8x16x4xbf16> to vector<128x4xbf16>
    %cst_59 = arith.constant dense<0.000000e+00> : vector<128x8xf32>
    %51 = tpu.matmul %50, %15, %cst_59 {dimension_numbers = #tpu.dot_dimension_numbers<[1], [0], [0], [1], [0, 0, 1, 1], [], []>} : vector<128x4xbf16>, vector<4x8xbf16>, vector<128x8xf32> -> vector<128x8xf32>
    %52 = arith.addf %48, %51 : vector<128x8xf32>
    %c0_60 = arith.constant 0 : index
    %c2_61 = arith.constant 2 : index
    %c2_62 = arith.constant 2 : index
    %c0_63 = arith.constant 0 : index
    %53 = vector.load %arg1[%c0_60, %c2_61, %c2_62, %c0_63] : memref<1x18x18x4xbf16, #tpu.memory_space<vmem>>, vector<1x8x16x4xbf16>
    %54 = vector.shape_cast %53 : vector<1x8x16x4xbf16> to vector<128x4xbf16>
    %cst_64 = arith.constant dense<0.000000e+00> : vector<128x8xf32>
    %55 = tpu.matmul %54, %17, %cst_64 {dimension_numbers = #tpu.dot_dimension_numbers<[1], [0], [0], [1], [0, 0, 1, 1], [], []>} : vector<128x4xbf16>, vector<4x8xbf16>, vector<128x8xf32> -> vector<128x8xf32>
    %56 = arith.addf %52, %55 : vector<128x8xf32>
    %cst_65 = arith.constant dense<0.000000e+00> : vector<8xf32>
    %57 = vector.multi_reduction <add>, %56, %cst_65 [0] : vector<128x8xf32> to vector<8xf32>
    %58 = vector.shape_cast %57 : vector<8xf32> to vector<1x8xf32>
    %59 = arith.addf %18, %58 : vector<1x8xf32>
    %60 = arith.mulf %56, %56 : vector<128x8xf32>
    %cst_66 = arith.constant dense<0.000000e+00> : vector<8xf32>
    %61 = vector.multi_reduction <add>, %60, %cst_66 [0] : vector<128x8xf32> to vector<8xf32>
    %62 = vector.shape_cast %61 : vector<8xf32> to vector<1x8xf32>
    %63 = arith.addf %19, %62 : vector<1x8xf32>
    %64 = vector.shape_cast %56 : vector<128x8xf32> to vector<1x8x16x8xf32>
    %65 = arith.truncf %64 : vector<1x8x16x8xf32> to vector<1x8x16x8xbf16>
    %c0_67 = arith.constant 0 : index
    %c0_68 = arith.constant 0 : index
    %c0_69 = arith.constant 0 : index
    %c0_70 = arith.constant 0 : index
    %66 = vector.load %arg3[%c0_67, %c0_68, %c0_69, %c0_70] : memref<1x16x16x8xbf16, #tpu.memory_space<vmem>>, vector<1x8x16x8xbf16>
    tpu.vector_store %arg3[%c0_67, %c0_68, %c0_69, %c0_70], %65 {strides = array<i32>} : memref<1x16x16x8xbf16, #tpu.memory_space<vmem>>, vector<1x8x16x8xbf16>,
    %cst_71 = arith.constant 0.000000e+00 : f32
    %67 = vector.broadcast %cst_71 : f32 to vector<128x8xf32>
    %c0_72 = arith.constant 0 : index
    %c8_73 = arith.constant 8 : index
    %c0_74 = arith.constant 0 : index
    %c0_75 = arith.constant 0 : index
    %68 = vector.load %arg1[%c0_72, %c8_73, %c0_74, %c0_75] : memref<1x18x18x4xbf16, #tpu.memory_space<vmem>>, vector<1x8x16x4xbf16>
    %69 = vector.shape_cast %68 : vector<1x8x16x4xbf16> to vector<128x4xbf16>
    %cst_76 = arith.constant dense<0.000000e+00> : vector<128x8xf32>
    %70 = tpu.matmul %69, %1, %cst_76 {dimension_numbers = #tpu.dot_dimension_numbers<[1], [0], [0], [1], [0, 0, 1, 1], [], []>} : vector<128x4xbf16>, vector<4x8xbf16>, vector<128x8xf32> -> vector<128x8xf32>
    %71 = arith.addf %67, %70 : vector<128x8xf32>
    %c0_77 = arith.constant 0 : index
    %c8_78 = arith.constant 8 : index
    %c1_79 = arith.constant 1 : index
    %c0_80 = arith.constant 0 : index
    %72 = vector.load %arg1[%c0_77, %c8_78, %c1_79, %c0_80] : memref<1x18x18x4xbf16, #tpu.memory_space<vmem>>, vector<1x8x16x4xbf16>
    %73 = vector.shape_cast %72 : vector<1x8x16x4xbf16> to vector<128x4xbf16>
    %cst_81 = arith.constant dense<0.000000e+00> : vector<128x8xf32>
    %74 = tpu.matmul %73, %3, %cst_81 {dimension_numbers = #tpu.dot_dimension_numbers<[1], [0], [0], [1], [0, 0, 1, 1], [], []>} : vector<128x4xbf16>, vector<4x8xbf16>, vector<128x8xf32> -> vector<128x8xf32>
    %75 = arith.addf %71, %74 : vector<128x8xf32>
    %c0_82 = arith.constant 0 : index
    %c8_83 = arith.constant 8 : index
    %c2_84 = arith.constant 2 : index
    %c0_85 = arith.constant 0 : index
    %76 = vector.load %arg1[%c0_82, %c8_83, %c2_84, %c0_85] : memref<1x18x18x4xbf16, #tpu.memory_space<vmem>>, vector<1x8x16x4xbf16>
    %77 = vector.shape_cast %76 : vector<1x8x16x4xbf16> to vector<128x4xbf16>
    %cst_86 = arith.constant dense<0.000000e+00> : vector<128x8xf32>
    %78 = tpu.matmul %77, %5, %cst_86 {dimension_numbers = #tpu.dot_dimension_numbers<[1], [0], [0], [1], [0, 0, 1, 1], [], []>} : vector<128x4xbf16>, vector<4x8xbf16>, vector<128x8xf32> -> vector<128x8xf32>
    %79 = arith.addf %75, %78 : vector<128x8xf32>
    %c0_87 = arith.constant 0 : index
    %c9 = arith.constant 9 : index
    %c0_88 = arith.constant 0 : index
    %c0_89 = arith.constant 0 : index
    %80 = vector.load %arg1[%c0_87, %c9, %c0_88, %c0_89] : memref<1x18x18x4xbf16, #tpu.memory_space<vmem>>, vector<1x8x16x4xbf16>
    %81 = vector.shape_cast %80 : vector<1x8x16x4xbf16> to vector<128x4xbf16>
    %cst_90 = arith.constant dense<0.000000e+00> : vector<128x8xf32>
    %82 = tpu.matmul %81, %7, %cst_90 {dimension_numbers = #tpu.dot_dimension_numbers<[1], [0], [0], [1], [0, 0, 1, 1], [], []>} : vector<128x4xbf16>, vector<4x8xbf16>, vector<128x8xf32> -> vector<128x8xf32>
    %83 = arith.addf %79, %82 : vector<128x8xf32>
    %c0_91 = arith.constant 0 : index
    %c9_92 = arith.constant 9 : index
    %c1_93 = arith.constant 1 : index
    %c0_94 = arith.constant 0 : index
    %84 = vector.load %arg1[%c0_91, %c9_92, %c1_93, %c0_94] : memref<1x18x18x4xbf16, #tpu.memory_space<vmem>>, vector<1x8x16x4xbf16>
    %85 = vector.shape_cast %84 : vector<1x8x16x4xbf16> to vector<128x4xbf16>
    %cst_95 = arith.constant dense<0.000000e+00> : vector<128x8xf32>
    %86 = tpu.matmul %85, %9, %cst_95 {dimension_numbers = #tpu.dot_dimension_numbers<[1], [0], [0], [1], [0, 0, 1, 1], [], []>} : vector<128x4xbf16>, vector<4x8xbf16>, vector<128x8xf32> -> vector<128x8xf32>
    %87 = arith.addf %83, %86 : vector<128x8xf32>
    %c0_96 = arith.constant 0 : index
    %c9_97 = arith.constant 9 : index
    %c2_98 = arith.constant 2 : index
    %c0_99 = arith.constant 0 : index
    %88 = vector.load %arg1[%c0_96, %c9_97, %c2_98, %c0_99] : memref<1x18x18x4xbf16, #tpu.memory_space<vmem>>, vector<1x8x16x4xbf16>
    %89 = vector.shape_cast %88 : vector<1x8x16x4xbf16> to vector<128x4xbf16>
    %cst_100 = arith.constant dense<0.000000e+00> : vector<128x8xf32>
    %90 = tpu.matmul %89, %11, %cst_100 {dimension_numbers = #tpu.dot_dimension_numbers<[1], [0], [0], [1], [0, 0, 1, 1], [], []>} : vector<128x4xbf16>, vector<4x8xbf16>, vector<128x8xf32> -> vector<128x8xf32>
    %91 = arith.addf %87, %90 : vector<128x8xf32>
    %c0_101 = arith.constant 0 : index
    %c10 = arith.constant 10 : index
    %c0_102 = arith.constant 0 : index
    %c0_103 = arith.constant 0 : index
    %92 = vector.load %arg1[%c0_101, %c10, %c0_102, %c0_103] : memref<1x18x18x4xbf16, #tpu.memory_space<vmem>>, vector<1x8x16x4xbf16>
    %93 = vector.shape_cast %92 : vector<1x8x16x4xbf16> to vector<128x4xbf16>
    %cst_104 = arith.constant dense<0.000000e+00> : vector<128x8xf32>
    %94 = tpu.matmul %93, %13, %cst_104 {dimension_numbers = #tpu.dot_dimension_numbers<[1], [0], [0], [1], [0, 0, 1, 1], [], []>} : vector<128x4xbf16>, vector<4x8xbf16>, vector<128x8xf32> -> vector<128x8xf32>
    %95 = arith.addf %91, %94 : vector<128x8xf32>
    %c0_105 = arith.constant 0 : index
    %c10_106 = arith.constant 10 : index
    %c1_107 = arith.constant 1 : index
    %c0_108 = arith.constant 0 : index
    %96 = vector.load %arg1[%c0_105, %c10_106, %c1_107, %c0_108] : memref<1x18x18x4xbf16, #tpu.memory_space<vmem>>, vector<1x8x16x4xbf16>
    %97 = vector.shape_cast %96 : vector<1x8x16x4xbf16> to vector<128x4xbf16>
    %cst_109 = arith.constant dense<0.000000e+00> : vector<128x8xf32>
    %98 = tpu.matmul %97, %15, %cst_109 {dimension_numbers = #tpu.dot_dimension_numbers<[1], [0], [0], [1], [0, 0, 1, 1], [], []>} : vector<128x4xbf16>, vector<4x8xbf16>, vector<128x8xf32> -> vector<128x8xf32>
    %99 = arith.addf %95, %98 : vector<128x8xf32>
    %c0_110 = arith.constant 0 : index
    %c10_111 = arith.constant 10 : index
    %c2_112 = arith.constant 2 : index
    %c0_113 = arith.constant 0 : index
    %100 = vector.load %arg1[%c0_110, %c10_111, %c2_112, %c0_113] : memref<1x18x18x4xbf16, #tpu.memory_space<vmem>>, vector<1x8x16x4xbf16>
    %101 = vector.shape_cast %100 : vector<1x8x16x4xbf16> to vector<128x4xbf16>
    %cst_114 = arith.constant dense<0.000000e+00> : vector<128x8xf32>
    %102 = tpu.matmul %101, %17, %cst_114 {dimension_numbers = #tpu.dot_dimension_numbers<[1], [0], [0], [1], [0, 0, 1, 1], [], []>} : vector<128x4xbf16>, vector<4x8xbf16>, vector<128x8xf32> -> vector<128x8xf32>
    %103 = arith.addf %99, %102 : vector<128x8xf32>
    %cst_115 = arith.constant dense<0.000000e+00> : vector<8xf32>
    %104 = vector.multi_reduction <add>, %103, %cst_115 [0] : vector<128x8xf32> to vector<8xf32>
    %105 = vector.shape_cast %104 : vector<8xf32> to vector<1x8xf32>
    %106 = arith.addf %59, %105 : vector<1x8xf32>
    %107 = arith.mulf %103, %103 : vector<128x8xf32>
    %cst_116 = arith.constant dense<0.000000e+00> : vector<8xf32>
    %108 = vector.multi_reduction <add>, %107, %cst_116 [0] : vector<128x8xf32> to vector<8xf32>
    %109 = vector.shape_cast %108 : vector<8xf32> to vector<1x8xf32>
    %110 = arith.addf %63, %109 : vector<1x8xf32>
    %111 = vector.shape_cast %103 : vector<128x8xf32> to vector<1x8x16x8xf32>
    %112 = arith.truncf %111 : vector<1x8x16x8xf32> to vector<1x8x16x8xbf16>
    %c0_117 = arith.constant 0 : index
    %c8_118 = arith.constant 8 : index
    %c0_119 = arith.constant 0 : index
    %c0_120 = arith.constant 0 : index
    %113 = vector.load %arg3[%c0_117, %c8_118, %c0_119, %c0_120] : memref<1x16x16x8xbf16, #tpu.memory_space<vmem>>, vector<1x8x16x8xbf16>
    tpu.vector_store %arg3[%c0_117, %c8_118, %c0_119, %c0_120], %112 {strides = array<i32>} : memref<1x16x16x8xbf16, #tpu.memory_space<vmem>>, vector<1x8x16x8xbf16>,
    %114 = vector.shape_cast %106 : vector<1x8xf32> to vector<1x1x8xf32>
    %c0_121 = arith.constant 0 : index
    %c0_122 = arith.constant 0 : index
    %c0_123 = arith.constant 0 : index
    %115 = vector.load %arg4[%c0_121, %c0_122, %c0_123] : memref<1x1x8xf32, #tpu.memory_space<vmem>>, vector<1x1x8xf32>
    tpu.vector_store %arg4[%c0_121, %c0_122, %c0_123], %114 {strides = array<i32>} : memref<1x1x8xf32, #tpu.memory_space<vmem>>, vector<1x1x8xf32>,
    %116 = vector.shape_cast %110 : vector<1x8xf32> to vector<1x1x8xf32>
    %c0_124 = arith.constant 0 : index
    %c0_125 = arith.constant 0 : index
    %c0_126 = arith.constant 0 : index
    %117 = vector.load %arg5[%c0_124, %c0_125, %c0_126] : memref<1x1x8xf32, #tpu.memory_space<vmem>>, vector<1x1x8xf32>
    tpu.vector_store %arg5[%c0_124, %c0_125, %c0_126], %116 {strides = array<i32>} : memref<1x1x8xf32, #tpu.memory_space<vmem>>, vector<1x1x8xf32>,
    return
  }
  func.func @transform_0(%arg0: i32) -> (i32, i32, i32, i32) {
    %c0_i32 = arith.constant 0 : i32
    %c0_i32_0 = arith.constant 0 : i32
    %c0_i32_1 = arith.constant 0 : i32
    %c0_i32_2 = arith.constant 0 : i32
    return %arg0, %c0_i32, %c0_i32_0, %c0_i32_1 : i32, i32, i32, i32
  }
  func.func @transform_1(%arg0: i32) -> (i32, i32, i32) {
    %c0_i32 = arith.constant 0 : i32
    %c0_i32_0 = arith.constant 0 : i32
    %c0_i32_1 = arith.constant 0 : i32
    %c0_i32_2 = arith.constant 0 : i32
    return %c0_i32, %c0_i32_0, %c0_i32_1 : i32, i32, i32
  }
  func.func @transform_2(%arg0: i32) -> (i32, i32, i32, i32) {
    %c0_i32 = arith.constant 0 : i32
    %c0_i32_0 = arith.constant 0 : i32
    %c0_i32_1 = arith.constant 0 : i32
    %c0_i32_2 = arith.constant 0 : i32
    return %arg0, %c0_i32, %c0_i32_0, %c0_i32_1 : i32, i32, i32, i32
  }
  func.func @transform_3(%arg0: i32) -> (i32, i32, i32) {
    %c0_i32 = arith.constant 0 : i32
    %c0_i32_0 = arith.constant 0 : i32
    %c0_i32_1 = arith.constant 0 : i32
    return %arg0, %c0_i32, %c0_i32_0 : i32, i32, i32
  }
  func.func @transform_4(%arg0: i32) -> (i32, i32, i32) {
    %c0_i32 = arith.constant 0 : i32
    %c0_i32_0 = arith.constant 0 : i32
    %c0_i32_1 = arith.constant 0 : i32
    return %arg0, %c0_i32, %c0_i32_0 : i32, i32, i32
  }
}

module attributes {stable_mosaic.version = 11 : i64} {
  func.func @_bn1_conv2_kernel(%arg0: i32, %arg1: memref<1x16x16x8xbf16, #tpu.memory_space<vmem>>, %arg2: memref<1x8xf32, #tpu.memory_space<vmem>>, %arg3: memref<1x8xf32, #tpu.memory_space<vmem>>, %arg4: memref<9x8x8xbf16, #tpu.memory_space<vmem>>, %arg5: memref<1x16x16x8xbf16, #tpu.memory_space<vmem>>, %arg6: memref<1x1x8xf32, #tpu.memory_space<vmem>>, %arg7: memref<1x1x8xf32, #tpu.memory_space<vmem>>, %arg8: memref<1x18x18x8xbf16, #tpu.memory_space<vmem>>) attributes {dimension_semantics = [#tpu.dimension_semantics<parallel>], iteration_bounds = array<i64: 2>, scalar_prefetch = 0 : i64, scratch_operands = 1 : i64, tpu.core_type = #tpu.core_type<tc>, window_params = [{transform_indices = @transform_0, window_bounds = array<i64: 1, 16, 16, 8>}, {pipeline_mode = #tpu.pipeline_mode<synchronous>, transform_indices = @transform_1, window_bounds = array<i64: 1, 8>}, {pipeline_mode = #tpu.pipeline_mode<synchronous>, transform_indices = @transform_2, window_bounds = array<i64: 1, 8>}, {pipeline_mode = #tpu.pipeline_mode<synchronous>, transform_indices = @transform_3, window_bounds = array<i64: 9, 8, 8>}, {transform_indices = @transform_4, window_bounds = array<i64: 1, 16, 16, 8>}, {transform_indices = @transform_5, window_bounds = array<i64: 1, 1, 8>}, {transform_indices = @transform_6, window_bounds = array<i64: 1, 1, 8>}]} {
    %c0 = arith.constant 0 : index
    %c0_0 = arith.constant 0 : index
    %0 = vector.load %arg2[%c0, %c0_0] : memref<1x8xf32, #tpu.memory_space<vmem>>, vector<1x8xf32>
    %c0_1 = arith.constant 0 : index
    %c0_2 = arith.constant 0 : index
    %1 = vector.load %arg3[%c0_1, %c0_2] : memref<1x8xf32, #tpu.memory_space<vmem>>, vector<1x8xf32>
    %c0_3 = arith.constant 0 : index
    %c0_4 = arith.constant 0 : index
    %c0_5 = arith.constant 0 : index
    %2 = vector.load %arg4[%c0_3, %c0_4, %c0_5] : memref<9x8x8xbf16, #tpu.memory_space<vmem>>, vector<1x8x8xbf16>
    %3 = vector.shape_cast %2 : vector<1x8x8xbf16> to vector<8x8xbf16>
    %c1 = arith.constant 1 : index
    %c0_6 = arith.constant 0 : index
    %c0_7 = arith.constant 0 : index
    %4 = vector.load %arg4[%c1, %c0_6, %c0_7] : memref<9x8x8xbf16, #tpu.memory_space<vmem>>, vector<1x8x8xbf16>
    %5 = vector.shape_cast %4 : vector<1x8x8xbf16> to vector<8x8xbf16>
    %c2 = arith.constant 2 : index
    %c0_8 = arith.constant 0 : index
    %c0_9 = arith.constant 0 : index
    %6 = vector.load %arg4[%c2, %c0_8, %c0_9] : memref<9x8x8xbf16, #tpu.memory_space<vmem>>, vector<1x8x8xbf16>
    %7 = vector.shape_cast %6 : vector<1x8x8xbf16> to vector<8x8xbf16>
    %c3 = arith.constant 3 : index
    %c0_10 = arith.constant 0 : index
    %c0_11 = arith.constant 0 : index
    %8 = vector.load %arg4[%c3, %c0_10, %c0_11] : memref<9x8x8xbf16, #tpu.memory_space<vmem>>, vector<1x8x8xbf16>
    %9 = vector.shape_cast %8 : vector<1x8x8xbf16> to vector<8x8xbf16>
    %c4 = arith.constant 4 : index
    %c0_12 = arith.constant 0 : index
    %c0_13 = arith.constant 0 : index
    %10 = vector.load %arg4[%c4, %c0_12, %c0_13] : memref<9x8x8xbf16, #tpu.memory_space<vmem>>, vector<1x8x8xbf16>
    %11 = vector.shape_cast %10 : vector<1x8x8xbf16> to vector<8x8xbf16>
    %c5 = arith.constant 5 : index
    %c0_14 = arith.constant 0 : index
    %c0_15 = arith.constant 0 : index
    %12 = vector.load %arg4[%c5, %c0_14, %c0_15] : memref<9x8x8xbf16, #tpu.memory_space<vmem>>, vector<1x8x8xbf16>
    %13 = vector.shape_cast %12 : vector<1x8x8xbf16> to vector<8x8xbf16>
    %c6 = arith.constant 6 : index
    %c0_16 = arith.constant 0 : index
    %c0_17 = arith.constant 0 : index
    %14 = vector.load %arg4[%c6, %c0_16, %c0_17] : memref<9x8x8xbf16, #tpu.memory_space<vmem>>, vector<1x8x8xbf16>
    %15 = vector.shape_cast %14 : vector<1x8x8xbf16> to vector<8x8xbf16>
    %c7 = arith.constant 7 : index
    %c0_18 = arith.constant 0 : index
    %c0_19 = arith.constant 0 : index
    %16 = vector.load %arg4[%c7, %c0_18, %c0_19] : memref<9x8x8xbf16, #tpu.memory_space<vmem>>, vector<1x8x8xbf16>
    %17 = vector.shape_cast %16 : vector<1x8x8xbf16> to vector<8x8xbf16>
    %c8 = arith.constant 8 : index
    %c0_20 = arith.constant 0 : index
    %c0_21 = arith.constant 0 : index
    %18 = vector.load %arg4[%c8, %c0_20, %c0_21] : memref<9x8x8xbf16, #tpu.memory_space<vmem>>, vector<1x8x8xbf16>
    %19 = vector.shape_cast %18 : vector<1x8x8xbf16> to vector<8x8xbf16>
    %cst = arith.constant 0.000000e+00 : bf16
    %20 = vector.broadcast %cst : bf16 to vector<1x1x18x8xbf16>
    %c0_22 = arith.constant 0 : index
    %c0_23 = arith.constant 0 : index
    %c0_24 = arith.constant 0 : index
    %c0_25 = arith.constant 0 : index
    %21 = vector.load %arg8[%c0_22, %c0_23, %c0_24, %c0_25] : memref<1x18x18x8xbf16, #tpu.memory_space<vmem>>, vector<1x1x18x8xbf16>
    tpu.vector_store %arg8[%c0_22, %c0_23, %c0_24, %c0_25], %20 {strides = array<i32>} : memref<1x18x18x8xbf16, #tpu.memory_space<vmem>>, vector<1x1x18x8xbf16>,
    %cst_26 = arith.constant 0.000000e+00 : bf16
    %22 = vector.broadcast %cst_26 : bf16 to vector<1x1x18x8xbf16>
    %c0_27 = arith.constant 0 : index
    %c17 = arith.constant 17 : index
    %c0_28 = arith.constant 0 : index
    %c0_29 = arith.constant 0 : index
    %23 = vector.load %arg8[%c0_27, %c17, %c0_28, %c0_29] : memref<1x18x18x8xbf16, #tpu.memory_space<vmem>>, vector<1x1x18x8xbf16>
    tpu.vector_store %arg8[%c0_27, %c17, %c0_28, %c0_29], %22 {strides = array<i32>} : memref<1x18x18x8xbf16, #tpu.memory_space<vmem>>, vector<1x1x18x8xbf16>,
    %cst_30 = arith.constant 0.000000e+00 : bf16
    %24 = vector.broadcast %cst_30 : bf16 to vector<1x18x1x8xbf16>
    %c0_31 = arith.constant 0 : index
    %c0_32 = arith.constant 0 : index
    %c0_33 = arith.constant 0 : index
    %c0_34 = arith.constant 0 : index
    %25 = vector.load %arg8[%c0_31, %c0_32, %c0_33, %c0_34] : memref<1x18x18x8xbf16, #tpu.memory_space<vmem>>, vector<1x18x1x8xbf16>
    tpu.vector_store %arg8[%c0_31, %c0_32, %c0_33, %c0_34], %24 {strides = array<i32>} : memref<1x18x18x8xbf16, #tpu.memory_space<vmem>>, vector<1x18x1x8xbf16>,
    %cst_35 = arith.constant 0.000000e+00 : bf16
    %26 = vector.broadcast %cst_35 : bf16 to vector<1x18x1x8xbf16>
    %c0_36 = arith.constant 0 : index
    %c0_37 = arith.constant 0 : index
    %c17_38 = arith.constant 17 : index
    %c0_39 = arith.constant 0 : index
    %27 = vector.load %arg8[%c0_36, %c0_37, %c17_38, %c0_39] : memref<1x18x18x8xbf16, #tpu.memory_space<vmem>>, vector<1x18x1x8xbf16>
    tpu.vector_store %arg8[%c0_36, %c0_37, %c17_38, %c0_39], %26 {strides = array<i32>} : memref<1x18x18x8xbf16, #tpu.memory_space<vmem>>, vector<1x18x1x8xbf16>,
    %c0_40 = arith.constant 0 : index
    %c0_41 = arith.constant 0 : index
    %c0_42 = arith.constant 0 : index
    %c0_43 = arith.constant 0 : index
    %28 = vector.load %arg1[%c0_40, %c0_41, %c0_42, %c0_43] : memref<1x16x16x8xbf16, #tpu.memory_space<vmem>>, vector<1x8x16x8xbf16>
    %29 = arith.extf %28 : vector<1x8x16x8xbf16> to vector<1x8x16x8xf32>
    %30 = vector.shape_cast %29 : vector<1x8x16x8xf32> to vector<128x8xf32>
    %31 = vector.broadcast %0 : vector<1x8xf32> to vector<128x8xf32>
    %32 = arith.mulf %30, %31 : vector<128x8xf32>
    %33 = vector.broadcast %1 : vector<1x8xf32> to vector<128x8xf32>
    %34 = arith.addf %32, %33 : vector<128x8xf32>
    %cst_44 = arith.constant 0.000000e+00 : f32
    %35 = vector.broadcast %cst_44 : f32 to vector<128x8xf32>
    %36 = arith.maximumf %34, %35 : vector<128x8xf32>
    %37 = vector.shape_cast %36 : vector<128x8xf32> to vector<1x8x16x8xf32>
    %38 = arith.truncf %37 : vector<1x8x16x8xf32> to vector<1x8x16x8xbf16>
    %c0_45 = arith.constant 0 : index
    %c1_46 = arith.constant 1 : index
    %c1_47 = arith.constant 1 : index
    %c0_48 = arith.constant 0 : index
    %39 = vector.load %arg8[%c0_45, %c1_46, %c1_47, %c0_48] : memref<1x18x18x8xbf16, #tpu.memory_space<vmem>>, vector<1x8x16x8xbf16>
    tpu.vector_store %arg8[%c0_45, %c1_46, %c1_47, %c0_48], %38 {strides = array<i32>} : memref<1x18x18x8xbf16, #tpu.memory_space<vmem>>, vector<1x8x16x8xbf16>,
    %c0_49 = arith.constant 0 : index
    %c8_50 = arith.constant 8 : index
    %c0_51 = arith.constant 0 : index
    %c0_52 = arith.constant 0 : index
    %40 = vector.load %arg1[%c0_49, %c8_50, %c0_51, %c0_52] : memref<1x16x16x8xbf16, #tpu.memory_space<vmem>>, vector<1x8x16x8xbf16>
    %41 = arith.extf %40 : vector<1x8x16x8xbf16> to vector<1x8x16x8xf32>
    %42 = vector.shape_cast %41 : vector<1x8x16x8xf32> to vector<128x8xf32>
    %43 = vector.broadcast %0 : vector<1x8xf32> to vector<128x8xf32>
    %44 = arith.mulf %42, %43 : vector<128x8xf32>
    %45 = vector.broadcast %1 : vector<1x8xf32> to vector<128x8xf32>
    %46 = arith.addf %44, %45 : vector<128x8xf32>
    %cst_53 = arith.constant 0.000000e+00 : f32
    %47 = vector.broadcast %cst_53 : f32 to vector<128x8xf32>
    %48 = arith.maximumf %46, %47 : vector<128x8xf32>
    %49 = vector.shape_cast %48 : vector<128x8xf32> to vector<1x8x16x8xf32>
    %50 = arith.truncf %49 : vector<1x8x16x8xf32> to vector<1x8x16x8xbf16>
    %c0_54 = arith.constant 0 : index
    %c9 = arith.constant 9 : index
    %c1_55 = arith.constant 1 : index
    %c0_56 = arith.constant 0 : index
    %51 = vector.load %arg8[%c0_54, %c9, %c1_55, %c0_56] : memref<1x18x18x8xbf16, #tpu.memory_space<vmem>>, vector<1x8x16x8xbf16>
    tpu.vector_store %arg8[%c0_54, %c9, %c1_55, %c0_56], %50 {strides = array<i32>} : memref<1x18x18x8xbf16, #tpu.memory_space<vmem>>, vector<1x8x16x8xbf16>,
    %cst_57 = arith.constant 0.000000e+00 : f32
    %52 = vector.broadcast %cst_57 : f32 to vector<1x8xf32>
    %cst_58 = arith.constant 0.000000e+00 : f32
    %53 = vector.broadcast %cst_58 : f32 to vector<1x8xf32>
    %cst_59 = arith.constant 0.000000e+00 : f32
    %54 = vector.broadcast %cst_59 : f32 to vector<128x8xf32>
    %c0_60 = arith.constant 0 : index
    %c0_61 = arith.constant 0 : index
    %c0_62 = arith.constant 0 : index
    %c0_63 = arith.constant 0 : index
    %55 = vector.load %arg8[%c0_60, %c0_61, %c0_62, %c0_63] : memref<1x18x18x8xbf16, #tpu.memory_space<vmem>>, vector<1x8x16x8xbf16>
    %56 = vector.shape_cast %55 : vector<1x8x16x8xbf16> to vector<128x8xbf16>
    %cst_64 = arith.constant dense<0.000000e+00> : vector<128x8xf32>
    %57 = tpu.matmul %56, %3, %cst_64 {dimension_numbers = #tpu.dot_dimension_numbers<[1], [0], [0], [1], [0, 0, 1, 1], [], []>} : vector<128x8xbf16>, vector<8x8xbf16>, vector<128x8xf32> -> vector<128x8xf32>
    %58 = arith.addf %54, %57 : vector<128x8xf32>
    %c0_65 = arith.constant 0 : index
    %c0_66 = arith.constant 0 : index
    %c1_67 = arith.constant 1 : index
    %c0_68 = arith.constant 0 : index
    %59 = vector.load %arg8[%c0_65, %c0_66, %c1_67, %c0_68] : memref<1x18x18x8xbf16, #tpu.memory_space<vmem>>, vector<1x8x16x8xbf16>
    %60 = vector.shape_cast %59 : vector<1x8x16x8xbf16> to vector<128x8xbf16>
    %cst_69 = arith.constant dense<0.000000e+00> : vector<128x8xf32>
    %61 = tpu.matmul %60, %5, %cst_69 {dimension_numbers = #tpu.dot_dimension_numbers<[1], [0], [0], [1], [0, 0, 1, 1], [], []>} : vector<128x8xbf16>, vector<8x8xbf16>, vector<128x8xf32> -> vector<128x8xf32>
    %62 = arith.addf %58, %61 : vector<128x8xf32>
    %c0_70 = arith.constant 0 : index
    %c0_71 = arith.constant 0 : index
    %c2_72 = arith.constant 2 : index
    %c0_73 = arith.constant 0 : index
    %63 = vector.load %arg8[%c0_70, %c0_71, %c2_72, %c0_73] : memref<1x18x18x8xbf16, #tpu.memory_space<vmem>>, vector<1x8x16x8xbf16>
    %64 = vector.shape_cast %63 : vector<1x8x16x8xbf16> to vector<128x8xbf16>
    %cst_74 = arith.constant dense<0.000000e+00> : vector<128x8xf32>
    %65 = tpu.matmul %64, %7, %cst_74 {dimension_numbers = #tpu.dot_dimension_numbers<[1], [0], [0], [1], [0, 0, 1, 1], [], []>} : vector<128x8xbf16>, vector<8x8xbf16>, vector<128x8xf32> -> vector<128x8xf32>
    %66 = arith.addf %62, %65 : vector<128x8xf32>
    %c0_75 = arith.constant 0 : index
    %c1_76 = arith.constant 1 : index
    %c0_77 = arith.constant 0 : index
    %c0_78 = arith.constant 0 : index
    %67 = vector.load %arg8[%c0_75, %c1_76, %c0_77, %c0_78] : memref<1x18x18x8xbf16, #tpu.memory_space<vmem>>, vector<1x8x16x8xbf16>
    %68 = vector.shape_cast %67 : vector<1x8x16x8xbf16> to vector<128x8xbf16>
    %cst_79 = arith.constant dense<0.000000e+00> : vector<128x8xf32>
    %69 = tpu.matmul %68, %9, %cst_79 {dimension_numbers = #tpu.dot_dimension_numbers<[1], [0], [0], [1], [0, 0, 1, 1], [], []>} : vector<128x8xbf16>, vector<8x8xbf16>, vector<128x8xf32> -> vector<128x8xf32>
    %70 = arith.addf %66, %69 : vector<128x8xf32>
    %c0_80 = arith.constant 0 : index
    %c1_81 = arith.constant 1 : index
    %c1_82 = arith.constant 1 : index
    %c0_83 = arith.constant 0 : index
    %71 = vector.load %arg8[%c0_80, %c1_81, %c1_82, %c0_83] : memref<1x18x18x8xbf16, #tpu.memory_space<vmem>>, vector<1x8x16x8xbf16>
    %72 = vector.shape_cast %71 : vector<1x8x16x8xbf16> to vector<128x8xbf16>
    %cst_84 = arith.constant dense<0.000000e+00> : vector<128x8xf32>
    %73 = tpu.matmul %72, %11, %cst_84 {dimension_numbers = #tpu.dot_dimension_numbers<[1], [0], [0], [1], [0, 0, 1, 1], [], []>} : vector<128x8xbf16>, vector<8x8xbf16>, vector<128x8xf32> -> vector<128x8xf32>
    %74 = arith.addf %70, %73 : vector<128x8xf32>
    %c0_85 = arith.constant 0 : index
    %c1_86 = arith.constant 1 : index
    %c2_87 = arith.constant 2 : index
    %c0_88 = arith.constant 0 : index
    %75 = vector.load %arg8[%c0_85, %c1_86, %c2_87, %c0_88] : memref<1x18x18x8xbf16, #tpu.memory_space<vmem>>, vector<1x8x16x8xbf16>
    %76 = vector.shape_cast %75 : vector<1x8x16x8xbf16> to vector<128x8xbf16>
    %cst_89 = arith.constant dense<0.000000e+00> : vector<128x8xf32>
    %77 = tpu.matmul %76, %13, %cst_89 {dimension_numbers = #tpu.dot_dimension_numbers<[1], [0], [0], [1], [0, 0, 1, 1], [], []>} : vector<128x8xbf16>, vector<8x8xbf16>, vector<128x8xf32> -> vector<128x8xf32>
    %78 = arith.addf %74, %77 : vector<128x8xf32>
    %c0_90 = arith.constant 0 : index
    %c2_91 = arith.constant 2 : index
    %c0_92 = arith.constant 0 : index
    %c0_93 = arith.constant 0 : index
    %79 = vector.load %arg8[%c0_90, %c2_91, %c0_92, %c0_93] : memref<1x18x18x8xbf16, #tpu.memory_space<vmem>>, vector<1x8x16x8xbf16>
    %80 = vector.shape_cast %79 : vector<1x8x16x8xbf16> to vector<128x8xbf16>
    %cst_94 = arith.constant dense<0.000000e+00> : vector<128x8xf32>
    %81 = tpu.matmul %80, %15, %cst_94 {dimension_numbers = #tpu.dot_dimension_numbers<[1], [0], [0], [1], [0, 0, 1, 1], [], []>} : vector<128x8xbf16>, vector<8x8xbf16>, vector<128x8xf32> -> vector<128x8xf32>
    %82 = arith.addf %78, %81 : vector<128x8xf32>
    %c0_95 = arith.constant 0 : index
    %c2_96 = arith.constant 2 : index
    %c1_97 = arith.constant 1 : index
    %c0_98 = arith.constant 0 : index
    %83 = vector.load %arg8[%c0_95, %c2_96, %c1_97, %c0_98] : memref<1x18x18x8xbf16, #tpu.memory_space<vmem>>, vector<1x8x16x8xbf16>
    %84 = vector.shape_cast %83 : vector<1x8x16x8xbf16> to vector<128x8xbf16>
    %cst_99 = arith.constant dense<0.000000e+00> : vector<128x8xf32>
    %85 = tpu.matmul %84, %17, %cst_99 {dimension_numbers = #tpu.dot_dimension_numbers<[1], [0], [0], [1], [0, 0, 1, 1], [], []>} : vector<128x8xbf16>, vector<8x8xbf16>, vector<128x8xf32> -> vector<128x8xf32>
    %86 = arith.addf %82, %85 : vector<128x8xf32>
    %c0_100 = arith.constant 0 : index
    %c2_101 = arith.constant 2 : index
    %c2_102 = arith.constant 2 : index
    %c0_103 = arith.constant 0 : index
    %87 = vector.load %arg8[%c0_100, %c2_101, %c2_102, %c0_103] : memref<1x18x18x8xbf16, #tpu.memory_space<vmem>>, vector<1x8x16x8xbf16>
    %88 = vector.shape_cast %87 : vector<1x8x16x8xbf16> to vector<128x8xbf16>
    %cst_104 = arith.constant dense<0.000000e+00> : vector<128x8xf32>
    %89 = tpu.matmul %88, %19, %cst_104 {dimension_numbers = #tpu.dot_dimension_numbers<[1], [0], [0], [1], [0, 0, 1, 1], [], []>} : vector<128x8xbf16>, vector<8x8xbf16>, vector<128x8xf32> -> vector<128x8xf32>
    %90 = arith.addf %86, %89 : vector<128x8xf32>
    %cst_105 = arith.constant dense<0.000000e+00> : vector<8xf32>
    %91 = vector.multi_reduction <add>, %90, %cst_105 [0] : vector<128x8xf32> to vector<8xf32>
    %92 = vector.shape_cast %91 : vector<8xf32> to vector<1x8xf32>
    %93 = arith.addf %52, %92 : vector<1x8xf32>
    %94 = arith.mulf %90, %90 : vector<128x8xf32>
    %cst_106 = arith.constant dense<0.000000e+00> : vector<8xf32>
    %95 = vector.multi_reduction <add>, %94, %cst_106 [0] : vector<128x8xf32> to vector<8xf32>
    %96 = vector.shape_cast %95 : vector<8xf32> to vector<1x8xf32>
    %97 = arith.addf %53, %96 : vector<1x8xf32>
    %98 = vector.shape_cast %90 : vector<128x8xf32> to vector<1x8x16x8xf32>
    %99 = arith.truncf %98 : vector<1x8x16x8xf32> to vector<1x8x16x8xbf16>
    %c0_107 = arith.constant 0 : index
    %c0_108 = arith.constant 0 : index
    %c0_109 = arith.constant 0 : index
    %c0_110 = arith.constant 0 : index
    %100 = vector.load %arg5[%c0_107, %c0_108, %c0_109, %c0_110] : memref<1x16x16x8xbf16, #tpu.memory_space<vmem>>, vector<1x8x16x8xbf16>
    tpu.vector_store %arg5[%c0_107, %c0_108, %c0_109, %c0_110], %99 {strides = array<i32>} : memref<1x16x16x8xbf16, #tpu.memory_space<vmem>>, vector<1x8x16x8xbf16>,
    %cst_111 = arith.constant 0.000000e+00 : f32
    %101 = vector.broadcast %cst_111 : f32 to vector<128x8xf32>
    %c0_112 = arith.constant 0 : index
    %c8_113 = arith.constant 8 : index
    %c0_114 = arith.constant 0 : index
    %c0_115 = arith.constant 0 : index
    %102 = vector.load %arg8[%c0_112, %c8_113, %c0_114, %c0_115] : memref<1x18x18x8xbf16, #tpu.memory_space<vmem>>, vector<1x8x16x8xbf16>
    %103 = vector.shape_cast %102 : vector<1x8x16x8xbf16> to vector<128x8xbf16>
    %cst_116 = arith.constant dense<0.000000e+00> : vector<128x8xf32>
    %104 = tpu.matmul %103, %3, %cst_116 {dimension_numbers = #tpu.dot_dimension_numbers<[1], [0], [0], [1], [0, 0, 1, 1], [], []>} : vector<128x8xbf16>, vector<8x8xbf16>, vector<128x8xf32> -> vector<128x8xf32>
    %105 = arith.addf %101, %104 : vector<128x8xf32>
    %c0_117 = arith.constant 0 : index
    %c8_118 = arith.constant 8 : index
    %c1_119 = arith.constant 1 : index
    %c0_120 = arith.constant 0 : index
    %106 = vector.load %arg8[%c0_117, %c8_118, %c1_119, %c0_120] : memref<1x18x18x8xbf16, #tpu.memory_space<vmem>>, vector<1x8x16x8xbf16>
    %107 = vector.shape_cast %106 : vector<1x8x16x8xbf16> to vector<128x8xbf16>
    %cst_121 = arith.constant dense<0.000000e+00> : vector<128x8xf32>
    %108 = tpu.matmul %107, %5, %cst_121 {dimension_numbers = #tpu.dot_dimension_numbers<[1], [0], [0], [1], [0, 0, 1, 1], [], []>} : vector<128x8xbf16>, vector<8x8xbf16>, vector<128x8xf32> -> vector<128x8xf32>
    %109 = arith.addf %105, %108 : vector<128x8xf32>
    %c0_122 = arith.constant 0 : index
    %c8_123 = arith.constant 8 : index
    %c2_124 = arith.constant 2 : index
    %c0_125 = arith.constant 0 : index
    %110 = vector.load %arg8[%c0_122, %c8_123, %c2_124, %c0_125] : memref<1x18x18x8xbf16, #tpu.memory_space<vmem>>, vector<1x8x16x8xbf16>
    %111 = vector.shape_cast %110 : vector<1x8x16x8xbf16> to vector<128x8xbf16>
    %cst_126 = arith.constant dense<0.000000e+00> : vector<128x8xf32>
    %112 = tpu.matmul %111, %7, %cst_126 {dimension_numbers = #tpu.dot_dimension_numbers<[1], [0], [0], [1], [0, 0, 1, 1], [], []>} : vector<128x8xbf16>, vector<8x8xbf16>, vector<128x8xf32> -> vector<128x8xf32>
    %113 = arith.addf %109, %112 : vector<128x8xf32>
    %c0_127 = arith.constant 0 : index
    %c9_128 = arith.constant 9 : index
    %c0_129 = arith.constant 0 : index
    %c0_130 = arith.constant 0 : index
    %114 = vector.load %arg8[%c0_127, %c9_128, %c0_129, %c0_130] : memref<1x18x18x8xbf16, #tpu.memory_space<vmem>>, vector<1x8x16x8xbf16>
    %115 = vector.shape_cast %114 : vector<1x8x16x8xbf16> to vector<128x8xbf16>
    %cst_131 = arith.constant dense<0.000000e+00> : vector<128x8xf32>
    %116 = tpu.matmul %115, %9, %cst_131 {dimension_numbers = #tpu.dot_dimension_numbers<[1], [0], [0], [1], [0, 0, 1, 1], [], []>} : vector<128x8xbf16>, vector<8x8xbf16>, vector<128x8xf32> -> vector<128x8xf32>
    %117 = arith.addf %113, %116 : vector<128x8xf32>
    %c0_132 = arith.constant 0 : index
    %c9_133 = arith.constant 9 : index
    %c1_134 = arith.constant 1 : index
    %c0_135 = arith.constant 0 : index
    %118 = vector.load %arg8[%c0_132, %c9_133, %c1_134, %c0_135] : memref<1x18x18x8xbf16, #tpu.memory_space<vmem>>, vector<1x8x16x8xbf16>
    %119 = vector.shape_cast %118 : vector<1x8x16x8xbf16> to vector<128x8xbf16>
    %cst_136 = arith.constant dense<0.000000e+00> : vector<128x8xf32>
    %120 = tpu.matmul %119, %11, %cst_136 {dimension_numbers = #tpu.dot_dimension_numbers<[1], [0], [0], [1], [0, 0, 1, 1], [], []>} : vector<128x8xbf16>, vector<8x8xbf16>, vector<128x8xf32> -> vector<128x8xf32>
    %121 = arith.addf %117, %120 : vector<128x8xf32>
    %c0_137 = arith.constant 0 : index
    %c9_138 = arith.constant 9 : index
    %c2_139 = arith.constant 2 : index
    %c0_140 = arith.constant 0 : index
    %122 = vector.load %arg8[%c0_137, %c9_138, %c2_139, %c0_140] : memref<1x18x18x8xbf16, #tpu.memory_space<vmem>>, vector<1x8x16x8xbf16>
    %123 = vector.shape_cast %122 : vector<1x8x16x8xbf16> to vector<128x8xbf16>
    %cst_141 = arith.constant dense<0.000000e+00> : vector<128x8xf32>
    %124 = tpu.matmul %123, %13, %cst_141 {dimension_numbers = #tpu.dot_dimension_numbers<[1], [0], [0], [1], [0, 0, 1, 1], [], []>} : vector<128x8xbf16>, vector<8x8xbf16>, vector<128x8xf32> -> vector<128x8xf32>
    %125 = arith.addf %121, %124 : vector<128x8xf32>
    %c0_142 = arith.constant 0 : index
    %c10 = arith.constant 10 : index
    %c0_143 = arith.constant 0 : index
    %c0_144 = arith.constant 0 : index
    %126 = vector.load %arg8[%c0_142, %c10, %c0_143, %c0_144] : memref<1x18x18x8xbf16, #tpu.memory_space<vmem>>, vector<1x8x16x8xbf16>
    %127 = vector.shape_cast %126 : vector<1x8x16x8xbf16> to vector<128x8xbf16>
    %cst_145 = arith.constant dense<0.000000e+00> : vector<128x8xf32>
    %128 = tpu.matmul %127, %15, %cst_145 {dimension_numbers = #tpu.dot_dimension_numbers<[1], [0], [0], [1], [0, 0, 1, 1], [], []>} : vector<128x8xbf16>, vector<8x8xbf16>, vector<128x8xf32> -> vector<128x8xf32>
    %129 = arith.addf %125, %128 : vector<128x8xf32>
    %c0_146 = arith.constant 0 : index
    %c10_147 = arith.constant 10 : index
    %c1_148 = arith.constant 1 : index
    %c0_149 = arith.constant 0 : index
    %130 = vector.load %arg8[%c0_146, %c10_147, %c1_148, %c0_149] : memref<1x18x18x8xbf16, #tpu.memory_space<vmem>>, vector<1x8x16x8xbf16>
    %131 = vector.shape_cast %130 : vector<1x8x16x8xbf16> to vector<128x8xbf16>
    %cst_150 = arith.constant dense<0.000000e+00> : vector<128x8xf32>
    %132 = tpu.matmul %131, %17, %cst_150 {dimension_numbers = #tpu.dot_dimension_numbers<[1], [0], [0], [1], [0, 0, 1, 1], [], []>} : vector<128x8xbf16>, vector<8x8xbf16>, vector<128x8xf32> -> vector<128x8xf32>
    %133 = arith.addf %129, %132 : vector<128x8xf32>
    %c0_151 = arith.constant 0 : index
    %c10_152 = arith.constant 10 : index
    %c2_153 = arith.constant 2 : index
    %c0_154 = arith.constant 0 : index
    %134 = vector.load %arg8[%c0_151, %c10_152, %c2_153, %c0_154] : memref<1x18x18x8xbf16, #tpu.memory_space<vmem>>, vector<1x8x16x8xbf16>
    %135 = vector.shape_cast %134 : vector<1x8x16x8xbf16> to vector<128x8xbf16>
    %cst_155 = arith.constant dense<0.000000e+00> : vector<128x8xf32>
    %136 = tpu.matmul %135, %19, %cst_155 {dimension_numbers = #tpu.dot_dimension_numbers<[1], [0], [0], [1], [0, 0, 1, 1], [], []>} : vector<128x8xbf16>, vector<8x8xbf16>, vector<128x8xf32> -> vector<128x8xf32>
    %137 = arith.addf %133, %136 : vector<128x8xf32>
    %cst_156 = arith.constant dense<0.000000e+00> : vector<8xf32>
    %138 = vector.multi_reduction <add>, %137, %cst_156 [0] : vector<128x8xf32> to vector<8xf32>
    %139 = vector.shape_cast %138 : vector<8xf32> to vector<1x8xf32>
    %140 = arith.addf %93, %139 : vector<1x8xf32>
    %141 = arith.mulf %137, %137 : vector<128x8xf32>
    %cst_157 = arith.constant dense<0.000000e+00> : vector<8xf32>
    %142 = vector.multi_reduction <add>, %141, %cst_157 [0] : vector<128x8xf32> to vector<8xf32>
    %143 = vector.shape_cast %142 : vector<8xf32> to vector<1x8xf32>
    %144 = arith.addf %97, %143 : vector<1x8xf32>
    %145 = vector.shape_cast %137 : vector<128x8xf32> to vector<1x8x16x8xf32>
    %146 = arith.truncf %145 : vector<1x8x16x8xf32> to vector<1x8x16x8xbf16>
    %c0_158 = arith.constant 0 : index
    %c8_159 = arith.constant 8 : index
    %c0_160 = arith.constant 0 : index
    %c0_161 = arith.constant 0 : index
    %147 = vector.load %arg5[%c0_158, %c8_159, %c0_160, %c0_161] : memref<1x16x16x8xbf16, #tpu.memory_space<vmem>>, vector<1x8x16x8xbf16>
    tpu.vector_store %arg5[%c0_158, %c8_159, %c0_160, %c0_161], %146 {strides = array<i32>} : memref<1x16x16x8xbf16, #tpu.memory_space<vmem>>, vector<1x8x16x8xbf16>,
    %148 = vector.shape_cast %140 : vector<1x8xf32> to vector<1x1x8xf32>
    %c0_162 = arith.constant 0 : index
    %c0_163 = arith.constant 0 : index
    %c0_164 = arith.constant 0 : index
    %149 = vector.load %arg6[%c0_162, %c0_163, %c0_164] : memref<1x1x8xf32, #tpu.memory_space<vmem>>, vector<1x1x8xf32>
    tpu.vector_store %arg6[%c0_162, %c0_163, %c0_164], %148 {strides = array<i32>} : memref<1x1x8xf32, #tpu.memory_space<vmem>>, vector<1x1x8xf32>,
    %150 = vector.shape_cast %144 : vector<1x8xf32> to vector<1x1x8xf32>
    %c0_165 = arith.constant 0 : index
    %c0_166 = arith.constant 0 : index
    %c0_167 = arith.constant 0 : index
    %151 = vector.load %arg7[%c0_165, %c0_166, %c0_167] : memref<1x1x8xf32, #tpu.memory_space<vmem>>, vector<1x1x8xf32>
    tpu.vector_store %arg7[%c0_165, %c0_166, %c0_167], %150 {strides = array<i32>} : memref<1x1x8xf32, #tpu.memory_space<vmem>>, vector<1x1x8xf32>,
    return
  }
  func.func @transform_0(%arg0: i32) -> (i32, i32, i32, i32) {
    %c0_i32 = arith.constant 0 : i32
    %c0_i32_0 = arith.constant 0 : i32
    %c0_i32_1 = arith.constant 0 : i32
    %c0_i32_2 = arith.constant 0 : i32
    return %arg0, %c0_i32, %c0_i32_0, %c0_i32_1 : i32, i32, i32, i32
  }
  func.func @transform_1(%arg0: i32) -> (i32, i32) {
    %c0_i32 = arith.constant 0 : i32
    %c0_i32_0 = arith.constant 0 : i32
    %c0_i32_1 = arith.constant 0 : i32
    return %c0_i32, %c0_i32_0 : i32, i32
  }
  func.func @transform_2(%arg0: i32) -> (i32, i32) {
    %c0_i32 = arith.constant 0 : i32
    %c0_i32_0 = arith.constant 0 : i32
    %c0_i32_1 = arith.constant 0 : i32
    return %c0_i32, %c0_i32_0 : i32, i32
  }
  func.func @transform_3(%arg0: i32) -> (i32, i32, i32) {
    %c0_i32 = arith.constant 0 : i32
    %c0_i32_0 = arith.constant 0 : i32
    %c0_i32_1 = arith.constant 0 : i32
    %c0_i32_2 = arith.constant 0 : i32
    return %c0_i32, %c0_i32_0, %c0_i32_1 : i32, i32, i32
  }
  func.func @transform_4(%arg0: i32) -> (i32, i32, i32, i32) {
    %c0_i32 = arith.constant 0 : i32
    %c0_i32_0 = arith.constant 0 : i32
    %c0_i32_1 = arith.constant 0 : i32
    %c0_i32_2 = arith.constant 0 : i32
    return %arg0, %c0_i32, %c0_i32_0, %c0_i32_1 : i32, i32, i32, i32
  }
  func.func @transform_5(%arg0: i32) -> (i32, i32, i32) {
    %c0_i32 = arith.constant 0 : i32
    %c0_i32_0 = arith.constant 0 : i32
    %c0_i32_1 = arith.constant 0 : i32
    return %arg0, %c0_i32, %c0_i32_0 : i32, i32, i32
  }
  func.func @transform_6(%arg0: i32) -> (i32, i32, i32) {
    %c0_i32 = arith.constant 0 : i32
    %c0_i32_0 = arith.constant 0 : i32
    %c0_i32_1 = arith.constant 0 : i32
    return %arg0, %c0_i32, %c0_i32_0 : i32, i32, i32
  }
}

module attributes {stable_mosaic.version = 11 : i64} {
  func.func @_bn2_relu_kernel(%arg0: i32, %arg1: memref<1x16x16x8xbf16, #tpu.memory_space<vmem>>, %arg2: memref<1x8xf32, #tpu.memory_space<vmem>>, %arg3: memref<1x8xf32, #tpu.memory_space<vmem>>, %arg4: memref<1x16x16x8xf32, #tpu.memory_space<vmem>>) attributes {dimension_semantics = [#tpu.dimension_semantics<parallel>], iteration_bounds = array<i64: 2>, scalar_prefetch = 0 : i64, scratch_operands = 0 : i64, tpu.core_type = #tpu.core_type<tc>, window_params = [{transform_indices = @transform_0, window_bounds = array<i64: 1, 16, 16, 8>}, {pipeline_mode = #tpu.pipeline_mode<synchronous>, transform_indices = @transform_1, window_bounds = array<i64: 1, 8>}, {pipeline_mode = #tpu.pipeline_mode<synchronous>, transform_indices = @transform_2, window_bounds = array<i64: 1, 8>}, {transform_indices = @transform_3, window_bounds = array<i64: 1, 16, 16, 8>}]} {
    %c0 = arith.constant 0 : index
    %c0_0 = arith.constant 0 : index
    %c0_1 = arith.constant 0 : index
    %c0_2 = arith.constant 0 : index
    %0 = vector.load %arg1[%c0, %c0_0, %c0_1, %c0_2] : memref<1x16x16x8xbf16, #tpu.memory_space<vmem>>, vector<1x16x16x8xbf16>
    %1 = arith.extf %0 : vector<1x16x16x8xbf16> to vector<1x16x16x8xf32>
    %2 = vector.shape_cast %1 : vector<1x16x16x8xf32> to vector<256x8xf32>
    %c0_3 = arith.constant 0 : index
    %c0_4 = arith.constant 0 : index
    %3 = vector.load %arg2[%c0_3, %c0_4] : memref<1x8xf32, #tpu.memory_space<vmem>>, vector<1x8xf32>
    %4 = vector.broadcast %3 : vector<1x8xf32> to vector<256x8xf32>
    %5 = arith.mulf %2, %4 : vector<256x8xf32>
    %c0_5 = arith.constant 0 : index
    %c0_6 = arith.constant 0 : index
    %6 = vector.load %arg3[%c0_5, %c0_6] : memref<1x8xf32, #tpu.memory_space<vmem>>, vector<1x8xf32>
    %7 = vector.broadcast %6 : vector<1x8xf32> to vector<256x8xf32>
    %8 = arith.addf %5, %7 : vector<256x8xf32>
    %cst = arith.constant 0.000000e+00 : f32
    %9 = vector.broadcast %cst : f32 to vector<256x8xf32>
    %10 = arith.maximumf %8, %9 : vector<256x8xf32>
    %11 = vector.shape_cast %10 : vector<256x8xf32> to vector<1x16x16x8xf32>
    %c0_7 = arith.constant 0 : index
    %c0_8 = arith.constant 0 : index
    %c0_9 = arith.constant 0 : index
    %c0_10 = arith.constant 0 : index
    %12 = vector.load %arg4[%c0_7, %c0_8, %c0_9, %c0_10] : memref<1x16x16x8xf32, #tpu.memory_space<vmem>>, vector<1x16x16x8xf32>
    tpu.vector_store %arg4[%c0_7, %c0_8, %c0_9, %c0_10], %11 {strides = array<i32>} : memref<1x16x16x8xf32, #tpu.memory_space<vmem>>, vector<1x16x16x8xf32>,
    return
  }
  func.func @transform_0(%arg0: i32) -> (i32, i32, i32, i32) {
    %c0_i32 = arith.constant 0 : i32
    %c0_i32_0 = arith.constant 0 : i32
    %c0_i32_1 = arith.constant 0 : i32
    %c0_i32_2 = arith.constant 0 : i32
    return %arg0, %c0_i32, %c0_i32_0, %c0_i32_1 : i32, i32, i32, i32
  }
  func.func @transform_1(%arg0: i32) -> (i32, i32) {
    %c0_i32 = arith.constant 0 : i32
    %c0_i32_0 = arith.constant 0 : i32
    %c0_i32_1 = arith.constant 0 : i32
    return %c0_i32, %c0_i32_0 : i32, i32
  }
  func.func @transform_2(%arg0: i32) -> (i32, i32) {
    %c0_i32 = arith.constant 0 : i32
    %c0_i32_0 = arith.constant 0 : i32
    %c0_i32_1 = arith.constant 0 : i32
    return %c0_i32, %c0_i32_0 : i32, i32
  }
  func.func @transform_3(%arg0: i32) -> (i32, i32, i32, i32) {
    %c0_i32 = arith.constant 0 : i32
    %c0_i32_0 = arith.constant 0 : i32
    %c0_i32_1 = arith.constant 0 : i32
    %c0_i32_2 = arith.constant 0 : i32
    return %arg0, %c0_i32, %c0_i32_0, %c0_i32_1 : i32, i32, i32, i32
  }
}

</mosaic_0001>

<llo_original>
// kernel: bottleneck_forward.5
$region0: #{bottleneck_forward.5}
  #allocation0 [shape = 'u32[]', space=smem, size = 0x4, offset = 0x4, fixed_abs, tag = 'smem constant byte address 0x4 - core index']
  #allocation1 [shape = 'u32[144,128]{1,0:T(1,128)}', space=vmem, size = 0x12000, scoped, tag = 'internal scratch']
  %s0 = inlined_call_operand.vmem [shape: bf16[2,16,16,8], index: 0, kind: input, shape index: {}]
  %s1 = inlined_call_operand.vmem [shape: f32[1,8], index: 1, kind: input, shape index: {}]
  %s2 = inlined_call_operand.vmem [shape: f32[1,8], index: 2, kind: input, shape index: {}]
  %s3 = inlined_call_operand.vmem [shape: f32[2,16,16,8], index: 3, kind: output, shape index: {}]
  %s4 = sld [smem:[#allocation0]]
  $region45: #{bottleneck_forward.5} parent=0
    _
  %s6 = ssub.s32 1, %s4
  %s7 = scalar_select 0, %s6, %s4
  loop: start=0, step=1, limit=4
  $region2: #{bottleneck_forward.5} parent=0 // loop_pre_header
    _
  $region3: #{bottleneck_forward.5} parent=0 // loop_header
    %s9 = sphi 0, %s13
    %p10 = scmp.ge.s32.totalorder %s9, 4
    %s19 = sphi 0, %s21
    %s22 = sphi 0, %s19
    %s23 = sphi 0, %s22
    %s39 = sphi 0, %s23
    %s43 = sphi 0, %s43
    %s45 = sphi 0, %s43
    %s46 = sphi 0, %s45
    %s60 = sphi 0, %s46
    %s64 = sphi 0, %s64
    %s66 = sphi 0, %s64
    %s67 = sphi 0, %s66
    %s81 = sphi 0, %s67
    %s87 = sphi 0, %s89
    %s90 = sphi 0, %s87
    %s91 = sphi 0, %s90
    %s107 = sphi 0, %s91
  $region4: #{bottleneck_forward.5} parent=0 // loop_header_branch
    %12 = sbr.rel (%p10) target = $region8
  $region5: #{bottleneck_forward.5} parent=0 // loop_body
    %s14 = ssub.s32 %s9, 1
    %s15 = ssub.s32 %s9, 2
    %s16 = sadd.s32 %s9, 1
    %s17 = ssub.s32 %s9, %s16
    %p18 = scmp.eq.s32.totalorder %s17, 0
    %s20 = sadd.s32 %s19, 1
    %s21 = scalar_select %p18, %s19, %s20
    %p24 = pneg %p18
    %p25 = scmp.eq.s32.totalorder %s9, 1
    %p26 = por %p24, %p25
    %p27 = scmp.ne.s32.totalorder %s19, %s22
    %p28 = scmp.eq.s32.totalorder %s9, 0
    %p29 = por %p27, %p28
    %p30 = scmp.ne.s32.totalorder %s19, %s22
    %p31 = scmp.eq.s32.totalorder %s14, 1
    %p32 = por %p30, %p31
    %p33 = scmp.ne.s32.totalorder %s22, %s23
    %p34 = scmp.eq.s32.totalorder %s14, 0
    %p35 = por %p33, %p34
    %p36 = scmp.ne.s32.totalorder %s22, %s23
    %p37 = scmp.eq.s32.totalorder %s15, 1
    %p38 = por %p36, %p37
    %p40 = scmp.ne.s32.totalorder %s23, %s39
    %p41 = scmp.eq.s32.totalorder %s15, 0
    %p42 = por %p40, %p41
    %s44 = sadd.s32 %s43, 1
    %p47 = scmp.eq.s32.totalorder %s9, 1
    %p48 = scmp.ne.s32.totalorder %s43, %s45
    %p49 = scmp.eq.s32.totalorder %s9, 0
    %p50 = por %p48, %p49
    %p51 = scmp.ne.s32.totalorder %s43, %s45
    %p52 = scmp.eq.s32.totalorder %s14, 1
    %p53 = por %p51, %p52
    %p54 = scmp.ne.s32.totalorder %s45, %s46
    %p55 = scmp.eq.s32.totalorder %s14, 0
    %p56 = por %p54, %p55
    %p57 = scmp.ne.s32.totalorder %s45, %s46
    %p58 = scmp.eq.s32.totalorder %s15, 1
    %p59 = por %p57, %p58
    %p61 = scmp.ne.s32.totalorder %s46, %s60
    %p62 = scmp.eq.s32.totalorder %s15, 0
    %p63 = por %p61, %p62
    %s65 = sadd.s32 %s64, 1
    %p68 = scmp.eq.s32.totalorder %s9, 1
    %p69 = scmp.ne.s32.totalorder %s64, %s66
    %p70 = scmp.eq.s32.totalorder %s9, 0
    %p71 = por %p69, %p70
    %p72 = scmp.ne.s32.totalorder %s64, %s66
    %p73 = scmp.eq.s32.totalorder %s14, 1
    %p74 = por %p72, %p73
    %p75 = scmp.ne.s32.totalorder %s66, %s67
    %p76 = scmp.eq.s32.totalorder %s14, 0
    %p77 = por %p75, %p76
    %p78 = scmp.ne.s32.totalorder %s66, %s67
    %p79 = scmp.eq.s32.totalorder %s15, 1
    %p80 = por %p78, %p79
    %p82 = scmp.ne.s32.totalorder %s67, %s81
    %p83 = scmp.eq.s32.totalorder %s15, 0
    %p84 = por %p82, %p83
    %s85 = ssub.s32 %s9, %s16
    %p86 = scmp.eq.s32.totalorder %s85, 0
    %s88 = sadd.s32 %s87, 1
    %s89 = scalar_select %p86, %s87, %s88
    %p92 = pneg %p86
    %p93 = scmp.eq.s32.totalorder %s9, 1
    %p94 = por %p92, %p93
    %p95 = scmp.ne.s32.totalorder %s87, %s90
    %p96 = scmp.eq.s32.totalorder %s9, 0
    %p97 = por %p95, %p96
    %p98 = scmp.ne.s32.totalorder %s87, %s90
    %p99 = scmp.eq.s32.totalorder %s14, 1
    %p100 = por %p98, %p99
    %p101 = scmp.ne.s32.totalorder %s90, %s91
    %p102 = scmp.eq.s32.totalorder %s14, 0
    %p103 = por %p101, %p102
    %p104 = scmp.ne.s32.totalorder %s90, %s91
    %p105 = scmp.eq.s32.totalorder %s15, 1
    %p106 = por %p104, %p105
    %p108 = scmp.ne.s32.totalorder %s91, %s107
    %p109 = scmp.eq.s32.totalorder %s15, 0
    %p110 = por %p108, %p109
    %p111 = scmp.le.s32.totalorder 1, %s9
    %p112 = scmp.lt.s32.totalorder %s9, 3
    %p113 = pnand %p111, %p112
    %p114 = pneg %p113
    // Predicated region
    $region9: #{bottleneck_forward.5} parent=5 // pred_check
      _
    $region10: #{bottleneck_forward.5} parent=5 // pred_check_branch
      %116 = sbr.rel (%p113) target = $region12
    $region11: #{bottleneck_forward.5} parent=5 // pred_region
      %s117 = ssub.s32 %s9, 1
      // Predicated region
      $region13: #{bottleneck_forward.5} parent=11 // pred_check
        %p118 = pneg %p56
      $region14: #{bottleneck_forward.5} parent=11 // pred_check_branch
        %120 = sbr.rel (%p118) target = $region16
      $region15: #{bottleneck_forward.5} parent=11 // pred_region
        _
      $region16: #{bottleneck_forward.5} parent=11 // pred_fallthru
        _
      // Predicated region
      $region17: #{bottleneck_forward.5} parent=11 // pred_check
        %p121 = pneg %p77
      $region18: #{bottleneck_forward.5} parent=11 // pred_check_branch
        %123 = sbr.rel (%p121) target = $region20
      $region19: #{bottleneck_forward.5} parent=11 // pred_region
        _
      $region20: #{bottleneck_forward.5} parent=11 // pred_fallthru
        _
    $region12: #{bottleneck_forward.5} parent=5 // pred_fallthru
      _
    %p124 = scmp.lt.s32.totalorder %s9, 2
    // Predicated region
    $region21: #{bottleneck_forward.5} parent=5 // pred_check
      %p125 = pneg %p124
    $region22: #{bottleneck_forward.5} parent=5 // pred_check_branch
      %127 = sbr.rel (%p125) target = $region24
    $region23: #{bottleneck_forward.5} parent=5 // pred_region
      // Predicated region
      $region25: #{bottleneck_forward.5} parent=23 // pred_check
        %p128 = pneg %p29
      $region26: #{bottleneck_forward.5} parent=23 // pred_check_branch
        %130 = sbr.rel (%p128) target = $region28
      $region27: #{bottleneck_forward.5} parent=23 // pred_region
        %p131 = scmp.lt.s32.totalorder %s9, 1
        %s132 = scalar_select %p131, %s9, 1
        %s133 = smul.addr %s132, 32
        %s134 = smul.addr %s133, 4
        %s135 = scalar_lea.vmem %s0, %s134
      $region28: #{bottleneck_forward.5} parent=23 // pred_fallthru
        _
    $region24: #{bottleneck_forward.5} parent=5 // pred_fallthru
      _
    %p136 = scmp.le.s32.totalorder 1, %s9
    %p137 = scmp.lt.s32.totalorder %s9, 3
    %p138 = pnand %p136, %p137
    %p139 = pneg %p138
    // Predicated region
    $region29: #{bottleneck_forward.5} parent=5 // pred_check
      _
    $region30: #{bottleneck_forward.5} parent=5 // pred_check_branch
      %141 = sbr.rel (%p138) target = $region32
    $region31: #{bottleneck_forward.5} parent=5 // pred_region
      %s142 = ssub.s32 %s9, 1
      %p143 = scmp.lt.s32.totalorder %s14, 1
      %s144 = scalar_select %p143, %s14, 1
      %s145 = smul.addr %s144, 32
      %s146 = smul.addr %s145, 4
      %s147 = scalar_lea.vmem %s0, %s146
      %p148 = pneg %p35
      %p149 = pneg %p32
      %p150 = pneg %p56
      %p151 = pneg %p53
      %p152 = pneg %p77
      %p153 = pneg %p74
      %p154 = pneg %p103
      %p155 = pneg %p100
      %p156 = scmp.lt.s32.totalorder %s14, 1
      %s157 = scalar_select %p156, %s14, 1
      %s158 = smul.addr %s157, 32
      %s159 = smul.addr %s158, 8
      %s160 = scalar_lea.vmem %s3, %s159
      %p161 = scmp.lt.s32.totalorder %s14, 1
      %s162 = scalar_select %p161, %s14, 1
      %s163 = smul.addr %s162, 32
      %s164 = smul.addr %s163, 4
      %s165 = scalar_lea.vmem %s0, %s164
      %p166 = scmp.lt.s32.totalorder %s14, 1
      %s167 = scalar_select %p166, %s14, 1
      %s168 = smul.addr %s167, 32
      %s169 = smul.addr %s168, 8
      %s170 = scalar_lea.vmem %s3, %s169
      %v171 = vld [vmem:[%s165] sm:$0xf]
      %v172 = vld [vmem:[%s165 + $0x4] sm:$0xf]
      %v173 = vld [vmem:[%s165 + $0x8] sm:$0xf]
      %v174 = vld [vmem:[%s165 + $0xc] sm:$0xf]
      %v175 = vld [vmem:[%s165 + $0x10] sm:$0xf]
      %v176 = vld [vmem:[%s165 + $0x14] sm:$0xf]
      %v177 = vld [vmem:[%s165 + $0x18] sm:$0xf]
      %v178 = vld [vmem:[%s165 + $0x1c] sm:$0xf]
      %v179 = vld [vmem:[%s165 + $0x20] sm:$0xf]
      %v180 = vld [vmem:[%s165 + $0x24] sm:$0xf]
      %v181 = vld [vmem:[%s165 + $0x28] sm:$0xf]
      %v182 = vld [vmem:[%s165 + $0x2c] sm:$0xf]
      %v183 = vld [vmem:[%s165 + $0x30] sm:$0xf]
      %v184 = vld [vmem:[%s165 + $0x34] sm:$0xf]
      %v185 = vld [vmem:[%s165 + $0x38] sm:$0xf]
      %v186 = vld [vmem:[%s165 + $0x3c] sm:$0xf]
      %v187 = vld [vmem:[%s165 + $0x40] sm:$0xf]
      %v188 = vld [vmem:[%s165 + $0x44] sm:$0xf]
      %v189 = vld [vmem:[%s165 + $0x48] sm:$0xf]
      %v190 = vld [vmem:[%s165 + $0x4c] sm:$0xf]
      %v191 = vld [vmem:[%s165 + $0x50] sm:$0xf]
      %v192 = vld [vmem:[%s165 + $0x54] sm:$0xf]
      %v193 = vld [vmem:[%s165 + $0x58] sm:$0xf]
      %v194 = vld [vmem:[%s165 + $0x5c] sm:$0xf]
      %v195 = vld [vmem:[%s165 + $0x60] sm:$0xf]
      %v196 = vld [vmem:[%s165 + $0x64] sm:$0xf]
      %v197 = vld [vmem:[%s165 + $0x68] sm:$0xf]
      %v198 = vld [vmem:[%s165 + $0x6c] sm:$0xf]
      %v199 = vld [vmem:[%s165 + $0x70] sm:$0xf]
      %v200 = vld [vmem:[%s165 + $0x74] sm:$0xf]
      %v201 = vld [vmem:[%s165 + $0x78] sm:$0xf]
      %v202 = vld [vmem:[%s165 + $0x7c] sm:$0xf]
      %v203 = vunpack.c.l.bf16 %v171
      %v204 = vunpack.c.l.bf16 %v172
      %v205 = vunpack.c.l.bf16 %v173
      %v206 = vunpack.c.l.bf16 %v174
      %v207 = vunpack.c.l.bf16 %v175
      %v208 = vunpack.c.l.bf16 %v176
      %v209 = vunpack.c.l.bf16 %v177
      %v210 = vunpack.c.l.bf16 %v178
      %v211 = vunpack.c.l.bf16 %v179
      %v212 = vunpack.c.l.bf16 %v180
      %v213 = vunpack.c.l.bf16 %v181
      %v214 = vunpack.c.l.bf16 %v182
      %v215 = vunpack.c.l.bf16 %v183
      %v216 = vunpack.c.l.bf16 %v184
      %v217 = vunpack.c.l.bf16 %v185
      %v218 = vunpack.c.l.bf16 %v186
      %v219 = vunpack.c.l.bf16 %v187
      %v220 = vunpack.c.l.bf16 %v188
      %v221 = vunpack.c.l.bf16 %v189
      %v222 = vunpack.c.l.bf16 %v190
      %v223 = vunpack.c.l.bf16 %v191
      %v224 = vunpack.c.l.bf16 %v192
      %v225 = vunpack.c.l.bf16 %v193
      %v226 = vunpack.c.l.bf16 %v194
      %v227 = vunpack.c.l.bf16 %v195
      %v228 = vunpack.c.l.bf16 %v196
      %v229 = vunpack.c.l.bf16 %v197
      %v230 = vunpack.c.l.bf16 %v198
      %v231 = vunpack.c.l.bf16 %v199
      %v232 = vunpack.c.l.bf16 %v200
      %v233 = vunpack.c.l.bf16 %v201
      %v234 = vunpack.c.l.bf16 %v202
      %v235 = vld [vmem:[%s1] sm:$0x1]
      %v237 = vlaneseq
      %v238 = vshrl.u32 %v237, 7
      %v239 = vsub.s32 0, %v238
      %v240 = vrot.slane %v235, %v239
      %v242 = vmul.f32 %v203, %v240
      %v243 = vmul.f32 %v204, %v240
      %v244 = vmul.f32 %v205, %v240
      %v245 = vmul.f32 %v206, %v240
      %v246 = vmul.f32 %v207, %v240
      %v247 = vmul.f32 %v208, %v240
      %v248 = vmul.f32 %v209, %v240
      %v249 = vmul.f32 %v210, %v240
      %v250 = vmul.f32 %v211, %v240
      %v251 = vmul.f32 %v212, %v240
      %v252 = vmul.f32 %v213, %v240
      %v253 = vmul.f32 %v214, %v240
      %v254 = vmul.f32 %v215, %v240
      %v255 = vmul.f32 %v216, %v240
      %v256 = vmul.f32 %v217, %v240
      %v257 = vmul.f32 %v218, %v240
      %v258 = vmul.f32 %v219, %v240
      %v259 = vmul.f32 %v220, %v240
      %v260 = vmul.f32 %v221, %v240
      %v261 = vmul.f32 %v222, %v240
      %v262 = vmul.f32 %v223, %v240
      %v263 = vmul.f32 %v224, %v240
      %v264 = vmul.f32 %v225, %v240
      %v265 = vmul.f32 %v226, %v240
      %v266 = vmul.f32 %v227, %v240
      %v267 = vmul.f32 %v228, %v240
      %v268 = vmul.f32 %v229, %v240
      %v269 = vmul.f32 %v230, %v240
      %v270 = vmul.f32 %v231, %v240
      %v271 = vmul.f32 %v232, %v240
      %v272 = vmul.f32 %v233, %v240
      %v273 = vmul.f32 %v234, %v240
      %v274 = vld [vmem:[%s2] sm:$0x1]
      %v276 = vlaneseq
      %v277 = vshrl.u32 %v276, 7
      %v278 = vsub.s32 0, %v277
      %v279 = vrot.slane %v274, %v278
      %v281 = vadd.f32 %v242, %v279
      %v282 = vadd.f32 %v243, %v279
      %v283 = vadd.f32 %v244, %v279
      %v284 = vadd.f32 %v245, %v279
      %v285 = vadd.f32 %v246, %v279
      %v286 = vadd.f32 %v247, %v279
      %v287 = vadd.f32 %v248, %v279
      %v288 = vadd.f32 %v249, %v279
      %v289 = vadd.f32 %v250, %v279
      %v290 = vadd.f32 %v251, %v279
      %v291 = vadd.f32 %v252, %v279
      %v292 = vadd.f32 %v253, %v279
      %v293 = vadd.f32 %v254, %v279
      %v294 = vadd.f32 %v255, %v279
      %v295 = vadd.f32 %v256, %v279
      %v296 = vadd.f32 %v257, %v279
      %v297 = vadd.f32 %v258, %v279
      %v298 = vadd.f32 %v259, %v279
      %v299 = vadd.f32 %v260, %v279
      %v300 = vadd.f32 %v261, %v279
      %v301 = vadd.f32 %v262, %v279
      %v302 = vadd.f32 %v263, %v279
      %v303 = vadd.f32 %v264, %v279
      %v304 = vadd.f32 %v265, %v279
      %v305 = vadd.f32 %v266, %v279
      %v306 = vadd.f32 %v267, %v279
      %v307 = vadd.f32 %v268, %v279
      %v308 = vadd.f32 %v269, %v279
      %v309 = vadd.f32 %v270, %v279
      %v310 = vadd.f32 %v271, %v279
      %v311 = vadd.f32 %v272, %v279
      %v312 = vadd.f32 %v273, %v279
      %v313 = vmax.f32 %v281, 0.0
      %v314 = vmax.f32 %v282, 0.0
      %v315 = vmax.f32 %v283, 0.0
      %v316 = vmax.f32 %v284, 0.0
      %v317 = vmax.f32 %v285, 0.0
      %v318 = vmax.f32 %v286, 0.0
      %v319 = vmax.f32 %v287, 0.0
      %v320 = vmax.f32 %v288, 0.0
      %v321 = vmax.f32 %v289, 0.0
      %v322 = vmax.f32 %v290, 0.0
      %v323 = vmax.f32 %v291, 0.0
      %v324 = vmax.f32 %v292, 0.0
      %v325 = vmax.f32 %v293, 0.0
      %v326 = vmax.f32 %v294, 0.0
      %v327 = vmax.f32 %v295, 0.0
      %v328 = vmax.f32 %v296, 0.0
      %v329 = vmax.f32 %v297, 0.0
      %v330 = vmax.f32 %v298, 0.0
      %v331 = vmax.f32 %v299, 0.0
      %v332 = vmax.f32 %v300, 0.0
      %v333 = vmax.f32 %v301, 0.0
      %v334 = vmax.f32 %v302, 0.0
      %v335 = vmax.f32 %v303, 0.0
      %v336 = vmax.f32 %v304, 0.0
      %v337 = vmax.f32 %v305, 0.0
      %v338 = vmax.f32 %v306, 0.0
      %v339 = vmax.f32 %v307, 0.0
      %v340 = vmax.f32 %v308, 0.0
      %v341 = vmax.f32 %v309, 0.0
      %v342 = vmax.f32 %v310, 0.0
      %v343 = vmax.f32 %v311, 0.0
      %v344 = vmax.f32 %v312, 0.0
      %vm345 = vcmask 64512
      %346 = vst.msk [vmem:[%s170] sm:$0xff] %vm345, %v313
      %347 = vst.msk [vmem:[%s170 + $0x8] sm:$0xff] %vm345, %v314
      %348 = vst.msk [vmem:[%s170 + $0x10] sm:$0xff] %vm345, %v315
      %349 = vst.msk [vmem:[%s170 + $0x18] sm:$0xff] %vm345, %v316
      %350 = vst.msk [vmem:[%s170 + $0x20] sm:$0xff] %vm345, %v317
      %351 = vst.msk [vmem:[%s170 + $0x28] sm:$0xff] %vm345, %v318
      %352 = vst.msk [vmem:[%s170 + $0x30] sm:$0xff] %vm345, %v319
      %353 = vst.msk [vmem:[%s170 + $0x38] sm:$0xff] %vm345, %v320
      %354 = vst.msk [vmem:[%s170 + $0x40] sm:$0xff] %vm345, %v321
      %355 = vst.msk [vmem:[%s170 + $0x48] sm:$0xff] %vm345, %v322
      %356 = vst.msk [vmem:[%s170 + $0x50] sm:$0xff] %vm345, %v323
      %357 = vst.msk [vmem:[%s170 + $0x58] sm:$0xff] %vm345, %v324
      %358 = vst.msk [vmem:[%s170 + $0x60] sm:$0xff] %vm345, %v325
      %359 = vst.msk [vmem:[%s170 + $0x68] sm:$0xff] %vm345, %v326
      %360 = vst.msk [vmem:[%s170 + $0x70] sm:$0xff] %vm345, %v327
      %361 = vst.msk [vmem:[%s170 + $0x78] sm:$0xff] %vm345, %v328
      %362 = vst.msk [vmem:[%s170 + $0x80] sm:$0xff] %vm345, %v329
      %363 = vst.msk [vmem:[%s170 + $0x88] sm:$0xff] %vm345, %v330
      %364 = vst.msk [vmem:[%s170 + $0x90] sm:$0xff] %vm345, %v331
      %365 = vst.msk [vmem:[%s170 + $0x98] sm:$0xff] %vm345, %v332
      %366 = vst.msk [vmem:[%s170 + $0xa0] sm:$0xff] %vm345, %v333
      %367 = vst.msk [vmem:[%s170 + $0xa8] sm:$0xff] %vm345, %v334
      %368 = vst.msk [vmem:[%s170 + $0xb0] sm:$0xff] %vm345, %v335
      %369 = vst.msk [vmem:[%s170 + $0xb8] sm:$0xff] %vm345, %v336
      %370 = vst.msk [vmem:[%s170 + $0xc0] sm:$0xff] %vm345, %v337
      %371 = vst.msk [vmem:[%s170 + $0xc8] sm:$0xff] %vm345, %v338
      %372 = vst.msk [vmem:[%s170 + $0xd0] sm:$0xff] %vm345, %v339
      %373 = vst.msk [vmem:[%s170 + $0xd8] sm:$0xff] %vm345, %v340
      %374 = vst.msk [vmem:[%s170 + $0xe0] sm:$0xff] %vm345, %v341
      %375 = vst.msk [vmem:[%s170 + $0xe8] sm:$0xff] %vm345, %v342
      %376 = vst.msk [vmem:[%s170 + $0xf0] sm:$0xff] %vm345, %v343
      %377 = vst.msk [vmem:[%s170 + $0xf8] sm:$0xff] %vm345, %v344
      %p378 = scmp.lt.s32.totalorder %s14, 1
      %s379 = scalar_select %p378, %s14, 1
      %s380 = smul.addr %s379, 32
      %s381 = smul.addr %s380, 8
      %s382 = scalar_lea.vmem %s3, %s381
      // Predicated region
      $region33: #{bottleneck_forward.5} parent=31 // pred_check
        %p383 = pneg %p100
      $region34: #{bottleneck_forward.5} parent=31 // pred_check_branch
        %385 = sbr.rel (%p383) target = $region36
      $region35: #{bottleneck_forward.5} parent=31 // pred_region
        _
      $region36: #{bottleneck_forward.5} parent=31 // pred_fallthru
        _
    $region32: #{bottleneck_forward.5} parent=5 // pred_fallthru
      _
    %p386 = scmp.le.s32.totalorder 2, %s9
    // Predicated region
    $region37: #{bottleneck_forward.5} parent=5 // pred_check
      %p387 = pneg %p386
    $region38: #{bottleneck_forward.5} parent=5 // pred_check_branch
      %389 = sbr.rel (%p387) target = $region40
    $region39: #{bottleneck_forward.5} parent=5 // pred_region
      %s390 = ssub.s32 %s9, 2
      // Predicated region
      $region41: #{bottleneck_forward.5} parent=39 // pred_check
        %p391 = pneg %p106
      $region42: #{bottleneck_forward.5} parent=39 // pred_check_branch
        %393 = sbr.rel (%p391) target = $region44
      $region43: #{bottleneck_forward.5} parent=39 // pred_region
        %p394 = scmp.lt.s32.totalorder %s15, 1
        %s395 = scalar_select %p394, %s15, 1
        %s396 = smul.addr %s395, 32
        %s397 = smul.addr %s396, 8
        %s398 = scalar_lea.vmem %s3, %s397
      $region44: #{bottleneck_forward.5} parent=39 // pred_fallthru
        _
    $region40: #{bottleneck_forward.5} parent=5 // pred_fallthru
      _
  $region6: #{bottleneck_forward.5} parent=0 // loop_footer
    %s13 = sadd.s32 1, %s9
  $region7: #{bottleneck_forward.5} parent=0 // loop_footer_branch
    %8 = sbr.rel target = $region3
  $region8: #{bottleneck_forward.5} parent=0 // loop_exit
    _

// kernel: bottleneck_forward.3
$region0: #{bottleneck_forward.3}
  #allocation0 [shape = 'u32[]', space=smem, size = 0x4, offset = 0x4, fixed_abs, tag = 'smem constant byte address 0x4 - core index']
  #allocation1 [shape = 'u32[144,128]{1,0:T(1,128)}', space=vmem, size = 0x12000, scoped, tag = 'internal scratch']
  %s0 = inlined_call_operand.vmem [shape: bf16[2,18,18,4], index: 0, kind: input, shape index: {}]
  %s1 = inlined_call_operand.vmem [shape: bf16[9,4,8], index: 1, kind: input, shape index: {}]
  %s2 = inlined_call_operand.vmem [shape: bf16[2,16,16,8], index: 2, kind: output, shape index: {0}]
  %s3 = inlined_call_operand.vmem [shape: f32[2,1,8], index: 3, kind: output, shape index: {1}]
  %s4 = inlined_call_operand.vmem [shape: f32[2,1,8], index: 4, kind: output, shape index: {2}]
  %5 = xla_tuple %s2, %s3, %s4
  %s6 = sld [smem:[#allocation0]]
  $region57: #{bottleneck_forward.3} parent=0
    _
  %s8 = ssub.s32 1, %s6
  %s9 = scalar_select 0, %s8, %s6
  loop: start=0, step=1, limit=4
  $region2: #{bottleneck_forward.3} parent=0 // loop_pre_header
    _
  $region3: #{bottleneck_forward.3} parent=0 // loop_header
    %s11 = sphi 0, %s15
    %p12 = scmp.ge.s32.totalorder %s11, 4
    %s21 = sphi 0, %s23
    %s24 = sphi 0, %s21
    %s25 = sphi 0, %s24
    %s41 = sphi 0, %s25
    %s45 = sphi 0, %s45
    %s47 = sphi 0, %s45
    %s48 = sphi 0, %s47
    %s62 = sphi 0, %s48
    %s68 = sphi 0, %s70
    %s71 = sphi 0, %s68
    %s72 = sphi 0, %s71
    %s88 = sphi 0, %s72
    %s94 = sphi 0, %s96
    %s97 = sphi 0, %s94
    %s98 = sphi 0, %s97
    %s114 = sphi 0, %s98
    %s120 = sphi 0, %s122
    %s123 = sphi 0, %s120
    %s124 = sphi 0, %s123
    %s140 = sphi 0, %s124
  $region4: #{bottleneck_forward.3} parent=0 // loop_header_branch
    %14 = sbr.rel (%p12) target = $region8
  $region5: #{bottleneck_forward.3} parent=0 // loop_body
    %s16 = ssub.s32 %s11, 1
    %s17 = ssub.s32 %s11, 2
    %s18 = sadd.s32 %s11, 1
    %s19 = ssub.s32 %s11, %s18
    %p20 = scmp.eq.s32.totalorder %s19, 0
    %s22 = sadd.s32 %s21, 1
    %s23 = scalar_select %p20, %s21, %s22
    %p26 = pneg %p20
    %p27 = scmp.eq.s32.totalorder %s11, 1
    %p28 = por %p26, %p27
    %p29 = scmp.ne.s32.totalorder %s21, %s24
    %p30 = scmp.eq.s32.totalorder %s11, 0
    %p31 = por %p29, %p30
    %p32 = scmp.ne.s32.totalorder %s21, %s24
    %p33 = scmp.eq.s32.totalorder %s16, 1
    %p34 = por %p32, %p33
    %p35 = scmp.ne.s32.totalorder %s24, %s25
    %p36 = scmp.eq.s32.totalorder %s16, 0
    %p37 = por %p35, %p36
    %p38 = scmp.ne.s32.totalorder %s24, %s25
    %p39 = scmp.eq.s32.totalorder %s17, 1
    %p40 = por %p38, %p39
    %p42 = scmp.ne.s32.totalorder %s25, %s41
    %p43 = scmp.eq.s32.totalorder %s17, 0
    %p44 = por %p42, %p43
    %s46 = sadd.s32 %s45, 1
    %p49 = scmp.eq.s32.totalorder %s11, 1
    %p50 = scmp.ne.s32.totalorder %s45, %s47
    %p51 = scmp.eq.s32.totalorder %s11, 0
    %p52 = por %p50, %p51
    %p53 = scmp.ne.s32.totalorder %s45, %s47
    %p54 = scmp.eq.s32.totalorder %s16, 1
    %p55 = por %p53, %p54
    %p56 = scmp.ne.s32.totalorder %s47, %s48
    %p57 = scmp.eq.s32.totalorder %s16, 0
    %p58 = por %p56, %p57
    %p59 = scmp.ne.s32.totalorder %s47, %s48
    %p60 = scmp.eq.s32.totalorder %s17, 1
    %p61 = por %p59, %p60
    %p63 = scmp.ne.s32.totalorder %s48, %s62
    %p64 = scmp.eq.s32.totalorder %s17, 0
    %p65 = por %p63, %p64
    %s66 = ssub.s32 %s11, %s18
    %p67 = scmp.eq.s32.totalorder %s66, 0
    %s69 = sadd.s32 %s68, 1
    %s70 = scalar_select %p67, %s68, %s69
    %p73 = pneg %p67
    %p74 = scmp.eq.s32.totalorder %s11, 1
    %p75 = por %p73, %p74
    %p76 = scmp.ne.s32.totalorder %s68, %s71
    %p77 = scmp.eq.s32.totalorder %s11, 0
    %p78 = por %p76, %p77
    %p79 = scmp.ne.s32.totalorder %s68, %s71
    %p80 = scmp.eq.s32.totalorder %s16, 1
    %p81 = por %p79, %p80
    %p82 = scmp.ne.s32.totalorder %s71, %s72
    %p83 = scmp.eq.s32.totalorder %s16, 0
    %p84 = por %p82, %p83
    %p85 = scmp.ne.s32.totalorder %s71, %s72
    %p86 = scmp.eq.s32.totalorder %s17, 1
    %p87 = por %p85, %p86
    %p89 = scmp.ne.s32.totalorder %s72, %s88
    %p90 = scmp.eq.s32.totalorder %s17, 0
    %p91 = por %p89, %p90
    %s92 = ssub.s32 %s11, %s18
    %p93 = scmp.eq.s32.totalorder %s92, 0
    %s95 = sadd.s32 %s94, 1
    %s96 = scalar_select %p93, %s94, %s95
    %p99 = pneg %p93
    %p100 = scmp.eq.s32.totalorder %s11, 1
    %p101 = por %p99, %p100
    %p102 = scmp.ne.s32.totalorder %s94, %s97
    %p103 = scmp.eq.s32.totalorder %s11, 0
    %p104 = por %p102, %p103
    %p105 = scmp.ne.s32.totalorder %s94, %s97
    %p106 = scmp.eq.s32.totalorder %s16, 1
    %p107 = por %p105, %p106
    %p108 = scmp.ne.s32.totalorder %s97, %s98
    %p109 = scmp.eq.s32.totalorder %s16, 0
    %p110 = por %p108, %p109
    %p111 = scmp.ne.s32.totalorder %s97, %s98
    %p112 = scmp.eq.s32.totalorder %s17, 1
    %p113 = por %p111, %p112
    %p115 = scmp.ne.s32.totalorder %s98, %s114
    %p116 = scmp.eq.s32.totalorder %s17, 0
    %p117 = por %p115, %p116
    %s118 = ssub.s32 %s11, %s18
    %p119 = scmp.eq.s32.totalorder %s118, 0
    %s121 = sadd.s32 %s120, 1
    %s122 = scalar_select %p119, %s120, %s121
    %p125 = pneg %p119
    %p126 = scmp.eq.s32.totalorder %s11, 1
    %p127 = por %p125, %p126
    %p128 = scmp.ne.s32.totalorder %s120, %s123
    %p129 = scmp.eq.s32.totalorder %s11, 0
    %p130 = por %p128, %p129
    %p131 = scmp.ne.s32.totalorder %s120, %s123
    %p132 = scmp.eq.s32.totalorder %s16, 1
    %p133 = por %p131, %p132
    %p134 = scmp.ne.s32.totalorder %s123, %s124
    %p135 = scmp.eq.s32.totalorder %s16, 0
    %p136 = por %p134, %p135
    %p137 = scmp.ne.s32.totalorder %s123, %s124
    %p138 = scmp.eq.s32.totalorder %s17, 1
    %p139 = por %p137, %p138
    %p141 = scmp.ne.s32.totalorder %s124, %s140
    %p142 = scmp.eq.s32.totalorder %s17, 0
    %p143 = por %p141, %p142
    %p144 = scmp.le.s32.totalorder 1, %s11
    %p145 = scmp.lt.s32.totalorder %s11, 3
    %p146 = pnand %p144, %p145
    %p147 = pneg %p146
    // Predicated region
    $region9: #{bottleneck_forward.3} parent=5 // pred_check
      _
    $region10: #{bottleneck_forward.3} parent=5 // pred_check_branch
      %149 = sbr.rel (%p146) target = $region12
    $region11: #{bottleneck_forward.3} parent=5 // pred_region
      %s150 = ssub.s32 %s11, 1
      // Predicated region
      $region13: #{bottleneck_forward.3} parent=11 // pred_check
        %p151 = pneg %p58
      $region14: #{bottleneck_forward.3} parent=11 // pred_check_branch
        %153 = sbr.rel (%p151) target = $region16
      $region15: #{bottleneck_forward.3} parent=11 // pred_region
        _
      $region16: #{bottleneck_forward.3} parent=11 // pred_fallthru
        _
    $region12: #{bottleneck_forward.3} parent=5 // pred_fallthru
      _
    %p154 = scmp.lt.s32.totalorder %s11, 2
    // Predicated region
    $region17: #{bottleneck_forward.3} parent=5 // pred_check
      %p155 = pneg %p154
    $region18: #{bottleneck_forward.3} parent=5 // pred_check_branch
      %157 = sbr.rel (%p155) target = $region20
    $region19: #{bottleneck_forward.3} parent=5 // pred_region
      // Predicated region
      $region21: #{bottleneck_forward.3} parent=19 // pred_check
        %p158 = pneg %p31
      $region22: #{bottleneck_forward.3} parent=19 // pred_check_branch
        %160 = sbr.rel (%p158) target = $region24
      $region23: #{bottleneck_forward.3} parent=19 // pred_region
        %p161 = scmp.lt.s32.totalorder %s11, 1
        %s162 = scalar_select %p161, %s11, 1
        %s163 = smul.addr %s162, 54
        %s164 = smul.addr %s163, 4
        %s165 = scalar_lea.vmem %s0, %s164
      $region24: #{bottleneck_forward.3} parent=19 // pred_fallthru
        _
    $region20: #{bottleneck_forward.3} parent=5 // pred_fallthru
      _
    %p166 = scmp.le.s32.totalorder 1, %s11
    %p167 = scmp.lt.s32.totalorder %s11, 3
    %p168 = pnand %p166, %p167
    %p169 = pneg %p168
    // Predicated region
    $region25: #{bottleneck_forward.3} parent=5 // pred_check
      _
    $region26: #{bottleneck_forward.3} parent=5 // pred_check_branch
      %171 = sbr.rel (%p168) target = $region28
    $region27: #{bottleneck_forward.3} parent=5 // pred_region
      %s172 = ssub.s32 %s11, 1
      %p173 = scmp.lt.s32.totalorder %s16, 1
      %s174 = scalar_select %p173, %s16, 1
      %s175 = smul.addr %s174, 54
      %s176 = smul.addr %s175, 4
      %s177 = scalar_lea.vmem %s0, %s176
      %p178 = pneg %p37
      %p179 = pneg %p34
      %p180 = pneg %p58
      %p181 = pneg %p55
      %p182 = pneg %p84
      %p183 = pneg %p81
      %p184 = scmp.lt.s32.totalorder %s16, 1
      %s185 = scalar_select %p184, %s16, 1
      %s186 = smul.addr %s185, 32
      %s187 = smul.addr %s186, 4
      %s188 = scalar_lea.vmem %s2, %s187
      %p189 = pneg %p110
      %p190 = pneg %p107
      %p191 = scmp.lt.s32.totalorder %s16, 1
      %s192 = scalar_select %p191, %s16, 1
      %s193 = scalar_lea.vmem %s3, %s192
      %p194 = pneg %p136
      %p195 = pneg %p133
      %p196 = scmp.lt.s32.totalorder %s16, 1
      %s197 = scalar_select %p196, %s16, 1
      %s198 = scalar_lea.vmem %s4, %s197
      %p199 = scmp.lt.s32.totalorder %s16, 1
      %s200 = scalar_select %p199, %s16, 1
      %s201 = smul.addr %s200, 54
      %s202 = smul.addr %s201, 4
      %s203 = scalar_lea.vmem %s0, %s202
      %p204 = scmp.lt.s32.totalorder %s16, 1
      %s205 = scalar_select %p204, %s16, 1
      %s206 = smul.addr %s205, 32
      %s207 = smul.addr %s206, 4
      %s208 = scalar_lea.vmem %s2, %s207
      %p209 = scmp.lt.s32.totalorder %s16, 1
      %s210 = scalar_select %p209, %s16, 1
      %s211 = scalar_lea.vmem %s3, %s210
      %p212 = scmp.lt.s32.totalorder %s16, 1
      %s213 = scalar_select %p212, %s16, 1
      %s214 = scalar_lea.vmem %s4, %s213
      %v216 = vld [vmem:[%s1] sm:$0x3]
      %s217 = scalar_lea.vmem %s1, 2
      %v218 = vld [vmem:[%s217] sm:$0x3]
      %s219 = scalar_lea.vmem %s1, 4
      %v220 = vld [vmem:[%s219] sm:$0x3]
      %s221 = scalar_lea.vmem %s1, 6
      %v222 = vld [vmem:[%s221] sm:$0x3]
      %s223 = scalar_lea.vmem %s1, 8
      %v224 = vld [vmem:[%s223] sm:$0x3]
      %s225 = scalar_lea.vmem %s1, 10
      %v226 = vld [vmem:[%s225] sm:$0x3]
      %s227 = scalar_lea.vmem %s1, 12
      %v228 = vld [vmem:[%s227] sm:$0x3]
      %s229 = scalar_lea.vmem %s1, 14
      %v230 = vld [vmem:[%s229] sm:$0x3]
      %s231 = scalar_lea.vmem %s1, 16
      %v232 = vld [vmem:[%s231] sm:$0x3]
      %v233 = vld [vmem:[%s203] sm:$0xf]
      %v234 = vld [vmem:[%s203 + $0x4] sm:$0xf]
      %v235 = vld [vmem:[%s203 + $0xc] sm:$0xf]
      %v236 = vld [vmem:[%s203 + $0x10] sm:$0xf]
      %v237 = vld [vmem:[%s203 + $0x18] sm:$0xf]
      %v238 = vld [vmem:[%s203 + $0x1c] sm:$0xf]
      %v239 = vld [vmem:[%s203 + $0x24] sm:$0xf]
      %v240 = vld [vmem:[%s203 + $0x28] sm:$0xf]
      %v241 = vld [vmem:[%s203 + $0x30] sm:$0xf]
      %v242 = vld [vmem:[%s203 + $0x34] sm:$0xf]
      %v243 = vld [vmem:[%s203 + $0x3c] sm:$0xf]
      %v244 = vld [vmem:[%s203 + $0x40] sm:$0xf]
      %v245 = vld [vmem:[%s203 + $0x48] sm:$0xf]
      %v246 = vld [vmem:[%s203 + $0x4c] sm:$0xf]
      %v247 = vld [vmem:[%s203 + $0x54] sm:$0xf]
      %v248 = vld [vmem:[%s203 + $0x58] sm:$0xf]
      %v249 = vld [vmem:[%s203 + $0x8] sm:$0x1]
      %v250 = vld [vmem:[%s203 + $0x14] sm:$0x1]
      %v251 = vld [vmem:[%s203 + $0x20] sm:$0x1]
      %v252 = vld [vmem:[%s203 + $0x2c] sm:$0x1]
      %v253 = vld [vmem:[%s203 + $0x38] sm:$0x1]
      %v254 = vld [vmem:[%s203 + $0x44] sm:$0x1]
      %v255 = vld [vmem:[%s203 + $0x50] sm:$0x1]
      %v256 = vld [vmem:[%s203 + $0x5c] sm:$0x1]
      %vm257 = vsmask.f32 3328
      %vm258 = vsmask.f32 7440
      %vm259 = vmor %vm257, %vm258
      %v261 = vshrl.u32 %v233, 16
      %v263 = vrot.slane %v261, 4
      %v264 = vshll.u32 %v233, 16
      %v266 = vrot.slane %v264, 5
      %v267 = vor.u32 %v263, %v266
      %v268 = vrot.slane %v267, 4
      %v270 = vshll.u32 %v234, 16
      %v272 = vrot.slane %v270, 5
      %v273 = vsel %vm259, %v268, %v272
      %v274 = vshrl.u32 %v234, 16
      %v276 = vrot.slane %v274, 4
      %v277 = vor.u32 %v276, %v272
      %v278 = vrot.slane %v277, 4
      %v280 = vshll.u32 %v249, 16
      %v282 = vrot.slane %v280, 5
      %v283 = vsel %vm259, %v278, %v282
      %v285 = vshrl.u32 %v235, 16
      %v287 = vrot.slane %v285, 4
      %v288 = vshll.u32 %v235, 16
      %v290 = vrot.slane %v288, 5
      %v291 = vor.u32 %v287, %v290
      %v292 = vrot.slane %v291, 4
      %v294 = vshll.u32 %v236, 16
      %v296 = vrot.slane %v294, 5
      %v297 = vsel %vm259, %v292, %v296
      %v298 = vshrl.u32 %v236, 16
      %v300 = vrot.slane %v298, 4
      %v301 = vor.u32 %v300, %v296
      %v302 = vrot.slane %v301, 4
      %v304 = vshll.u32 %v250, 16
      %v306 = vrot.slane %v304, 5
      %v307 = vsel %vm259, %v302, %v306
      %v309 = vshrl.u32 %v237, 16
      %v311 = vrot.slane %v309, 4
      %v312 = vshll.u32 %v237, 16
      %v314 = vrot.slane %v312, 5
      %v315 = vor.u32 %v311, %v314
      %v316 = vrot.slane %v315, 4
      %v318 = vshll.u32 %v238, 16
      %v320 = vrot.slane %v318, 5
      %v321 = vsel %vm259, %v316, %v320
      %v322 = vshrl.u32 %v238, 16
      %v324 = vrot.slane %v322, 4
      %v325 = vor.u32 %v324, %v320
      %v326 = vrot.slane %v325, 4
      %v328 = vshll.u32 %v251, 16
      %v330 = vrot.slane %v328, 5
      %v331 = vsel %vm259, %v326, %v330
      %v333 = vshrl.u32 %v239, 16
      %v335 = vrot.slane %v333, 4
      %v336 = vshll.u32 %v239, 16
      %v338 = vrot.slane %v336, 5
      %v339 = vor.u32 %v335, %v338
      %v340 = vrot.slane %v339, 4
      %v342 = vshll.u32 %v240, 16
      %v344 = vrot.slane %v342, 5
      %v345 = vsel %vm259, %v340, %v344
      %v346 = vshrl.u32 %v240, 16
      %v348 = vrot.slane %v346, 4
      %v349 = vor.u32 %v348, %v344
      %v350 = vrot.slane %v349, 4
      %v352 = vshll.u32 %v252, 16
      %v354 = vrot.slane %v352, 5
      %v355 = vsel %vm259, %v350, %v354
      %v357 = vshrl.u32 %v241, 16
      %v359 = vrot.slane %v357, 4
      %v360 = vshll.u32 %v241, 16
      %v362 = vrot.slane %v360, 5
      %v363 = vor.u32 %v359, %v362
      %v364 = vrot.slane %v363, 4
      %v366 = vshll.u32 %v242, 16
      %v368 = vrot.slane %v366, 5
      %v369 = vsel %vm259, %v364, %v368
      %v370 = vshrl.u32 %v242, 16
      %v372 = vrot.slane %v370, 4
      %v373 = vor.u32 %v372, %v368
      %v374 = vrot.slane %v373, 4
      %v376 = vshll.u32 %v253, 16
      %v378 = vrot.slane %v376, 5
      %v379 = vsel %vm259, %v374, %v378
      %v381 = vshrl.u32 %v243, 16
      %v383 = vrot.slane %v381, 4
      %v384 = vshll.u32 %v243, 16
      %v386 = vrot.slane %v384, 5
      %v387 = vor.u32 %v383, %v386
      %v388 = vrot.slane %v387, 4
      %v390 = vshll.u32 %v244, 16
      %v392 = vrot.slane %v390, 5
      %v393 = vsel %vm259, %v388, %v392
      %v394 = vshrl.u32 %v244, 16
      %v396 = vrot.slane %v394, 4
      %v397 = vor.u32 %v396, %v392
      %v398 = vrot.slane %v397, 4
      %v400 = vshll.u32 %v254, 16
      %v402 = vrot.slane %v400, 5
      %v403 = vsel %vm259, %v398, %v402
      %v405 = vshrl.u32 %v245, 16
      %v407 = vrot.slane %v405, 4
      %v408 = vshll.u32 %v245, 16
      %v410 = vrot.slane %v408, 5
      %v411 = vor.u32 %v407, %v410
      %v412 = vrot.slane %v411, 4
      %v414 = vshll.u32 %v246, 16
      %v416 = vrot.slane %v414, 5
      %v417 = vsel %vm259, %v412, %v416
      %v418 = vshrl.u32 %v246, 16
      %v420 = vrot.slane %v418, 4
      %v421 = vor.u32 %v420, %v416
      %v422 = vrot.slane %v421, 4
      %v424 = vshll.u32 %v255, 16
      %v426 = vrot.slane %v424, 5
      %v427 = vsel %vm259, %v422, %v426
      %v429 = vshrl.u32 %v247, 16
      %v431 = vrot.slane %v429, 4
      %v432 = vshll.u32 %v247, 16
      %v434 = vrot.slane %v432, 5
      %v435 = vor.u32 %v431, %v434
      %v436 = vrot.slane %v435, 4
      %v438 = vshll.u32 %v248, 16
      %v440 = vrot.slane %v438, 5
      %v441 = vsel %vm259, %v436, %v440
      %v442 = vshrl.u32 %v248, 16
      %v444 = vrot.slane %v442, 4
      %v445 = vor.u32 %v444, %v440
      %v446 = vrot.slane %v445, 4
      %v448 = vshll.u32 %v256, 16
      %v450 = vrot.slane %v448, 5
      %v451 = vsel %vm259, %v446, %v450
      %v452 = vunpack.c.l.b16 %v273
      %v453 = vunpack.c.l.b16 %v283
      %v454 = vunpack.c.l.b16 %v297
      %v455 = vunpack.c.l.b16 %v307
      %v456 = vunpack.c.l.b16 %v321
      %v457 = vunpack.c.l.b16 %v331
      %v458 = vunpack.c.l.b16 %v345
      %v459 = vunpack.c.l.b16 %v355
      %v460 = vunpack.c.l.b16 %v369
      %v461 = vunpack.c.l.b16 %v379
      %v462 = vunpack.c.l.b16 %v393
      %v463 = vunpack.c.l.b16 %v403
      %v464 = vunpack.c.l.b16 %v417
      %v465 = vunpack.c.l.b16 %v427
      %v466 = vunpack.c.l.b16 %v441
      %v467 = vunpack.c.l.b16 %v451
      %v468 = vpack.c.b16 %v453, %v452
      %v469 = vpack.c.b16 %v455, %v454
      %v470 = vpack.c.b16 %v457, %v456
      %v471 = vpack.c.b16 %v459, %v458
      %v472 = vpack.c.b16 %v461, %v460
      %v473 = vpack.c.b16 %v463, %v462
      %v474 = vpack.c.b16 %v465, %v464
      %v475 = vpack.c.b16 %v467, %v466
      %vm476 = vcmask 31744
      %v478 = vsel %vm476, %v468, 0
      %v481 = vsel %vm476, %v469, 0
      %v484 = vsel %vm476, %v470, 0
      %v487 = vsel %vm476, %v471, 0
      %v490 = vsel %vm476, %v472, 0
      %v493 = vsel %vm476, %v473, 0
      %v496 = vsel %vm476, %v474, 0
      %v499 = vsel %vm476, %v475, 0
      %vm501 = vcmask 1041408
      %v503 = vsel %vm501, %v218, 0
      %505 = vmatprep.subr.bf16.mxu0 0
      %506 = vmatpush1.bf16.msra.mxu0 0
      %507 = vmatprep.subr.bf16.mxu0 0
      %508 = vmatpush1.bf16.msra.mxu0 0
      %509 = vmatprep.subr.bf16.mxu0 0
      %510 = vmatpush1.bf16.msra.mxu0 0
      %511 = vmatprep.subr.bf16.mxu0 0
      %512 = vmatpush1.bf16.msra.mxu0 0
      %513 = vmatprep.subr.bf16.mxu0 0
      %514 = vmatpush1.bf16.msra.mxu0 0
      %515 = vmatprep.subr.bf16.mxu0 0
      %516 = vmatpush1.bf16.msra.mxu0 0
      %517 = vmatprep.subr.bf16.mxu0 0
      %518 = vmatpush1.bf16.msra.mxu0 0
      %519 = vmatprep.subr.bf16.mxu0 0
      %520 = vmatpush1.bf16.msra.mxu0 %v503
      %521 = vmatprep.subr.bf16.mxu0 0
      %522 = vmatpush2.bf16.msra.mxu0 0
      %523 = vmatprep.subr.bf16.mxu0 0
      %524 = vmatpush2.bf16.msra.mxu0 0
      %525 = vmatprep.subr.bf16.mxu0 0
      %526 = vmatpush2.bf16.msra.mxu0 0
      %527 = vmatprep.subr.bf16.mxu0 0
      %528 = vmatpush2.bf16.msra.mxu0 0
      %529 = vmatprep.subr.bf16.mxu0 0
      %530 = vmatpush2.bf16.msra.mxu0 0
      %531 = vmatprep.subr.bf16.mxu0 0
      %532 = vmatpush2.bf16.msra.mxu0 0
      %533 = vmatprep.subr.bf16.mxu0 0
      %534 = vmatpush2.bf16.msra.mxu0 0
      %535 = vmatprep.subr.bf16.mxu0 0
      %536 = vmatpush2.bf16.msra.mxu0 0
      %537 = vmatprep.mubr.bf16.mxu0 0
      %538 = vmatmul.mubr.bf16.gmra.mxu0 %v478
      %v539 = vpop.f32.mrf.mxu0
      %v540 = vadd.f32 0.0, %v539
      %v541 = vpop.f32.mrf.mxu0
      %v542 = vpop.f32.mrf.mxu0
      %v543 = vadd.f32 0.0, %v542
      %v544 = vpop.f32.mrf.mxu0
      %545 = vmatprep.mubr.bf16.mxu0 0
      %546 = vmatmul.mubr.bf16.gmra.mxu0 %v481
      %v547 = vpop.f32.mrf.mxu0
      %v548 = vadd.f32 0.0, %v547
      %v549 = vpop.f32.mrf.mxu0
      %v550 = vpop.f32.mrf.mxu0
      %v551 = vadd.f32 0.0, %v550
      %v552 = vpop.f32.mrf.mxu0
      %553 = vmatprep.mubr.bf16.mxu0 0
      %554 = vmatmul.mubr.bf16.gmra.mxu0 %v484
      %v555 = vpop.f32.mrf.mxu0
      %v556 = vadd.f32 0.0, %v555
      %v557 = vpop.f32.mrf.mxu0
      %v558 = vpop.f32.mrf.mxu0
      %v559 = vadd.f32 0.0, %v558
      %v560 = vpop.f32.mrf.mxu0
      %561 = vmatprep.mubr.bf16.mxu0 0
      %562 = vmatmul.mubr.bf16.gmra.mxu0 %v487
      %v563 = vpop.f32.mrf.mxu0
      %v564 = vadd.f32 0.0, %v563
      %v565 = vpop.f32.mrf.mxu0
      %v566 = vpop.f32.mrf.mxu0
      %v567 = vadd.f32 0.0, %v566
      %v568 = vpop.f32.mrf.mxu0
      %569 = vmatprep.mubr.bf16.mxu0 0
      %570 = vmatmul.mubr.bf16.gmra.mxu0 %v490
      %v571 = vpop.f32.mrf.mxu0
      %v572 = vadd.f32 0.0, %v571
      %v573 = vpop.f32.mrf.mxu0
      %v574 = vpop.f32.mrf.mxu0
      %v575 = vadd.f32 0.0, %v574
      %v576 = vpop.f32.mrf.mxu0
      %577 = vmatprep.mubr.bf16.mxu0 0
      %578 = vmatmul.mubr.bf16.gmra.mxu0 %v493
      %v579 = vpop.f32.mrf.mxu0
      %v580 = vadd.f32 0.0, %v579
      %v581 = vpop.f32.mrf.mxu0
      %v582 = vpop.f32.mrf.mxu0
      %v583 = vadd.f32 0.0, %v582
      %v584 = vpop.f32.mrf.mxu0
      %585 = vmatprep.mubr.bf16.mxu0 0
      %586 = vmatmul.mubr.bf16.gmra.mxu0 %v496
      %v587 = vpop.f32.mrf.mxu0
      %v588 = vadd.f32 0.0, %v587
      %v589 = vpop.f32.mrf.mxu0
      %v590 = vpop.f32.mrf.mxu0
      %v591 = vadd.f32 0.0, %v590
      %v592 = vpop.f32.mrf.mxu0
      %593 = vmatprep.mubr.bf16.mxu0 0
      %594 = vmatmul.mubr.bf16.gmra.mxu0 %v499
      %v595 = vpop.f32.mrf.mxu0
      %v596 = vadd.f32 0.0, %v595
      %v597 = vpop.f32.mrf.mxu0
      %v598 = vpop.f32.mrf.mxu0
      %v599 = vadd.f32 0.0, %v598
      %v600 = vpop.f32.mrf.mxu0
      %601 = vdwg.mxu0
      %v618 = vunpack.c.l.b16 %v233
      %v619 = vunpack.c.l.b16 %v234
      %v620 = vunpack.c.l.b16 %v235
      %v621 = vunpack.c.l.b16 %v236
      %v622 = vunpack.c.l.b16 %v237
      %v623 = vunpack.c.l.b16 %v238
      %v624 = vunpack.c.l.b16 %v239
      %v625 = vunpack.c.l.b16 %v240
      %v626 = vunpack.c.l.b16 %v241
      %v627 = vunpack.c.l.b16 %v242
      %v628 = vunpack.c.l.b16 %v243
      %v629 = vunpack.c.l.b16 %v244
      %v630 = vunpack.c.l.b16 %v245
      %v631 = vunpack.c.l.b16 %v246
      %v632 = vunpack.c.l.b16 %v247
      %v633 = vunpack.c.l.b16 %v248
      %v634 = vpack.c.b16 %v619, %v618
      %v635 = vpack.c.b16 %v621, %v620
      %v636 = vpack.c.b16 %v623, %v622
      %v637 = vpack.c.b16 %v625, %v624
      %v638 = vpack.c.b16 %v627, %v626
      %v639 = vpack.c.b16 %v629, %v628
      %v640 = vpack.c.b16 %v631, %v630
      %v641 = vpack.c.b16 %v633, %v632
      %v643 = vsel %vm476, %v634, 0
      %v646 = vsel %vm476, %v635, 0
      %v649 = vsel %vm476, %v636, 0
      %v652 = vsel %vm476, %v637, 0
      %v655 = vsel %vm476, %v638, 0
      %v658 = vsel %vm476, %v639, 0
      %v661 = vsel %vm476, %v640, 0
      %v664 = vsel %vm476, %v641, 0
      %v667 = vsel %vm501, %v216, 0
      %669 = vmatprep.subr.bf16.mxu0 0
      %670 = vmatpush1.bf16.msra.mxu0 0
      %671 = vmatprep.subr.bf16.mxu0 0
      %672 = vmatpush1.bf16.msra.mxu0 0
      %673 = vmatprep.subr.bf16.mxu0 0
      %674 = vmatpush1.bf16.msra.mxu0 0
      %675 = vmatprep.subr.bf16.mxu0 0
      %676 = vmatpush1.bf16.msra.mxu0 0
      %677 = vmatprep.subr.bf16.mxu0 0
      %678 = vmatpush1.bf16.msra.mxu0 0
      %679 = vmatprep.subr.bf16.mxu0 0
      %680 = vmatpush1.bf16.msra.mxu0 0
      %681 = vmatprep.subr.bf16.mxu0 0
      %682 = vmatpush1.bf16.msra.mxu0 0
      %683 = vmatprep.subr.bf16.mxu0 0
      %684 = vmatpush1.bf16.msra.mxu0 %v667
      %685 = vmatprep.subr.bf16.mxu0 0
      %686 = vmatpush2.bf16.msra.mxu0 0
      %687 = vmatprep.subr.bf16.mxu0 0
      %688 = vmatpush2.bf16.msra.mxu0 0
      %689 = vmatprep.subr.bf16.mxu0 0
      %690 = vmatpush2.bf16.msra.mxu0 0
      %691 = vmatprep.subr.bf16.mxu0 0
      %692 = vmatpush2.bf16.msra.mxu0 0
      %693 = vmatprep.subr.bf16.mxu0 0
      %694 = vmatpush2.bf16.msra.mxu0 0
      %695 = vmatprep.subr.bf16.mxu0 0
      %696 = vmatpush2.bf16.msra.mxu0 0
      %697 = vmatprep.subr.bf16.mxu0 0
      %698 = vmatpush2.bf16.msra.mxu0 0
      %699 = vmatprep.subr.bf16.mxu0 0
      %700 = vmatpush2.bf16.msra.mxu0 0
      %701 = vmatprep.mubr.bf16.mxu0 0
      %702 = vmatmul.mubr.bf16.gmra.mxu0 %v643
      %v703 = vpop.f32.mrf.mxu0
      %v704 = vadd.f32 %v540, %v703
      %v705 = vpop.f32.mrf.mxu0
      %v706 = vpop.f32.mrf.mxu0
      %v707 = vadd.f32 %v543, %v706
      %v708 = vpop.f32.mrf.mxu0
      %709 = vmatprep.mubr.bf16.mxu0 0
      %710 = vmatmul.mubr.bf16.gmra.mxu0 %v646
      %v711 = vpop.f32.mrf.mxu0
      %v712 = vadd.f32 %v548, %v711
      %v713 = vpop.f32.mrf.mxu0
      %v714 = vpop.f32.mrf.mxu0
      %v715 = vadd.f32 %v551, %v714
      %v716 = vpop.f32.mrf.mxu0
      %717 = vmatprep.mubr.bf16.mxu0 0
      %718 = vmatmul.mubr.bf16.gmra.mxu0 %v649
      %v719 = vpop.f32.mrf.mxu0
      %v720 = vadd.f32 %v556, %v719
      %v721 = vpop.f32.mrf.mxu0
      %v722 = vpop.f32.mrf.mxu0
      %v723 = vadd.f32 %v559, %v722
      %v724 = vpop.f32.mrf.mxu0
      %725 = vmatprep.mubr.bf16.mxu0 0
      %726 = vmatmul.mubr.bf16.gmra.mxu0 %v652
      %v727 = vpop.f32.mrf.mxu0
      %v728 = vadd.f32 %v564, %v727
      %v729 = vpop.f32.mrf.mxu0
      %v730 = vpop.f32.mrf.mxu0
      %v731 = vadd.f32 %v567, %v730
      %v732 = vpop.f32.mrf.mxu0
      %733 = vmatprep.mubr.bf16.mxu0 0
      %734 = vmatmul.mubr.bf16.gmra.mxu0 %v655
      %v735 = vpop.f32.mrf.mxu0
      %v736 = vadd.f32 %v572, %v735
      %v737 = vpop.f32.mrf.mxu0
      %v738 = vpop.f32.mrf.mxu0
      %v739 = vadd.f32 %v575, %v738
      %v740 = vpop.f32.mrf.mxu0
      %741 = vmatprep.mubr.bf16.mxu0 0
      %742 = vmatmul.mubr.bf16.gmra.mxu0 %v658
      %v743 = vpop.f32.mrf.mxu0
      %v744 = vadd.f32 %v580, %v743
      %v745 = vpop.f32.mrf.mxu0
      %v746 = vpop.f32.mrf.mxu0
      %v747 = vadd.f32 %v583, %v746
      %v748 = vpop.f32.mrf.mxu0
      %749 = vmatprep.mubr.bf16.mxu0 0
      %750 = vmatmul.mubr.bf16.gmra.mxu0 %v661
      %v751 = vpop.f32.mrf.mxu0
      %v752 = vadd.f32 %v588, %v751
      %v753 = vpop.f32.mrf.mxu0
      %v754 = vpop.f32.mrf.mxu0
      %v755 = vadd.f32 %v591, %v754
      %v756 = vpop.f32.mrf.mxu0
      %757 = vmatprep.mubr.bf16.mxu0 0
      %758 = vmatmul.mubr.bf16.gmra.mxu0 %v664
      %v759 = vpop.f32.mrf.mxu0
      %v760 = vadd.f32 %v596, %v759
      %v761 = vpop.f32.mrf.mxu0
      %v762 = vpop.f32.mrf.mxu0
      %v763 = vadd.f32 %v599, %v762
      %v764 = vpop.f32.mrf.mxu0
      %765 = vdwg.mxu0
      %v766 = vld [vmem:[%s203] sm:$0xe]
      %v767 = vld [vmem:[%s203 + $0xc] sm:$0xe]
      %v768 = vld [vmem:[%s203 + $0x18] sm:$0xe]
      %v769 = vld [vmem:[%s203 + $0x24] sm:$0xe]
      %v770 = vld [vmem:[%s203 + $0x30] sm:$0xe]
      %v771 = vld [vmem:[%s203 + $0x3c] sm:$0xe]
      %v772 = vld [vmem:[%s203 + $0x48] sm:$0xe]
      %v773 = vld [vmem:[%s203 + $0x54] sm:$0xe]
      %vm790 = vcmask 1042432
      %vm791 = vcmask 1046532
      %vm792 = vmor %vm790, %vm791
      %v793 = vrot.slane %v766, 5
      %v794 = vrot.slane %v793, 4
      %v795 = vrot.slane %v234, 5
      %v796 = vsel %vm792, %v794, %v795
      %v797 = vrot.slane %v795, 4
      %v798 = vrot.slane %v249, 5
      %v799 = vsel %vm792, %v797, %v798
      %v800 = vrot.slane %v767, 5
      %v801 = vrot.slane %v800, 4
      %v802 = vrot.slane %v236, 5
      %v803 = vsel %vm792, %v801, %v802
      %v804 = vrot.slane %v802, 4
      %v805 = vrot.slane %v250, 5
      %v806 = vsel %vm792, %v804, %v805
      %v807 = vrot.slane %v768, 5
      %v808 = vrot.slane %v807, 4
      %v809 = vrot.slane %v238, 5
      %v810 = vsel %vm792, %v808, %v809
      %v811 = vrot.slane %v809, 4
      %v812 = vrot.slane %v251, 5
      %v813 = vsel %vm792, %v811, %v812
      %v814 = vrot.slane %v769, 5
      %v815 = vrot.slane %v814, 4
      %v816 = vrot.slane %v240, 5
      %v817 = vsel %vm792, %v815, %v816
      %v818 = vrot.slane %v816, 4
      %v819 = vrot.slane %v252, 5
      %v820 = vsel %vm792, %v818, %v819
      %v821 = vrot.slane %v770, 5
      %v822 = vrot.slane %v821, 4
      %v823 = vrot.slane %v242, 5
      %v824 = vsel %vm792, %v822, %v823
      %v825 = vrot.slane %v823, 4
      %v826 = vrot.slane %v253, 5
      %v827 = vsel %vm792, %v825, %v826
      %v828 = vrot.slane %v771, 5
      %v829 = vrot.slane %v828, 4
      %v830 = vrot.slane %v244, 5
      %v831 = vsel %vm792, %v829, %v830
      %v832 = vrot.slane %v830, 4
      %v833 = vrot.slane %v254, 5
      %v834 = vsel %vm792, %v832, %v833
      %v835 = vrot.slane %v772, 5
      %v836 = vrot.slane %v835, 4
      %v837 = vrot.slane %v246, 5
      %v838 = vsel %vm792, %v836, %v837
      %v839 = vrot.slane %v837, 4
      %v840 = vrot.slane %v255, 5
      %v841 = vsel %vm792, %v839, %v840
      %v842 = vrot.slane %v773, 5
      %v843 = vrot.slane %v842, 4
      %v844 = vrot.slane %v248, 5
      %v845 = vsel %vm792, %v843, %v844
      %v846 = vrot.slane %v844, 4
      %v847 = vrot.slane %v256, 5
      %v848 = vsel %vm792, %v846, %v847
      %v849 = vunpack.c.l.b16 %v796
      %v850 = vunpack.c.l.b16 %v799
      %v851 = vunpack.c.l.b16 %v803
      %v852 = vunpack.c.l.b16 %v806
      %v853 = vunpack.c.l.b16 %v810
      %v854 = vunpack.c.l.b16 %v813
      %v855 = vunpack.c.l.b16 %v817
      %v856 = vunpack.c.l.b16 %v820
      %v857 = vunpack.c.l.b16 %v824
      %v858 = vunpack.c.l.b16 %v827
      %v859 = vunpack.c.l.b16 %v831
      %v860 = vunpack.c.l.b16 %v834
      %v861 = vunpack.c.l.b16 %v838
      %v862 = vunpack.c.l.b16 %v841
      %v863 = vunpack.c.l.b16 %v845
      %v864 = vunpack.c.l.b16 %v848
      %v865 = vpack.c.b16 %v850, %v849
      %v866 = vpack.c.b16 %v852, %v851
      %v867 = vpack.c.b16 %v854, %v853
      %v868 = vpack.c.b16 %v856, %v855
      %v869 = vpack.c.b16 %v858, %v857
      %v870 = vpack.c.b16 %v860, %v859
      %v871 = vpack.c.b16 %v862, %v861
      %v872 = vpack.c.b16 %v864, %v863
      %v874 = vsel %vm476, %v865, 0
      %v877 = vsel %vm476, %v866, 0
      %v880 = vsel %vm476, %v867, 0
      %v883 = vsel %vm476, %v868, 0
      %v886 = vsel %vm476, %v869, 0
      %v889 = vsel %vm476, %v870, 0
      %v892 = vsel %vm476, %v871, 0
      %v895 = vsel %vm476, %v872, 0
      %v898 = vsel %vm501, %v220, 0
      %900 = vmatprep.subr.bf16.mxu0 0
      %901 = vmatpush1.bf16.msra.mxu0 0
      %902 = vmatprep.subr.bf16.mxu0 0
      %903 = vmatpush1.bf16.msra.mxu0 0
      %904 = vmatprep.subr.bf16.mxu0 0
      %905 = vmatpush1.bf16.msra.mxu0 0
      %906 = vmatprep.subr.bf16.mxu0 0
      %907 = vmatpush1.bf16.msra.mxu0 0
      %908 = vmatprep.subr.bf16.mxu0 0
      %909 = vmatpush1.bf16.msra.mxu0 0
      %910 = vmatprep.subr.bf16.mxu0 0
      %911 = vmatpush1.bf16.msra.mxu0 0
      %912 = vmatprep.subr.bf16.mxu0 0
      %913 = vmatpush1.bf16.msra.mxu0 0
      %914 = vmatprep.subr.bf16.mxu0 0
      %915 = vmatpush1.bf16.msra.mxu0 %v898
      %916 = vmatprep.subr.bf16.mxu0 0
      %917 = vmatpush2.bf16.msra.mxu0 0
      %918 = vmatprep.subr.bf16.mxu0 0
      %919 = vmatpush2.bf16.msra.mxu0 0
      %920 = vmatprep.subr.bf16.mxu0 0
      %921 = vmatpush2.bf16.msra.mxu0 0
      %922 = vmatprep.subr.bf16.mxu0 0
      %923 = vmatpush2.bf16.msra.mxu0 0
      %924 = vmatprep.subr.bf16.mxu0 0
      %925 = vmatpush2.bf16.msra.mxu0 0
      %926 = vmatprep.subr.bf16.mxu0 0
      %927 = vmatpush2.bf16.msra.mxu0 0
      %928 = vmatprep.subr.bf16.mxu0 0
      %929 = vmatpush2.bf16.msra.mxu0 0
      %930 = vmatprep.subr.bf16.mxu0 0
      %931 = vmatpush2.bf16.msra.mxu0 0
      %932 = vmatprep.mubr.bf16.mxu0 0
      %933 = vmatmul.mubr.bf16.gmra.mxu0 %v874
      %v934 = vpop.f32.mrf.mxu0
      %v935 = vadd.f32 0.0, %v934
      %v936 = vpop.f32.mrf.mxu0
      %v937 = vpop.f32.mrf.mxu0
      %v938 = vadd.f32 0.0, %v937
      %v939 = vpop.f32.mrf.mxu0
      %940 = vmatprep.mubr.bf16.mxu0 0
      %941 = vmatmul.mubr.bf16.gmra.mxu0 %v877
      %v942 = vpop.f32.mrf.mxu0
      %v943 = vadd.f32 0.0, %v942
      %v944 = vpop.f32.mrf.mxu0
      %v945 = vpop.f32.mrf.mxu0
      %v946 = vadd.f32 0.0, %v945
      %v947 = vpop.f32.mrf.mxu0
      %948 = vmatprep.mubr.bf16.mxu0 0
      %949 = vmatmul.mubr.bf16.gmra.mxu0 %v880
      %v950 = vpop.f32.mrf.mxu0
      %v951 = vadd.f32 0.0, %v950
      %v952 = vpop.f32.mrf.mxu0
      %v953 = vpop.f32.mrf.mxu0
      %v954 = vadd.f32 0.0, %v953
      %v955 = vpop.f32.mrf.mxu0
      %956 = vmatprep.mubr.bf16.mxu0 0
      %957 = vmatmul.mubr.bf16.gmra.mxu0 %v883
      %v958 = vpop.f32.mrf.mxu0
      %v959 = vadd.f32 0.0, %v958
      %v960 = vpop.f32.mrf.mxu0
      %v961 = vpop.f32.mrf.mxu0
      %v962 = vadd.f32 0.0, %v961
      %v963 = vpop.f32.mrf.mxu0
      %964 = vmatprep.mubr.bf16.mxu0 0
      %965 = vmatmul.mubr.bf16.gmra.mxu0 %v886
      %v966 = vpop.f32.mrf.mxu0
      %v967 = vadd.f32 0.0, %v966
      %v968 = vpop.f32.mrf.mxu0
      %v969 = vpop.f32.mrf.mxu0
      %v970 = vadd.f32 0.0, %v969
      %v971 = vpop.f32.mrf.mxu0
      %972 = vmatprep.mubr.bf16.mxu0 0
      %973 = vmatmul.mubr.bf16.gmra.mxu0 %v889
      %v974 = vpop.f32.mrf.mxu0
      %v975 = vadd.f32 0.0, %v974
      %v976 = vpop.f32.mrf.mxu0
      %v977 = vpop.f32.mrf.mxu0
      %v978 = vadd.f32 0.0, %v977
      %v979 = vpop.f32.mrf.mxu0
      %980 = vmatprep.mubr.bf16.mxu0 0
      %981 = vmatmul.mubr.bf16.gmra.mxu0 %v892
      %v982 = vpop.f32.mrf.mxu0
      %v983 = vadd.f32 0.0, %v982
      %v984 = vpop.f32.mrf.mxu0
      %v985 = vpop.f32.mrf.mxu0
      %v986 = vadd.f32 0.0, %v985
      %v987 = vpop.f32.mrf.mxu0
      %988 = vmatprep.mubr.bf16.mxu0 0
      %989 = vmatmul.mubr.bf16.gmra.mxu0 %v895
      %v990 = vpop.f32.mrf.mxu0
      %v991 = vadd.f32 0.0, %v990
      %v992 = vpop.f32.mrf.mxu0
      %v993 = vpop.f32.mrf.mxu0
      %v994 = vadd.f32 0.0, %v993
      %v995 = vpop.f32.mrf.mxu0
      %996 = vdwg.mxu0
      %v997 = vadd.f32 %v704, %v935
      %v998 = vadd.f32 %v707, %v938
      %v999 = vadd.f32 %v712, %v943
      %v1000 = vadd.f32 %v715, %v946
      %v1001 = vadd.f32 %v720, %v951
      %v1002 = vadd.f32 %v723, %v954
      %v1003 = vadd.f32 %v728, %v959
      %v1004 = vadd.f32 %v731, %v962
      %v1005 = vadd.f32 %v736, %v967
      %v1006 = vadd.f32 %v739, %v970
      %v1007 = vadd.f32 %v744, %v975
      %v1008 = vadd.f32 %v747, %v978
      %v1009 = vadd.f32 %v752, %v983
      %v1010 = vadd.f32 %v755, %v986
      %v1011 = vadd.f32 %v760, %v991
      %v1012 = vadd.f32 %v763, %v994
      %s1013 = scalar_lea.vmem %s203, 12
      %v1014 = vld [vmem:[%s1013] sm:$0xf]
      %v1015 = vld [vmem:[%s1013 + $0x4] sm:$0xf]
      %v1016 = vld [vmem:[%s1013 + $0xc] sm:$0xf]
      %v1017 = vld [vmem:[%s1013 + $0x10] sm:$0xf]
      %v1018 = vld [vmem:[%s1013 + $0x18] sm:$0xf]
      %v1019 = vld [vmem:[%s1013 + $0x1c] sm:$0xf]
      %v1020 = vld [vmem:[%s1013 + $0x24] sm:$0xf]
      %v1021 = vld [vmem:[%s1013 + $0x28] sm:$0xf]
      %v1022 = vld [vmem:[%s1013 + $0x30] sm:$0xf]
      %v1023 = vld [vmem:[%s1013 + $0x34] sm:$0xf]
      %v1024 = vld [vmem:[%s1013 + $0x3c] sm:$0xf]
      %v1025 = vld [vmem:[%s1013 + $0x40] sm:$0xf]
      %v1026 = vld [vmem:[%s1013 + $0x48] sm:$0xf]
      %v1027 = vld [vmem:[%s1013 + $0x4c] sm:$0xf]
      %v1028 = vld [vmem:[%s1013 + $0x54] sm:$0xf]
      %v1029 = vld [vmem:[%s1013 + $0x58] sm:$0xf]
      %v1046 = vunpack.c.l.b16 %v1014
      %v1047 = vunpack.c.l.b16 %v1015
      %v1048 = vunpack.c.l.b16 %v1016
      %v1049 = vunpack.c.l.b16 %v1017
      %v1050 = vunpack.c.l.b16 %v1018
      %v1051 = vunpack.c.l.b16 %v1019
      %v1052 = vunpack.c.l.b16 %v1020
      %v1053 = vunpack.c.l.b16 %v1021
      %v1054 = vunpack.c.l.b16 %v1022
      %v1055 = vunpack.c.l.b16 %v1023
      %v1056 = vunpack.c.l.b16 %v1024
      %v1057 = vunpack.c.l.b16 %v1025
      %v1058 = vunpack.c.l.b16 %v1026
      %v1059 = vunpack.c.l.b16 %v1027
      %v1060 = vunpack.c.l.b16 %v1028
      %v1061 = vunpack.c.l.b16 %v1029
      %v1062 = vpack.c.b16 %v1047, %v1046
      %v1063 = vpack.c.b16 %v1049, %v1048
      %v1064 = vpack.c.b16 %v1051, %v1050
      %v1065 = vpack.c.b16 %v1053, %v1052
      %v1066 = vpack.c.b16 %v1055, %v1054
      %v1067 = vpack.c.b16 %v1057, %v1056
      %v1068 = vpack.c.b16 %v1059, %v1058
      %v1069 = vpack.c.b16 %v1061, %v1060
      %v1071 = vsel %vm476, %v1062, 0
      %v1074 = vsel %vm476, %v1063, 0
      %v1077 = vsel %vm476, %v1064, 0
      %v1080 = vsel %vm476, %v1065, 0
      %v1083 = vsel %vm476, %v1066, 0
      %v1086 = vsel %vm476, %v1067, 0
      %v1089 = vsel %vm476, %v1068, 0
      %v1092 = vsel %vm476, %v1069, 0
      %v1095 = vsel %vm501, %v222, 0
      %1097 = vmatprep.subr.bf16.mxu0 0
      %1098 = vmatpush1.bf16.msra.mxu0 0
      %1099 = vmatprep.subr.bf16.mxu0 0
      %1100 = vmatpush1.bf16.msra.mxu0 0
      %1101 = vmatprep.subr.bf16.mxu0 0
      %1102 = vmatpush1.bf16.msra.mxu0 0
      %1103 = vmatprep.subr.bf16.mxu0 0
      %1104 = vmatpush1.bf16.msra.mxu0 0
      %1105 = vmatprep.subr.bf16.mxu0 0
      %1106 = vmatpush1.bf16.msra.mxu0 0
      %1107 = vmatprep.subr.bf16.mxu0 0
      %1108 = vmatpush1.bf16.msra.mxu0 0
      %1109 = vmatprep.subr.bf16.mxu0 0
      %1110 = vmatpush1.bf16.msra.mxu0 0
      %1111 = vmatprep.subr.bf16.mxu0 0
      %1112 = vmatpush1.bf16.msra.mxu0 %v1095
      %1113 = vmatprep.subr.bf16.mxu0 0
      %1114 = vmatpush2.bf16.msra.mxu0 0
      %1115 = vmatprep.subr.bf16.mxu0 0
      %1116 = vmatpush2.bf16.msra.mxu0 0
      %1117 = vmatprep.subr.bf16.mxu0 0
      %1118 = vmatpush2.bf16.msra.mxu0 0
      %1119 = vmatprep.subr.bf16.mxu0 0
      %1120 = vmatpush2.bf16.msra.mxu0 0
      %1121 = vmatprep.subr.bf16.mxu0 0
      %1122 = vmatpush2.bf16.msra.mxu0 0
      %1123 = vmatprep.subr.bf16.mxu0 0
      %1124 = vmatpush2.bf16.msra.mxu0 0
      %1125 = vmatprep.subr.bf16.mxu0 0
      %1126 = vmatpush2.bf16.msra.mxu0 0
      %1127 = vmatprep.subr.bf16.mxu0 0
      %1128 = vmatpush2.bf16.msra.mxu0 0
      %1129 = vmatprep.mubr.bf16.mxu0 0
      %1130 = vmatmul.mubr.bf16.gmra.mxu0 %v1071
      %v1131 = vpop.f32.mrf.mxu0
      %v1132 = vadd.f32 0.0, %v1131
      %v1133 = vpop.f32.mrf.mxu0
      %v1134 = vpop.f32.mrf.mxu0
      %v1135 = vadd.f32 0.0, %v1134
      %v1136 = vpop.f32.mrf.mxu0
      %1137 = vmatprep.mubr.bf16.mxu0 0
      %1138 = vmatmul.mubr.bf16.gmra.mxu0 %v1074
      %v1139 = vpop.f32.mrf.mxu0
      %v1140 = vadd.f32 0.0, %v1139
      %v1141 = vpop.f32.mrf.mxu0
      %v1142 = vpop.f32.mrf.mxu0
      %v1143 = vadd.f32 0.0, %v1142
      %v1144 = vpop.f32.mrf.mxu0
      %1145 = vmatprep.mubr.bf16.mxu0 0
      %1146 = vmatmul.mubr.bf16.gmra.mxu0 %v1077
      %v1147 = vpop.f32.mrf.mxu0
      %v1148 = vadd.f32 0.0, %v1147
      %v1149 = vpop.f32.mrf.mxu0
      %v1150 = vpop.f32.mrf.mxu0
      %v1151 = vadd.f32 0.0, %v1150
      %v1152 = vpop.f32.mrf.mxu0
      %1153 = vmatprep.mubr.bf16.mxu0 0
      %1154 = vmatmul.mubr.bf16.gmra.mxu0 %v1080
      %v1155 = vpop.f32.mrf.mxu0
      %v1156 = vadd.f32 0.0, %v1155
      %v1157 = vpop.f32.mrf.mxu0
      %v1158 = vpop.f32.mrf.mxu0
      %v1159 = vadd.f32 0.0, %v1158
      %v1160 = vpop.f32.mrf.mxu0
      %1161 = vmatprep.mubr.bf16.mxu0 0
      %1162 = vmatmul.mubr.bf16.gmra.mxu0 %v1083
      %v1163 = vpop.f32.mrf.mxu0
      %v1164 = vadd.f32 0.0, %v1163
      %v1165 = vpop.f32.mrf.mxu0
      %v1166 = vpop.f32.mrf.mxu0
      %v1167 = vadd.f32 0.0, %v1166
      %v1168 = vpop.f32.mrf.mxu0
      %1169 = vmatprep.mubr.bf16.mxu0 0
      %1170 = vmatmul.mubr.bf16.gmra.mxu0 %v1086
      %v1171 = vpop.f32.mrf.mxu0
      %v1172 = vadd.f32 0.0, %v1171
      %v1173 = vpop.f32.mrf.mxu0
      %v1174 = vpop.f32.mrf.mxu0
      %v1175 = vadd.f32 0.0, %v1174
      %v1176 = vpop.f32.mrf.mxu0
      %1177 = vmatprep.mubr.bf16.mxu0 0
      %1178 = vmatmul.mubr.bf16.gmra.mxu0 %v1089
      %v1179 = vpop.f32.mrf.mxu0
      %v1180 = vadd.f32 0.0, %v1179
      %v1181 = vpop.f32.mrf.mxu0
      %v1182 = vpop.f32.mrf.mxu0
      %v1183 = vadd.f32 0.0, %v1182
      %v1184 = vpop.f32.mrf.mxu0
      %1185 = vmatprep.mubr.bf16.mxu0 0
      %1186 = vmatmul.mubr.bf16.gmra.mxu0 %v1092
      %v1187 = vpop.f32.mrf.mxu0
      %v1188 = vadd.f32 0.0, %v1187
      %v1189 = vpop.f32.mrf.mxu0
      %v1190 = vpop.f32.mrf.mxu0
      %v1191 = vadd.f32 0.0, %v1190
      %v1192 = vpop.f32.mrf.mxu0
      %1193 = vdwg.mxu0
      %v1194 = vadd.f32 %v997, %v1132
      %v1195 = vadd.f32 %v998, %v1135
      %v1196 = vadd.f32 %v999, %v1140
      %v1197 = vadd.f32 %v1000, %v1143
      %v1198 = vadd.f32 %v1001, %v1148
      %v1199 = vadd.f32 %v1002, %v1151
      %v1200 = vadd.f32 %v1003, %v1156
      %v1201 = vadd.f32 %v1004, %v1159
      %v1202 = vadd.f32 %v1005, %v1164
      %v1203 = vadd.f32 %v1006, %v1167
      %v1204 = vadd.f32 %v1007, %v1172
      %v1205 = vadd.f32 %v1008, %v1175
      %v1206 = vadd.f32 %v1009, %v1180
      %v1207 = vadd.f32 %v1010, %v1183
      %v1208 = vadd.f32 %v1011, %v1188
      %v1209 = vadd.f32 %v1012, %v1191
      %v1210 = vld [vmem:[%s1013] sm:$0xf]
      %v1211 = vld [vmem:[%s1013 + $0x4] sm:$0xf]
      %v1212 = vld [vmem:[%s1013 + $0x8] sm:$0x1]
      %v1213 = vld [vmem:[%s1013 + $0xc] sm:$0xf]
      %v1214 = vld [vmem:[%s1013 + $0x10] sm:$0xf]
      %v1215 = vld [vmem:[%s1013 + $0x14] sm:$0x1]
      %v1216 = vld [vmem:[%s1013 + $0x18] sm:$0xf]
      %v1217 = vld [vmem:[%s1013 + $0x1c] sm:$0xf]
      %v1218 = vld [vmem:[%s1013 + $0x20] sm:$0x1]
      %v1219 = vld [vmem:[%s1013 + $0x24] sm:$0xf]
      %v1220 = vld [vmem:[%s1013 + $0x28] sm:$0xf]
      %v1221 = vld [vmem:[%s1013 + $0x2c] sm:$0x1]
      %v1222 = vld [vmem:[%s1013 + $0x30] sm:$0xf]
      %v1223 = vld [vmem:[%s1013 + $0x34] sm:$0xf]
      %v1224 = vld [vmem:[%s1013 + $0x38] sm:$0x1]
      %v1225 = vld [vmem:[%s1013 + $0x3c] sm:$0xf]
      %v1226 = vld [vmem:[%s1013 + $0x40] sm:$0xf]
      %v1227 = vld [vmem:[%s1013 + $0x44] sm:$0x1]
      %v1228 = vld [vmem:[%s1013 + $0x48] sm:$0xf]
      %v1229 = vld [vmem:[%s1013 + $0x4c] sm:$0xf]
      %v1230 = vld [vmem:[%s1013 + $0x50] sm:$0x1]
      %v1231 = vld [vmem:[%s1013 + $0x54] sm:$0xf]
      %v1232 = vld [vmem:[%s1013 + $0x58] sm:$0xf]
      %v1233 = vld [vmem:[%s1013 + $0x5c] sm:$0x1]
      %v1235 = vshrl.u32 %v1210, 16
      %v1237 = vrot.slane %v1235, 4
      %v1238 = vshll.u32 %v1210, 16
      %v1240 = vrot.slane %v1238, 5
      %v1241 = vor.u32 %v1237, %v1240
      %v1242 = vrot.slane %v1241, 4
      %v1244 = vshll.u32 %v1211, 16
      %v1246 = vrot.slane %v1244, 5
      %v1247 = vsel %vm259, %v1242, %v1246
      %v1248 = vshrl.u32 %v1211, 16
      %v1250 = vrot.slane %v1248, 4
      %v1251 = vor.u32 %v1250, %v1246
      %v1252 = vrot.slane %v1251, 4
      %v1254 = vshll.u32 %v1212, 16
      %v1256 = vrot.slane %v1254, 5
      %v1257 = vsel %vm259, %v1252, %v1256
      %v1259 = vshrl.u32 %v1213, 16
      %v1261 = vrot.slane %v1259, 4
      %v1262 = vshll.u32 %v1213, 16
      %v1264 = vrot.slane %v1262, 5
      %v1265 = vor.u32 %v1261, %v1264
      %v1266 = vrot.slane %v1265, 4
      %v1268 = vshll.u32 %v1214, 16
      %v1270 = vrot.slane %v1268, 5
      %v1271 = vsel %vm259, %v1266, %v1270
      %v1272 = vshrl.u32 %v1214, 16
      %v1274 = vrot.slane %v1272, 4
      %v1275 = vor.u32 %v1274, %v1270
      %v1276 = vrot.slane %v1275, 4
      %v1278 = vshll.u32 %v1215, 16
      %v1280 = vrot.slane %v1278, 5
      %v1281 = vsel %vm259, %v1276, %v1280
      %v1283 = vshrl.u32 %v1216, 16
      %v1285 = vrot.slane %v1283, 4
      %v1286 = vshll.u32 %v1216, 16
      %v1288 = vrot.slane %v1286, 5
      %v1289 = vor.u32 %v1285, %v1288
      %v1290 = vrot.slane %v1289, 4
      %v1292 = vshll.u32 %v1217, 16
      %v1294 = vrot.slane %v1292, 5
      %v1295 = vsel %vm259, %v1290, %v1294
      %v1296 = vshrl.u32 %v1217, 16
      %v1298 = vrot.slane %v1296, 4
      %v1299 = vor.u32 %v1298, %v1294
      %v1300 = vrot.slane %v1299, 4
      %v1302 = vshll.u32 %v1218, 16
      %v1304 = vrot.slane %v1302, 5
      %v1305 = vsel %vm259, %v1300, %v1304
      %v1307 = vshrl.u32 %v1219, 16
      %v1309 = vrot.slane %v1307, 4
      %v1310 = vshll.u32 %v1219, 16
      %v1312 = vrot.slane %v1310, 5
      %v1313 = vor.u32 %v1309, %v1312
      %v1314 = vrot.slane %v1313, 4
      %v1316 = vshll.u32 %v1220, 16
      %v1318 = vrot.slane %v1316, 5
      %v1319 = vsel %vm259, %v1314, %v1318
      %v1320 = vshrl.u32 %v1220, 16
      %v1322 = vrot.slane %v1320, 4
      %v1323 = vor.u32 %v1322, %v1318
      %v1324 = vrot.slane %v1323, 4
      %v1326 = vshll.u32 %v1221, 16
      %v1328 = vrot.slane %v1326, 5
      %v1329 = vsel %vm259, %v1324, %v1328
      %v1331 = vshrl.u32 %v1222, 16
      %v1333 = vrot.slane %v1331, 4
      %v1334 = vshll.u32 %v1222, 16
      %v1336 = vrot.slane %v1334, 5
      %v1337 = vor.u32 %v1333, %v1336
      %v1338 = vrot.slane %v1337, 4
      %v1340 = vshll.u32 %v1223, 16
      %v1342 = vrot.slane %v1340, 5
      %v1343 = vsel %vm259, %v1338, %v1342
      %v1344 = vshrl.u32 %v1223, 16
      %v1346 = vrot.slane %v1344, 4
      %v1347 = vor.u32 %v1346, %v1342
      %v1348 = vrot.slane %v1347, 4
      %v1350 = vshll.u32 %v1224, 16
      %v1352 = vrot.slane %v1350, 5
      %v1353 = vsel %vm259, %v1348, %v1352
      %v1355 = vshrl.u32 %v1225, 16
      %v1357 = vrot.slane %v1355, 4
      %v1358 = vshll.u32 %v1225, 16
      %v1360 = vrot.slane %v1358, 5
      %v1361 = vor.u32 %v1357, %v1360
      %v1362 = vrot.slane %v1361, 4
      %v1364 = vshll.u32 %v1226, 16
      %v1366 = vrot.slane %v1364, 5
      %v1367 = vsel %vm259, %v1362, %v1366
      %v1368 = vshrl.u32 %v1226, 16
      %v1370 = vrot.slane %v1368, 4
      %v1371 = vor.u32 %v1370, %v1366
      %v1372 = vrot.slane %v1371, 4
      %v1374 = vshll.u32 %v1227, 16
      %v1376 = vrot.slane %v1374, 5
      %v1377 = vsel %vm259, %v1372, %v1376
      %v1379 = vshrl.u32 %v1228, 16
      %v1381 = vrot.slane %v1379, 4
      %v1382 = vshll.u32 %v1228, 16
      %v1384 = vrot.slane %v1382, 5
      %v1385 = vor.u32 %v1381, %v1384
      %v1386 = vrot.slane %v1385, 4
      %v1388 = vshll.u32 %v1229, 16
      %v1390 = vrot.slane %v1388, 5
      %v1391 = vsel %vm259, %v1386, %v1390
      %v1392 = vshrl.u32 %v1229, 16
      %v1394 = vrot.slane %v1392, 4
      %v1395 = vor.u32 %v1394, %v1390
      %v1396 = vrot.slane %v1395, 4
      %v1398 = vshll.u32 %v1230, 16
      %v1400 = vrot.slane %v1398, 5
      %v1401 = vsel %vm259, %v1396, %v1400
      %v1403 = vshrl.u32 %v1231, 16
      %v1405 = vrot.slane %v1403, 4
      %v1406 = vshll.u32 %v1231, 16
      %v1408 = vrot.slane %v1406, 5
      %v1409 = vor.u32 %v1405, %v1408
      %v1410 = vrot.slane %v1409, 4
      %v1412 = vshll.u32 %v1232, 16
      %v1414 = vrot.slane %v1412, 5
      %v1415 = vsel %vm259, %v1410, %v1414
      %v1416 = vshrl.u32 %v1232, 16
      %v1418 = vrot.slane %v1416, 4
      %v1419 = vor.u32 %v1418, %v1414
      %v1420 = vrot.slane %v1419, 4
      %v1422 = vshll.u32 %v1233, 16
      %v1424 = vrot.slane %v1422, 5
      %v1425 = vsel %vm259, %v1420, %v1424
      %v1426 = vunpack.c.l.b16 %v1247
      %v1427 = vunpack.c.l.b16 %v1257
      %v1428 = vunpack.c.l.b16 %v1271
      %v1429 = vunpack.c.l.b16 %v1281
      %v1430 = vunpack.c.l.b16 %v1295
      %v1431 = vunpack.c.l.b16 %v1305
      %v1432 = vunpack.c.l.b16 %v1319
      %v1433 = vunpack.c.l.b16 %v1329
      %v1434 = vunpack.c.l.b16 %v1343
      %v1435 = vunpack.c.l.b16 %v1353
      %v1436 = vunpack.c.l.b16 %v1367
      %v1437 = vunpack.c.l.b16 %v1377
      %v1438 = vunpack.c.l.b16 %v1391
      %v1439 = vunpack.c.l.b16 %v1401
      %v1440 = vunpack.c.l.b16 %v1415
      %v1441 = vunpack.c.l.b16 %v1425
      %v1442 = vpack.c.b16 %v1427, %v1426
      %v1443 = vpack.c.b16 %v1429, %v1428
      %v1444 = vpack.c.b16 %v1431, %v1430
      %v1445 = vpack.c.b16 %v1433, %v1432
      %v1446 = vpack.c.b16 %v1435, %v1434
      %v1447 = vpack.c.b16 %v1437, %v1436
      %v1448 = vpack.c.b16 %v1439, %v1438
      %v1449 = vpack.c.b16 %v1441, %v1440
      %v1451 = vsel %vm476, %v1442, 0
      %v1454 = vsel %vm476, %v1443, 0
      %v1457 = vsel %vm476, %v1444, 0
      %v1460 = vsel %vm476, %v1445, 0
      %v1463 = vsel %vm476, %v1446, 0
      %v1466 = vsel %vm476, %v1447, 0
      %v1469 = vsel %vm476, %v1448, 0
      %v1472 = vsel %vm476, %v1449, 0
      %v1475 = vsel %vm501, %v224, 0
      %1477 = vmatprep.subr.bf16.mxu0 0
      %1478 = vmatpush1.bf16.msra.mxu0 0
      %1479 = vmatprep.subr.bf16.mxu0 0
      %1480 = vmatpush1.bf16.msra.mxu0 0
      %1481 = vmatprep.subr.bf16.mxu0 0
      %1482 = vmatpush1.bf16.msra.mxu0 0
      %1483 = vmatprep.subr.bf16.mxu0 0
      %1484 = vmatpush1.bf16.msra.mxu0 0
      %1485 = vmatprep.subr.bf16.mxu0 0
      %1486 = vmatpush1.bf16.msra.mxu0 0
      %1487 = vmatprep.subr.bf16.mxu0 0
      %1488 = vmatpush1.bf16.msra.mxu0 0
      %1489 = vmatprep.subr.bf16.mxu0 0
      %1490 = vmatpush1.bf16.msra.mxu0 0
      %1491 = vmatprep.subr.bf16.mxu0 0
      %1492 = vmatpush1.bf16.msra.mxu0 %v1475
      %1493 = vmatprep.subr.bf16.mxu0 0
      %1494 = vmatpush2.bf16.msra.mxu0 0
      %1495 = vmatprep.subr.bf16.mxu0 0
      %1496 = vmatpush2.bf16.msra.mxu0 0
      %1497 = vmatprep.subr.bf16.mxu0 0
      %1498 = vmatpush2.bf16.msra.mxu0 0
      %1499 = vmatprep.subr.bf16.mxu0 0
      %1500 = vmatpush2.bf16.msra.mxu0 0
      %1501 = vmatprep.subr.bf16.mxu0 0
      %1502 = vmatpush2.bf16.msra.mxu0 0
      %1503 = vmatprep.subr.bf16.mxu0 0
      %1504 = vmatpush2.bf16.msra.mxu0 0
      %1505 = vmatprep.subr.bf16.mxu0 0
      %1506 = vmatpush2.bf16.msra.mxu0 0
      %1507 = vmatprep.subr.bf16.mxu0 0
      %1508 = vmatpush2.bf16.msra.mxu0 0
      %1509 = vmatprep.mubr.bf16.mxu0 0
      %1510 = vmatmul.mubr.bf16.gmra.mxu0 %v1451
      %v1511 = vpop.f32.mrf.mxu0
      %v1512 = vadd.f32 0.0, %v1511
      %v1513 = vpop.f32.mrf.mxu0
      %v1514 = vpop.f32.mrf.mxu0
      %v1515 = vadd.f32 0.0, %v1514
      %v1516 = vpop.f32.mrf.mxu0
      %1517 = vmatprep.mubr.bf16.mxu0 0
      %1518 = vmatmul.mubr.bf16.gmra.mxu0 %v1454
      %v1519 = vpop.f32.mrf.mxu0
      %v1520 = vadd.f32 0.0, %v1519
      %v1521 = vpop.f32.mrf.mxu0
      %v1522 = vpop.f32.mrf.mxu0
      %v1523 = vadd.f32 0.0, %v1522
      %v1524 = vpop.f32.mrf.mxu0
      %1525 = vmatprep.mubr.bf16.mxu0 0
      %1526 = vmatmul.mubr.bf16.gmra.mxu0 %v1457
      %v1527 = vpop.f32.mrf.mxu0
      %v1528 = vadd.f32 0.0, %v1527
      %v1529 = vpop.f32.mrf.mxu0
      %v1530 = vpop.f32.mrf.mxu0
      %v1531 = vadd.f32 0.0, %v1530
      %v1532 = vpop.f32.mrf.mxu0
      %1533 = vmatprep.mubr.bf16.mxu0 0
      %1534 = vmatmul.mubr.bf16.gmra.mxu0 %v1460
      %v1535 = vpop.f32.mrf.mxu0
      %v1536 = vadd.f32 0.0, %v1535
      %v1537 = vpop.f32.mrf.mxu0
      %v1538 = vpop.f32.mrf.mxu0
      %v1539 = vadd.f32 0.0, %v1538
      %v1540 = vpop.f32.mrf.mxu0
      %1541 = vmatprep.mubr.bf16.mxu0 0
      %1542 = vmatmul.mubr.bf16.gmra.mxu0 %v1463
      %v1543 = vpop.f32.mrf.mxu0
      %v1544 = vadd.f32 0.0, %v1543
      %v1545 = vpop.f32.mrf.mxu0
      %v1546 = vpop.f32.mrf.mxu0
      %v1547 = vadd.f32 0.0, %v1546
      %v1548 = vpop.f32.mrf.mxu0
      %1549 = vmatprep.mubr.bf16.mxu0 0
      %1550 = vmatmul.mubr.bf16.gmra.mxu0 %v1466
      %v1551 = vpop.f32.mrf.mxu0
      %v1552 = vadd.f32 0.0, %v1551
      %v1553 = vpop.f32.mrf.mxu0
      %v1554 = vpop.f32.mrf.mxu0
      %v1555 = vadd.f32 0.0, %v1554
      %v1556 = vpop.f32.mrf.mxu0
      %1557 = vmatprep.mubr.bf16.mxu0 0
      %1558 = vmatmul.mubr.bf16.gmra.mxu0 %v1469
      %v1559 = vpop.f32.mrf.mxu0
      %v1560 = vadd.f32 0.0, %v1559
      %v1561 = vpop.f32.mrf.mxu0
      %v1562 = vpop.f32.mrf.mxu0
      %v1563 = vadd.f32 0.0, %v1562
      %v1564 = vpop.f32.mrf.mxu0
      %1565 = vmatprep.mubr.bf16.mxu0 0
      %1566 = vmatmul.mubr.bf16.gmra.mxu0 %v1472
      %v1567 = vpop.f32.mrf.mxu0
      %v1568 = vadd.f32 0.0, %v1567
      %v1569 = vpop.f32.mrf.mxu0
      %v1570 = vpop.f32.mrf.mxu0
      %v1571 = vadd.f32 0.0, %v1570
      %v1572 = vpop.f32.mrf.mxu0
      %1573 = vdwg.mxu0
      %v1574 = vadd.f32 %v1194, %v1512
      %v1575 = vadd.f32 %v1195, %v1515
      %v1576 = vadd.f32 %v1196, %v1520
      %v1577 = vadd.f32 %v1197, %v1523
      %v1578 = vadd.f32 %v1198, %v1528
      %v1579 = vadd.f32 %v1199, %v1531
      %v1580 = vadd.f32 %v1200, %v1536
      %v1581 = vadd.f32 %v1201, %v1539
      %v1582 = vadd.f32 %v1202, %v1544
      %v1583 = vadd.f32 %v1203, %v1547
      %v1584 = vadd.f32 %v1204, %v1552
      %v1585 = vadd.f32 %v1205, %v1555
      %v1586 = vadd.f32 %v1206, %v1560
      %v1587 = vadd.f32 %v1207, %v1563
      %v1588 = vadd.f32 %v1208, %v1568
      %v1589 = vadd.f32 %v1209, %v1571
      %v1590 = vld [vmem:[%s1013] sm:$0xe]
      %v1591 = vld [vmem:[%s1013 + $0xc] sm:$0xe]
      %v1592 = vld [vmem:[%s1013 + $0x18] sm:$0xe]
      %v1593 = vld [vmem:[%s1013 + $0x24] sm:$0xe]
      %v1594 = vld [vmem:[%s1013 + $0x30] sm:$0xe]
      %v1595 = vld [vmem:[%s1013 + $0x3c] sm:$0xe]
      %v1596 = vld [vmem:[%s1013 + $0x48] sm:$0xe]
      %v1597 = vld [vmem:[%s1013 + $0x54] sm:$0xe]
      %v1622 = vrot.slane %v1590, 5
      %v1623 = vrot.slane %v1622, 4
      %v1624 = vrot.slane %v1211, 5
      %v1625 = vsel %vm792, %v1623, %v1624
      %v1626 = vrot.slane %v1624, 4
      %v1627 = vrot.slane %v1212, 5
      %v1628 = vsel %vm792, %v1626, %v1627
      %v1629 = vrot.slane %v1591, 5
      %v1630 = vrot.slane %v1629, 4
      %v1631 = vrot.slane %v1214, 5
      %v1632 = vsel %vm792, %v1630, %v1631
      %v1633 = vrot.slane %v1631, 4
      %v1634 = vrot.slane %v1215, 5
      %v1635 = vsel %vm792, %v1633, %v1634
      %v1636 = vrot.slane %v1592, 5
      %v1637 = vrot.slane %v1636, 4
      %v1638 = vrot.slane %v1217, 5
      %v1639 = vsel %vm792, %v1637, %v1638
      %v1640 = vrot.slane %v1638, 4
      %v1641 = vrot.slane %v1218, 5
      %v1642 = vsel %vm792, %v1640, %v1641
      %v1643 = vrot.slane %v1593, 5
      %v1644 = vrot.slane %v1643, 4
      %v1645 = vrot.slane %v1220, 5
      %v1646 = vsel %vm792, %v1644, %v1645
      %v1647 = vrot.slane %v1645, 4
      %v1648 = vrot.slane %v1221, 5
      %v1649 = vsel %vm792, %v1647, %v1648
      %v1650 = vrot.slane %v1594, 5
      %v1651 = vrot.slane %v1650, 4
      %v1652 = vrot.slane %v1223, 5
      %v1653 = vsel %vm792, %v1651, %v1652
      %v1654 = vrot.slane %v1652, 4
      %v1655 = vrot.slane %v1224, 5
      %v1656 = vsel %vm792, %v1654, %v1655
      %v1657 = vrot.slane %v1595, 5
      %v1658 = vrot.slane %v1657, 4
      %v1659 = vrot.slane %v1226, 5
      %v1660 = vsel %vm792, %v1658, %v1659
      %v1661 = vrot.slane %v1659, 4
      %v1662 = vrot.slane %v1227, 5
      %v1663 = vsel %vm792, %v1661, %v1662
      %v1664 = vrot.slane %v1596, 5
      %v1665 = vrot.slane %v1664, 4
      %v1666 = vrot.slane %v1229, 5
      %v1667 = vsel %vm792, %v1665, %v1666
      %v1668 = vrot.slane %v1666, 4
      %v1669 = vrot.slane %v1230, 5
      %v1670 = vsel %vm792, %v1668, %v1669
      %v1671 = vrot.slane %v1597, 5
      %v1672 = vrot.slane %v1671, 4
      %v1673 = vrot.slane %v1232, 5
      %v1674 = vsel %vm792, %v1672, %v1673
      %v1675 = vrot.slane %v1673, 4
      %v1676 = vrot.slane %v1233, 5
      %v1677 = vsel %vm792, %v1675, %v1676
      %v1678 = vunpack.c.l.b16 %v1625
      %v1679 = vunpack.c.l.b16 %v1628
      %v1680 = vunpack.c.l.b16 %v1632
      %v1681 = vunpack.c.l.b16 %v1635
      %v1682 = vunpack.c.l.b16 %v1639
      %v1683 = vunpack.c.l.b16 %v1642
      %v1684 = vunpack.c.l.b16 %v1646
      %v1685 = vunpack.c.l.b16 %v1649
      %v1686 = vunpack.c.l.b16 %v1653
      %v1687 = vunpack.c.l.b16 %v1656
      %v1688 = vunpack.c.l.b16 %v1660
      %v1689 = vunpack.c.l.b16 %v1663
      %v1690 = vunpack.c.l.b16 %v1667
      %v1691 = vunpack.c.l.b16 %v1670
      %v1692 = vunpack.c.l.b16 %v1674
      %v1693 = vunpack.c.l.b16 %v1677
      %v1694 = vpack.c.b16 %v1679, %v1678
      %v1695 = vpack.c.b16 %v1681, %v1680
      %v1696 = vpack.c.b16 %v1683, %v1682
      %v1697 = vpack.c.b16 %v1685, %v1684
      %v1698 = vpack.c.b16 %v1687, %v1686
      %v1699 = vpack.c.b16 %v1689, %v1688
      %v1700 = vpack.c.b16 %v1691, %v1690
      %v1701 = vpack.c.b16 %v1693, %v1692
      %v1703 = vsel %vm476, %v1694, 0
      %v1706 = vsel %vm476, %v1695, 0
      %v1709 = vsel %vm476, %v1696, 0
      %v1712 = vsel %vm476, %v1697, 0
      %v1715 = vsel %vm476, %v1698, 0
      %v1718 = vsel %vm476, %v1699, 0
      %v1721 = vsel %vm476, %v1700, 0
      %v1724 = vsel %vm476, %v1701, 0
      %v1727 = vsel %vm501, %v226, 0
      %1729 = vmatprep.subr.bf16.mxu0 0
      %1730 = vmatpush1.bf16.msra.mxu0 0
      %1731 = vmatprep.subr.bf16.mxu0 0
      %1732 = vmatpush1.bf16.msra.mxu0 0
      %1733 = vmatprep.subr.bf16.mxu0 0
      %1734 = vmatpush1.bf16.msra.mxu0 0
      %1735 = vmatprep.subr.bf16.mxu0 0
      %1736 = vmatpush1.bf16.msra.mxu0 0
      %1737 = vmatprep.subr.bf16.mxu0 0
      %1738 = vmatpush1.bf16.msra.mxu0 0
      %1739 = vmatprep.subr.bf16.mxu0 0
      %1740 = vmatpush1.bf16.msra.mxu0 0
      %1741 = vmatprep.subr.bf16.mxu0 0
      %1742 = vmatpush1.bf16.msra.mxu0 0
      %1743 = vmatprep.subr.bf16.mxu0 0
      %1744 = vmatpush1.bf16.msra.mxu0 %v1727
      %1745 = vmatprep.subr.bf16.mxu0 0
      %1746 = vmatpush2.bf16.msra.mxu0 0
      %1747 = vmatprep.subr.bf16.mxu0 0
      %1748 = vmatpush2.bf16.msra.mxu0 0
      %1749 = vmatprep.subr.bf16.mxu0 0
      %1750 = vmatpush2.bf16.msra.mxu0 0
      %1751 = vmatprep.subr.bf16.mxu0 0
      %1752 = vmatpush2.bf16.msra.mxu0 0
      %1753 = vmatprep.subr.bf16.mxu0 0
      %1754 = vmatpush2.bf16.msra.mxu0 0
      %1755 = vmatprep.subr.bf16.mxu0 0
      %1756 = vmatpush2.bf16.msra.mxu0 0
      %1757 = vmatprep.subr.bf16.mxu0 0
      %1758 = vmatpush2.bf16.msra.mxu0 0
      %1759 = vmatprep.subr.bf16.mxu0 0
      %1760 = vmatpush2.bf16.msra.mxu0 0
      %1761 = vmatprep.mubr.bf16.mxu0 0
      %1762 = vmatmul.mubr.bf16.gmra.mxu0 %v1703
      %v1763 = vpop.f32.mrf.mxu0
      %v1764 = vadd.f32 0.0, %v1763
      %v1765 = vpop.f32.mrf.mxu0
      %v1766 = vpop.f32.mrf.mxu0
      %v1767 = vadd.f32 0.0, %v1766
      %v1768 = vpop.f32.mrf.mxu0
      %1769 = vmatprep.mubr.bf16.mxu0 0
      %1770 = vmatmul.mubr.bf16.gmra.mxu0 %v1706
      %v1771 = vpop.f32.mrf.mxu0
      %v1772 = vadd.f32 0.0, %v1771
      %v1773 = vpop.f32.mrf.mxu0
      %v1774 = vpop.f32.mrf.mxu0
      %v1775 = vadd.f32 0.0, %v1774
      %v1776 = vpop.f32.mrf.mxu0
      %1777 = vmatprep.mubr.bf16.mxu0 0
      %1778 = vmatmul.mubr.bf16.gmra.mxu0 %v1709
      %v1779 = vpop.f32.mrf.mxu0
      %v1780 = vadd.f32 0.0, %v1779
      %v1781 = vpop.f32.mrf.mxu0
      %v1782 = vpop.f32.mrf.mxu0
      %v1783 = vadd.f32 0.0, %v1782
      %v1784 = vpop.f32.mrf.mxu0
      %1785 = vmatprep.mubr.bf16.mxu0 0
      %1786 = vmatmul.mubr.bf16.gmra.mxu0 %v1712
      %v1787 = vpop.f32.mrf.mxu0
      %v1788 = vadd.f32 0.0, %v1787
      %v1789 = vpop.f32.mrf.mxu0
      %v1790 = vpop.f32.mrf.mxu0
      %v1791 = vadd.f32 0.0, %v1790
      %v1792 = vpop.f32.mrf.mxu0
      %1793 = vmatprep.mubr.bf16.mxu0 0
      %1794 = vmatmul.mubr.bf16.gmra.mxu0 %v1715
      %v1795 = vpop.f32.mrf.mxu0
      %v1796 = vadd.f32 0.0, %v1795
      %v1797 = vpop.f32.mrf.mxu0
      %v1798 = vpop.f32.mrf.mxu0
      %v1799 = vadd.f32 0.0, %v1798
      %v1800 = vpop.f32.mrf.mxu0
      %1801 = vmatprep.mubr.bf16.mxu0 0
      %1802 = vmatmul.mubr.bf16.gmra.mxu0 %v1718
      %v1803 = vpop.f32.mrf.mxu0
      %v1804 = vadd.f32 0.0, %v1803
      %v1805 = vpop.f32.mrf.mxu0
      %v1806 = vpop.f32.mrf.mxu0
      %v1807 = vadd.f32 0.0, %v1806
      %v1808 = vpop.f32.mrf.mxu0
      %1809 = vmatprep.mubr.bf16.mxu0 0
      %1810 = vmatmul.mubr.bf16.gmra.mxu0 %v1721
      %v1811 = vpop.f32.mrf.mxu0
      %v1812 = vadd.f32 0.0, %v1811
      %v1813 = vpop.f32.mrf.mxu0
      %v1814 = vpop.f32.mrf.mxu0
      %v1815 = vadd.f32 0.0, %v1814
      %v1816 = vpop.f32.mrf.mxu0
      %1817 = vmatprep.mubr.bf16.mxu0 0
      %1818 = vmatmul.mubr.bf16.gmra.mxu0 %v1724
      %v1819 = vpop.f32.mrf.mxu0
      %v1820 = vadd.f32 0.0, %v1819
      %v1821 = vpop.f32.mrf.mxu0
      %v1822 = vpop.f32.mrf.mxu0
      %v1823 = vadd.f32 0.0, %v1822
      %v1824 = vpop.f32.mrf.mxu0
      %1825 = vdwg.mxu0
      %v1826 = vadd.f32 %v1574, %v1764
      %v1827 = vadd.f32 %v1575, %v1767
      %v1828 = vadd.f32 %v1576, %v1772
      %v1829 = vadd.f32 %v1577, %v1775
      %v1830 = vadd.f32 %v1578, %v1780
      %v1831 = vadd.f32 %v1579, %v1783
      %v1832 = vadd.f32 %v1580, %v1788
      %v1833 = vadd.f32 %v1581, %v1791
      %v1834 = vadd.f32 %v1582, %v1796
      %v1835 = vadd.f32 %v1583, %v1799
      %v1836 = vadd.f32 %v1584, %v1804
      %v1837 = vadd.f32 %v1585, %v1807
      %v1838 = vadd.f32 %v1586, %v1812
      %v1839 = vadd.f32 %v1587, %v1815
      %v1840 = vadd.f32 %v1588, %v1820
      %v1841 = vadd.f32 %v1589, %v1823
      %s1842 = scalar_lea.vmem %s203, 24
      %v1843 = vld [vmem:[%s1842] sm:$0xf]
      %v1844 = vld [vmem:[%s1842 + $0x4] sm:$0xf]
      %v1845 = vld [vmem:[%s1842 + $0xc] sm:$0xf]
      %v1846 = vld [vmem:[%s1842 + $0x10] sm:$0xf]
      %v1847 = vld [vmem:[%s1842 + $0x18] sm:$0xf]
      %v1848 = vld [vmem:[%s1842 + $0x1c] sm:$0xf]
      %v1849 = vld [vmem:[%s1842 + $0x24] sm:$0xf]
      %v1850 = vld [vmem:[%s1842 + $0x28] sm:$0xf]
      %v1851 = vld [vmem:[%s1842 + $0x30] sm:$0xf]
      %v1852 = vld [vmem:[%s1842 + $0x34] sm:$0xf]
      %v1853 = vld [vmem:[%s1842 + $0x3c] sm:$0xf]
      %v1854 = vld [vmem:[%s1842 + $0x40] sm:$0xf]
      %v1855 = vld [vmem:[%s1842 + $0x48] sm:$0xf]
      %v1856 = vld [vmem:[%s1842 + $0x4c] sm:$0xf]
      %v1857 = vld [vmem:[%s1842 + $0x54] sm:$0xf]
      %v1858 = vld [vmem:[%s1842 + $0x58] sm:$0xf]
      %v1875 = vunpack.c.l.b16 %v1843
      %v1876 = vunpack.c.l.b16 %v1844
      %v1877 = vunpack.c.l.b16 %v1845
      %v1878 = vunpack.c.l.b16 %v1846
      %v1879 = vunpack.c.l.b16 %v1847
      %v1880 = vunpack.c.l.b16 %v1848
      %v1881 = vunpack.c.l.b16 %v1849
      %v1882 = vunpack.c.l.b16 %v1850
      %v1883 = vunpack.c.l.b16 %v1851
      %v1884 = vunpack.c.l.b16 %v1852
      %v1885 = vunpack.c.l.b16 %v1853
      %v1886 = vunpack.c.l.b16 %v1854
      %v1887 = vunpack.c.l.b16 %v1855
      %v1888 = vunpack.c.l.b16 %v1856
      %v1889 = vunpack.c.l.b16 %v1857
      %v1890 = vunpack.c.l.b16 %v1858
      %v1891 = vpack.c.b16 %v1876, %v1875
      %v1892 = vpack.c.b16 %v1878, %v1877
      %v1893 = vpack.c.b16 %v1880, %v1879
      %v1894 = vpack.c.b16 %v1882, %v1881
      %v1895 = vpack.c.b16 %v1884, %v1883
      %v1896 = vpack.c.b16 %v1886, %v1885
      %v1897 = vpack.c.b16 %v1888, %v1887
      %v1898 = vpack.c.b16 %v1890, %v1889
      %v1900 = vsel %vm476, %v1891, 0
      %v1903 = vsel %vm476, %v1892, 0
      %v1906 = vsel %vm476, %v1893, 0
      %v1909 = vsel %vm476, %v1894, 0
      %v1912 = vsel %vm476, %v1895, 0
      %v1915 = vsel %vm476, %v1896, 0
      %v1918 = vsel %vm476, %v1897, 0
      %v1921 = vsel %vm476, %v1898, 0
      %v1924 = vsel %vm501, %v228, 0
      %1926 = vmatprep.subr.bf16.mxu0 0
      %1927 = vmatpush1.bf16.msra.mxu0 0
      %1928 = vmatprep.subr.bf16.mxu0 0
      %1929 = vmatpush1.bf16.msra.mxu0 0
      %1930 = vmatprep.subr.bf16.mxu0 0
      %1931 = vmatpush1.bf16.msra.mxu0 0
      %1932 = vmatprep.subr.bf16.mxu0 0
      %1933 = vmatpush1.bf16.msra.mxu0 0
      %1934 = vmatprep.subr.bf16.mxu0 0
      %1935 = vmatpush1.bf16.msra.mxu0 0
      %1936 = vmatprep.subr.bf16.mxu0 0
      %1937 = vmatpush1.bf16.msra.mxu0 0
      %1938 = vmatprep.subr.bf16.mxu0 0
      %1939 = vmatpush1.bf16.msra.mxu0 0
      %1940 = vmatprep.subr.bf16.mxu0 0
      %1941 = vmatpush1.bf16.msra.mxu0 %v1924
      %1942 = vmatprep.subr.bf16.mxu0 0
      %1943 = vmatpush2.bf16.msra.mxu0 0
      %1944 = vmatprep.subr.bf16.mxu0 0
      %1945 = vmatpush2.bf16.msra.mxu0 0
      %1946 = vmatprep.subr.bf16.mxu0 0
      %1947 = vmatpush2.bf16.msra.mxu0 0
      %1948 = vmatprep.subr.bf16.mxu0 0
      %1949 = vmatpush2.bf16.msra.mxu0 0
      %1950 = vmatprep.subr.bf16.mxu0 0
      %1951 = vmatpush2.bf16.msra.mxu0 0
      %1952 = vmatprep.subr.bf16.mxu0 0
      %1953 = vmatpush2.bf16.msra.mxu0 0
      %1954 = vmatprep.subr.bf16.mxu0 0
      %1955 = vmatpush2.bf16.msra.mxu0 0
      %1956 = vmatprep.subr.bf16.mxu0 0
      %1957 = vmatpush2.bf16.msra.mxu0 0
      %1958 = vmatprep.mubr.bf16.mxu0 0
      %1959 = vmatmul.mubr.bf16.gmra.mxu0 %v1900
      %v1960 = vpop.f32.mrf.mxu0
      %v1961 = vadd.f32 0.0, %v1960
      %v1962 = vpop.f32.mrf.mxu0
      %v1963 = vpop.f32.mrf.mxu0
      %v1964 = vadd.f32 0.0, %v1963
      %v1965 = vpop.f32.mrf.mxu0
      %1966 = vmatprep.mubr.bf16.mxu0 0
      %1967 = vmatmul.mubr.bf16.gmra.mxu0 %v1903
      %v1968 = vpop.f32.mrf.mxu0
      %v1969 = vadd.f32 0.0, %v1968
      %v1970 = vpop.f32.mrf.mxu0
      %v1971 = vpop.f32.mrf.mxu0
      %v1972 = vadd.f32 0.0, %v1971
      %v1973 = vpop.f32.mrf.mxu0
      %1974 = vmatprep.mubr.bf16.mxu0 0
      %1975 = vmatmul.mubr.bf16.gmra.mxu0 %v1906
      %v1976 = vpop.f32.mrf.mxu0
      %v1977 = vadd.f32 0.0, %v1976
      %v1978 = vpop.f32.mrf.mxu0
      %v1979 = vpop.f32.mrf.mxu0
      %v1980 = vadd.f32 0.0, %v1979
      %v1981 = vpop.f32.mrf.mxu0
      %1982 = vmatprep.mubr.bf16.mxu0 0
      %1983 = vmatmul.mubr.bf16.gmra.mxu0 %v1909
      %v1984 = vpop.f32.mrf.mxu0
      %v1985 = vadd.f32 0.0, %v1984
      %v1986 = vpop.f32.mrf.mxu0
      %v1987 = vpop.f32.mrf.mxu0
      %v1988 = vadd.f32 0.0, %v1987
      %v1989 = vpop.f32.mrf.mxu0
      %1990 = vmatprep.mubr.bf16.mxu0 0
      %1991 = vmatmul.mubr.bf16.gmra.mxu0 %v1912
      %v1992 = vpop.f32.mrf.mxu0
      %v1993 = vadd.f32 0.0, %v1992
      %v1994 = vpop.f32.mrf.mxu0
      %v1995 = vpop.f32.mrf.mxu0
      %v1996 = vadd.f32 0.0, %v1995
      %v1997 = vpop.f32.mrf.mxu0
      %1998 = vmatprep.mubr.bf16.mxu0 0
      %1999 = vmatmul.mubr.bf16.gmra.mxu0 %v1915
      %v2000 = vpop.f32.mrf.mxu0
      %v2001 = vadd.f32 0.0, %v2000
      %v2002 = vpop.f32.mrf.mxu0
      %v2003 = vpop.f32.mrf.mxu0
      %v2004 = vadd.f32 0.0, %v2003
      %v2005 = vpop.f32.mrf.mxu0
      %2006 = vmatprep.mubr.bf16.mxu0 0
      %2007 = vmatmul.mubr.bf16.gmra.mxu0 %v1918
      %v2008 = vpop.f32.mrf.mxu0
      %v2009 = vadd.f32 0.0, %v2008
      %v2010 = vpop.f32.mrf.mxu0
      %v2011 = vpop.f32.mrf.mxu0
      %v2012 = vadd.f32 0.0, %v2011
      %v2013 = vpop.f32.mrf.mxu0
      %2014 = vmatprep.mubr.bf16.mxu0 0
      %2015 = vmatmul.mubr.bf16.gmra.mxu0 %v1921
      %v2016 = vpop.f32.mrf.mxu0
      %v2017 = vadd.f32 0.0, %v2016
      %v2018 = vpop.f32.mrf.mxu0
      %v2019 = vpop.f32.mrf.mxu0
      %v2020 = vadd.f32 0.0, %v2019
      %v2021 = vpop.f32.mrf.mxu0
      %2022 = vdwg.mxu0
      %v2023 = vadd.f32 %v1826, %v1961
      %v2024 = vadd.f32 %v1827, %v1964
      %v2025 = vadd.f32 %v1828, %v1969
      %v2026 = vadd.f32 %v1829, %v1972
      %v2027 = vadd.f32 %v1830, %v1977
      %v2028 = vadd.f32 %v1831, %v1980
      %v2029 = vadd.f32 %v1832, %v1985
      %v2030 = vadd.f32 %v1833, %v1988
      %v2031 = vadd.f32 %v1834, %v1993
      %v2032 = vadd.f32 %v1835, %v1996
      %v2033 = vadd.f32 %v1836, %v2001
      %v2034 = vadd.f32 %v1837, %v2004
      %v2035 = vadd.f32 %v1838, %v2009
      %v2036 = vadd.f32 %v1839, %v2012
      %v2037 = vadd.f32 %v1840, %v2017
      %v2038 = vadd.f32 %v1841, %v2020
      %v2039 = vld [vmem:[%s1842] sm:$0xf]
      %v2040 = vld [vmem:[%s1842 + $0x4] sm:$0xf]
      %v2041 = vld [vmem:[%s1842 + $0x8] sm:$0x1]
      %v2042 = vld [vmem:[%s1842 + $0xc] sm:$0xf]
      %v2043 = vld [vmem:[%s1842 + $0x10] sm:$0xf]
      %v2044 = vld [vmem:[%s1842 + $0x14] sm:$0x1]
      %v2045 = vld [vmem:[%s1842 + $0x18] sm:$0xf]
      %v2046 = vld [vmem:[%s1842 + $0x1c] sm:$0xf]
      %v2047 = vld [vmem:[%s1842 + $0x20] sm:$0x1]
      %v2048 = vld [vmem:[%s1842 + $0x24] sm:$0xf]
      %v2049 = vld [vmem:[%s1842 + $0x28] sm:$0xf]
      %v2050 = vld [vmem:[%s1842 + $0x2c] sm:$0x1]
      %v2051 = vld [vmem:[%s1842 + $0x30] sm:$0xf]
      %v2052 = vld [vmem:[%s1842 + $0x34] sm:$0xf]
      %v2053 = vld [vmem:[%s1842 + $0x38] sm:$0x1]
      %v2054 = vld [vmem:[%s1842 + $0x3c] sm:$0xf]
      %v2055 = vld [vmem:[%s1842 + $0x40] sm:$0xf]
      %v2056 = vld [vmem:[%s1842 + $0x44] sm:$0x1]
      %v2057 = vld [vmem:[%s1842 + $0x48] sm:$0xf]
      %v2058 = vld [vmem:[%s1842 + $0x4c] sm:$0xf]
      %v2059 = vld [vmem:[%s1842 + $0x50] sm:$0x1]
      %v2060 = vld [vmem:[%s1842 + $0x54] sm:$0xf]
      %v2061 = vld [vmem:[%s1842 + $0x58] sm:$0xf]
      %v2062 = vld [vmem:[%s1842 + $0x5c] sm:$0x1]
      %v2064 = vshrl.u32 %v2039, 16
      %v2066 = vrot.slane %v2064, 4
      %v2067 = vshll.u32 %v2039, 16
      %v2069 = vrot.slane %v2067, 5
      %v2070 = vor.u32 %v2066, %v2069
      %v2071 = vrot.slane %v2070, 4
      %v2073 = vshll.u32 %v2040, 16
      %v2075 = vrot.slane %v2073, 5
      %v2076 = vsel %vm259, %v2071, %v2075
      %v2077 = vshrl.u32 %v2040, 16
      %v2079 = vrot.slane %v2077, 4
      %v2080 = vor.u32 %v2079, %v2075
      %v2081 = vrot.slane %v2080, 4
      %v2083 = vshll.u32 %v2041, 16
      %v2085 = vrot.slane %v2083, 5
      %v2086 = vsel %vm259, %v2081, %v2085
      %v2088 = vshrl.u32 %v2042, 16
      %v2090 = vrot.slane %v2088, 4
      %v2091 = vshll.u32 %v2042, 16
      %v2093 = vrot.slane %v2091, 5
      %v2094 = vor.u32 %v2090, %v2093
      %v2095 = vrot.slane %v2094, 4
      %v2097 = vshll.u32 %v2043, 16
      %v2099 = vrot.slane %v2097, 5
      %v2100 = vsel %vm259, %v2095, %v2099
      %v2101 = vshrl.u32 %v2043, 16
      %v2103 = vrot.slane %v2101, 4
      %v2104 = vor.u32 %v2103, %v2099
      %v2105 = vrot.slane %v2104, 4
      %v2107 = vshll.u32 %v2044, 16
      %v2109 = vrot.slane %v2107, 5
      %v2110 = vsel %vm259, %v2105, %v2109
      %v2112 = vshrl.u32 %v2045, 16
      %v2114 = vrot.slane %v2112, 4
      %v2115 = vshll.u32 %v2045, 16
      %v2117 = vrot.slane %v2115, 5
      %v2118 = vor.u32 %v2114, %v2117
      %v2119 = vrot.slane %v2118, 4
      %v2121 = vshll.u32 %v2046, 16
      %v2123 = vrot.slane %v2121, 5
      %v2124 = vsel %vm259, %v2119, %v2123
      %v2125 = vshrl.u32 %v2046, 16
      %v2127 = vrot.slane %v2125, 4
      %v2128 = vor.u32 %v2127, %v2123
      %v2129 = vrot.slane %v2128, 4
      %v2131 = vshll.u32 %v2047, 16
      %v2133 = vrot.slane %v2131, 5
      %v2134 = vsel %vm259, %v2129, %v2133
      %v2136 = vshrl.u32 %v2048, 16
      %v2138 = vrot.slane %v2136, 4
      %v2139 = vshll.u32 %v2048, 16
      %v2141 = vrot.slane %v2139, 5
      %v2142 = vor.u32 %v2138, %v2141
      %v2143 = vrot.slane %v2142, 4
      %v2145 = vshll.u32 %v2049, 16
      %v2147 = vrot.slane %v2145, 5
      %v2148 = vsel %vm259, %v2143, %v2147
      %v2149 = vshrl.u32 %v2049, 16
      %v2151 = vrot.slane %v2149, 4
      %v2152 = vor.u32 %v2151, %v2147
      %v2153 = vrot.slane %v2152, 4
      %v2155 = vshll.u32 %v2050, 16
      %v2157 = vrot.slane %v2155, 5
      %v2158 = vsel %vm259, %v2153, %v2157
      %v2160 = vshrl.u32 %v2051, 16
      %v2162 = vrot.slane %v2160, 4
      %v2163 = vshll.u32 %v2051, 16
      %v2165 = vrot.slane %v2163, 5
      %v2166 = vor.u32 %v2162, %v2165
      %v2167 = vrot.slane %v2166, 4
      %v2169 = vshll.u32 %v2052, 16
      %v2171 = vrot.slane %v2169, 5
      %v2172 = vsel %vm259, %v2167, %v2171
      %v2173 = vshrl.u32 %v2052, 16
      %v2175 = vrot.slane %v2173, 4
      %v2176 = vor.u32 %v2175, %v2171
      %v2177 = vrot.slane %v2176, 4
      %v2179 = vshll.u32 %v2053, 16
      %v2181 = vrot.slane %v2179, 5
      %v2182 = vsel %vm259, %v2177, %v2181
      %v2184 = vshrl.u32 %v2054, 16
      %v2186 = vrot.slane %v2184, 4
      %v2187 = vshll.u32 %v2054, 16
      %v2189 = vrot.slane %v2187, 5
      %v2190 = vor.u32 %v2186, %v2189
      %v2191 = vrot.slane %v2190, 4
      %v2193 = vshll.u32 %v2055, 16
      %v2195 = vrot.slane %v2193, 5
      %v2196 = vsel %vm259, %v2191, %v2195
      %v2197 = vshrl.u32 %v2055, 16
      %v2199 = vrot.slane %v2197, 4
      %v2200 = vor.u32 %v2199, %v2195
      %v2201 = vrot.slane %v2200, 4
      %v2203 = vshll.u32 %v2056, 16
      %v2205 = vrot.slane %v2203, 5
      %v2206 = vsel %vm259, %v2201, %v2205
      %v2208 = vshrl.u32 %v2057, 16
      %v2210 = vrot.slane %v2208, 4
      %v2211 = vshll.u32 %v2057, 16
      %v2213 = vrot.slane %v2211, 5
      %v2214 = vor.u32 %v2210, %v2213
      %v2215 = vrot.slane %v2214, 4
      %v2217 = vshll.u32 %v2058, 16
      %v2219 = vrot.slane %v2217, 5
      %v2220 = vsel %vm259, %v2215, %v2219
      %v2221 = vshrl.u32 %v2058, 16
      %v2223 = vrot.slane %v2221, 4
      %v2224 = vor.u32 %v2223, %v2219
      %v2225 = vrot.slane %v2224, 4
      %v2227 = vshll.u32 %v2059, 16
      %v2229 = vrot.slane %v2227, 5
      %v2230 = vsel %vm259, %v2225, %v2229
      %v2232 = vshrl.u32 %v2060, 16
      %v2234 = vrot.slane %v2232, 4
      %v2235 = vshll.u32 %v2060, 16
      %v2237 = vrot.slane %v2235, 5
      %v2238 = vor.u32 %v2234, %v2237
      %v2239 = vrot.slane %v2238, 4
      %v2241 = vshll.u32 %v2061, 16
      %v2243 = vrot.slane %v2241, 5
      %v2244 = vsel %vm259, %v2239, %v2243
      %v2245 = vshrl.u32 %v2061, 16
      %v2247 = vrot.slane %v2245, 4
      %v2248 = vor.u32 %v2247, %v2243
      %v2249 = vrot.slane %v2248, 4
      %v2251 = vshll.u32 %v2062, 16
      %v2253 = vrot.slane %v2251, 5
      %v2254 = vsel %vm259, %v2249, %v2253
      %v2255 = vunpack.c.l.b16 %v2076
      %v2256 = vunpack.c.l.b16 %v2086
      %v2257 = vunpack.c.l.b16 %v2100
      %v2258 = vunpack.c.l.b16 %v2110
      %v2259 = vunpack.c.l.b16 %v2124
      %v2260 = vunpack.c.l.b16 %v2134
      %v2261 = vunpack.c.l.b16 %v2148
      %v2262 = vunpack.c.l.b16 %v2158
      %v2263 = vunpack.c.l.b16 %v2172
      %v2264 = vunpack.c.l.b16 %v2182
      %v2265 = vunpack.c.l.b16 %v2196
      %v2266 = vunpack.c.l.b16 %v2206
      %v2267 = vunpack.c.l.b16 %v2220
      %v2268 = vunpack.c.l.b16 %v2230
      %v2269 = vunpack.c.l.b16 %v2244
      %v2270 = vunpack.c.l.b16 %v2254
      %v2271 = vpack.c.b16 %v2256, %v2255
      %v2272 = vpack.c.b16 %v2258, %v2257
      %v2273 = vpack.c.b16 %v2260, %v2259
      %v2274 = vpack.c.b16 %v2262, %v2261
      %v2275 = vpack.c.b16 %v2264, %v2263
      %v2276 = vpack.c.b16 %v2266, %v2265
      %v2277 = vpack.c.b16 %v2268, %v2267
      %v2278 = vpack.c.b16 %v2270, %v2269
      %v2280 = vsel %vm476, %v2271, 0
      %v2283 = vsel %vm476, %v2272, 0
      %v2286 = vsel %vm476, %v2273, 0
      %v2289 = vsel %vm476, %v2274, 0
      %v2292 = vsel %vm476, %v2275, 0
      %v2295 = vsel %vm476, %v2276, 0
      %v2298 = vsel %vm476, %v2277, 0
      %v2301 = vsel %vm476, %v2278, 0
      %v2304 = vsel %vm501, %v230, 0
      %2306 = vmatprep.subr.bf16.mxu0 0
      %2307 = vmatpush1.bf16.msra.mxu0 0
      %2308 = vmatprep.subr.bf16.mxu0 0
      %2309 = vmatpush1.bf16.msra.mxu0 0
      %2310 = vmatprep.subr.bf16.mxu0 0
      %2311 = vmatpush1.bf16.msra.mxu0 0
      %2312 = vmatprep.subr.bf16.mxu0 0
      %2313 = vmatpush1.bf16.msra.mxu0 0
      %2314 = vmatprep.subr.bf16.mxu0 0
      %2315 = vmatpush1.bf16.msra.mxu0 0
      %2316 = vmatprep.subr.bf16.mxu0 0
      %2317 = vmatpush1.bf16.msra.mxu0 0
      %2318 = vmatprep.subr.bf16.mxu0 0
      %2319 = vmatpush1.bf16.msra.mxu0 0
      %2320 = vmatprep.subr.bf16.mxu0 0
      %2321 = vmatpush1.bf16.msra.mxu0 %v2304
      %2322 = vmatprep.subr.bf16.mxu0 0
      %2323 = vmatpush2.bf16.msra.mxu0 0
      %2324 = vmatprep.subr.bf16.mxu0 0
      %2325 = vmatpush2.bf16.msra.mxu0 0
      %2326 = vmatprep.subr.bf16.mxu0 0
      %2327 = vmatpush2.bf16.msra.mxu0 0
      %2328 = vmatprep.subr.bf16.mxu0 0
      %2329 = vmatpush2.bf16.msra.mxu0 0
      %2330 = vmatprep.subr.bf16.mxu0 0
      %2331 = vmatpush2.bf16.msra.mxu0 0
      %2332 = vmatprep.subr.bf16.mxu0 0
      %2333 = vmatpush2.bf16.msra.mxu0 0
      %2334 = vmatprep.subr.bf16.mxu0 0
      %2335 = vmatpush2.bf16.msra.mxu0 0
      %2336 = vmatprep.subr.bf16.mxu0 0
      %2337 = vmatpush2.bf16.msra.mxu0 0
      %2338 = vmatprep.mubr.bf16.mxu0 0
      %2339 = vmatmul.mubr.bf16.gmra.mxu0 %v2280
      %v2340 = vpop.f32.mrf.mxu0
      %v2341 = vadd.f32 0.0, %v2340
      %v2342 = vpop.f32.mrf.mxu0
      %v2343 = vpop.f32.mrf.mxu0
      %v2344 = vadd.f32 0.0, %v2343
      %v2345 = vpop.f32.mrf.mxu0
      %2346 = vmatprep.mubr.bf16.mxu0 0
      %2347 = vmatmul.mubr.bf16.gmra.mxu0 %v2283
      %v2348 = vpop.f32.mrf.mxu0
      %v2349 = vadd.f32 0.0, %v2348
      %v2350 = vpop.f32.mrf.mxu0
      %v2351 = vpop.f32.mrf.mxu0
      %v2352 = vadd.f32 0.0, %v2351
      %v2353 = vpop.f32.mrf.mxu0
      %2354 = vmatprep.mubr.bf16.mxu0 0
      %2355 = vmatmul.mubr.bf16.gmra.mxu0 %v2286
      %v2356 = vpop.f32.mrf.mxu0
      %v2357 = vadd.f32 0.0, %v2356
      %v2358 = vpop.f32.mrf.mxu0
      %v2359 = vpop.f32.mrf.mxu0
      %v2360 = vadd.f32 0.0, %v2359
      %v2361 = vpop.f32.mrf.mxu0
      %2362 = vmatprep.mubr.bf16.mxu0 0
      %2363 = vmatmul.mubr.bf16.gmra.mxu0 %v2289
      %v2364 = vpop.f32.mrf.mxu0
      %v2365 = vadd.f32 0.0, %v2364
      %v2366 = vpop.f32.mrf.mxu0
      %v2367 = vpop.f32.mrf.mxu0
      %v2368 = vadd.f32 0.0, %v2367
      %v2369 = vpop.f32.mrf.mxu0
      %2370 = vmatprep.mubr.bf16.mxu0 0
      %2371 = vmatmul.mubr.bf16.gmra.mxu0 %v2292
      %v2372 = vpop.f32.mrf.mxu0
      %v2373 = vadd.f32 0.0, %v2372
      %v2374 = vpop.f32.mrf.mxu0
      %v2375 = vpop.f32.mrf.mxu0
      %v2376 = vadd.f32 0.0, %v2375
      %v2377 = vpop.f32.mrf.mxu0
      %2378 = vmatprep.mubr.bf16.mxu0 0
      %2379 = vmatmul.mubr.bf16.gmra.mxu0 %v2295
      %v2380 = vpop.f32.mrf.mxu0
      %v2381 = vadd.f32 0.0, %v2380
      %v2382 = vpop.f32.mrf.mxu0
      %v2383 = vpop.f32.mrf.mxu0
      %v2384 = vadd.f32 0.0, %v2383
      %v2385 = vpop.f32.mrf.mxu0
      %2386 = vmatprep.mubr.bf16.mxu0 0
      %2387 = vmatmul.mubr.bf16.gmra.mxu0 %v2298
      %v2388 = vpop.f32.mrf.mxu0
      %v2389 = vadd.f32 0.0, %v2388
      %v2390 = vpop.f32.mrf.mxu0
      %v2391 = vpop.f32.mrf.mxu0
      %v2392 = vadd.f32 0.0, %v2391
      %v2393 = vpop.f32.mrf.mxu0
      %2394 = vmatprep.mubr.bf16.mxu0 0
      %2395 = vmatmul.mubr.bf16.gmra.mxu0 %v2301
      %v2396 = vpop.f32.mrf.mxu0
      %v2397 = vadd.f32 0.0, %v2396
      %v2398 = vpop.f32.mrf.mxu0
      %v2399 = vpop.f32.mrf.mxu0
      %v2400 = vadd.f32 0.0, %v2399
      %v2401 = vpop.f32.mrf.mxu0
      %2402 = vdwg.mxu0
      %v2403 = vadd.f32 %v2023, %v2341
      %v2404 = vadd.f32 %v2024, %v2344
      %v2405 = vadd.f32 %v2025, %v2349
      %v2406 = vadd.f32 %v2026, %v2352
      %v2407 = vadd.f32 %v2027, %v2357
      %v2408 = vadd.f32 %v2028, %v2360
      %v2409 = vadd.f32 %v2029, %v2365
      %v2410 = vadd.f32 %v2030, %v2368
      %v2411 = vadd.f32 %v2031, %v2373
      %v2412 = vadd.f32 %v2032, %v2376
      %v2413 = vadd.f32 %v2033, %v2381
      %v2414 = vadd.f32 %v2034, %v2384
      %v2415 = vadd.f32 %v2035, %v2389
      %v2416 = vadd.f32 %v2036, %v2392
      %v2417 = vadd.f32 %v2037, %v2397
      %v2418 = vadd.f32 %v2038, %v2400
      %v2419 = vld [vmem:[%s1842] sm:$0xe]
      %v2420 = vld [vmem:[%s1842 + $0xc] sm:$0xe]
      %v2421 = vld [vmem:[%s1842 + $0x18] sm:$0xe]
      %v2422 = vld [vmem:[%s1842 + $0x24] sm:$0xe]
      %v2423 = vld [vmem:[%s1842 + $0x30] sm:$0xe]
      %v2424 = vld [vmem:[%s1842 + $0x3c] sm:$0xe]
      %v2425 = vld [vmem:[%s1842 + $0x48] sm:$0xe]
      %v2426 = vld [vmem:[%s1842 + $0x54] sm:$0xe]
      %v2451 = vrot.slane %v2419, 5
      %v2452 = vrot.slane %v2451, 4
      %v2453 = vrot.slane %v2040, 5
      %v2454 = vsel %vm792, %v2452, %v2453
      %v2455 = vrot.slane %v2453, 4
      %v2456 = vrot.slane %v2041, 5
      %v2457 = vsel %vm792, %v2455, %v2456
      %v2458 = vrot.slane %v2420, 5
      %v2459 = vrot.slane %v2458, 4
      %v2460 = vrot.slane %v2043, 5
      %v2461 = vsel %vm792, %v2459, %v2460
      %v2462 = vrot.slane %v2460, 4
      %v2463 = vrot.slane %v2044, 5
      %v2464 = vsel %vm792, %v2462, %v2463
      %v2465 = vrot.slane %v2421, 5
      %v2466 = vrot.slane %v2465, 4
      %v2467 = vrot.slane %v2046, 5
      %v2468 = vsel %vm792, %v2466, %v2467
      %v2469 = vrot.slane %v2467, 4
      %v2470 = vrot.slane %v2047, 5
      %v2471 = vsel %vm792, %v2469, %v2470
      %v2472 = vrot.slane %v2422, 5
      %v2473 = vrot.slane %v2472, 4
      %v2474 = vrot.slane %v2049, 5
      %v2475 = vsel %vm792, %v2473, %v2474
      %v2476 = vrot.slane %v2474, 4
      %v2477 = vrot.slane %v2050, 5
      %v2478 = vsel %vm792, %v2476, %v2477
      %v2479 = vrot.slane %v2423, 5
      %v2480 = vrot.slane %v2479, 4
      %v2481 = vrot.slane %v2052, 5
      %v2482 = vsel %vm792, %v2480, %v2481
      %v2483 = vrot.slane %v2481, 4
      %v2484 = vrot.slane %v2053, 5
      %v2485 = vsel %vm792, %v2483, %v2484
      %v2486 = vrot.slane %v2424, 5
      %v2487 = vrot.slane %v2486, 4
      %v2488 = vrot.slane %v2055, 5
      %v2489 = vsel %vm792, %v2487, %v2488
      %v2490 = vrot.slane %v2488, 4
      %v2491 = vrot.slane %v2056, 5
      %v2492 = vsel %vm792, %v2490, %v2491
      %v2493 = vrot.slane %v2425, 5
      %v2494 = vrot.slane %v2493, 4
      %v2495 = vrot.slane %v2058, 5
      %v2496 = vsel %vm792, %v2494, %v2495
      %v2497 = vrot.slane %v2495, 4
      %v2498 = vrot.slane %v2059, 5
      %v2499 = vsel %vm792, %v2497, %v2498
      %v2500 = vrot.slane %v2426, 5
      %v2501 = vrot.slane %v2500, 4
      %v2502 = vrot.slane %v2061, 5
      %v2503 = vsel %vm792, %v2501, %v2502
      %v2504 = vrot.slane %v2502, 4
      %v2505 = vrot.slane %v2062, 5
      %v2506 = vsel %vm792, %v2504, %v2505
      %v2507 = vunpack.c.l.b16 %v2454
      %v2508 = vunpack.c.l.b16 %v2457
      %v2509 = vunpack.c.l.b16 %v2461
      %v2510 = vunpack.c.l.b16 %v2464
      %v2511 = vunpack.c.l.b16 %v2468
      %v2512 = vunpack.c.l.b16 %v2471
      %v2513 = vunpack.c.l.b16 %v2475
      %v2514 = vunpack.c.l.b16 %v2478
      %v2515 = vunpack.c.l.b16 %v2482
      %v2516 = vunpack.c.l.b16 %v2485
      %v2517 = vunpack.c.l.b16 %v2489
      %v2518 = vunpack.c.l.b16 %v2492
      %v2519 = vunpack.c.l.b16 %v2496
      %v2520 = vunpack.c.l.b16 %v2499
      %v2521 = vunpack.c.l.b16 %v2503
      %v2522 = vunpack.c.l.b16 %v2506
      %v2523 = vpack.c.b16 %v2508, %v2507
      %v2524 = vpack.c.b16 %v2510, %v2509
      %v2525 = vpack.c.b16 %v2512, %v2511
      %v2526 = vpack.c.b16 %v2514, %v2513
      %v2527 = vpack.c.b16 %v2516, %v2515
      %v2528 = vpack.c.b16 %v2518, %v2517
      %v2529 = vpack.c.b16 %v2520, %v2519
      %v2530 = vpack.c.b16 %v2522, %v2521
      %v2532 = vsel %vm476, %v2523, 0
      %v2535 = vsel %vm476, %v2524, 0
      %v2538 = vsel %vm476, %v2525, 0
      %v2541 = vsel %vm476, %v2526, 0
      %v2544 = vsel %vm476, %v2527, 0
      %v2547 = vsel %vm476, %v2528, 0
      %v2550 = vsel %vm476, %v2529, 0
      %v2553 = vsel %vm476, %v2530, 0
      %v2556 = vsel %vm501, %v232, 0
      %2558 = vmatprep.subr.bf16.mxu0 0
      %2559 = vmatpush1.bf16.msra.mxu0 0
      %2560 = vmatprep.subr.bf16.mxu0 0
      %2561 = vmatpush1.bf16.msra.mxu0 0
      %2562 = vmatprep.subr.bf16.mxu0 0
      %2563 = vmatpush1.bf16.msra.mxu0 0
      %2564 = vmatprep.subr.bf16.mxu0 0
      %2565 = vmatpush1.bf16.msra.mxu0 0
      %2566 = vmatprep.subr.bf16.mxu0 0
      %2567 = vmatpush1.bf16.msra.mxu0 0
      %2568 = vmatprep.subr.bf16.mxu0 0
      %2569 = vmatpush1.bf16.msra.mxu0 0
      %2570 = vmatprep.subr.bf16.mxu0 0
      %2571 = vmatpush1.bf16.msra.mxu0 0
      %2572 = vmatprep.subr.bf16.mxu0 0
      %2573 = vmatpush1.bf16.msra.mxu0 %v2556
      %2574 = vmatprep.subr.bf16.mxu0 0
      %2575 = vmatpush2.bf16.msra.mxu0 0
      %2576 = vmatprep.subr.bf16.mxu0 0
      %2577 = vmatpush2.bf16.msra.mxu0 0
      %2578 = vmatprep.subr.bf16.mxu0 0
      %2579 = vmatpush2.bf16.msra.mxu0 0
      %2580 = vmatprep.subr.bf16.mxu0 0
      %2581 = vmatpush2.bf16.msra.mxu0 0
      %2582 = vmatprep.subr.bf16.mxu0 0
      %2583 = vmatpush2.bf16.msra.mxu0 0
      %2584 = vmatprep.subr.bf16.mxu0 0
      %2585 = vmatpush2.bf16.msra.mxu0 0
      %2586 = vmatprep.subr.bf16.mxu0 0
      %2587 = vmatpush2.bf16.msra.mxu0 0
      %2588 = vmatprep.subr.bf16.mxu0 0
      %2589 = vmatpush2.bf16.msra.mxu0 0
      %2590 = vmatprep.mubr.bf16.mxu0 0
      %2591 = vmatmul.mubr.bf16.gmra.mxu0 %v2532
      %v2592 = vpop.f32.mrf.mxu0
      %v2593 = vadd.f32 0.0, %v2592
      %v2594 = vpop.f32.mrf.mxu0
      %v2595 = vpop.f32.mrf.mxu0
      %v2596 = vadd.f32 0.0, %v2595
      %v2597 = vpop.f32.mrf.mxu0
      %2598 = vmatprep.mubr.bf16.mxu0 0
      %2599 = vmatmul.mubr.bf16.gmra.mxu0 %v2535
      %v2600 = vpop.f32.mrf.mxu0
      %v2601 = vadd.f32 0.0, %v2600
      %v2602 = vpop.f32.mrf.mxu0
      %v2603 = vpop.f32.mrf.mxu0
      %v2604 = vadd.f32 0.0, %v2603
      %v2605 = vpop.f32.mrf.mxu0
      %2606 = vmatprep.mubr.bf16.mxu0 0
      %2607 = vmatmul.mubr.bf16.gmra.mxu0 %v2538
      %v2608 = vpop.f32.mrf.mxu0
      %v2609 = vadd.f32 0.0, %v2608
      %v2610 = vpop.f32.mrf.mxu0
      %v2611 = vpop.f32.mrf.mxu0
      %v2612 = vadd.f32 0.0, %v2611
      %v2613 = vpop.f32.mrf.mxu0
      %2614 = vmatprep.mubr.bf16.mxu0 0
      %2615 = vmatmul.mubr.bf16.gmra.mxu0 %v2541
      %v2616 = vpop.f32.mrf.mxu0
      %v2617 = vadd.f32 0.0, %v2616
      %v2618 = vpop.f32.mrf.mxu0
      %v2619 = vpop.f32.mrf.mxu0
      %v2620 = vadd.f32 0.0, %v2619
      %v2621 = vpop.f32.mrf.mxu0
      %2622 = vmatprep.mubr.bf16.mxu0 0
      %2623 = vmatmul.mubr.bf16.gmra.mxu0 %v2544
      %v2624 = vpop.f32.mrf.mxu0
      %v2625 = vadd.f32 0.0, %v2624
      %v2626 = vpop.f32.mrf.mxu0
      %v2627 = vpop.f32.mrf.mxu0
      %v2628 = vadd.f32 0.0, %v2627
      %v2629 = vpop.f32.mrf.mxu0
      %2630 = vmatprep.mubr.bf16.mxu0 0
      %2631 = vmatmul.mubr.bf16.gmra.mxu0 %v2547
      %v2632 = vpop.f32.mrf.mxu0
      %v2633 = vadd.f32 0.0, %v2632
      %v2634 = vpop.f32.mrf.mxu0
      %v2635 = vpop.f32.mrf.mxu0
      %v2636 = vadd.f32 0.0, %v2635
      %v2637 = vpop.f32.mrf.mxu0
      %2638 = vmatprep.mubr.bf16.mxu0 0
      %2639 = vmatmul.mubr.bf16.gmra.mxu0 %v2550
      %v2640 = vpop.f32.mrf.mxu0
      %v2641 = vadd.f32 0.0, %v2640
      %v2642 = vpop.f32.mrf.mxu0
      %v2643 = vpop.f32.mrf.mxu0
      %v2644 = vadd.f32 0.0, %v2643
      %v2645 = vpop.f32.mrf.mxu0
      %2646 = vmatprep.mubr.bf16.mxu0 0
      %2647 = vmatmul.mubr.bf16.gmra.mxu0 %v2553
      %v2648 = vpop.f32.mrf.mxu0
      %v2649 = vadd.f32 0.0, %v2648
      %v2650 = vpop.f32.mrf.mxu0
      %v2651 = vpop.f32.mrf.mxu0
      %v2652 = vadd.f32 0.0, %v2651
      %v2653 = vpop.f32.mrf.mxu0
      %2654 = vdwg.mxu0
      %v2655 = vadd.f32 %v2403, %v2593
      %v2656 = vadd.f32 %v2404, %v2596
      %v2657 = vadd.f32 %v2405, %v2601
      %v2658 = vadd.f32 %v2406, %v2604
      %v2659 = vadd.f32 %v2407, %v2609
      %v2660 = vadd.f32 %v2408, %v2612
      %v2661 = vadd.f32 %v2409, %v2617
      %v2662 = vadd.f32 %v2410, %v2620
      %v2663 = vadd.f32 %v2411, %v2625
      %v2664 = vadd.f32 %v2412, %v2628
      %v2665 = vadd.f32 %v2413, %v2633
      %v2666 = vadd.f32 %v2414, %v2636
      %v2667 = vadd.f32 %v2415, %v2641
      %v2668 = vadd.f32 %v2416, %v2644
      %v2669 = vadd.f32 %v2417, %v2649
      %v2670 = vadd.f32 %v2418, %v2652
      %vm2671 = vcmask 64512
      %v2672 = vsel %vm2671, %v2655, 0.0
      %v2673 = vsel %vm2671, %v2656, 0.0
      %v2674 = vadd.f32 %v2672, %v2673
      %v2675 = vsel %vm2671, %v2657, 0.0
      %v2676 = vadd.f32 %v2674, %v2675
      %v2677 = vsel %vm2671, %v2658, 0.0
      %v2678 = vadd.f32 %v2676, %v2677
      %v2679 = vsel %vm2671, %v2659, 0.0
      %v2680 = vadd.f32 %v2678, %v2679
      %v2681 = vsel %vm2671, %v2660, 0.0
      %v2682 = vadd.f32 %v2680, %v2681
      %v2683 = vsel %vm2671, %v2661, 0.0
      %v2684 = vadd.f32 %v2682, %v2683
      %v2685 = vsel %vm2671, %v2662, 0.0
      %v2686 = vadd.f32 %v2684, %v2685
      %v2687 = vsel %vm2671, %v2663, 0.0
      %v2688 = vadd.f32 %v2686, %v2687
      %v2689 = vsel %vm2671, %v2664, 0.0
      %v2690 = vadd.f32 %v2688, %v2689
      %v2691 = vsel %vm2671, %v2665, 0.0
      %v2692 = vadd.f32 %v2690, %v2691
      %v2693 = vsel %vm2671, %v2666, 0.0
      %v2694 = vadd.f32 %v2692, %v2693
      %v2695 = vsel %vm2671, %v2667, 0.0
      %v2696 = vadd.f32 %v2694, %v2695
      %v2697 = vsel %vm2671, %v2668, 0.0
      %v2698 = vadd.f32 %v2696, %v2697
      %v2699 = vsel %vm2671, %v2669, 0.0
      %v2700 = vadd.f32 %v2698, %v2699
      %v2701 = vsel %vm2671, %v2670, 0.0
      %v2702 = vadd.f32 %v2700, %v2701
      %v2703 = vrot.slane %v2702, 4
      %v2704 = vadd.f32 %v2702, %v2703
      %v2705 = vrot.slane %v2704, 2
      %v2706 = vadd.f32 %v2704, %v2705
      %v2707 = vrot.slane %v2706, 1
      %v2708 = vadd.f32 %v2706, %v2707
      %v2709 = vadd.f32 %v2708, 0.0
      %v2710 = vmul.f32 %v2655, %v2655
      %v2711 = vmul.f32 %v2656, %v2656
      %v2712 = vmul.f32 %v2657, %v2657
      %v2713 = vmul.f32 %v2658, %v2658
      %v2714 = vmul.f32 %v2659, %v2659
      %v2715 = vmul.f32 %v2660, %v2660
      %v2716 = vmul.f32 %v2661, %v2661
      %v2717 = vmul.f32 %v2662, %v2662
      %v2718 = vmul.f32 %v2663, %v2663
      %v2719 = vmul.f32 %v2664, %v2664
      %v2720 = vmul.f32 %v2665, %v2665
      %v2721 = vmul.f32 %v2666, %v2666
      %v2722 = vmul.f32 %v2667, %v2667
      %v2723 = vmul.f32 %v2668, %v2668
      %v2724 = vmul.f32 %v2669, %v2669
      %v2725 = vmul.f32 %v2670, %v2670
      %v2726 = vsel %vm2671, %v2710, 0.0
      %v2727 = vsel %vm2671, %v2711, 0.0
      %v2728 = vadd.f32 %v2726, %v2727
      %v2729 = vsel %vm2671, %v2712, 0.0
      %v2730 = vadd.f32 %v2728, %v2729
      %v2731 = vsel %vm2671, %v2713, 0.0
      %v2732 = vadd.f32 %v2730, %v2731
      %v2733 = vsel %vm2671, %v2714, 0.0
      %v2734 = vadd.f32 %v2732, %v2733
      %v2735 = vsel %vm2671, %v2715, 0.0
      %v2736 = vadd.f32 %v2734, %v2735
      %v2737 = vsel %vm2671, %v2716, 0.0
      %v2738 = vadd.f32 %v2736, %v2737
      %v2739 = vsel %vm2671, %v2717, 0.0
      %v2740 = vadd.f32 %v2738, %v2739
      %v2741 = vsel %vm2671, %v2718, 0.0
      %v2742 = vadd.f32 %v2740, %v2741
      %v2743 = vsel %vm2671, %v2719, 0.0
      %v2744 = vadd.f32 %v2742, %v2743
      %v2745 = vsel %vm2671, %v2720, 0.0
      %v2746 = vadd.f32 %v2744, %v2745
      %v2747 = vsel %vm2671, %v2721, 0.0
      %v2748 = vadd.f32 %v2746, %v2747
      %v2749 = vsel %vm2671, %v2722, 0.0
      %v2750 = vadd.f32 %v2748, %v2749
      %v2751 = vsel %vm2671, %v2723, 0.0
      %v2752 = vadd.f32 %v2750, %v2751
      %v2753 = vsel %vm2671, %v2724, 0.0
      %v2754 = vadd.f32 %v2752, %v2753
      %v2755 = vsel %vm2671, %v2725, 0.0
      %v2756 = vadd.f32 %v2754, %v2755
      %v2757 = vrot.slane %v2756, 4
      %v2758 = vadd.f32 %v2756, %v2757
      %v2759 = vrot.slane %v2758, 2
      %v2760 = vadd.f32 %v2758, %v2759
      %v2761 = vrot.slane %v2760, 1
      %v2762 = vadd.f32 %v2760, %v2761
      %v2763 = vadd.f32 %v2762, 0.0
      %v2764 = vpack.c.bf16 %v2656, %v2655
      %v2765 = vpack.c.bf16 %v2658, %v2657
      %v2766 = vpack.c.bf16 %v2660, %v2659
      %v2767 = vpack.c.bf16 %v2662, %v2661
      %v2768 = vpack.c.bf16 %v2664, %v2663
      %v2769 = vpack.c.bf16 %v2666, %v2665
      %v2770 = vpack.c.bf16 %v2668, %v2667
      %v2771 = vpack.c.bf16 %v2670, %v2669
      %v2780 = vunpack.c.l.b16 %v2764
      %v2781 = vunpack.c.h.b16 %v2764
      %v2782 = vunpack.c.l.b16 %v2765
      %v2783 = vunpack.c.h.b16 %v2765
      %v2784 = vunpack.c.l.b16 %v2766
      %v2785 = vunpack.c.h.b16 %v2766
      %v2786 = vunpack.c.l.b16 %v2767
      %v2787 = vunpack.c.h.b16 %v2767
      %v2788 = vunpack.c.l.b16 %v2768
      %v2789 = vunpack.c.h.b16 %v2768
      %v2790 = vunpack.c.l.b16 %v2769
      %v2791 = vunpack.c.h.b16 %v2769
      %v2792 = vunpack.c.l.b16 %v2770
      %v2793 = vunpack.c.h.b16 %v2770
      %v2794 = vunpack.c.l.b16 %v2771
      %v2795 = vunpack.c.h.b16 %v2771
      %v2796 = vpack.c.b16 %v2780, %v2780
      %v2797 = vpack.c.b16 %v2781, %v2781
      %v2798 = vpack.c.b16 %v2782, %v2782
      %v2799 = vpack.c.b16 %v2783, %v2783
      %v2800 = vpack.c.b16 %v2784, %v2784
      %v2801 = vpack.c.b16 %v2785, %v2785
      %v2802 = vpack.c.b16 %v2786, %v2786
      %v2803 = vpack.c.b16 %v2787, %v2787
      %v2804 = vpack.c.b16 %v2788, %v2788
      %v2805 = vpack.c.b16 %v2789, %v2789
      %v2806 = vpack.c.b16 %v2790, %v2790
      %v2807 = vpack.c.b16 %v2791, %v2791
      %v2808 = vpack.c.b16 %v2792, %v2792
      %v2809 = vpack.c.b16 %v2793, %v2793
      %v2810 = vpack.c.b16 %v2794, %v2794
      %v2811 = vpack.c.b16 %v2795, %v2795
      %vm2828 = vcmask 60416
      %2829 = vst.msk [vmem:[%s208] sm:$0xf] %vm2828, %v2796
      %2830 = vst.msk [vmem:[%s208 + $0x4] sm:$0xf] %vm2828, %v2797
      %2831 = vst.msk [vmem:[%s208 + $0x8] sm:$0xf] %vm2828, %v2798
      %2832 = vst.msk [vmem:[%s208 + $0xc] sm:$0xf] %vm2828, %v2799
      %2833 = vst.msk [vmem:[%s208 + $0x10] sm:$0xf] %vm2828, %v2800
      %2834 = vst.msk [vmem:[%s208 + $0x14] sm:$0xf] %vm2828, %v2801
      %2835 = vst.msk [vmem:[%s208 + $0x18] sm:$0xf] %vm2828, %v2802
      %2836 = vst.msk [vmem:[%s208 + $0x1c] sm:$0xf] %vm2828, %v2803
      %2837 = vst.msk [vmem:[%s208 + $0x20] sm:$0xf] %vm2828, %v2804
      %2838 = vst.msk [vmem:[%s208 + $0x24] sm:$0xf] %vm2828, %v2805
      %2839 = vst.msk [vmem:[%s208 + $0x28] sm:$0xf] %vm2828, %v2806
      %2840 = vst.msk [vmem:[%s208 + $0x2c] sm:$0xf] %vm2828, %v2807
      %2841 = vst.msk [vmem:[%s208 + $0x30] sm:$0xf] %vm2828, %v2808
      %2842 = vst.msk [vmem:[%s208 + $0x34] sm:$0xf] %vm2828, %v2809
      %2843 = vst.msk [vmem:[%s208 + $0x38] sm:$0xf] %vm2828, %v2810
      %2844 = vst.msk [vmem:[%s208 + $0x3c] sm:$0xf] %vm2828, %v2811
      %s2845 = scalar_lea.vmem %s203, 96
      %v2846 = vld [vmem:[%s2845] sm:$0xf]
      %v2847 = vld [vmem:[%s2845 + $0x4] sm:$0xf]
      %v2848 = vld [vmem:[%s2845 + $0xc] sm:$0xf]
      %v2849 = vld [vmem:[%s2845 + $0x10] sm:$0xf]
      %v2850 = vld [vmem:[%s2845 + $0x18] sm:$0xf]
      %v2851 = vld [vmem:[%s2845 + $0x1c] sm:$0xf]
      %v2852 = vld [vmem:[%s2845 + $0x24] sm:$0xf]
      %v2853 = vld [vmem:[%s2845 + $0x28] sm:$0xf]
      %v2854 = vld [vmem:[%s2845 + $0x30] sm:$0xf]
      %v2855 = vld [vmem:[%s2845 + $0x34] sm:$0xf]
      %v2856 = vld [vmem:[%s2845 + $0x3c] sm:$0xf]
      %v2857 = vld [vmem:[%s2845 + $0x40] sm:$0xf]
      %v2858 = vld [vmem:[%s2845 + $0x48] sm:$0xf]
      %v2859 = vld [vmem:[%s2845 + $0x4c] sm:$0xf]
      %v2860 = vld [vmem:[%s2845 + $0x54] sm:$0xf]
      %v2861 = vld [vmem:[%s2845 + $0x58] sm:$0xf]
      %v2862 = vld [vmem:[%s2845 + $0x8] sm:$0x1]
      %v2863 = vld [vmem:[%s2845 + $0x14] sm:$0x1]
      %v2864 = vld [vmem:[%s2845 + $0x20] sm:$0x1]
      %v2865 = vld [vmem:[%s2845 + $0x2c] sm:$0x1]
      %v2866 = vld [vmem:[%s2845 + $0x38] sm:$0x1]
      %v2867 = vld [vmem:[%s2845 + $0x44] sm:$0x1]
      %v2868 = vld [vmem:[%s2845 + $0x50] sm:$0x1]
      %v2869 = vld [vmem:[%s2845 + $0x5c] sm:$0x1]
      %v2871 = vshrl.u32 %v2846, 16
      %v2873 = vrot.slane %v2871, 4
      %v2874 = vshll.u32 %v2846, 16
      %v2876 = vrot.slane %v2874, 5
      %v2877 = vor.u32 %v2873, %v2876
      %v2878 = vrot.slane %v2877, 4
      %v2880 = vshll.u32 %v2847, 16
      %v2882 = vrot.slane %v2880, 5
      %v2883 = vsel %vm259, %v2878, %v2882
      %v2884 = vshrl.u32 %v2847, 16
      %v2886 = vrot.slane %v2884, 4
      %v2887 = vor.u32 %v2886, %v2882
      %v2888 = vrot.slane %v2887, 4
      %v2890 = vshll.u32 %v2862, 16
      %v2892 = vrot.slane %v2890, 5
      %v2893 = vsel %vm259, %v2888, %v2892
      %v2895 = vshrl.u32 %v2848, 16
      %v2897 = vrot.slane %v2895, 4
      %v2898 = vshll.u32 %v2848, 16
      %v2900 = vrot.slane %v2898, 5
      %v2901 = vor.u32 %v2897, %v2900
      %v2902 = vrot.slane %v2901, 4
      %v2904 = vshll.u32 %v2849, 16
      %v2906 = vrot.slane %v2904, 5
      %v2907 = vsel %vm259, %v2902, %v2906
      %v2908 = vshrl.u32 %v2849, 16
      %v2910 = vrot.slane %v2908, 4
      %v2911 = vor.u32 %v2910, %v2906
      %v2912 = vrot.slane %v2911, 4
      %v2914 = vshll.u32 %v2863, 16
      %v2916 = vrot.slane %v2914, 5
      %v2917 = vsel %vm259, %v2912, %v2916
      %v2919 = vshrl.u32 %v2850, 16
      %v2921 = vrot.slane %v2919, 4
      %v2922 = vshll.u32 %v2850, 16
      %v2924 = vrot.slane %v2922, 5
      %v2925 = vor.u32 %v2921, %v2924
      %v2926 = vrot.slane %v2925, 4
      %v2928 = vshll.u32 %v2851, 16
      %v2930 = vrot.slane %v2928, 5
      %v2931 = vsel %vm259, %v2926, %v2930
      %v2932 = vshrl.u32 %v2851, 16
      %v2934 = vrot.slane %v2932, 4
      %v2935 = vor.u32 %v2934, %v2930
      %v2936 = vrot.slane %v2935, 4
      %v2938 = vshll.u32 %v2864, 16
      %v2940 = vrot.slane %v2938, 5
      %v2941 = vsel %vm259, %v2936, %v2940
      %v2943 = vshrl.u32 %v2852, 16
      %v2945 = vrot.slane %v2943, 4
      %v2946 = vshll.u32 %v2852, 16
      %v2948 = vrot.slane %v2946, 5
      %v2949 = vor.u32 %v2945, %v2948
      %v2950 = vrot.slane %v2949, 4
      %v2952 = vshll.u32 %v2853, 16
      %v2954 = vrot.slane %v2952, 5
      %v2955 = vsel %vm259, %v2950, %v2954
      %v2956 = vshrl.u32 %v2853, 16
      %v2958 = vrot.slane %v2956, 4
      %v2959 = vor.u32 %v2958, %v2954
      %v2960 = vrot.slane %v2959, 4
      %v2962 = vshll.u32 %v2865, 16
      %v2964 = vrot.slane %v2962, 5
      %v2965 = vsel %vm259, %v2960, %v2964
      %v2967 = vshrl.u32 %v2854, 16
      %v2969 = vrot.slane %v2967, 4
      %v2970 = vshll.u32 %v2854, 16
      %v2972 = vrot.slane %v2970, 5
      %v2973 = vor.u32 %v2969, %v2972
      %v2974 = vrot.slane %v2973, 4
      %v2976 = vshll.u32 %v2855, 16
      %v2978 = vrot.slane %v2976, 5
      %v2979 = vsel %vm259, %v2974, %v2978
      %v2980 = vshrl.u32 %v2855, 16
      %v2982 = vrot.slane %v2980, 4
      %v2983 = vor.u32 %v2982, %v2978
      %v2984 = vrot.slane %v2983, 4
      %v2986 = vshll.u32 %v2866, 16
      %v2988 = vrot.slane %v2986, 5
      %v2989 = vsel %vm259, %v2984, %v2988
      %v2991 = vshrl.u32 %v2856, 16
      %v2993 = vrot.slane %v2991, 4
      %v2994 = vshll.u32 %v2856, 16
      %v2996 = vrot.slane %v2994, 5
      %v2997 = vor.u32 %v2993, %v2996
      %v2998 = vrot.slane %v2997, 4
      %v3000 = vshll.u32 %v2857, 16
      %v3002 = vrot.slane %v3000, 5
      %v3003 = vsel %vm259, %v2998, %v3002
      %v3004 = vshrl.u32 %v2857, 16
      %v3006 = vrot.slane %v3004, 4
      %v3007 = vor.u32 %v3006, %v3002
      %v3008 = vrot.slane %v3007, 4
      %v3010 = vshll.u32 %v2867, 16
      %v3012 = vrot.slane %v3010, 5
      %v3013 = vsel %vm259, %v3008, %v3012
      %v3015 = vshrl.u32 %v2858, 16
      %v3017 = vrot.slane %v3015, 4
      %v3018 = vshll.u32 %v2858, 16
      %v3020 = vrot.slane %v3018, 5
      %v3021 = vor.u32 %v3017, %v3020
      %v3022 = vrot.slane %v3021, 4
      %v3024 = vshll.u32 %v2859, 16
      %v3026 = vrot.slane %v3024, 5
      %v3027 = vsel %vm259, %v3022, %v3026
      %v3028 = vshrl.u32 %v2859, 16
      %v3030 = vrot.slane %v3028, 4
      %v3031 = vor.u32 %v3030, %v3026
      %v3032 = vrot.slane %v3031, 4
      %v3034 = vshll.u32 %v2868, 16
      %v3036 = vrot.slane %v3034, 5
      %v3037 = vsel %vm259, %v3032, %v3036
      %v3039 = vshrl.u32 %v2860, 16
      %v3041 = vrot.slane %v3039, 4
      %v3042 = vshll.u32 %v2860, 16
      %v3044 = vrot.slane %v3042, 5
      %v3045 = vor.u32 %v3041, %v3044
      %v3046 = vrot.slane %v3045, 4
      %v3048 = vshll.u32 %v2861, 16
      %v3050 = vrot.slane %v3048, 5
      %v3051 = vsel %vm259, %v3046, %v3050
      %v3052 = vshrl.u32 %v2861, 16
      %v3054 = vrot.slane %v3052, 4
      %v3055 = vor.u32 %v3054, %v3050
      %v3056 = vrot.slane %v3055, 4
      %v3058 = vshll.u32 %v2869, 16
      %v3060 = vrot.slane %v3058, 5
      %v3061 = vsel %vm259, %v3056, %v3060
      %v3062 = vunpack.c.l.b16 %v2883
      %v3063 = vunpack.c.l.b16 %v2893
      %v3064 = vunpack.c.l.b16 %v2907
      %v3065 = vunpack.c.l.b16 %v2917
      %v3066 = vunpack.c.l.b16 %v2931
      %v3067 = vunpack.c.l.b16 %v2941
      %v3068 = vunpack.c.l.b16 %v2955
      %v3069 = vunpack.c.l.b16 %v2965
      %v3070 = vunpack.c.l.b16 %v2979
      %v3071 = vunpack.c.l.b16 %v2989
      %v3072 = vunpack.c.l.b16 %v3003
      %v3073 = vunpack.c.l.b16 %v3013
      %v3074 = vunpack.c.l.b16 %v3027
      %v3075 = vunpack.c.l.b16 %v3037
      %v3076 = vunpack.c.l.b16 %v3051
      %v3077 = vunpack.c.l.b16 %v3061
      %v3078 = vpack.c.b16 %v3063, %v3062
      %v3079 = vpack.c.b16 %v3065, %v3064
      %v3080 = vpack.c.b16 %v3067, %v3066
      %v3081 = vpack.c.b16 %v3069, %v3068
      %v3082 = vpack.c.b16 %v3071, %v3070
      %v3083 = vpack.c.b16 %v3073, %v3072
      %v3084 = vpack.c.b16 %v3075, %v3074
      %v3085 = vpack.c.b16 %v3077, %v3076
      %v3087 = vsel %vm476, %v3078, 0
      %v3090 = vsel %vm476, %v3079, 0
      %v3093 = vsel %vm476, %v3080, 0
      %v3096 = vsel %vm476, %v3081, 0
      %v3099 = vsel %vm476, %v3082, 0
      %v3102 = vsel %vm476, %v3083, 0
      %v3105 = vsel %vm476, %v3084, 0
      %v3108 = vsel %vm476, %v3085, 0
      %3110 = vmatprep.subr.bf16.mxu0 0
      %3111 = vmatpush1.bf16.msra.mxu0 0
      %3112 = vmatprep.subr.bf16.mxu0 0
      %3113 = vmatpush1.bf16.msra.mxu0 0
      %3114 = vmatprep.subr.bf16.mxu0 0
      %3115 = vmatpush1.bf16.msra.mxu0 0
      %3116 = vmatprep.subr.bf16.mxu0 0
      %3117 = vmatpush1.bf16.msra.mxu0 0
      %3118 = vmatprep.subr.bf16.mxu0 0
      %3119 = vmatpush1.bf16.msra.mxu0 0
      %3120 = vmatprep.subr.bf16.mxu0 0
      %3121 = vmatpush1.bf16.msra.mxu0 0
      %3122 = vmatprep.subr.bf16.mxu0 0
      %3123 = vmatpush1.bf16.msra.mxu0 0
      %3124 = vmatprep.subr.bf16.mxu0 0
      %3125 = vmatpush1.bf16.msra.mxu0 %v503
      %3126 = vmatprep.subr.bf16.mxu0 0
      %3127 = vmatpush2.bf16.msra.mxu0 0
      %3128 = vmatprep.subr.bf16.mxu0 0
      %3129 = vmatpush2.bf16.msra.mxu0 0
      %3130 = vmatprep.subr.bf16.mxu0 0
      %3131 = vmatpush2.bf16.msra.mxu0 0
      %3132 = vmatprep.subr.bf16.mxu0 0
      %3133 = vmatpush2.bf16.msra.mxu0 0
      %3134 = vmatprep.subr.bf16.mxu0 0
      %3135 = vmatpush2.bf16.msra.mxu0 0
      %3136 = vmatprep.subr.bf16.mxu0 0
      %3137 = vmatpush2.bf16.msra.mxu0 0
      %3138 = vmatprep.subr.bf16.mxu0 0
      %3139 = vmatpush2.bf16.msra.mxu0 0
      %3140 = vmatprep.subr.bf16.mxu0 0
      %3141 = vmatpush2.bf16.msra.mxu0 0
      %3142 = vmatprep.mubr.bf16.mxu0 0
      %3143 = vmatmul.mubr.bf16.gmra.mxu0 %v3087
      %v3144 = vpop.f32.mrf.mxu0
      %v3145 = vadd.f32 0.0, %v3144
      %v3146 = vpop.f32.mrf.mxu0
      %v3147 = vpop.f32.mrf.mxu0
      %v3148 = vadd.f32 0.0, %v3147
      %v3149 = vpop.f32.mrf.mxu0
      %3150 = vmatprep.mubr.bf16.mxu0 0
      %3151 = vmatmul.mubr.bf16.gmra.mxu0 %v3090
      %v3152 = vpop.f32.mrf.mxu0
      %v3153 = vadd.f32 0.0, %v3152
      %v3154 = vpop.f32.mrf.mxu0
      %v3155 = vpop.f32.mrf.mxu0
      %v3156 = vadd.f32 0.0, %v3155
      %v3157 = vpop.f32.mrf.mxu0
      %3158 = vmatprep.mubr.bf16.mxu0 0
      %3159 = vmatmul.mubr.bf16.gmra.mxu0 %v3093
      %v3160 = vpop.f32.mrf.mxu0
      %v3161 = vadd.f32 0.0, %v3160
      %v3162 = vpop.f32.mrf.mxu0
      %v3163 = vpop.f32.mrf.mxu0
      %v3164 = vadd.f32 0.0, %v3163
      %v3165 = vpop.f32.mrf.mxu0
      %3166 = vmatprep.mubr.bf16.mxu0 0
      %3167 = vmatmul.mubr.bf16.gmra.mxu0 %v3096
      %v3168 = vpop.f32.mrf.mxu0
      %v3169 = vadd.f32 0.0, %v3168
      %v3170 = vpop.f32.mrf.mxu0
      %v3171 = vpop.f32.mrf.mxu0
      %v3172 = vadd.f32 0.0, %v3171
      %v3173 = vpop.f32.mrf.mxu0
      %3174 = vmatprep.mubr.bf16.mxu0 0
      %3175 = vmatmul.mubr.bf16.gmra.mxu0 %v3099
      %v3176 = vpop.f32.mrf.mxu0
      %v3177 = vadd.f32 0.0, %v3176
      %v3178 = vpop.f32.mrf.mxu0
      %v3179 = vpop.f32.mrf.mxu0
      %v3180 = vadd.f32 0.0, %v3179
      %v3181 = vpop.f32.mrf.mxu0
      %3182 = vmatprep.mubr.bf16.mxu0 0
      %3183 = vmatmul.mubr.bf16.gmra.mxu0 %v3102
      %v3184 = vpop.f32.mrf.mxu0
      %v3185 = vadd.f32 0.0, %v3184
      %v3186 = vpop.f32.mrf.mxu0
      %v3187 = vpop.f32.mrf.mxu0
      %v3188 = vadd.f32 0.0, %v3187
      %v3189 = vpop.f32.mrf.mxu0
      %3190 = vmatprep.mubr.bf16.mxu0 0
      %3191 = vmatmul.mubr.bf16.gmra.mxu0 %v3105
      %v3192 = vpop.f32.mrf.mxu0
      %v3193 = vadd.f32 0.0, %v3192
      %v3194 = vpop.f32.mrf.mxu0
      %v3195 = vpop.f32.mrf.mxu0
      %v3196 = vadd.f32 0.0, %v3195
      %v3197 = vpop.f32.mrf.mxu0
      %3198 = vmatprep.mubr.bf16.mxu0 0
      %3199 = vmatmul.mubr.bf16.gmra.mxu0 %v3108
      %v3200 = vpop.f32.mrf.mxu0
      %v3201 = vadd.f32 0.0, %v3200
      %v3202 = vpop.f32.mrf.mxu0
      %v3203 = vpop.f32.mrf.mxu0
      %v3204 = vadd.f32 0.0, %v3203
      %v3205 = vpop.f32.mrf.mxu0
      %3206 = vdwg.mxu0
      %v3223 = vunpack.c.l.b16 %v2846
      %v3224 = vunpack.c.l.b16 %v2847
      %v3225 = vunpack.c.l.b16 %v2848
      %v3226 = vunpack.c.l.b16 %v2849
      %v3227 = vunpack.c.l.b16 %v2850
      %v3228 = vunpack.c.l.b16 %v2851
      %v3229 = vunpack.c.l.b16 %v2852
      %v3230 = vunpack.c.l.b16 %v2853
      %v3231 = vunpack.c.l.b16 %v2854
      %v3232 = vunpack.c.l.b16 %v2855
      %v3233 = vunpack.c.l.b16 %v2856
      %v3234 = vunpack.c.l.b16 %v2857
      %v3235 = vunpack.c.l.b16 %v2858
      %v3236 = vunpack.c.l.b16 %v2859
      %v3237 = vunpack.c.l.b16 %v2860
      %v3238 = vunpack.c.l.b16 %v2861
      %v3239 = vpack.c.b16 %v3224, %v3223
      %v3240 = vpack.c.b16 %v3226, %v3225
      %v3241 = vpack.c.b16 %v3228, %v3227
      %v3242 = vpack.c.b16 %v3230, %v3229
      %v3243 = vpack.c.b16 %v3232, %v3231
      %v3244 = vpack.c.b16 %v3234, %v3233
      %v3245 = vpack.c.b16 %v3236, %v3235
      %v3246 = vpack.c.b16 %v3238, %v3237
      %v3248 = vsel %vm476, %v3239, 0
      %v3251 = vsel %vm476, %v3240, 0
      %v3254 = vsel %vm476, %v3241, 0
      %v3257 = vsel %vm476, %v3242, 0
      %v3260 = vsel %vm476, %v3243, 0
      %v3263 = vsel %vm476, %v3244, 0
      %v3266 = vsel %vm476, %v3245, 0
      %v3269 = vsel %vm476, %v3246, 0
      %3271 = vmatprep.subr.bf16.mxu0 0
      %3272 = vmatpush1.bf16.msra.mxu0 0
      %3273 = vmatprep.subr.bf16.mxu0 0
      %3274 = vmatpush1.bf16.msra.mxu0 0
      %3275 = vmatprep.subr.bf16.mxu0 0
      %3276 = vmatpush1.bf16.msra.mxu0 0
      %3277 = vmatprep.subr.bf16.mxu0 0
      %3278 = vmatpush1.bf16.msra.mxu0 0
      %3279 = vmatprep.subr.bf16.mxu0 0
      %3280 = vmatpush1.bf16.msra.mxu0 0
      %3281 = vmatprep.subr.bf16.mxu0 0
      %3282 = vmatpush1.bf16.msra.mxu0 0
      %3283 = vmatprep.subr.bf16.mxu0 0
      %3284 = vmatpush1.bf16.msra.mxu0 0
      %3285 = vmatprep.subr.bf16.mxu0 0
      %3286 = vmatpush1.bf16.msra.mxu0 %v667
      %3287 = vmatprep.subr.bf16.mxu0 0
      %3288 = vmatpush2.bf16.msra.mxu0 0
      %3289 = vmatprep.subr.bf16.mxu0 0
      %3290 = vmatpush2.bf16.msra.mxu0 0
      %3291 = vmatprep.subr.bf16.mxu0 0
      %3292 = vmatpush2.bf16.msra.mxu0 0
      %3293 = vmatprep.subr.bf16.mxu0 0
      %3294 = vmatpush2.bf16.msra.mxu0 0
      %3295 = vmatprep.subr.bf16.mxu0 0
      %3296 = vmatpush2.bf16.msra.mxu0 0
      %3297 = vmatprep.subr.bf16.mxu0 0
      %3298 = vmatpush2.bf16.msra.mxu0 0
      %3299 = vmatprep.subr.bf16.mxu0 0
      %3300 = vmatpush2.bf16.msra.mxu0 0
      %3301 = vmatprep.subr.bf16.mxu0 0
      %3302 = vmatpush2.bf16.msra.mxu0 0
      %3303 = vmatprep.mubr.bf16.mxu0 0
      %3304 = vmatmul.mubr.bf16.gmra.mxu0 %v3248
      %v3305 = vpop.f32.mrf.mxu0
      %v3306 = vadd.f32 %v3145, %v3305
      %v3307 = vpop.f32.mrf.mxu0
      %v3308 = vpop.f32.mrf.mxu0
      %v3309 = vadd.f32 %v3148, %v3308
      %v3310 = vpop.f32.mrf.mxu0
      %3311 = vmatprep.mubr.bf16.mxu0 0
      %3312 = vmatmul.mubr.bf16.gmra.mxu0 %v3251
      %v3313 = vpop.f32.mrf.mxu0
      %v3314 = vadd.f32 %v3153, %v3313
      %v3315 = vpop.f32.mrf.mxu0
      %v3316 = vpop.f32.mrf.mxu0
      %v3317 = vadd.f32 %v3156, %v3316
      %v3318 = vpop.f32.mrf.mxu0
      %3319 = vmatprep.mubr.bf16.mxu0 0
      %3320 = vmatmul.mubr.bf16.gmra.mxu0 %v3254
      %v3321 = vpop.f32.mrf.mxu0
      %v3322 = vadd.f32 %v3161, %v3321
      %v3323 = vpop.f32.mrf.mxu0
      %v3324 = vpop.f32.mrf.mxu0
      %v3325 = vadd.f32 %v3164, %v3324
      %v3326 = vpop.f32.mrf.mxu0
      %3327 = vmatprep.mubr.bf16.mxu0 0
      %3328 = vmatmul.mubr.bf16.gmra.mxu0 %v3257
      %v3329 = vpop.f32.mrf.mxu0
      %v3330 = vadd.f32 %v3169, %v3329
      %v3331 = vpop.f32.mrf.mxu0
      %v3332 = vpop.f32.mrf.mxu0
      %v3333 = vadd.f32 %v3172, %v3332
      %v3334 = vpop.f32.mrf.mxu0
      %3335 = vmatprep.mubr.bf16.mxu0 0
      %3336 = vmatmul.mubr.bf16.gmra.mxu0 %v3260
      %v3337 = vpop.f32.mrf.mxu0
      %v3338 = vadd.f32 %v3177, %v3337
      %v3339 = vpop.f32.mrf.mxu0
      %v3340 = vpop.f32.mrf.mxu0
      %v3341 = vadd.f32 %v3180, %v3340
      %v3342 = vpop.f32.mrf.mxu0
      %3343 = vmatprep.mubr.bf16.mxu0 0
      %3344 = vmatmul.mubr.bf16.gmra.mxu0 %v3263
      %v3345 = vpop.f32.mrf.mxu0
      %v3346 = vadd.f32 %v3185, %v3345
      %v3347 = vpop.f32.mrf.mxu0
      %v3348 = vpop.f32.mrf.mxu0
      %v3349 = vadd.f32 %v3188, %v3348
      %v3350 = vpop.f32.mrf.mxu0
      %3351 = vmatprep.mubr.bf16.mxu0 0
      %3352 = vmatmul.mubr.bf16.gmra.mxu0 %v3266
      %v3353 = vpop.f32.mrf.mxu0
      %v3354 = vadd.f32 %v3193, %v3353
      %v3355 = vpop.f32.mrf.mxu0
      %v3356 = vpop.f32.mrf.mxu0
      %v3357 = vadd.f32 %v3196, %v3356
      %v3358 = vpop.f32.mrf.mxu0
      %3359 = vmatprep.mubr.bf16.mxu0 0
      %3360 = vmatmul.mubr.bf16.gmra.mxu0 %v3269
      %v3361 = vpop.f32.mrf.mxu0
      %v3362 = vadd.f32 %v3201, %v3361
      %v3363 = vpop.f32.mrf.mxu0
      %v3364 = vpop.f32.mrf.mxu0
      %v3365 = vadd.f32 %v3204, %v3364
      %v3366 = vpop.f32.mrf.mxu0
      %3367 = vdwg.mxu0
      %v3368 = vld [vmem:[%s2845] sm:$0xe]
      %v3369 = vld [vmem:[%s2845 + $0xc] sm:$0xe]
      %v3370 = vld [vmem:[%s2845 + $0x18] sm:$0xe]
      %v3371 = vld [vmem:[%s2845 + $0x24] sm:$0xe]
      %v3372 = vld [vmem:[%s2845 + $0x30] sm:$0xe]
      %v3373 = vld [vmem:[%s2845 + $0x3c] sm:$0xe]
      %v3374 = vld [vmem:[%s2845 + $0x48] sm:$0xe]
      %v3375 = vld [vmem:[%s2845 + $0x54] sm:$0xe]
      %v3392 = vrot.slane %v3368, 5
      %v3393 = vrot.slane %v3392, 4
      %v3394 = vrot.slane %v2847, 5
      %v3395 = vsel %vm792, %v3393, %v3394
      %v3396 = vrot.slane %v3394, 4
      %v3397 = vrot.slane %v2862, 5
      %v3398 = vsel %vm792, %v3396, %v3397
      %v3399 = vrot.slane %v3369, 5
      %v3400 = vrot.slane %v3399, 4
      %v3401 = vrot.slane %v2849, 5
      %v3402 = vsel %vm792, %v3400, %v3401
      %v3403 = vrot.slane %v3401, 4
      %v3404 = vrot.slane %v2863, 5
      %v3405 = vsel %vm792, %v3403, %v3404
      %v3406 = vrot.slane %v3370, 5
      %v3407 = vrot.slane %v3406, 4
      %v3408 = vrot.slane %v2851, 5
      %v3409 = vsel %vm792, %v3407, %v3408
      %v3410 = vrot.slane %v3408, 4
      %v3411 = vrot.slane %v2864, 5
      %v3412 = vsel %vm792, %v3410, %v3411
      %v3413 = vrot.slane %v3371, 5
      %v3414 = vrot.slane %v3413, 4
      %v3415 = vrot.slane %v2853, 5
      %v3416 = vsel %vm792, %v3414, %v3415
      %v3417 = vrot.slane %v3415, 4
      %v3418 = vrot.slane %v2865, 5
      %v3419 = vsel %vm792, %v3417, %v3418
      %v3420 = vrot.slane %v3372, 5
      %v3421 = vrot.slane %v3420, 4
      %v3422 = vrot.slane %v2855, 5
      %v3423 = vsel %vm792, %v3421, %v3422
      %v3424 = vrot.slane %v3422, 4
      %v3425 = vrot.slane %v2866, 5
      %v3426 = vsel %vm792, %v3424, %v3425
      %v3427 = vrot.slane %v3373, 5
      %v3428 = vrot.slane %v3427, 4
      %v3429 = vrot.slane %v2857, 5
      %v3430 = vsel %vm792, %v3428, %v3429
      %v3431 = vrot.slane %v3429, 4
      %v3432 = vrot.slane %v2867, 5
      %v3433 = vsel %vm792, %v3431, %v3432
      %v3434 = vrot.slane %v3374, 5
      %v3435 = vrot.slane %v3434, 4
      %v3436 = vrot.slane %v2859, 5
      %v3437 = vsel %vm792, %v3435, %v3436
      %v3438 = vrot.slane %v3436, 4
      %v3439 = vrot.slane %v2868, 5
      %v3440 = vsel %vm792, %v3438, %v3439
      %v3441 = vrot.slane %v3375, 5
      %v3442 = vrot.slane %v3441, 4
      %v3443 = vrot.slane %v2861, 5
      %v3444 = vsel %vm792, %v3442, %v3443
      %v3445 = vrot.slane %v3443, 4
      %v3446 = vrot.slane %v2869, 5
      %v3447 = vsel %vm792, %v3445, %v3446
      %v3448 = vunpack.c.l.b16 %v3395
      %v3449 = vunpack.c.l.b16 %v3398
      %v3450 = vunpack.c.l.b16 %v3402
      %v3451 = vunpack.c.l.b16 %v3405
      %v3452 = vunpack.c.l.b16 %v3409
      %v3453 = vunpack.c.l.b16 %v3412
      %v3454 = vunpack.c.l.b16 %v3416
      %v3455 = vunpack.c.l.b16 %v3419
      %v3456 = vunpack.c.l.b16 %v3423
      %v3457 = vunpack.c.l.b16 %v3426
      %v3458 = vunpack.c.l.b16 %v3430
      %v3459 = vunpack.c.l.b16 %v3433
      %v3460 = vunpack.c.l.b16 %v3437
      %v3461 = vunpack.c.l.b16 %v3440
      %v3462 = vunpack.c.l.b16 %v3444
      %v3463 = vunpack.c.l.b16 %v3447
      %v3464 = vpack.c.b16 %v3449, %v3448
      %v3465 = vpack.c.b16 %v3451, %v3450
      %v3466 = vpack.c.b16 %v3453, %v3452
      %v3467 = vpack.c.b16 %v3455, %v3454
      %v3468 = vpack.c.b16 %v3457, %v3456
      %v3469 = vpack.c.b16 %v3459, %v3458
      %v3470 = vpack.c.b16 %v3461, %v3460
      %v3471 = vpack.c.b16 %v3463, %v3462
      %v3473 = vsel %vm476, %v3464, 0
      %v3476 = vsel %vm476, %v3465, 0
      %v3479 = vsel %vm476, %v3466, 0
      %v3482 = vsel %vm476, %v3467, 0
      %v3485 = vsel %vm476, %v3468, 0
      %v3488 = vsel %vm476, %v3469, 0
      %v3491 = vsel %vm476, %v3470, 0
      %v3494 = vsel %vm476, %v3471, 0
      %3496 = vmatprep.subr.bf16.mxu0 0
      %3497 = vmatpush1.bf16.msra.mxu0 0
      %3498 = vmatprep.subr.bf16.mxu0 0
      %3499 = vmatpush1.bf16.msra.mxu0 0
      %3500 = vmatprep.subr.bf16.mxu0 0
      %3501 = vmatpush1.bf16.msra.mxu0 0
      %3502 = vmatprep.subr.bf16.mxu0 0
      %3503 = vmatpush1.bf16.msra.mxu0 0
      %3504 = vmatprep.subr.bf16.mxu0 0
      %3505 = vmatpush1.bf16.msra.mxu0 0
      %3506 = vmatprep.subr.bf16.mxu0 0
      %3507 = vmatpush1.bf16.msra.mxu0 0
      %3508 = vmatprep.subr.bf16.mxu0 0
      %3509 = vmatpush1.bf16.msra.mxu0 0
      %3510 = vmatprep.subr.bf16.mxu0 0
      %3511 = vmatpush1.bf16.msra.mxu0 %v898
      %3512 = vmatprep.subr.bf16.mxu0 0
      %3513 = vmatpush2.bf16.msra.mxu0 0
      %3514 = vmatprep.subr.bf16.mxu0 0
      %3515 = vmatpush2.bf16.msra.mxu0 0
      %3516 = vmatprep.subr.bf16.mxu0 0
      %3517 = vmatpush2.bf16.msra.mxu0 0
      %3518 = vmatprep.subr.bf16.mxu0 0
      %3519 = vmatpush2.bf16.msra.mxu0 0
      %3520 = vmatprep.subr.bf16.mxu0 0
      %3521 = vmatpush2.bf16.msra.mxu0 0
      %3522 = vmatprep.subr.bf16.mxu0 0
      %3523 = vmatpush2.bf16.msra.mxu0 0
      %3524 = vmatprep.subr.bf16.mxu0 0
      %3525 = vmatpush2.bf16.msra.mxu0 0
      %3526 = vmatprep.subr.bf16.mxu0 0
      %3527 = vmatpush2.bf16.msra.mxu0 0
      %3528 = vmatprep.mubr.bf16.mxu0 0
      %3529 = vmatmul.mubr.bf16.gmra.mxu0 %v3473
      %v3530 = vpop.f32.mrf.mxu0
      %v3531 = vadd.f32 0.0, %v3530
      %v3532 = vpop.f32.mrf.mxu0
      %v3533 = vpop.f32.mrf.mxu0
      %v3534 = vadd.f32 0.0, %v3533
      %v3535 = vpop.f32.mrf.mxu0
      %3536 = vmatprep.mubr.bf16.mxu0 0
      %3537 = vmatmul.mubr.bf16.gmra.mxu0 %v3476
      %v3538 = vpop.f32.mrf.mxu0
      %v3539 = vadd.f32 0.0, %v3538
      %v3540 = vpop.f32.mrf.mxu0
      %v3541 = vpop.f32.mrf.mxu0
      %v3542 = vadd.f32 0.0, %v3541
      %v3543 = vpop.f32.mrf.mxu0
      %3544 = vmatprep.mubr.bf16.mxu0 0
      %3545 = vmatmul.mubr.bf16.gmra.mxu0 %v3479
      %v3546 = vpop.f32.mrf.mxu0
      %v3547 = vadd.f32 0.0, %v3546
      %v3548 = vpop.f32.mrf.mxu0
      %v3549 = vpop.f32.mrf.mxu0
      %v3550 = vadd.f32 0.0, %v3549
      %v3551 = vpop.f32.mrf.mxu0
      %3552 = vmatprep.mubr.bf16.mxu0 0
      %3553 = vmatmul.mubr.bf16.gmra.mxu0 %v3482
      %v3554 = vpop.f32.mrf.mxu0
      %v3555 = vadd.f32 0.0, %v3554
      %v3556 = vpop.f32.mrf.mxu0
      %v3557 = vpop.f32.mrf.mxu0
      %v3558 = vadd.f32 0.0, %v3557
      %v3559 = vpop.f32.mrf.mxu0
      %3560 = vmatprep.mubr.bf16.mxu0 0
      %3561 = vmatmul.mubr.bf16.gmra.mxu0 %v3485
      %v3562 = vpop.f32.mrf.mxu0
      %v3563 = vadd.f32 0.0, %v3562
      %v3564 = vpop.f32.mrf.mxu0
      %v3565 = vpop.f32.mrf.mxu0
      %v3566 = vadd.f32 0.0, %v3565
      %v3567 = vpop.f32.mrf.mxu0
      %3568 = vmatprep.mubr.bf16.mxu0 0
      %3569 = vmatmul.mubr.bf16.gmra.mxu0 %v3488
      %v3570 = vpop.f32.mrf.mxu0
      %v3571 = vadd.f32 0.0, %v3570
      %v3572 = vpop.f32.mrf.mxu0
      %v3573 = vpop.f32.mrf.mxu0
      %v3574 = vadd.f32 0.0, %v3573
      %v3575 = vpop.f32.mrf.mxu0
      %3576 = vmatprep.mubr.bf16.mxu0 0
      %3577 = vmatmul.mubr.bf16.gmra.mxu0 %v3491
      %v3578 = vpop.f32.mrf.mxu0
      %v3579 = vadd.f32 0.0, %v3578
      %v3580 = vpop.f32.mrf.mxu0
      %v3581 = vpop.f32.mrf.mxu0
      %v3582 = vadd.f32 0.0, %v3581
      %v3583 = vpop.f32.mrf.mxu0
      %3584 = vmatprep.mubr.bf16.mxu0 0
      %3585 = vmatmul.mubr.bf16.gmra.mxu0 %v3494
      %v3586 = vpop.f32.mrf.mxu0
      %v3587 = vadd.f32 0.0, %v3586
      %v3588 = vpop.f32.mrf.mxu0
      %v3589 = vpop.f32.mrf.mxu0
      %v3590 = vadd.f32 0.0, %v3589
      %v3591 = vpop.f32.mrf.mxu0
      %3592 = vdwg.mxu0
      %v3593 = vadd.f32 %v3306, %v3531
      %v3594 = vadd.f32 %v3309, %v3534
      %v3595 = vadd.f32 %v3314, %v3539
      %v3596 = vadd.f32 %v3317, %v3542
      %v3597 = vadd.f32 %v3322, %v3547
      %v3598 = vadd.f32 %v3325, %v3550
      %v3599 = vadd.f32 %v3330, %v3555
      %v3600 = vadd.f32 %v3333, %v3558
      %v3601 = vadd.f32 %v3338, %v3563
      %v3602 = vadd.f32 %v3341, %v3566
      %v3603 = vadd.f32 %v3346, %v3571
      %v3604 = vadd.f32 %v3349, %v3574
      %v3605 = vadd.f32 %v3354, %v3579
      %v3606 = vadd.f32 %v3357, %v3582
      %v3607 = vadd.f32 %v3362, %v3587
      %v3608 = vadd.f32 %v3365, %v3590
      %s3609 = scalar_lea.vmem %s203, 108
      %v3610 = vld [vmem:[%s3609] sm:$0xf]
      %v3611 = vld [vmem:[%s3609 + $0x4] sm:$0xf]
      %v3612 = vld [vmem:[%s3609 + $0xc] sm:$0xf]
      %v3613 = vld [vmem:[%s3609 + $0x10] sm:$0xf]
      %v3614 = vld [vmem:[%s3609 + $0x18] sm:$0xf]
      %v3615 = vld [vmem:[%s3609 + $0x1c] sm:$0xf]
      %v3616 = vld [vmem:[%s3609 + $0x24] sm:$0xf]
      %v3617 = vld [vmem:[%s3609 + $0x28] sm:$0xf]
      %v3618 = vld [vmem:[%s3609 + $0x30] sm:$0xf]
      %v3619 = vld [vmem:[%s3609 + $0x34] sm:$0xf]
      %v3620 = vld [vmem:[%s3609 + $0x3c] sm:$0xf]
      %v3621 = vld [vmem:[%s3609 + $0x40] sm:$0xf]
      %v3622 = vld [vmem:[%s3609 + $0x48] sm:$0xf]
      %v3623 = vld [vmem:[%s3609 + $0x4c] sm:$0xf]
      %v3624 = vld [vmem:[%s3609 + $0x54] sm:$0xf]
      %v3625 = vld [vmem:[%s3609 + $0x58] sm:$0xf]
      %v3642 = vunpack.c.l.b16 %v3610
      %v3643 = vunpack.c.l.b16 %v3611
      %v3644 = vunpack.c.l.b16 %v3612
      %v3645 = vunpack.c.l.b16 %v3613
      %v3646 = vunpack.c.l.b16 %v3614
      %v3647 = vunpack.c.l.b16 %v3615
      %v3648 = vunpack.c.l.b16 %v3616
      %v3649 = vunpack.c.l.b16 %v3617
      %v3650 = vunpack.c.l.b16 %v3618
      %v3651 = vunpack.c.l.b16 %v3619
      %v3652 = vunpack.c.l.b16 %v3620
      %v3653 = vunpack.c.l.b16 %v3621
      %v3654 = vunpack.c.l.b16 %v3622
      %v3655 = vunpack.c.l.b16 %v3623
      %v3656 = vunpack.c.l.b16 %v3624
      %v3657 = vunpack.c.l.b16 %v3625
      %v3658 = vpack.c.b16 %v3643, %v3642
      %v3659 = vpack.c.b16 %v3645, %v3644
      %v3660 = vpack.c.b16 %v3647, %v3646
      %v3661 = vpack.c.b16 %v3649, %v3648
      %v3662 = vpack.c.b16 %v3651, %v3650
      %v3663 = vpack.c.b16 %v3653, %v3652
      %v3664 = vpack.c.b16 %v3655, %v3654
      %v3665 = vpack.c.b16 %v3657, %v3656
      %v3667 = vsel %vm476, %v3658, 0
      %v3670 = vsel %vm476, %v3659, 0
      %v3673 = vsel %vm476, %v3660, 0
      %v3676 = vsel %vm476, %v3661, 0
      %v3679 = vsel %vm476, %v3662, 0
      %v3682 = vsel %vm476, %v3663, 0
      %v3685 = vsel %vm476, %v3664, 0
      %v3688 = vsel %vm476, %v3665, 0
      %3690 = vmatprep.subr.bf16.mxu0 0
      %3691 = vmatpush1.bf16.msra.mxu0 0
      %3692 = vmatprep.subr.bf16.mxu0 0
      %3693 = vmatpush1.bf16.msra.mxu0 0
      %3694 = vmatprep.subr.bf16.mxu0 0
      %3695 = vmatpush1.bf16.msra.mxu0 0
      %3696 = vmatprep.subr.bf16.mxu0 0
      %3697 = vmatpush1.bf16.msra.mxu0 0
      %3698 = vmatprep.subr.bf16.mxu0 0
      %3699 = vmatpush1.bf16.msra.mxu0 0
      %3700 = vmatprep.subr.bf16.mxu0 0
      %3701 = vmatpush1.bf16.msra.mxu0 0
      %3702 = vmatprep.subr.bf16.mxu0 0
      %3703 = vmatpush1.bf16.msra.mxu0 0
      %3704 = vmatprep.subr.bf16.mxu0 0
      %3705 = vmatpush1.bf16.msra.mxu0 %v1095
      %3706 = vmatprep.subr.bf16.mxu0 0
      %3707 = vmatpush2.bf16.msra.mxu0 0
      %3708 = vmatprep.subr.bf16.mxu0 0
      %3709 = vmatpush2.bf16.msra.mxu0 0
      %3710 = vmatprep.subr.bf16.mxu0 0
      %3711 = vmatpush2.bf16.msra.mxu0 0
      %3712 = vmatprep.subr.bf16.mxu0 0
      %3713 = vmatpush2.bf16.msra.mxu0 0
      %3714 = vmatprep.subr.bf16.mxu0 0
      %3715 = vmatpush2.bf16.msra.mxu0 0
      %3716 = vmatprep.subr.bf16.mxu0 0
      %3717 = vmatpush2.bf16.msra.mxu0 0
      %3718 = vmatprep.subr.bf16.mxu0 0
      %3719 = vmatpush2.bf16.msra.mxu0 0
      %3720 = vmatprep.subr.bf16.mxu0 0
      %3721 = vmatpush2.bf16.msra.mxu0 0
      %3722 = vmatprep.mubr.bf16.mxu0 0
      %3723 = vmatmul.mubr.bf16.gmra.mxu0 %v3667
      %v3724 = vpop.f32.mrf.mxu0
      %v3725 = vadd.f32 0.0, %v3724
      %v3726 = vpop.f32.mrf.mxu0
      %v3727 = vpop.f32.mrf.mxu0
      %v3728 = vadd.f32 0.0, %v3727
      %v3729 = vpop.f32.mrf.mxu0
      %3730 = vmatprep.mubr.bf16.mxu0 0
      %3731 = vmatmul.mubr.bf16.gmra.mxu0 %v3670
      %v3732 = vpop.f32.mrf.mxu0
      %v3733 = vadd.f32 0.0, %v3732
      %v3734 = vpop.f32.mrf.mxu0
      %v3735 = vpop.f32.mrf.mxu0
      %v3736 = vadd.f32 0.0, %v3735
      %v3737 = vpop.f32.mrf.mxu0
      %3738 = vmatprep.mubr.bf16.mxu0 0
      %3739 = vmatmul.mubr.bf16.gmra.mxu0 %v3673
      %v3740 = vpop.f32.mrf.mxu0
      %v3741 = vadd.f32 0.0, %v3740
      %v3742 = vpop.f32.mrf.mxu0
      %v3743 = vpop.f32.mrf.mxu0
      %v3744 = vadd.f32 0.0, %v3743
      %v3745 = vpop.f32.mrf.mxu0
      %3746 = vmatprep.mubr.bf16.mxu0 0
      %3747 = vmatmul.mubr.bf16.gmra.mxu0 %v3676
      %v3748 = vpop.f32.mrf.mxu0
      %v3749 = vadd.f32 0.0, %v3748
      %v3750 = vpop.f32.mrf.mxu0
      %v3751 = vpop.f32.mrf.mxu0
      %v3752 = vadd.f32 0.0, %v3751
      %v3753 = vpop.f32.mrf.mxu0
      %3754 = vmatprep.mubr.bf16.mxu0 0
      %3755 = vmatmul.mubr.bf16.gmra.mxu0 %v3679
      %v3756 = vpop.f32.mrf.mxu0
      %v3757 = vadd.f32 0.0, %v3756
      %v3758 = vpop.f32.mrf.mxu0
      %v3759 = vpop.f32.mrf.mxu0
      %v3760 = vadd.f32 0.0, %v3759
      %v3761 = vpop.f32.mrf.mxu0
      %3762 = vmatprep.mubr.bf16.mxu0 0
      %3763 = vmatmul.mubr.bf16.gmra.mxu0 %v3682
      %v3764 = vpop.f32.mrf.mxu0
      %v3765 = vadd.f32 0.0, %v3764
      %v3766 = vpop.f32.mrf.mxu0
      %v3767 = vpop.f32.mrf.mxu0
      %v3768 = vadd.f32 0.0, %v3767
      %v3769 = vpop.f32.mrf.mxu0
      %3770 = vmatprep.mubr.bf16.mxu0 0
      %3771 = vmatmul.mubr.bf16.gmra.mxu0 %v3685
      %v3772 = vpop.f32.mrf.mxu0
      %v3773 = vadd.f32 0.0, %v3772
      %v3774 = vpop.f32.mrf.mxu0
      %v3775 = vpop.f32.mrf.mxu0
      %v3776 = vadd.f32 0.0, %v3775
      %v3777 = vpop.f32.mrf.mxu0
      %3778 = vmatprep.mubr.bf16.mxu0 0
      %3779 = vmatmul.mubr.bf16.gmra.mxu0 %v3688
      %v3780 = vpop.f32.mrf.mxu0
      %v3781 = vadd.f32 0.0, %v3780
      %v3782 = vpop.f32.mrf.mxu0
      %v3783 = vpop.f32.mrf.mxu0
      %v3784 = vadd.f32 0.0, %v3783
      %v3785 = vpop.f32.mrf.mxu0
      %3786 = vdwg.mxu0
      %v3787 = vadd.f32 %v3593, %v3725
      %v3788 = vadd.f32 %v3594, %v3728
      %v3789 = vadd.f32 %v3595, %v3733
      %v3790 = vadd.f32 %v3596, %v3736
      %v3791 = vadd.f32 %v3597, %v3741
      %v3792 = vadd.f32 %v3598, %v3744
      %v3793 = vadd.f32 %v3599, %v3749
      %v3794 = vadd.f32 %v3600, %v3752
      %v3795 = vadd.f32 %v3601, %v3757
      %v3796 = vadd.f32 %v3602, %v3760
      %v3797 = vadd.f32 %v3603, %v3765
      %v3798 = vadd.f32 %v3604, %v3768
      %v3799 = vadd.f32 %v3605, %v3773
      %v3800 = vadd.f32 %v3606, %v3776
      %v3801 = vadd.f32 %v3607, %v3781
      %v3802 = vadd.f32 %v3608, %v3784
      %v3803 = vld [vmem:[%s3609] sm:$0xf]
      %v3804 = vld [vmem:[%s3609 + $0x4] sm:$0xf]
      %v3805 = vld [vmem:[%s3609 + $0x8] sm:$0x1]
      %v3806 = vld [vmem:[%s3609 + $0xc] sm:$0xf]
      %v3807 = vld [vmem:[%s3609 + $0x10] sm:$0xf]
      %v3808 = vld [vmem:[%s3609 + $0x14] sm:$0x1]
      %v3809 = vld [vmem:[%s3609 + $0x18] sm:$0xf]
      %v3810 = vld [vmem:[%s3609 + $0x1c] sm:$0xf]
      %v3811 = vld [vmem:[%s3609 + $0x20] sm:$0x1]
      %v3812 = vld [vmem:[%s3609 + $0x24] sm:$0xf]
      %v3813 = vld [vmem:[%s3609 + $0x28] sm:$0xf]
      %v3814 = vld [vmem:[%s3609 + $0x2c] sm:$0x1]
      %v3815 = vld [vmem:[%s3609 + $0x30] sm:$0xf]
      %v3816 = vld [vmem:[%s3609 + $0x34] sm:$0xf]
      %v3817 = vld [vmem:[%s3609 + $0x38] sm:$0x1]
      %v3818 = vld [vmem:[%s3609 + $0x3c] sm:$0xf]
      %v3819 = vld [vmem:[%s3609 + $0x40] sm:$0xf]
      %v3820 = vld [vmem:[%s3609 + $0x44] sm:$0x1]
      %v3821 = vld [vmem:[%s3609 + $0x48] sm:$0xf]
      %v3822 = vld [vmem:[%s3609 + $0x4c] sm:$0xf]
      %v3823 = vld [vmem:[%s3609 + $0x50] sm:$0x1]
      %v3824 = vld [vmem:[%s3609 + $0x54] sm:$0xf]
      %v3825 = vld [vmem:[%s3609 + $0x58] sm:$0xf]
      %v3826 = vld [vmem:[%s3609 + $0x5c] sm:$0x1]
      %v3828 = vshrl.u32 %v3803, 16
      %v3830 = vrot.slane %v3828, 4
      %v3831 = vshll.u32 %v3803, 16
      %v3833 = vrot.slane %v3831, 5
      %v3834 = vor.u32 %v3830, %v3833
      %v3835 = vrot.slane %v3834, 4
      %v3837 = vshll.u32 %v3804, 16
      %v3839 = vrot.slane %v3837, 5
      %v3840 = vsel %vm259, %v3835, %v3839
      %v3841 = vshrl.u32 %v3804, 16
      %v3843 = vrot.slane %v3841, 4
      %v3844 = vor.u32 %v3843, %v3839
      %v3845 = vrot.slane %v3844, 4
      %v3847 = vshll.u32 %v3805, 16
      %v3849 = vrot.slane %v3847, 5
      %v3850 = vsel %vm259, %v3845, %v3849
      %v3852 = vshrl.u32 %v3806, 16
      %v3854 = vrot.slane %v3852, 4
      %v3855 = vshll.u32 %v3806, 16
      %v3857 = vrot.slane %v3855, 5
      %v3858 = vor.u32 %v3854, %v3857
      %v3859 = vrot.slane %v3858, 4
      %v3861 = vshll.u32 %v3807, 16
      %v3863 = vrot.slane %v3861, 5
      %v3864 = vsel %vm259, %v3859, %v3863
      %v3865 = vshrl.u32 %v3807, 16
      %v3867 = vrot.slane %v3865, 4
      %v3868 = vor.u32 %v3867, %v3863
      %v3869 = vrot.slane %v3868, 4
      %v3871 = vshll.u32 %v3808, 16
      %v3873 = vrot.slane %v3871, 5
      %v3874 = vsel %vm259, %v3869, %v3873
      %v3876 = vshrl.u32 %v3809, 16
      %v3878 = vrot.slane %v3876, 4
      %v3879 = vshll.u32 %v3809, 16
      %v3881 = vrot.slane %v3879, 5
      %v3882 = vor.u32 %v3878, %v3881
      %v3883 = vrot.slane %v3882, 4
      %v3885 = vshll.u32 %v3810, 16
      %v3887 = vrot.slane %v3885, 5
      %v3888 = vsel %vm259, %v3883, %v3887
      %v3889 = vshrl.u32 %v3810, 16
      %v3891 = vrot.slane %v3889, 4
      %v3892 = vor.u32 %v3891, %v3887
      %v3893 = vrot.slane %v3892, 4
      %v3895 = vshll.u32 %v3811, 16
      %v3897 = vrot.slane %v3895, 5
      %v3898 = vsel %vm259, %v3893, %v3897
      %v3900 = vshrl.u32 %v3812, 16
      %v3902 = vrot.slane %v3900, 4
      %v3903 = vshll.u32 %v3812, 16
      %v3905 = vrot.slane %v3903, 5
      %v3906 = vor.u32 %v3902, %v3905
      %v3907 = vrot.slane %v3906, 4
      %v3909 = vshll.u32 %v3813, 16
      %v3911 = vrot.slane %v3909, 5
      %v3912 = vsel %vm259, %v3907, %v3911
      %v3913 = vshrl.u32 %v3813, 16
      %v3915 = vrot.slane %v3913, 4
      %v3916 = vor.u32 %v3915, %v3911
      %v3917 = vrot.slane %v3916, 4
      %v3919 = vshll.u32 %v3814, 16
      %v3921 = vrot.slane %v3919, 5
      %v3922 = vsel %vm259, %v3917, %v3921
      %v3924 = vshrl.u32 %v3815, 16
      %v3926 = vrot.slane %v3924, 4
      %v3927 = vshll.u32 %v3815, 16
      %v3929 = vrot.slane %v3927, 5
      %v3930 = vor.u32 %v3926, %v3929
      %v3931 = vrot.slane %v3930, 4
      %v3933 = vshll.u32 %v3816, 16
      %v3935 = vrot.slane %v3933, 5
      %v3936 = vsel %vm259, %v3931, %v3935
      %v3937 = vshrl.u32 %v3816, 16
      %v3939 = vrot.slane %v3937, 4
      %v3940 = vor.u32 %v3939, %v3935
      %v3941 = vrot.slane %v3940, 4
      %v3943 = vshll.u32 %v3817, 16
      %v3945 = vrot.slane %v3943, 5
      %v3946 = vsel %vm259, %v3941, %v3945
      %v3948 = vshrl.u32 %v3818, 16
      %v3950 = vrot.slane %v3948, 4
      %v3951 = vshll.u32 %v3818, 16
      %v3953 = vrot.slane %v3951, 5
      %v3954 = vor.u32 %v3950, %v3953
      %v3955 = vrot.slane %v3954, 4
      %v3957 = vshll.u32 %v3819, 16
      %v3959 = vrot.slane %v3957, 5
      %v3960 = vsel %vm259, %v3955, %v3959
      %v3961 = vshrl.u32 %v3819, 16
      %v3963 = vrot.slane %v3961, 4
      %v3964 = vor.u32 %v3963, %v3959
      %v3965 = vrot.slane %v3964, 4
      %v3967 = vshll.u32 %v3820, 16
      %v3969 = vrot.slane %v3967, 5
      %v3970 = vsel %vm259, %v3965, %v3969
      %v3972 = vshrl.u32 %v3821, 16
      %v3974 = vrot.slane %v3972, 4
      %v3975 = vshll.u32 %v3821, 16
      %v3977 = vrot.slane %v3975, 5
      %v3978 = vor.u32 %v3974, %v3977
      %v3979 = vrot.slane %v3978, 4
      %v3981 = vshll.u32 %v3822, 16
      %v3983 = vrot.slane %v3981, 5
      %v3984 = vsel %vm259, %v3979, %v3983
      %v3985 = vshrl.u32 %v3822, 16
      %v3987 = vrot.slane %v3985, 4
      %v3988 = vor.u32 %v3987, %v3983
      %v3989 = vrot.slane %v3988, 4
      %v3991 = vshll.u32 %v3823, 16
      %v3993 = vrot.slane %v3991, 5
      %v3994 = vsel %vm259, %v3989, %v3993
      %v3996 = vshrl.u32 %v3824, 16
      %v3998 = vrot.slane %v3996, 4
      %v3999 = vshll.u32 %v3824, 16
      %v4001 = vrot.slane %v3999, 5
      %v4002 = vor.u32 %v3998, %v4001
      %v4003 = vrot.slane %v4002, 4
      %v4005 = vshll.u32 %v3825, 16
      %v4007 = vrot.slane %v4005, 5
      %v4008 = vsel %vm259, %v4003, %v4007
      %v4009 = vshrl.u32 %v3825, 16
      %v4011 = vrot.slane %v4009, 4
      %v4012 = vor.u32 %v4011, %v4007
      %v4013 = vrot.slane %v4012, 4
      %v4015 = vshll.u32 %v3826, 16
      %v4017 = vrot.slane %v4015, 5
      %v4018 = vsel %vm259, %v4013, %v4017
      %v4019 = vunpack.c.l.b16 %v3840
      %v4020 = vunpack.c.l.b16 %v3850
      %v4021 = vunpack.c.l.b16 %v3864
      %v4022 = vunpack.c.l.b16 %v3874
      %v4023 = vunpack.c.l.b16 %v3888
      %v4024 = vunpack.c.l.b16 %v3898
      %v4025 = vunpack.c.l.b16 %v3912
      %v4026 = vunpack.c.l.b16 %v3922
      %v4027 = vunpack.c.l.b16 %v3936
      %v4028 = vunpack.c.l.b16 %v3946
      %v4029 = vunpack.c.l.b16 %v3960
      %v4030 = vunpack.c.l.b16 %v3970
      %v4031 = vunpack.c.l.b16 %v3984
      %v4032 = vunpack.c.l.b16 %v3994
      %v4033 = vunpack.c.l.b16 %v4008
      %v4034 = vunpack.c.l.b16 %v4018
      %v4035 = vpack.c.b16 %v4020, %v4019
      %v4036 = vpack.c.b16 %v4022, %v4021
      %v4037 = vpack.c.b16 %v4024, %v4023
      %v4038 = vpack.c.b16 %v4026, %v4025
      %v4039 = vpack.c.b16 %v4028, %v4027
      %v4040 = vpack.c.b16 %v4030, %v4029
      %v4041 = vpack.c.b16 %v4032, %v4031
      %v4042 = vpack.c.b16 %v4034, %v4033
      %v4044 = vsel %vm476, %v4035, 0
      %v4047 = vsel %vm476, %v4036, 0
      %v4050 = vsel %vm476, %v4037, 0
      %v4053 = vsel %vm476, %v4038, 0
      %v4056 = vsel %vm476, %v4039, 0
      %v4059 = vsel %vm476, %v4040, 0
      %v4062 = vsel %vm476, %v4041, 0
      %v4065 = vsel %vm476, %v4042, 0
      %4067 = vmatprep.subr.bf16.mxu0 0
      %4068 = vmatpush1.bf16.msra.mxu0 0
      %4069 = vmatprep.subr.bf16.mxu0 0
      %4070 = vmatpush1.bf16.msra.mxu0 0
      %4071 = vmatprep.subr.bf16.mxu0 0
      %4072 = vmatpush1.bf16.msra.mxu0 0
      %4073 = vmatprep.subr.bf16.mxu0 0
      %4074 = vmatpush1.bf16.msra.mxu0 0
      %4075 = vmatprep.subr.bf16.mxu0 0
      %4076 = vmatpush1.bf16.msra.mxu0 0
      %4077 = vmatprep.subr.bf16.mxu0 0
      %4078 = vmatpush1.bf16.msra.mxu0 0
      %4079 = vmatprep.subr.bf16.mxu0 0
      %4080 = vmatpush1.bf16.msra.mxu0 0
      %4081 = vmatprep.subr.bf16.mxu0 0
      %4082 = vmatpush1.bf16.msra.mxu0 %v1475
      %4083 = vmatprep.subr.bf16.mxu0 0
      %4084 = vmatpush2.bf16.msra.mxu0 0
      %4085 = vmatprep.subr.bf16.mxu0 0
      %4086 = vmatpush2.bf16.msra.mxu0 0
      %4087 = vmatprep.subr.bf16.mxu0 0
      %4088 = vmatpush2.bf16.msra.mxu0 0
      %4089 = vmatprep.subr.bf16.mxu0 0
      %4090 = vmatpush2.bf16.msra.mxu0 0
      %4091 = vmatprep.subr.bf16.mxu0 0
      %4092 = vmatpush2.bf16.msra.mxu0 0
      %4093 = vmatprep.subr.bf16.mxu0 0
      %4094 = vmatpush2.bf16.msra.mxu0 0
      %4095 = vmatprep.subr.bf16.mxu0 0
      %4096 = vmatpush2.bf16.msra.mxu0 0
      %4097 = vmatprep.subr.bf16.mxu0 0
      %4098 = vmatpush2.bf16.msra.mxu0 0
      %4099 = vmatprep.mubr.bf16.mxu0 0
      %4100 = vmatmul.mubr.bf16.gmra.mxu0 %v4044
      %v4101 = vpop.f32.mrf.mxu0
      %v4102 = vadd.f32 0.0, %v4101
      %v4103 = vpop.f32.mrf.mxu0
      %v4104 = vpop.f32.mrf.mxu0
      %v4105 = vadd.f32 0.0, %v4104
      %v4106 = vpop.f32.mrf.mxu0
      %4107 = vmatprep.mubr.bf16.mxu0 0
      %4108 = vmatmul.mubr.bf16.gmra.mxu0 %v4047
      %v4109 = vpop.f32.mrf.mxu0
      %v4110 = vadd.f32 0.0, %v4109
      %v4111 = vpop.f32.mrf.mxu0
      %v4112 = vpop.f32.mrf.mxu0
      %v4113 = vadd.f32 0.0, %v4112
      %v4114 = vpop.f32.mrf.mxu0
      %4115 = vmatprep.mubr.bf16.mxu0 0
      %4116 = vmatmul.mubr.bf16.gmra.mxu0 %v4050
      %v4117 = vpop.f32.mrf.mxu0
      %v4118 = vadd.f32 0.0, %v4117
      %v4119 = vpop.f32.mrf.mxu0
      %v4120 = vpop.f32.mrf.mxu0
      %v4121 = vadd.f32 0.0, %v4120
      %v4122 = vpop.f32.mrf.mxu0
      %4123 = vmatprep.mubr.bf16.mxu0 0
      %4124 = vmatmul.mubr.bf16.gmra.mxu0 %v4053
      %v4125 = vpop.f32.mrf.mxu0
      %v4126 = vadd.f32 0.0, %v4125
      %v4127 = vpop.f32.mrf.mxu0
      %v4128 = vpop.f32.mrf.mxu0
      %v4129 = vadd.f32 0.0, %v4128
      %v4130 = vpop.f32.mrf.mxu0
      %4131 = vmatprep.mubr.bf16.mxu0 0
      %4132 = vmatmul.mubr.bf16.gmra.mxu0 %v4056
      %v4133 = vpop.f32.mrf.mxu0
      %v4134 = vadd.f32 0.0, %v4133
      %v4135 = vpop.f32.mrf.mxu0
      %v4136 = vpop.f32.mrf.mxu0
      %v4137 = vadd.f32 0.0, %v4136
      %v4138 = vpop.f32.mrf.mxu0
      %4139 = vmatprep.mubr.bf16.mxu0 0
      %4140 = vmatmul.mubr.bf16.gmra.mxu0 %v4059
      %v4141 = vpop.f32.mrf.mxu0
      %v4142 = vadd.f32 0.0, %v4141
      %v4143 = vpop.f32.mrf.mxu0
      %v4144 = vpop.f32.mrf.mxu0
      %v4145 = vadd.f32 0.0, %v4144
      %v4146 = vpop.f32.mrf.mxu0
      %4147 = vmatprep.mubr.bf16.mxu0 0
      %4148 = vmatmul.mubr.bf16.gmra.mxu0 %v4062
      %v4149 = vpop.f32.mrf.mxu0
      %v4150 = vadd.f32 0.0, %v4149
      %v4151 = vpop.f32.mrf.mxu0
      %v4152 = vpop.f32.mrf.mxu0
      %v4153 = vadd.f32 0.0, %v4152
      %v4154 = vpop.f32.mrf.mxu0
      %4155 = vmatprep.mubr.bf16.mxu0 0
      %4156 = vmatmul.mubr.bf16.gmra.mxu0 %v4065
      %v4157 = vpop.f32.mrf.mxu0
      %v4158 = vadd.f32 0.0, %v4157
      %v4159 = vpop.f32.mrf.mxu0
      %v4160 = vpop.f32.mrf.mxu0
      %v4161 = vadd.f32 0.0, %v4160
      %v4162 = vpop.f32.mrf.mxu0
      %4163 = vdwg.mxu0
      %v4164 = vadd.f32 %v3787, %v4102
      %v4165 = vadd.f32 %v3788, %v4105
      %v4166 = vadd.f32 %v3789, %v4110
      %v4167 = vadd.f32 %v3790, %v4113
      %v4168 = vadd.f32 %v3791, %v4118
      %v4169 = vadd.f32 %v3792, %v4121
      %v4170 = vadd.f32 %v3793, %v4126
      %v4171 = vadd.f32 %v3794, %v4129
      %v4172 = vadd.f32 %v3795, %v4134
      %v4173 = vadd.f32 %v3796, %v4137
      %v4174 = vadd.f32 %v3797, %v4142
      %v4175 = vadd.f32 %v3798, %v4145
      %v4176 = vadd.f32 %v3799, %v4150
      %v4177 = vadd.f32 %v3800, %v4153
      %v4178 = vadd.f32 %v3801, %v4158
      %v4179 = vadd.f32 %v3802, %v4161
      %v4180 = vld [vmem:[%s3609] sm:$0xe]
      %v4181 = vld [vmem:[%s3609 + $0xc] sm:$0xe]
      %v4182 = vld [vmem:[%s3609 + $0x18] sm:$0xe]
      %v4183 = vld [vmem:[%s3609 + $0x24] sm:$0xe]
      %v4184 = vld [vmem:[%s3609 + $0x30] sm:$0xe]
      %v4185 = vld [vmem:[%s3609 + $0x3c] sm:$0xe]
      %v4186 = vld [vmem:[%s3609 + $0x48] sm:$0xe]
      %v4187 = vld [vmem:[%s3609 + $0x54] sm:$0xe]
      %v4212 = vrot.slane %v4180, 5
      %v4213 = vrot.slane %v4212, 4
      %v4214 = vrot.slane %v3804, 5
      %v4215 = vsel %vm792, %v4213, %v4214
      %v4216 = vrot.slane %v4214, 4
      %v4217 = vrot.slane %v3805, 5
      %v4218 = vsel %vm792, %v4216, %v4217
      %v4219 = vrot.slane %v4181, 5
      %v4220 = vrot.slane %v4219, 4
      %v4221 = vrot.slane %v3807, 5
      %v4222 = vsel %vm792, %v4220, %v4221
      %v4223 = vrot.slane %v4221, 4
      %v4224 = vrot.slane %v3808, 5
      %v4225 = vsel %vm792, %v4223, %v4224
      %v4226 = vrot.slane %v4182, 5
      %v4227 = vrot.slane %v4226, 4
      %v4228 = vrot.slane %v3810, 5
      %v4229 = vsel %vm792, %v4227, %v4228
      %v4230 = vrot.slane %v4228, 4
      %v4231 = vrot.slane %v3811, 5
      %v4232 = vsel %vm792, %v4230, %v4231
      %v4233 = vrot.slane %v4183, 5
      %v4234 = vrot.slane %v4233, 4
      %v4235 = vrot.slane %v3813, 5
      %v4236 = vsel %vm792, %v4234, %v4235
      %v4237 = vrot.slane %v4235, 4
      %v4238 = vrot.slane %v3814, 5
      %v4239 = vsel %vm792, %v4237, %v4238
      %v4240 = vrot.slane %v4184, 5
      %v4241 = vrot.slane %v4240, 4
      %v4242 = vrot.slane %v3816, 5
      %v4243 = vsel %vm792, %v4241, %v4242
      %v4244 = vrot.slane %v4242, 4
      %v4245 = vrot.slane %v3817, 5
      %v4246 = vsel %vm792, %v4244, %v4245
      %v4247 = vrot.slane %v4185, 5
      %v4248 = vrot.slane %v4247, 4
      %v4249 = vrot.slane %v3819, 5
      %v4250 = vsel %vm792, %v4248, %v4249
      %v4251 = vrot.slane %v4249, 4
      %v4252 = vrot.slane %v3820, 5
      %v4253 = vsel %vm792, %v4251, %v4252
      %v4254 = vrot.slane %v4186, 5
      %v4255 = vrot.slane %v4254, 4
      %v4256 = vrot.slane %v3822, 5
      %v4257 = vsel %vm792, %v4255, %v4256
      %v4258 = vrot.slane %v4256, 4
      %v4259 = vrot.slane %v3823, 5
      %v4260 = vsel %vm792, %v4258, %v4259
      %v4261 = vrot.slane %v4187, 5
      %v4262 = vrot.slane %v4261, 4
      %v4263 = vrot.slane %v3825, 5
      %v4264 = vsel %vm792, %v4262, %v4263
      %v4265 = vrot.slane %v4263, 4
      %v4266 = vrot.slane %v3826, 5
      %v4267 = vsel %vm792, %v4265, %v4266
      %v4268 = vunpack.c.l.b16 %v4215
      %v4269 = vunpack.c.l.b16 %v4218
      %v4270 = vunpack.c.l.b16 %v4222
      %v4271 = vunpack.c.l.b16 %v4225
      %v4272 = vunpack.c.l.b16 %v4229
      %v4273 = vunpack.c.l.b16 %v4232
      %v4274 = vunpack.c.l.b16 %v4236
      %v4275 = vunpack.c.l.b16 %v4239
      %v4276 = vunpack.c.l.b16 %v4243
      %v4277 = vunpack.c.l.b16 %v4246
      %v4278 = vunpack.c.l.b16 %v4250
      %v4279 = vunpack.c.l.b16 %v4253
      %v4280 = vunpack.c.l.b16 %v4257
      %v4281 = vunpack.c.l.b16 %v4260
      %v4282 = vunpack.c.l.b16 %v4264
      %v4283 = vunpack.c.l.b16 %v4267
      %v4284 = vpack.c.b16 %v4269, %v4268
      %v4285 = vpack.c.b16 %v4271, %v4270
      %v4286 = vpack.c.b16 %v4273, %v4272
      %v4287 = vpack.c.b16 %v4275, %v4274
      %v4288 = vpack.c.b16 %v4277, %v4276
      %v4289 = vpack.c.b16 %v4279, %v4278
      %v4290 = vpack.c.b16 %v4281, %v4280
      %v4291 = vpack.c.b16 %v4283, %v4282
      %v4293 = vsel %vm476, %v4284, 0
      %v4296 = vsel %vm476, %v4285, 0
      %v4299 = vsel %vm476, %v4286, 0
      %v4302 = vsel %vm476, %v4287, 0
      %v4305 = vsel %vm476, %v4288, 0
      %v4308 = vsel %vm476, %v4289, 0
      %v4311 = vsel %vm476, %v4290, 0
      %v4314 = vsel %vm476, %v4291, 0
      %4316 = vmatprep.subr.bf16.mxu0 0
      %4317 = vmatpush1.bf16.msra.mxu0 0
      %4318 = vmatprep.subr.bf16.mxu0 0
      %4319 = vmatpush1.bf16.msra.mxu0 0
      %4320 = vmatprep.subr.bf16.mxu0 0
      %4321 = vmatpush1.bf16.msra.mxu0 0
      %4322 = vmatprep.subr.bf16.mxu0 0
      %4323 = vmatpush1.bf16.msra.mxu0 0
      %4324 = vmatprep.subr.bf16.mxu0 0
      %4325 = vmatpush1.bf16.msra.mxu0 0
      %4326 = vmatprep.subr.bf16.mxu0 0
      %4327 = vmatpush1.bf16.msra.mxu0 0
      %4328 = vmatprep.subr.bf16.mxu0 0
      %4329 = vmatpush1.bf16.msra.mxu0 0
      %4330 = vmatprep.subr.bf16.mxu0 0
      %4331 = vmatpush1.bf16.msra.mxu0 %v1727
      %4332 = vmatprep.subr.bf16.mxu0 0
      %4333 = vmatpush2.bf16.msra.mxu0 0
      %4334 = vmatprep.subr.bf16.mxu0 0
      %4335 = vmatpush2.bf16.msra.mxu0 0
      %4336 = vmatprep.subr.bf16.mxu0 0
      %4337 = vmatpush2.bf16.msra.mxu0 0
      %4338 = vmatprep.subr.bf16.mxu0 0
      %4339 = vmatpush2.bf16.msra.mxu0 0
      %4340 = vmatprep.subr.bf16.mxu0 0
      %4341 = vmatpush2.bf16.msra.mxu0 0
      %4342 = vmatprep.subr.bf16.mxu0 0
      %4343 = vmatpush2.bf16.msra.mxu0 0
      %4344 = vmatprep.subr.bf16.mxu0 0
      %4345 = vmatpush2.bf16.msra.mxu0 0
      %4346 = vmatprep.subr.bf16.mxu0 0
      %4347 = vmatpush2.bf16.msra.mxu0 0
      %4348 = vmatprep.mubr.bf16.mxu0 0
      %4349 = vmatmul.mubr.bf16.gmra.mxu0 %v4293
      %v4350 = vpop.f32.mrf.mxu0
      %v4351 = vadd.f32 0.0, %v4350
      %v4352 = vpop.f32.mrf.mxu0
      %v4353 = vpop.f32.mrf.mxu0
      %v4354 = vadd.f32 0.0, %v4353
      %v4355 = vpop.f32.mrf.mxu0
      %4356 = vmatprep.mubr.bf16.mxu0 0
      %4357 = vmatmul.mubr.bf16.gmra.mxu0 %v4296
      %v4358 = vpop.f32.mrf.mxu0
      %v4359 = vadd.f32 0.0, %v4358
      %v4360 = vpop.f32.mrf.mxu0
      %v4361 = vpop.f32.mrf.mxu0
      %v4362 = vadd.f32 0.0, %v4361
      %v4363 = vpop.f32.mrf.mxu0
      %4364 = vmatprep.mubr.bf16.mxu0 0
      %4365 = vmatmul.mubr.bf16.gmra.mxu0 %v4299
      %v4366 = vpop.f32.mrf.mxu0
      %v4367 = vadd.f32 0.0, %v4366
      %v4368 = vpop.f32.mrf.mxu0
      %v4369 = vpop.f32.mrf.mxu0
      %v4370 = vadd.f32 0.0, %v4369
      %v4371 = vpop.f32.mrf.mxu0
      %4372 = vmatprep.mubr.bf16.mxu0 0
      %4373 = vmatmul.mubr.bf16.gmra.mxu0 %v4302
      %v4374 = vpop.f32.mrf.mxu0
      %v4375 = vadd.f32 0.0, %v4374
      %v4376 = vpop.f32.mrf.mxu0
      %v4377 = vpop.f32.mrf.mxu0
      %v4378 = vadd.f32 0.0, %v4377
      %v4379 = vpop.f32.mrf.mxu0
      %4380 = vmatprep.mubr.bf16.mxu0 0
      %4381 = vmatmul.mubr.bf16.gmra.mxu0 %v4305
      %v4382 = vpop.f32.mrf.mxu0
      %v4383 = vadd.f32 0.0, %v4382
      %v4384 = vpop.f32.mrf.mxu0
      %v4385 = vpop.f32.mrf.mxu0
      %v4386 = vadd.f32 0.0, %v4385
      %v4387 = vpop.f32.mrf.mxu0
      %4388 = vmatprep.mubr.bf16.mxu0 0
      %4389 = vmatmul.mubr.bf16.gmra.mxu0 %v4308
      %v4390 = vpop.f32.mrf.mxu0
      %v4391 = vadd.f32 0.0, %v4390
      %v4392 = vpop.f32.mrf.mxu0
      %v4393 = vpop.f32.mrf.mxu0
      %v4394 = vadd.f32 0.0, %v4393
      %v4395 = vpop.f32.mrf.mxu0
      %4396 = vmatprep.mubr.bf16.mxu0 0
      %4397 = vmatmul.mubr.bf16.gmra.mxu0 %v4311
      %v4398 = vpop.f32.mrf.mxu0
      %v4399 = vadd.f32 0.0, %v4398
      %v4400 = vpop.f32.mrf.mxu0
      %v4401 = vpop.f32.mrf.mxu0
      %v4402 = vadd.f32 0.0, %v4401
      %v4403 = vpop.f32.mrf.mxu0
      %4404 = vmatprep.mubr.bf16.mxu0 0
      %4405 = vmatmul.mubr.bf16.gmra.mxu0 %v4314
      %v4406 = vpop.f32.mrf.mxu0
      %v4407 = vadd.f32 0.0, %v4406
      %v4408 = vpop.f32.mrf.mxu0
      %v4409 = vpop.f32.mrf.mxu0
      %v4410 = vadd.f32 0.0, %v4409
      %v4411 = vpop.f32.mrf.mxu0
      %4412 = vdwg.mxu0
      %v4413 = vadd.f32 %v4164, %v4351
      %v4414 = vadd.f32 %v4165, %v4354
      %v4415 = vadd.f32 %v4166, %v4359
      %v4416 = vadd.f32 %v4167, %v4362
      %v4417 = vadd.f32 %v4168, %v4367
      %v4418 = vadd.f32 %v4169, %v4370
      %v4419 = vadd.f32 %v4170, %v4375
      %v4420 = vadd.f32 %v4171, %v4378
      %v4421 = vadd.f32 %v4172, %v4383
      %v4422 = vadd.f32 %v4173, %v4386
      %v4423 = vadd.f32 %v4174, %v4391
      %v4424 = vadd.f32 %v4175, %v4394
      %v4425 = vadd.f32 %v4176, %v4399
      %v4426 = vadd.f32 %v4177, %v4402
      %v4427 = vadd.f32 %v4178, %v4407
      %v4428 = vadd.f32 %v4179, %v4410
      %s4429 = scalar_lea.vmem %s203, 120
      %v4430 = vld [vmem:[%s4429] sm:$0xf]
      %v4431 = vld [vmem:[%s4429 + $0x4] sm:$0xf]
      %v4432 = vld [vmem:[%s4429 + $0xc] sm:$0xf]
      %v4433 = vld [vmem:[%s4429 + $0x10] sm:$0xf]
      %v4434 = vld [vmem:[%s4429 + $0x18] sm:$0xf]
      %v4435 = vld [vmem:[%s4429 + $0x1c] sm:$0xf]
      %v4436 = vld [vmem:[%s4429 + $0x24] sm:$0xf]
      %v4437 = vld [vmem:[%s4429 + $0x28] sm:$0xf]
      %v4438 = vld [vmem:[%s4429 + $0x30] sm:$0xf]
      %v4439 = vld [vmem:[%s4429 + $0x34] sm:$0xf]
      %v4440 = vld [vmem:[%s4429 + $0x3c] sm:$0xf]
      %v4441 = vld [vmem:[%s4429 + $0x40] sm:$0xf]
      %v4442 = vld [vmem:[%s4429 + $0x48] sm:$0xf]
      %v4443 = vld [vmem:[%s4429 + $0x4c] sm:$0xf]
      %v4444 = vld [vmem:[%s4429 + $0x54] sm:$0xf]
      %v4445 = vld [vmem:[%s4429 + $0x58] sm:$0xf]
      %v4462 = vunpack.c.l.b16 %v4430
      %v4463 = vunpack.c.l.b16 %v4431
      %v4464 = vunpack.c.l.b16 %v4432
      %v4465 = vunpack.c.l.b16 %v4433
      %v4466 = vunpack.c.l.b16 %v4434
      %v4467 = vunpack.c.l.b16 %v4435
      %v4468 = vunpack.c.l.b16 %v4436
      %v4469 = vunpack.c.l.b16 %v4437
      %v4470 = vunpack.c.l.b16 %v4438
      %v4471 = vunpack.c.l.b16 %v4439
      %v4472 = vunpack.c.l.b16 %v4440
      %v4473 = vunpack.c.l.b16 %v4441
      %v4474 = vunpack.c.l.b16 %v4442
      %v4475 = vunpack.c.l.b16 %v4443
      %v4476 = vunpack.c.l.b16 %v4444
      %v4477 = vunpack.c.l.b16 %v4445
      %v4478 = vpack.c.b16 %v4463, %v4462
      %v4479 = vpack.c.b16 %v4465, %v4464
      %v4480 = vpack.c.b16 %v4467, %v4466
      %v4481 = vpack.c.b16 %v4469, %v4468
      %v4482 = vpack.c.b16 %v4471, %v4470
      %v4483 = vpack.c.b16 %v4473, %v4472
      %v4484 = vpack.c.b16 %v4475, %v4474
      %v4485 = vpack.c.b16 %v4477, %v4476
      %v4487 = vsel %vm476, %v4478, 0
      %v4490 = vsel %vm476, %v4479, 0
      %v4493 = vsel %vm476, %v4480, 0
      %v4496 = vsel %vm476, %v4481, 0
      %v4499 = vsel %vm476, %v4482, 0
      %v4502 = vsel %vm476, %v4483, 0
      %v4505 = vsel %vm476, %v4484, 0
      %v4508 = vsel %vm476, %v4485, 0
      %4510 = vmatprep.subr.bf16.mxu0 0
      %4511 = vmatpush1.bf16.msra.mxu0 0
      %4512 = vmatprep.subr.bf16.mxu0 0
      %4513 = vmatpush1.bf16.msra.mxu0 0
      %4514 = vmatprep.subr.bf16.mxu0 0
      %4515 = vmatpush1.bf16.msra.mxu0 0
      %4516 = vmatprep.subr.bf16.mxu0 0
      %4517 = vmatpush1.bf16.msra.mxu0 0
      %4518 = vmatprep.subr.bf16.mxu0 0
      %4519 = vmatpush1.bf16.msra.mxu0 0
      %4520 = vmatprep.subr.bf16.mxu0 0
      %4521 = vmatpush1.bf16.msra.mxu0 0
      %4522 = vmatprep.subr.bf16.mxu0 0
      %4523 = vmatpush1.bf16.msra.mxu0 0
      %4524 = vmatprep.subr.bf16.mxu0 0
      %4525 = vmatpush1.bf16.msra.mxu0 %v1924
      %4526 = vmatprep.subr.bf16.mxu0 0
      %4527 = vmatpush2.bf16.msra.mxu0 0
      %4528 = vmatprep.subr.bf16.mxu0 0
      %4529 = vmatpush2.bf16.msra.mxu0 0
      %4530 = vmatprep.subr.bf16.mxu0 0
      %4531 = vmatpush2.bf16.msra.mxu0 0
      %4532 = vmatprep.subr.bf16.mxu0 0
      %4533 = vmatpush2.bf16.msra.mxu0 0
      %4534 = vmatprep.subr.bf16.mxu0 0
      %4535 = vmatpush2.bf16.msra.mxu0 0
      %4536 = vmatprep.subr.bf16.mxu0 0
      %4537 = vmatpush2.bf16.msra.mxu0 0
      %4538 = vmatprep.subr.bf16.mxu0 0
      %4539 = vmatpush2.bf16.msra.mxu0 0
      %4540 = vmatprep.subr.bf16.mxu0 0
      %4541 = vmatpush2.bf16.msra.mxu0 0
      %4542 = vmatprep.mubr.bf16.mxu0 0
      %4543 = vmatmul.mubr.bf16.gmra.mxu0 %v4487
      %v4544 = vpop.f32.mrf.mxu0
      %v4545 = vadd.f32 0.0, %v4544
      %v4546 = vpop.f32.mrf.mxu0
      %v4547 = vpop.f32.mrf.mxu0
      %v4548 = vadd.f32 0.0, %v4547
      %v4549 = vpop.f32.mrf.mxu0
      %4550 = vmatprep.mubr.bf16.mxu0 0
      %4551 = vmatmul.mubr.bf16.gmra.mxu0 %v4490
      %v4552 = vpop.f32.mrf.mxu0
      %v4553 = vadd.f32 0.0, %v4552
      %v4554 = vpop.f32.mrf.mxu0
      %v4555 = vpop.f32.mrf.mxu0
      %v4556 = vadd.f32 0.0, %v4555
      %v4557 = vpop.f32.mrf.mxu0
      %4558 = vmatprep.mubr.bf16.mxu0 0
      %4559 = vmatmul.mubr.bf16.gmra.mxu0 %v4493
      %v4560 = vpop.f32.mrf.mxu0
      %v4561 = vadd.f32 0.0, %v4560
      %v4562 = vpop.f32.mrf.mxu0
      %v4563 = vpop.f32.mrf.mxu0
      %v4564 = vadd.f32 0.0, %v4563
      %v4565 = vpop.f32.mrf.mxu0
      %4566 = vmatprep.mubr.bf16.mxu0 0
      %4567 = vmatmul.mubr.bf16.gmra.mxu0 %v4496
      %v4568 = vpop.f32.mrf.mxu0
      %v4569 = vadd.f32 0.0, %v4568
      %v4570 = vpop.f32.mrf.mxu0
      %v4571 = vpop.f32.mrf.mxu0
      %v4572 = vadd.f32 0.0, %v4571
      %v4573 = vpop.f32.mrf.mxu0
      %4574 = vmatprep.mubr.bf16.mxu0 0
      %4575 = vmatmul.mubr.bf16.gmra.mxu0 %v4499
      %v4576 = vpop.f32.mrf.mxu0
      %v4577 = vadd.f32 0.0, %v4576
      %v4578 = vpop.f32.mrf.mxu0
      %v4579 = vpop.f32.mrf.mxu0
      %v4580 = vadd.f32 0.0, %v4579
      %v4581 = vpop.f32.mrf.mxu0
      %4582 = vmatprep.mubr.bf16.mxu0 0
      %4583 = vmatmul.mubr.bf16.gmra.mxu0 %v4502
      %v4584 = vpop.f32.mrf.mxu0
      %v4585 = vadd.f32 0.0, %v4584
      %v4586 = vpop.f32.mrf.mxu0
      %v4587 = vpop.f32.mrf.mxu0
      %v4588 = vadd.f32 0.0, %v4587
      %v4589 = vpop.f32.mrf.mxu0
      %4590 = vmatprep.mubr.bf16.mxu0 0
      %4591 = vmatmul.mubr.bf16.gmra.mxu0 %v4505
      %v4592 = vpop.f32.mrf.mxu0
      %v4593 = vadd.f32 0.0, %v4592
      %v4594 = vpop.f32.mrf.mxu0
      %v4595 = vpop.f32.mrf.mxu0
      %v4596 = vadd.f32 0.0, %v4595
      %v4597 = vpop.f32.mrf.mxu0
      %4598 = vmatprep.mubr.bf16.mxu0 0
      %4599 = vmatmul.mubr.bf16.gmra.mxu0 %v4508
      %v4600 = vpop.f32.mrf.mxu0
      %v4601 = vadd.f32 0.0, %v4600
      %v4602 = vpop.f32.mrf.mxu0
      %v4603 = vpop.f32.mrf.mxu0
      %v4604 = vadd.f32 0.0, %v4603
      %v4605 = vpop.f32.mrf.mxu0
      %4606 = vdwg.mxu0
      %v4607 = vadd.f32 %v4413, %v4545
      %v4608 = vadd.f32 %v4414, %v4548
      %v4609 = vadd.f32 %v4415, %v4553
      %v4610 = vadd.f32 %v4416, %v4556
      %v4611 = vadd.f32 %v4417, %v4561
      %v4612 = vadd.f32 %v4418, %v4564
      %v4613 = vadd.f32 %v4419, %v4569
      %v4614 = vadd.f32 %v4420, %v4572
      %v4615 = vadd.f32 %v4421, %v4577
      %v4616 = vadd.f32 %v4422, %v4580
      %v4617 = vadd.f32 %v4423, %v4585
      %v4618 = vadd.f32 %v4424, %v4588
      %v4619 = vadd.f32 %v4425, %v4593
      %v4620 = vadd.f32 %v4426, %v4596
      %v4621 = vadd.f32 %v4427, %v4601
      %v4622 = vadd.f32 %v4428, %v4604
      %v4623 = vld [vmem:[%s4429] sm:$0xf]
      %v4624 = vld [vmem:[%s4429 + $0x4] sm:$0xf]
      %v4625 = vld [vmem:[%s4429 + $0x8] sm:$0x1]
      %v4626 = vld [vmem:[%s4429 + $0xc] sm:$0xf]
      %v4627 = vld [vmem:[%s4429 + $0x10] sm:$0xf]
      %v4628 = vld [vmem:[%s4429 + $0x14] sm:$0x1]
      %v4629 = vld [vmem:[%s4429 + $0x18] sm:$0xf]
      %v4630 = vld [vmem:[%s4429 + $0x1c] sm:$0xf]
      %v4631 = vld [vmem:[%s4429 + $0x20] sm:$0x1]
      %v4632 = vld [vmem:[%s4429 + $0x24] sm:$0xf]
      %v4633 = vld [vmem:[%s4429 + $0x28] sm:$0xf]
      %v4634 = vld [vmem:[%s4429 + $0x2c] sm:$0x1]
      %v4635 = vld [vmem:[%s4429 + $0x30] sm:$0xf]
      %v4636 = vld [vmem:[%s4429 + $0x34] sm:$0xf]
      %v4637 = vld [vmem:[%s4429 + $0x38] sm:$0x1]
      %v4638 = vld [vmem:[%s4429 + $0x3c] sm:$0xf]
      %v4639 = vld [vmem:[%s4429 + $0x40] sm:$0xf]
      %v4640 = vld [vmem:[%s4429 + $0x44] sm:$0x1]
      %v4641 = vld [vmem:[%s4429 + $0x48] sm:$0xf]
      %v4642 = vld [vmem:[%s4429 + $0x4c] sm:$0xf]
      %v4643 = vld [vmem:[%s4429 + $0x50] sm:$0x1]
      %v4644 = vld [vmem:[%s4429 + $0x54] sm:$0xf]
      %v4645 = vld [vmem:[%s4429 + $0x58] sm:$0xf]
      %v4646 = vld [vmem:[%s4429 + $0x5c] sm:$0x1]
      %v4648 = vshrl.u32 %v4623, 16
      %v4650 = vrot.slane %v4648, 4
      %v4651 = vshll.u32 %v4623, 16
      %v4653 = vrot.slane %v4651, 5
      %v4654 = vor.u32 %v4650, %v4653
      %v4655 = vrot.slane %v4654, 4
      %v4657 = vshll.u32 %v4624, 16
      %v4659 = vrot.slane %v4657, 5
      %v4660 = vsel %vm259, %v4655, %v4659
      %v4661 = vshrl.u32 %v4624, 16
      %v4663 = vrot.slane %v4661, 4
      %v4664 = vor.u32 %v4663, %v4659
      %v4665 = vrot.slane %v4664, 4
      %v4667 = vshll.u32 %v4625, 16
      %v4669 = vrot.slane %v4667, 5
      %v4670 = vsel %vm259, %v4665, %v4669
      %v4672 = vshrl.u32 %v4626, 16
      %v4674 = vrot.slane %v4672, 4
      %v4675 = vshll.u32 %v4626, 16
      %v4677 = vrot.slane %v4675, 5
      %v4678 = vor.u32 %v4674, %v4677
      %v4679 = vrot.slane %v4678, 4
      %v4681 = vshll.u32 %v4627, 16
      %v4683 = vrot.slane %v4681, 5
      %v4684 = vsel %vm259, %v4679, %v4683
      %v4685 = vshrl.u32 %v4627, 16
      %v4687 = vrot.slane %v4685, 4
      %v4688 = vor.u32 %v4687, %v4683
      %v4689 = vrot.slane %v4688, 4
      %v4691 = vshll.u32 %v4628, 16
      %v4693 = vrot.slane %v4691, 5
      %v4694 = vsel %vm259, %v4689, %v4693
      %v4696 = vshrl.u32 %v4629, 16
      %v4698 = vrot.slane %v4696, 4
      %v4699 = vshll.u32 %v4629, 16
      %v4701 = vrot.slane %v4699, 5
      %v4702 = vor.u32 %v4698, %v4701
      %v4703 = vrot.slane %v4702, 4
      %v4705 = vshll.u32 %v4630, 16
      %v4707 = vrot.slane %v4705, 5
      %v4708 = vsel %vm259, %v4703, %v4707
      %v4709 = vshrl.u32 %v4630, 16
      %v4711 = vrot.slane %v4709, 4
      %v4712 = vor.u32 %v4711, %v4707
      %v4713 = vrot.slane %v4712, 4
      %v4715 = vshll.u32 %v4631, 16
      %v4717 = vrot.slane %v4715, 5
      %v4718 = vsel %vm259, %v4713, %v4717
      %v4720 = vshrl.u32 %v4632, 16
      %v4722 = vrot.slane %v4720, 4
      %v4723 = vshll.u32 %v4632, 16
      %v4725 = vrot.slane %v4723, 5
      %v4726 = vor.u32 %v4722, %v4725
      %v4727 = vrot.slane %v4726, 4
      %v4729 = vshll.u32 %v4633, 16
      %v4731 = vrot.slane %v4729, 5
      %v4732 = vsel %vm259, %v4727, %v4731
      %v4733 = vshrl.u32 %v4633, 16
      %v4735 = vrot.slane %v4733, 4
      %v4736 = vor.u32 %v4735, %v4731
      %v4737 = vrot.slane %v4736, 4
      %v4739 = vshll.u32 %v4634, 16
      %v4741 = vrot.slane %v4739, 5
      %v4742 = vsel %vm259, %v4737, %v4741
      %v4744 = vshrl.u32 %v4635, 16
      %v4746 = vrot.slane %v4744, 4
      %v4747 = vshll.u32 %v4635, 16
      %v4749 = vrot.slane %v4747, 5
      %v4750 = vor.u32 %v4746, %v4749
      %v4751 = vrot.slane %v4750, 4
      %v4753 = vshll.u32 %v4636, 16
      %v4755 = vrot.slane %v4753, 5
      %v4756 = vsel %vm259, %v4751, %v4755
      %v4757 = vshrl.u32 %v4636, 16
      %v4759 = vrot.slane %v4757, 4
      %v4760 = vor.u32 %v4759, %v4755
      %v4761 = vrot.slane %v4760, 4
      %v4763 = vshll.u32 %v4637, 16
      %v4765 = vrot.slane %v4763, 5
      %v4766 = vsel %vm259, %v4761, %v4765
      %v4768 = vshrl.u32 %v4638, 16
      %v4770 = vrot.slane %v4768, 4
      %v4771 = vshll.u32 %v4638, 16
      %v4773 = vrot.slane %v4771, 5
      %v4774 = vor.u32 %v4770, %v4773
      %v4775 = vrot.slane %v4774, 4
      %v4777 = vshll.u32 %v4639, 16
      %v4779 = vrot.slane %v4777, 5
      %v4780 = vsel %vm259, %v4775, %v4779
      %v4781 = vshrl.u32 %v4639, 16
      %v4783 = vrot.slane %v4781, 4
      %v4784 = vor.u32 %v4783, %v4779
      %v4785 = vrot.slane %v4784, 4
      %v4787 = vshll.u32 %v4640, 16
      %v4789 = vrot.slane %v4787, 5
      %v4790 = vsel %vm259, %v4785, %v4789
      %v4792 = vshrl.u32 %v4641, 16
      %v4794 = vrot.slane %v4792, 4
      %v4795 = vshll.u32 %v4641, 16
      %v4797 = vrot.slane %v4795, 5
      %v4798 = vor.u32 %v4794, %v4797
      %v4799 = vrot.slane %v4798, 4
      %v4801 = vshll.u32 %v4642, 16
      %v4803 = vrot.slane %v4801, 5
      %v4804 = vsel %vm259, %v4799, %v4803
      %v4805 = vshrl.u32 %v4642, 16
      %v4807 = vrot.slane %v4805, 4
      %v4808 = vor.u32 %v4807, %v4803
      %v4809 = vrot.slane %v4808, 4
      %v4811 = vshll.u32 %v4643, 16
      %v4813 = vrot.slane %v4811, 5
      %v4814 = vsel %vm259, %v4809, %v4813
      %v4816 = vshrl.u32 %v4644, 16
      %v4818 = vrot.slane %v4816, 4
      %v4819 = vshll.u32 %v4644, 16
      %v4821 = vrot.slane %v4819, 5
      %v4822 = vor.u32 %v4818, %v4821
      %v4823 = vrot.slane %v4822, 4
      %v4825 = vshll.u32 %v4645, 16
      %v4827 = vrot.slane %v4825, 5
      %v4828 = vsel %vm259, %v4823, %v4827
      %v4829 = vshrl.u32 %v4645, 16
      %v4831 = vrot.slane %v4829, 4
      %v4832 = vor.u32 %v4831, %v4827
      %v4833 = vrot.slane %v4832, 4
      %v4835 = vshll.u32 %v4646, 16
      %v4837 = vrot.slane %v4835, 5
      %v4838 = vsel %vm259, %v4833, %v4837
      %v4839 = vunpack.c.l.b16 %v4660
      %v4840 = vunpack.c.l.b16 %v4670
      %v4841 = vunpack.c.l.b16 %v4684
      %v4842 = vunpack.c.l.b16 %v4694
      %v4843 = vunpack.c.l.b16 %v4708
      %v4844 = vunpack.c.l.b16 %v4718
      %v4845 = vunpack.c.l.b16 %v4732
      %v4846 = vunpack.c.l.b16 %v4742
      %v4847 = vunpack.c.l.b16 %v4756
      %v4848 = vunpack.c.l.b16 %v4766
      %v4849 = vunpack.c.l.b16 %v4780
      %v4850 = vunpack.c.l.b16 %v4790
      %v4851 = vunpack.c.l.b16 %v4804
      %v4852 = vunpack.c.l.b16 %v4814
      %v4853 = vunpack.c.l.b16 %v4828
      %v4854 = vunpack.c.l.b16 %v4838
      %v4855 = vpack.c.b16 %v4840, %v4839
      %v4856 = vpack.c.b16 %v4842, %v4841
      %v4857 = vpack.c.b16 %v4844, %v4843
      %v4858 = vpack.c.b16 %v4846, %v4845
      %v4859 = vpack.c.b16 %v4848, %v4847
      %v4860 = vpack.c.b16 %v4850, %v4849
      %v4861 = vpack.c.b16 %v4852, %v4851
      %v4862 = vpack.c.b16 %v4854, %v4853
      %v4864 = vsel %vm476, %v4855, 0
      %v4867 = vsel %vm476, %v4856, 0
      %v4870 = vsel %vm476, %v4857, 0
      %v4873 = vsel %vm476, %v4858, 0
      %v4876 = vsel %vm476, %v4859, 0
      %v4879 = vsel %vm476, %v4860, 0
      %v4882 = vsel %vm476, %v4861, 0
      %v4885 = vsel %vm476, %v4862, 0
      %4887 = vmatprep.subr.bf16.mxu0 0
      %4888 = vmatpush1.bf16.msra.mxu0 0
      %4889 = vmatprep.subr.bf16.mxu0 0
      %4890 = vmatpush1.bf16.msra.mxu0 0
      %4891 = vmatprep.subr.bf16.mxu0 0
      %4892 = vmatpush1.bf16.msra.mxu0 0
      %4893 = vmatprep.subr.bf16.mxu0 0
      %4894 = vmatpush1.bf16.msra.mxu0 0
      %4895 = vmatprep.subr.bf16.mxu0 0
      %4896 = vmatpush1.bf16.msra.mxu0 0
      %4897 = vmatprep.subr.bf16.mxu0 0
      %4898 = vmatpush1.bf16.msra.mxu0 0
      %4899 = vmatprep.subr.bf16.mxu0 0
      %4900 = vmatpush1.bf16.msra.mxu0 0
      %4901 = vmatprep.subr.bf16.mxu0 0
      %4902 = vmatpush1.bf16.msra.mxu0 %v2304
      %4903 = vmatprep.subr.bf16.mxu0 0
      %4904 = vmatpush2.bf16.msra.mxu0 0
      %4905 = vmatprep.subr.bf16.mxu0 0
      %4906 = vmatpush2.bf16.msra.mxu0 0
      %4907 = vmatprep.subr.bf16.mxu0 0
      %4908 = vmatpush2.bf16.msra.mxu0 0
      %4909 = vmatprep.subr.bf16.mxu0 0
      %4910 = vmatpush2.bf16.msra.mxu0 0
      %4911 = vmatprep.subr.bf16.mxu0 0
      %4912 = vmatpush2.bf16.msra.mxu0 0
      %4913 = vmatprep.subr.bf16.mxu0 0
      %4914 = vmatpush2.bf16.msra.mxu0 0
      %4915 = vmatprep.subr.bf16.mxu0 0
      %4916 = vmatpush2.bf16.msra.mxu0 0
      %4917 = vmatprep.subr.bf16.mxu0 0
      %4918 = vmatpush2.bf16.msra.mxu0 0
      %4919 = vmatprep.mubr.bf16.mxu0 0
      %4920 = vmatmul.mubr.bf16.gmra.mxu0 %v4864
      %v4921 = vpop.f32.mrf.mxu0
      %v4922 = vadd.f32 0.0, %v4921
      %v4923 = vpop.f32.mrf.mxu0
      %v4924 = vpop.f32.mrf.mxu0
      %v4925 = vadd.f32 0.0, %v4924
      %v4926 = vpop.f32.mrf.mxu0
      %4927 = vmatprep.mubr.bf16.mxu0 0
      %4928 = vmatmul.mubr.bf16.gmra.mxu0 %v4867
      %v4929 = vpop.f32.mrf.mxu0
      %v4930 = vadd.f32 0.0, %v4929
      %v4931 = vpop.f32.mrf.mxu0
      %v4932 = vpop.f32.mrf.mxu0
      %v4933 = vadd.f32 0.0, %v4932
      %v4934 = vpop.f32.mrf.mxu0
      %4935 = vmatprep.mubr.bf16.mxu0 0
      %4936 = vmatmul.mubr.bf16.gmra.mxu0 %v4870
      %v4937 = vpop.f32.mrf.mxu0
      %v4938 = vadd.f32 0.0, %v4937
      %v4939 = vpop.f32.mrf.mxu0
      %v4940 = vpop.f32.mrf.mxu0
      %v4941 = vadd.f32 0.0, %v4940
      %v4942 = vpop.f32.mrf.mxu0
      %4943 = vmatprep.mubr.bf16.mxu0 0
      %4944 = vmatmul.mubr.bf16.gmra.mxu0 %v4873
      %v4945 = vpop.f32.mrf.mxu0
      %v4946 = vadd.f32 0.0, %v4945
      %v4947 = vpop.f32.mrf.mxu0
      %v4948 = vpop.f32.mrf.mxu0
      %v4949 = vadd.f32 0.0, %v4948
      %v4950 = vpop.f32.mrf.mxu0
      %4951 = vmatprep.mubr.bf16.mxu0 0
      %4952 = vmatmul.mubr.bf16.gmra.mxu0 %v4876
      %v4953 = vpop.f32.mrf.mxu0
      %v4954 = vadd.f32 0.0, %v4953
      %v4955 = vpop.f32.mrf.mxu0
      %v4956 = vpop.f32.mrf.mxu0
      %v4957 = vadd.f32 0.0, %v4956
      %v4958 = vpop.f32.mrf.mxu0
      %4959 = vmatprep.mubr.bf16.mxu0 0
      %4960 = vmatmul.mubr.bf16.gmra.mxu0 %v4879
      %v4961 = vpop.f32.mrf.mxu0
      %v4962 = vadd.f32 0.0, %v4961
      %v4963 = vpop.f32.mrf.mxu0
      %v4964 = vpop.f32.mrf.mxu0
      %v4965 = vadd.f32 0.0, %v4964
      %v4966 = vpop.f32.mrf.mxu0
      %4967 = vmatprep.mubr.bf16.mxu0 0
      %4968 = vmatmul.mubr.bf16.gmra.mxu0 %v4882
      %v4969 = vpop.f32.mrf.mxu0
      %v4970 = vadd.f32 0.0, %v4969
      %v4971 = vpop.f32.mrf.mxu0
      %v4972 = vpop.f32.mrf.mxu0
      %v4973 = vadd.f32 0.0, %v4972
      %v4974 = vpop.f32.mrf.mxu0
      %4975 = vmatprep.mubr.bf16.mxu0 0
      %4976 = vmatmul.mubr.bf16.gmra.mxu0 %v4885
      %v4977 = vpop.f32.mrf.mxu0
      %v4978 = vadd.f32 0.0, %v4977
      %v4979 = vpop.f32.mrf.mxu0
      %v4980 = vpop.f32.mrf.mxu0
      %v4981 = vadd.f32 0.0, %v4980
      %v4982 = vpop.f32.mrf.mxu0
      %4983 = vdwg.mxu0
      %v4984 = vadd.f32 %v4607, %v4922
      %v4985 = vadd.f32 %v4608, %v4925
      %v4986 = vadd.f32 %v4609, %v4930
      %v4987 = vadd.f32 %v4610, %v4933
      %v4988 = vadd.f32 %v4611, %v4938
      %v4989 = vadd.f32 %v4612, %v4941
      %v4990 = vadd.f32 %v4613, %v4946
      %v4991 = vadd.f32 %v4614, %v4949
      %v4992 = vadd.f32 %v4615, %v4954
      %v4993 = vadd.f32 %v4616, %v4957
      %v4994 = vadd.f32 %v4617, %v4962
      %v4995 = vadd.f32 %v4618, %v4965
      %v4996 = vadd.f32 %v4619, %v4970
      %v4997 = vadd.f32 %v4620, %v4973
      %v4998 = vadd.f32 %v4621, %v4978
      %v4999 = vadd.f32 %v4622, %v4981
      %v5000 = vld [vmem:[%s4429] sm:$0xe]
      %v5001 = vld [vmem:[%s4429 + $0xc] sm:$0xe]
      %v5002 = vld [vmem:[%s4429 + $0x18] sm:$0xe]
      %v5003 = vld [vmem:[%s4429 + $0x24] sm:$0xe]
      %v5004 = vld [vmem:[%s4429 + $0x30] sm:$0xe]
      %v5005 = vld [vmem:[%s4429 + $0x3c] sm:$0xe]
      %v5006 = vld [vmem:[%s4429 + $0x48] sm:$0xe]
      %v5007 = vld [vmem:[%s4429 + $0x54] sm:$0xe]
      %v5032 = vrot.slane %v5000, 5
      %v5033 = vrot.slane %v5032, 4
      %v5034 = vrot.slane %v4624, 5
      %v5035 = vsel %vm792, %v5033, %v5034
      %v5036 = vrot.slane %v5034, 4
      %v5037 = vrot.slane %v4625, 5
      %v5038 = vsel %vm792, %v5036, %v5037
      %v5039 = vrot.slane %v5001, 5
      %v5040 = vrot.slane %v5039, 4
      %v5041 = vrot.slane %v4627, 5
      %v5042 = vsel %vm792, %v5040, %v5041
      %v5043 = vrot.slane %v5041, 4
      %v5044 = vrot.slane %v4628, 5
      %v5045 = vsel %vm792, %v5043, %v5044
      %v5046 = vrot.slane %v5002, 5
      %v5047 = vrot.slane %v5046, 4
      %v5048 = vrot.slane %v4630, 5
      %v5049 = vsel %vm792, %v5047, %v5048
      %v5050 = vrot.slane %v5048, 4
      %v5051 = vrot.slane %v4631, 5
      %v5052 = vsel %vm792, %v5050, %v5051
      %v5053 = vrot.slane %v5003, 5
      %v5054 = vrot.slane %v5053, 4
      %v5055 = vrot.slane %v4633, 5
      %v5056 = vsel %vm792, %v5054, %v5055
      %v5057 = vrot.slane %v5055, 4
      %v5058 = vrot.slane %v4634, 5
      %v5059 = vsel %vm792, %v5057, %v5058
      %v5060 = vrot.slane %v5004, 5
      %v5061 = vrot.slane %v5060, 4
      %v5062 = vrot.slane %v4636, 5
      %v5063 = vsel %vm792, %v5061, %v5062
      %v5064 = vrot.slane %v5062, 4
      %v5065 = vrot.slane %v4637, 5
      %v5066 = vsel %vm792, %v5064, %v5065
      %v5067 = vrot.slane %v5005, 5
      %v5068 = vrot.slane %v5067, 4
      %v5069 = vrot.slane %v4639, 5
      %v5070 = vsel %vm792, %v5068, %v5069
      %v5071 = vrot.slane %v5069, 4
      %v5072 = vrot.slane %v4640, 5
      %v5073 = vsel %vm792, %v5071, %v5072
      %v5074 = vrot.slane %v5006, 5
      %v5075 = vrot.slane %v5074, 4
      %v5076 = vrot.slane %v4642, 5
      %v5077 = vsel %vm792, %v5075, %v5076
      %v5078 = vrot.slane %v5076, 4
      %v5079 = vrot.slane %v4643, 5
      %v5080 = vsel %vm792, %v5078, %v5079
      %v5081 = vrot.slane %v5007, 5
      %v5082 = vrot.slane %v5081, 4
      %v5083 = vrot.slane %v4645, 5
      %v5084 = vsel %vm792, %v5082, %v5083
      %v5085 = vrot.slane %v5083, 4
      %v5086 = vrot.slane %v4646, 5
      %v5087 = vsel %vm792, %v5085, %v5086
      %v5088 = vunpack.c.l.b16 %v5035
      %v5089 = vunpack.c.l.b16 %v5038
      %v5090 = vunpack.c.l.b16 %v5042
      %v5091 = vunpack.c.l.b16 %v5045
      %v5092 = vunpack.c.l.b16 %v5049
      %v5093 = vunpack.c.l.b16 %v5052
      %v5094 = vunpack.c.l.b16 %v5056
      %v5095 = vunpack.c.l.b16 %v5059
      %v5096 = vunpack.c.l.b16 %v5063
      %v5097 = vunpack.c.l.b16 %v5066
      %v5098 = vunpack.c.l.b16 %v5070
      %v5099 = vunpack.c.l.b16 %v5073
      %v5100 = vunpack.c.l.b16 %v5077
      %v5101 = vunpack.c.l.b16 %v5080
      %v5102 = vunpack.c.l.b16 %v5084
      %v5103 = vunpack.c.l.b16 %v5087
      %v5104 = vpack.c.b16 %v5089, %v5088
      %v5105 = vpack.c.b16 %v5091, %v5090
      %v5106 = vpack.c.b16 %v5093, %v5092
      %v5107 = vpack.c.b16 %v5095, %v5094
      %v5108 = vpack.c.b16 %v5097, %v5096
      %v5109 = vpack.c.b16 %v5099, %v5098
      %v5110 = vpack.c.b16 %v5101, %v5100
      %v5111 = vpack.c.b16 %v5103, %v5102
      %v5113 = vsel %vm476, %v5104, 0
      %v5116 = vsel %vm476, %v5105, 0
      %v5119 = vsel %vm476, %v5106, 0
      %v5122 = vsel %vm476, %v5107, 0
      %v5125 = vsel %vm476, %v5108, 0
      %v5128 = vsel %vm476, %v5109, 0
      %v5131 = vsel %vm476, %v5110, 0
      %v5134 = vsel %vm476, %v5111, 0
      %5136 = vmatprep.subr.bf16.mxu0 0
      %5137 = vmatpush1.bf16.msra.mxu0 0
      %5138 = vmatprep.subr.bf16.mxu0 0
      %5139 = vmatpush1.bf16.msra.mxu0 0
      %5140 = vmatprep.subr.bf16.mxu0 0
      %5141 = vmatpush1.bf16.msra.mxu0 0
      %5142 = vmatprep.subr.bf16.mxu0 0
      %5143 = vmatpush1.bf16.msra.mxu0 0
      %5144 = vmatprep.subr.bf16.mxu0 0
      %5145 = vmatpush1.bf16.msra.mxu0 0
      %5146 = vmatprep.subr.bf16.mxu0 0
      %5147 = vmatpush1.bf16.msra.mxu0 0
      %5148 = vmatprep.subr.bf16.mxu0 0
      %5149 = vmatpush1.bf16.msra.mxu0 0
      %5150 = vmatprep.subr.bf16.mxu0 0
      %5151 = vmatpush1.bf16.msra.mxu0 %v2556
      %5152 = vmatprep.subr.bf16.mxu0 0
      %5153 = vmatpush2.bf16.msra.mxu0 0
      %5154 = vmatprep.subr.bf16.mxu0 0
      %5155 = vmatpush2.bf16.msra.mxu0 0
      %5156 = vmatprep.subr.bf16.mxu0 0
      %5157 = vmatpush2.bf16.msra.mxu0 0
      %5158 = vmatprep.subr.bf16.mxu0 0
      %5159 = vmatpush2.bf16.msra.mxu0 0
      %5160 = vmatprep.subr.bf16.mxu0 0
      %5161 = vmatpush2.bf16.msra.mxu0 0
      %5162 = vmatprep.subr.bf16.mxu0 0
      %5163 = vmatpush2.bf16.msra.mxu0 0
      %5164 = vmatprep.subr.bf16.mxu0 0
      %5165 = vmatpush2.bf16.msra.mxu0 0
      %5166 = vmatprep.subr.bf16.mxu0 0
      %5167 = vmatpush2.bf16.msra.mxu0 0
      %5168 = vmatprep.mubr.bf16.mxu0 0
      %5169 = vmatmul.mubr.bf16.gmra.mxu0 %v5113
      %v5170 = vpop.f32.mrf.mxu0
      %v5171 = vadd.f32 0.0, %v5170
      %v5172 = vpop.f32.mrf.mxu0
      %v5173 = vpop.f32.mrf.mxu0
      %v5174 = vadd.f32 0.0, %v5173
      %v5175 = vpop.f32.mrf.mxu0
      %5176 = vmatprep.mubr.bf16.mxu0 0
      %5177 = vmatmul.mubr.bf16.gmra.mxu0 %v5116
      %v5178 = vpop.f32.mrf.mxu0
      %v5179 = vadd.f32 0.0, %v5178
      %v5180 = vpop.f32.mrf.mxu0
      %v5181 = vpop.f32.mrf.mxu0
      %v5182 = vadd.f32 0.0, %v5181
      %v5183 = vpop.f32.mrf.mxu0
      %5184 = vmatprep.mubr.bf16.mxu0 0
      %5185 = vmatmul.mubr.bf16.gmra.mxu0 %v5119
      %v5186 = vpop.f32.mrf.mxu0
      %v5187 = vadd.f32 0.0, %v5186
      %v5188 = vpop.f32.mrf.mxu0
      %v5189 = vpop.f32.mrf.mxu0
      %v5190 = vadd.f32 0.0, %v5189
      %v5191 = vpop.f32.mrf.mxu0
      %5192 = vmatprep.mubr.bf16.mxu0 0
      %5193 = vmatmul.mubr.bf16.gmra.mxu0 %v5122
      %v5194 = vpop.f32.mrf.mxu0
      %v5195 = vadd.f32 0.0, %v5194
      %v5196 = vpop.f32.mrf.mxu0
      %v5197 = vpop.f32.mrf.mxu0
      %v5198 = vadd.f32 0.0, %v5197
      %v5199 = vpop.f32.mrf.mxu0
      %5200 = vmatprep.mubr.bf16.mxu0 0
      %5201 = vmatmul.mubr.bf16.gmra.mxu0 %v5125
      %v5202 = vpop.f32.mrf.mxu0
      %v5203 = vadd.f32 0.0, %v5202
      %v5204 = vpop.f32.mrf.mxu0
      %v5205 = vpop.f32.mrf.mxu0
      %v5206 = vadd.f32 0.0, %v5205
      %v5207 = vpop.f32.mrf.mxu0
      %5208 = vmatprep.mubr.bf16.mxu0 0
      %5209 = vmatmul.mubr.bf16.gmra.mxu0 %v5128
      %v5210 = vpop.f32.mrf.mxu0
      %v5211 = vadd.f32 0.0, %v5210
      %v5212 = vpop.f32.mrf.mxu0
      %v5213 = vpop.f32.mrf.mxu0
      %v5214 = vadd.f32 0.0, %v5213
      %v5215 = vpop.f32.mrf.mxu0
      %5216 = vmatprep.mubr.bf16.mxu0 0
      %5217 = vmatmul.mubr.bf16.gmra.mxu0 %v5131
      %v5218 = vpop.f32.mrf.mxu0
      %v5219 = vadd.f32 0.0, %v5218
      %v5220 = vpop.f32.mrf.mxu0
      %v5221 = vpop.f32.mrf.mxu0
      %v5222 = vadd.f32 0.0, %v5221
      %v5223 = vpop.f32.mrf.mxu0
      %5224 = vmatprep.mubr.bf16.mxu0 0
      %5225 = vmatmul.mubr.bf16.gmra.mxu0 %v5134
      %v5226 = vpop.f32.mrf.mxu0
      %v5227 = vadd.f32 0.0, %v5226
      %v5228 = vpop.f32.mrf.mxu0
      %v5229 = vpop.f32.mrf.mxu0
      %v5230 = vadd.f32 0.0, %v5229
      %v5231 = vpop.f32.mrf.mxu0
      %5232 = vdwg.mxu0
      %v5233 = vadd.f32 %v4984, %v5171
      %v5234 = vadd.f32 %v4985, %v5174
      %v5235 = vadd.f32 %v4986, %v5179
      %v5236 = vadd.f32 %v4987, %v5182
      %v5237 = vadd.f32 %v4988, %v5187
      %v5238 = vadd.f32 %v4989, %v5190
      %v5239 = vadd.f32 %v4990, %v5195
      %v5240 = vadd.f32 %v4991, %v5198
      %v5241 = vadd.f32 %v4992, %v5203
      %v5242 = vadd.f32 %v4993, %v5206
      %v5243 = vadd.f32 %v4994, %v5211
      %v5244 = vadd.f32 %v4995, %v5214
      %v5245 = vadd.f32 %v4996, %v5219
      %v5246 = vadd.f32 %v4997, %v5222
      %v5247 = vadd.f32 %v4998, %v5227
      %v5248 = vadd.f32 %v4999, %v5230
      %v5249 = vsel %vm2671, %v5233, 0.0
      %v5250 = vsel %vm2671, %v5234, 0.0
      %v5251 = vadd.f32 %v5249, %v5250
      %v5252 = vsel %vm2671, %v5235, 0.0
      %v5253 = vadd.f32 %v5251, %v5252
      %v5254 = vsel %vm2671, %v5236, 0.0
      %v5255 = vadd.f32 %v5253, %v5254
      %v5256 = vsel %vm2671, %v5237, 0.0
      %v5257 = vadd.f32 %v5255, %v5256
      %v5258 = vsel %vm2671, %v5238, 0.0
      %v5259 = vadd.f32 %v5257, %v5258
      %v5260 = vsel %vm2671, %v5239, 0.0
      %v5261 = vadd.f32 %v5259, %v5260
      %v5262 = vsel %vm2671, %v5240, 0.0
      %v5263 = vadd.f32 %v5261, %v5262
      %v5264 = vsel %vm2671, %v5241, 0.0
      %v5265 = vadd.f32 %v5263, %v5264
      %v5266 = vsel %vm2671, %v5242, 0.0
      %v5267 = vadd.f32 %v5265, %v5266
      %v5268 = vsel %vm2671, %v5243, 0.0
      %v5269 = vadd.f32 %v5267, %v5268
      %v5270 = vsel %vm2671, %v5244, 0.0
      %v5271 = vadd.f32 %v5269, %v5270
      %v5272 = vsel %vm2671, %v5245, 0.0
      %v5273 = vadd.f32 %v5271, %v5272
      %v5274 = vsel %vm2671, %v5246, 0.0
      %v5275 = vadd.f32 %v5273, %v5274
      %v5276 = vsel %vm2671, %v5247, 0.0
      %v5277 = vadd.f32 %v5275, %v5276
      %v5278 = vsel %vm2671, %v5248, 0.0
      %v5279 = vadd.f32 %v5277, %v5278
      %v5280 = vrot.slane %v5279, 4
      %v5281 = vadd.f32 %v5279, %v5280
      %v5282 = vrot.slane %v5281, 2
      %v5283 = vadd.f32 %v5281, %v5282
      %v5284 = vrot.slane %v5283, 1
      %v5285 = vadd.f32 %v5283, %v5284
      %v5286 = vadd.f32 %v2709, %v5285
      %v5287 = vmul.f32 %v5233, %v5233
      %v5288 = vmul.f32 %v5234, %v5234
      %v5289 = vmul.f32 %v5235, %v5235
      %v5290 = vmul.f32 %v5236, %v5236
      %v5291 = vmul.f32 %v5237, %v5237
      %v5292 = vmul.f32 %v5238, %v5238
      %v5293 = vmul.f32 %v5239, %v5239
      %v5294 = vmul.f32 %v5240, %v5240
      %v5295 = vmul.f32 %v5241, %v5241
      %v5296 = vmul.f32 %v5242, %v5242
      %v5297 = vmul.f32 %v5243, %v5243
      %v5298 = vmul.f32 %v5244, %v5244
      %v5299 = vmul.f32 %v5245, %v5245
      %v5300 = vmul.f32 %v5246, %v5246
      %v5301 = vmul.f32 %v5247, %v5247
      %v5302 = vmul.f32 %v5248, %v5248
      %v5303 = vsel %vm2671, %v5287, 0.0
      %v5304 = vsel %vm2671, %v5288, 0.0
      %v5305 = vadd.f32 %v5303, %v5304
      %v5306 = vsel %vm2671, %v5289, 0.0
      %v5307 = vadd.f32 %v5305, %v5306
      %v5308 = vsel %vm2671, %v5290, 0.0
      %v5309 = vadd.f32 %v5307, %v5308
      %v5310 = vsel %vm2671, %v5291, 0.0
      %v5311 = vadd.f32 %v5309, %v5310
      %v5312 = vsel %vm2671, %v5292, 0.0
      %v5313 = vadd.f32 %v5311, %v5312
      %v5314 = vsel %vm2671, %v5293, 0.0
      %v5315 = vadd.f32 %v5313, %v5314
      %v5316 = vsel %vm2671, %v5294, 0.0
      %v5317 = vadd.f32 %v5315, %v5316
      %v5318 = vsel %vm2671, %v5295, 0.0
      %v5319 = vadd.f32 %v5317, %v5318
      %v5320 = vsel %vm2671, %v5296, 0.0
      %v5321 = vadd.f32 %v5319, %v5320
      %v5322 = vsel %vm2671, %v5297, 0.0
      %v5323 = vadd.f32 %v5321, %v5322
      %v5324 = vsel %vm2671, %v5298, 0.0
      %v5325 = vadd.f32 %v5323, %v5324
      %v5326 = vsel %vm2671, %v5299, 0.0
      %v5327 = vadd.f32 %v5325, %v5326
      %v5328 = vsel %vm2671, %v5300, 0.0
      %v5329 = vadd.f32 %v5327, %v5328
      %v5330 = vsel %vm2671, %v5301, 0.0
      %v5331 = vadd.f32 %v5329, %v5330
      %v5332 = vsel %vm2671, %v5302, 0.0
      %v5333 = vadd.f32 %v5331, %v5332
      %v5334 = vrot.slane %v5333, 4
      %v5335 = vadd.f32 %v5333, %v5334
      %v5336 = vrot.slane %v5335, 2
      %v5337 = vadd.f32 %v5335, %v5336
      %v5338 = vrot.slane %v5337, 1
      %v5339 = vadd.f32 %v5337, %v5338
      %v5340 = vadd.f32 %v2763, %v5339
      %v5341 = vpack.c.bf16 %v5234, %v5233
      %v5342 = vpack.c.bf16 %v5236, %v5235
      %v5343 = vpack.c.bf16 %v5238, %v5237
      %v5344 = vpack.c.bf16 %v5240, %v5239
      %v5345 = vpack.c.bf16 %v5242, %v5241
      %v5346 = vpack.c.bf16 %v5244, %v5243
      %v5347 = vpack.c.bf16 %v5246, %v5245
      %v5348 = vpack.c.bf16 %v5248, %v5247
      %v5357 = vunpack.c.l.b16 %v5341
      %v5358 = vunpack.c.h.b16 %v5341
      %v5359 = vunpack.c.l.b16 %v5342
      %v5360 = vunpack.c.h.b16 %v5342
      %v5361 = vunpack.c.l.b16 %v5343
      %v5362 = vunpack.c.h.b16 %v5343
      %v5363 = vunpack.c.l.b16 %v5344
      %v5364 = vunpack.c.h.b16 %v5344
      %v5365 = vunpack.c.l.b16 %v5345
      %v5366 = vunpack.c.h.b16 %v5345
      %v5367 = vunpack.c.l.b16 %v5346
      %v5368 = vunpack.c.h.b16 %v5346
      %v5369 = vunpack.c.l.b16 %v5347
      %v5370 = vunpack.c.h.b16 %v5347
      %v5371 = vunpack.c.l.b16 %v5348
      %v5372 = vunpack.c.h.b16 %v5348
      %v5373 = vpack.c.b16 %v5357, %v5357
      %v5374 = vpack.c.b16 %v5358, %v5358
      %v5375 = vpack.c.b16 %v5359, %v5359
      %v5376 = vpack.c.b16 %v5360, %v5360
      %v5377 = vpack.c.b16 %v5361, %v5361
      %v5378 = vpack.c.b16 %v5362, %v5362
      %v5379 = vpack.c.b16 %v5363, %v5363
      %v5380 = vpack.c.b16 %v5364, %v5364
      %v5381 = vpack.c.b16 %v5365, %v5365
      %v5382 = vpack.c.b16 %v5366, %v5366
      %v5383 = vpack.c.b16 %v5367, %v5367
      %v5384 = vpack.c.b16 %v5368, %v5368
      %v5385 = vpack.c.b16 %v5369, %v5369
      %v5386 = vpack.c.b16 %v5370, %v5370
      %v5387 = vpack.c.b16 %v5371, %v5371
      %v5388 = vpack.c.b16 %v5372, %v5372
      %s5405 = scalar_lea.vmem %s208, 64
      %5406 = vst.msk [vmem:[%s5405] sm:$0xf] %vm2828, %v5373
      %5407 = vst.msk [vmem:[%s5405 + $0x4] sm:$0xf] %vm2828, %v5374
      %5408 = vst.msk [vmem:[%s5405 + $0x8] sm:$0xf] %vm2828, %v5375
      %5409 = vst.msk [vmem:[%s5405 + $0xc] sm:$0xf] %vm2828, %v5376
      %5410 = vst.msk [vmem:[%s5405 + $0x10] sm:$0xf] %vm2828, %v5377
      %5411 = vst.msk [vmem:[%s5405 + $0x14] sm:$0xf] %vm2828, %v5378
      %5412 = vst.msk [vmem:[%s5405 + $0x18] sm:$0xf] %vm2828, %v5379
      %5413 = vst.msk [vmem:[%s5405 + $0x1c] sm:$0xf] %vm2828, %v5380
      %5414 = vst.msk [vmem:[%s5405 + $0x20] sm:$0xf] %vm2828, %v5381
      %5415 = vst.msk [vmem:[%s5405 + $0x24] sm:$0xf] %vm2828, %v5382
      %5416 = vst.msk [vmem:[%s5405 + $0x28] sm:$0xf] %vm2828, %v5383
      %5417 = vst.msk [vmem:[%s5405 + $0x2c] sm:$0xf] %vm2828, %v5384
      %5418 = vst.msk [vmem:[%s5405 + $0x30] sm:$0xf] %vm2828, %v5385
      %5419 = vst.msk [vmem:[%s5405 + $0x34] sm:$0xf] %vm2828, %v5386
      %5420 = vst.msk [vmem:[%s5405 + $0x38] sm:$0xf] %vm2828, %v5387
      %5421 = vst.msk [vmem:[%s5405 + $0x3c] sm:$0xf] %vm2828, %v5388
      %vm5422 = vcmask 57344
      %5423 = vst.msk [vmem:[%s211] sm:$0x1] %vm5422, %v5286
      %5424 = vst.msk [vmem:[%s214] sm:$0x1] %vm5422, %v5340
      %p5425 = scmp.lt.s32.totalorder %s16, 1
      %s5426 = scalar_select %p5425, %s16, 1
      %s5427 = smul.addr %s5426, 32
      %s5428 = smul.addr %s5427, 4
      %s5429 = scalar_lea.vmem %s2, %s5428
      %p5430 = scmp.lt.s32.totalorder %s16, 1
      %s5431 = scalar_select %p5430, %s16, 1
      %s5432 = scalar_lea.vmem %s3, %s5431
      %p5433 = scmp.lt.s32.totalorder %s16, 1
      %s5434 = scalar_select %p5433, %s16, 1
      %s5435 = scalar_lea.vmem %s4, %s5434
      // Predicated region
      $region29: #{bottleneck_forward.3} parent=27 // pred_check
        %p5436 = pneg %p81
      $region30: #{bottleneck_forward.3} parent=27 // pred_check_branch
        %5438 = sbr.rel (%p5436) target = $region32
      $region31: #{bottleneck_forward.3} parent=27 // pred_region
        _
      $region32: #{bottleneck_forward.3} parent=27 // pred_fallthru
        _
      // Predicated region
      $region33: #{bottleneck_forward.3} parent=27 // pred_check
        %p5439 = pneg %p107
      $region34: #{bottleneck_forward.3} parent=27 // pred_check_branch
        %5441 = sbr.rel (%p5439) target = $region36
      $region35: #{bottleneck_forward.3} parent=27 // pred_region
        _
      $region36: #{bottleneck_forward.3} parent=27 // pred_fallthru
        _
      // Predicated region
      $region37: #{bottleneck_forward.3} parent=27 // pred_check
        %p5442 = pneg %p133
      $region38: #{bottleneck_forward.3} parent=27 // pred_check_branch
        %5444 = sbr.rel (%p5442) target = $region40
      $region39: #{bottleneck_forward.3} parent=27 // pred_region
        _
      $region40: #{bottleneck_forward.3} parent=27 // pred_fallthru
        _
    $region28: #{bottleneck_forward.3} parent=5 // pred_fallthru
      _
    %p5445 = scmp.le.s32.totalorder 2, %s11
    // Predicated region
    $region41: #{bottleneck_forward.3} parent=5 // pred_check
      %p5446 = pneg %p5445
    $region42: #{bottleneck_forward.3} parent=5 // pred_check_branch
      %5448 = sbr.rel (%p5446) target = $region44
    $region43: #{bottleneck_forward.3} parent=5 // pred_region
      %s5449 = ssub.s32 %s11, 2
      // Predicated region
      $region45: #{bottleneck_forward.3} parent=43 // pred_check
        %p5450 = pneg %p87
      $region46: #{bottleneck_forward.3} parent=43 // pred_check_branch
        %5452 = sbr.rel (%p5450) target = $region48
      $region47: #{bottleneck_forward.3} parent=43 // pred_region
        %p5453 = scmp.lt.s32.totalorder %s17, 1
        %s5454 = scalar_select %p5453, %s17, 1
        %s5455 = smul.addr %s5454, 32
        %s5456 = smul.addr %s5455, 4
        %s5457 = scalar_lea.vmem %s2, %s5456
      $region48: #{bottleneck_forward.3} parent=43 // pred_fallthru
        _
      // Predicated region
      $region49: #{bottleneck_forward.3} parent=43 // pred_check
        %p5458 = pneg %p113
      $region50: #{bottleneck_forward.3} parent=43 // pred_check_branch
        %5460 = sbr.rel (%p5458) target = $region52
      $region51: #{bottleneck_forward.3} parent=43 // pred_region
        %p5461 = scmp.lt.s32.totalorder %s17, 1
        %s5462 = scalar_select %p5461, %s17, 1
        %s5463 = scalar_lea.vmem %s3, %s5462
      $region52: #{bottleneck_forward.3} parent=43 // pred_fallthru
        _
      // Predicated region
      $region53: #{bottleneck_forward.3} parent=43 // pred_check
        %p5464 = pneg %p139
      $region54: #{bottleneck_forward.3} parent=43 // pred_check_branch
        %5466 = sbr.rel (%p5464) target = $region56
      $region55: #{bottleneck_forward.3} parent=43 // pred_region
        %p5467 = scmp.lt.s32.totalorder %s17, 1
        %s5468 = scalar_select %p5467, %s17, 1
        %s5469 = scalar_lea.vmem %s4, %s5468
      $region56: #{bottleneck_forward.3} parent=43 // pred_fallthru
        _
    $region44: #{bottleneck_forward.3} parent=5 // pred_fallthru
      _
  $region6: #{bottleneck_forward.3} parent=0 // loop_footer
    %s15 = sadd.s32 1, %s11
  $region7: #{bottleneck_forward.3} parent=0 // loop_footer_branch
    %10 = sbr.rel target = $region3
  $region8: #{bottleneck_forward.3} parent=0 // loop_exit
    _

// kernel: bottleneck_forward.4
$region0: #{bottleneck_forward.4}
  #allocation0 [shape = 'u32[]', space=smem, size = 0x4, offset = 0x4, fixed_abs, tag = 'smem constant byte address 0x4 - core index']
  #allocation1 [shape = 'u32[144,128]{1,0:T(1,128)}', space=vmem, size = 0x12000, scoped, tag = 'internal scratch']
  #allocation2 [shape = 'bf16[1,18,18,8]{3,2,1,0:T(8,128)(2,1)}', space=vmem, size = 0x1b000, scoped, tag = 'scratch operand']
  %s0 = inlined_call_operand.vmem [shape: bf16[2,16,16,8], index: 0, kind: input, shape index: {}]
  %s1 = inlined_call_operand.vmem [shape: f32[1,8], index: 1, kind: input, shape index: {}]
  %s2 = inlined_call_operand.vmem [shape: f32[1,8], index: 2, kind: input, shape index: {}]
  %s3 = inlined_call_operand.vmem [shape: bf16[9,8,8], index: 3, kind: input, shape index: {}]
  %s4 = inlined_call_operand.vmem [shape: bf16[2,16,16,8], index: 4, kind: output, shape index: {0}]
  %s5 = inlined_call_operand.vmem [shape: f32[2,1,8], index: 5, kind: output, shape index: {1}]
  %s6 = inlined_call_operand.vmem [shape: f32[2,1,8], index: 6, kind: output, shape index: {2}]
  %7 = xla_tuple %s4, %s5, %s6
  %s8 = sld [smem:[#allocation0]]
  $region65: #{bottleneck_forward.4} parent=0
    _
  %s10 = ssub.s32 1, %s8
  %s11 = scalar_select 0, %s10, %s8
  loop: start=0, step=1, limit=4
  $region2: #{bottleneck_forward.4} parent=0 // loop_pre_header
    _
  $region3: #{bottleneck_forward.4} parent=0 // loop_header
    %s13 = sphi 0, %s17
    %p14 = scmp.ge.s32.totalorder %s13, 4
    %s23 = sphi 0, %s25
    %s26 = sphi 0, %s23
    %s27 = sphi 0, %s26
    %s43 = sphi 0, %s27
    %s47 = sphi 0, %s47
    %s49 = sphi 0, %s47
    %s50 = sphi 0, %s49
    %s64 = sphi 0, %s50
    %s68 = sphi 0, %s68
    %s70 = sphi 0, %s68
    %s71 = sphi 0, %s70
    %s85 = sphi 0, %s71
    %s89 = sphi 0, %s89
    %s91 = sphi 0, %s89
    %s92 = sphi 0, %s91
    %s106 = sphi 0, %s92
    %s112 = sphi 0, %s114
    %s115 = sphi 0, %s112
    %s116 = sphi 0, %s115
    %s132 = sphi 0, %s116
    %s138 = sphi 0, %s140
    %s141 = sphi 0, %s138
    %s142 = sphi 0, %s141
    %s158 = sphi 0, %s142
    %s164 = sphi 0, %s166
    %s167 = sphi 0, %s164
    %s168 = sphi 0, %s167
    %s184 = sphi 0, %s168
  $region4: #{bottleneck_forward.4} parent=0 // loop_header_branch
    %16 = sbr.rel (%p14) target = $region8
  $region5: #{bottleneck_forward.4} parent=0 // loop_body
    %s18 = ssub.s32 %s13, 1
    %s19 = ssub.s32 %s13, 2
    %s20 = sadd.s32 %s13, 1
    %s21 = ssub.s32 %s13, %s20
    %p22 = scmp.eq.s32.totalorder %s21, 0
    %s24 = sadd.s32 %s23, 1
    %s25 = scalar_select %p22, %s23, %s24
    %p28 = pneg %p22
    %p29 = scmp.eq.s32.totalorder %s13, 1
    %p30 = por %p28, %p29
    %p31 = scmp.ne.s32.totalorder %s23, %s26
    %p32 = scmp.eq.s32.totalorder %s13, 0
    %p33 = por %p31, %p32
    %p34 = scmp.ne.s32.totalorder %s23, %s26
    %p35 = scmp.eq.s32.totalorder %s18, 1
    %p36 = por %p34, %p35
    %p37 = scmp.ne.s32.totalorder %s26, %s27
    %p38 = scmp.eq.s32.totalorder %s18, 0
    %p39 = por %p37, %p38
    %p40 = scmp.ne.s32.totalorder %s26, %s27
    %p41 = scmp.eq.s32.totalorder %s19, 1
    %p42 = por %p40, %p41
    %p44 = scmp.ne.s32.totalorder %s27, %s43
    %p45 = scmp.eq.s32.totalorder %s19, 0
    %p46 = por %p44, %p45
    %s48 = sadd.s32 %s47, 1
    %p51 = scmp.eq.s32.totalorder %s13, 1
    %p52 = scmp.ne.s32.totalorder %s47, %s49
    %p53 = scmp.eq.s32.totalorder %s13, 0
    %p54 = por %p52, %p53
    %p55 = scmp.ne.s32.totalorder %s47, %s49
    %p56 = scmp.eq.s32.totalorder %s18, 1
    %p57 = por %p55, %p56
    %p58 = scmp.ne.s32.totalorder %s49, %s50
    %p59 = scmp.eq.s32.totalorder %s18, 0
    %p60 = por %p58, %p59
    %p61 = scmp.ne.s32.totalorder %s49, %s50
    %p62 = scmp.eq.s32.totalorder %s19, 1
    %p63 = por %p61, %p62
    %p65 = scmp.ne.s32.totalorder %s50, %s64
    %p66 = scmp.eq.s32.totalorder %s19, 0
    %p67 = por %p65, %p66
    %s69 = sadd.s32 %s68, 1
    %p72 = scmp.eq.s32.totalorder %s13, 1
    %p73 = scmp.ne.s32.totalorder %s68, %s70
    %p74 = scmp.eq.s32.totalorder %s13, 0
    %p75 = por %p73, %p74
    %p76 = scmp.ne.s32.totalorder %s68, %s70
    %p77 = scmp.eq.s32.totalorder %s18, 1
    %p78 = por %p76, %p77
    %p79 = scmp.ne.s32.totalorder %s70, %s71
    %p80 = scmp.eq.s32.totalorder %s18, 0
    %p81 = por %p79, %p80
    %p82 = scmp.ne.s32.totalorder %s70, %s71
    %p83 = scmp.eq.s32.totalorder %s19, 1
    %p84 = por %p82, %p83
    %p86 = scmp.ne.s32.totalorder %s71, %s85
    %p87 = scmp.eq.s32.totalorder %s19, 0
    %p88 = por %p86, %p87
    %s90 = sadd.s32 %s89, 1
    %p93 = scmp.eq.s32.totalorder %s13, 1
    %p94 = scmp.ne.s32.totalorder %s89, %s91
    %p95 = scmp.eq.s32.totalorder %s13, 0
    %p96 = por %p94, %p95
    %p97 = scmp.ne.s32.totalorder %s89, %s91
    %p98 = scmp.eq.s32.totalorder %s18, 1
    %p99 = por %p97, %p98
    %p100 = scmp.ne.s32.totalorder %s91, %s92
    %p101 = scmp.eq.s32.totalorder %s18, 0
    %p102 = por %p100, %p101
    %p103 = scmp.ne.s32.totalorder %s91, %s92
    %p104 = scmp.eq.s32.totalorder %s19, 1
    %p105 = por %p103, %p104
    %p107 = scmp.ne.s32.totalorder %s92, %s106
    %p108 = scmp.eq.s32.totalorder %s19, 0
    %p109 = por %p107, %p108
    %s110 = ssub.s32 %s13, %s20
    %p111 = scmp.eq.s32.totalorder %s110, 0
    %s113 = sadd.s32 %s112, 1
    %s114 = scalar_select %p111, %s112, %s113
    %p117 = pneg %p111
    %p118 = scmp.eq.s32.totalorder %s13, 1
    %p119 = por %p117, %p118
    %p120 = scmp.ne.s32.totalorder %s112, %s115
    %p121 = scmp.eq.s32.totalorder %s13, 0
    %p122 = por %p120, %p121
    %p123 = scmp.ne.s32.totalorder %s112, %s115
    %p124 = scmp.eq.s32.totalorder %s18, 1
    %p125 = por %p123, %p124
    %p126 = scmp.ne.s32.totalorder %s115, %s116
    %p127 = scmp.eq.s32.totalorder %s18, 0
    %p128 = por %p126, %p127
    %p129 = scmp.ne.s32.totalorder %s115, %s116
    %p130 = scmp.eq.s32.totalorder %s19, 1
    %p131 = por %p129, %p130
    %p133 = scmp.ne.s32.totalorder %s116, %s132
    %p134 = scmp.eq.s32.totalorder %s19, 0
    %p135 = por %p133, %p134
    %s136 = ssub.s32 %s13, %s20
    %p137 = scmp.eq.s32.totalorder %s136, 0
    %s139 = sadd.s32 %s138, 1
    %s140 = scalar_select %p137, %s138, %s139
    %p143 = pneg %p137
    %p144 = scmp.eq.s32.totalorder %s13, 1
    %p145 = por %p143, %p144
    %p146 = scmp.ne.s32.totalorder %s138, %s141
    %p147 = scmp.eq.s32.totalorder %s13, 0
    %p148 = por %p146, %p147
    %p149 = scmp.ne.s32.totalorder %s138, %s141
    %p150 = scmp.eq.s32.totalorder %s18, 1
    %p151 = por %p149, %p150
    %p152 = scmp.ne.s32.totalorder %s141, %s142
    %p153 = scmp.eq.s32.totalorder %s18, 0
    %p154 = por %p152, %p153
    %p155 = scmp.ne.s32.totalorder %s141, %s142
    %p156 = scmp.eq.s32.totalorder %s19, 1
    %p157 = por %p155, %p156
    %p159 = scmp.ne.s32.totalorder %s142, %s158
    %p160 = scmp.eq.s32.totalorder %s19, 0
    %p161 = por %p159, %p160
    %s162 = ssub.s32 %s13, %s20
    %p163 = scmp.eq.s32.totalorder %s162, 0
    %s165 = sadd.s32 %s164, 1
    %s166 = scalar_select %p163, %s164, %s165
    %p169 = pneg %p163
    %p170 = scmp.eq.s32.totalorder %s13, 1
    %p171 = por %p169, %p170
    %p172 = scmp.ne.s32.totalorder %s164, %s167
    %p173 = scmp.eq.s32.totalorder %s13, 0
    %p174 = por %p172, %p173
    %p175 = scmp.ne.s32.totalorder %s164, %s167
    %p176 = scmp.eq.s32.totalorder %s18, 1
    %p177 = por %p175, %p176
    %p178 = scmp.ne.s32.totalorder %s167, %s168
    %p179 = scmp.eq.s32.totalorder %s18, 0
    %p180 = por %p178, %p179
    %p181 = scmp.ne.s32.totalorder %s167, %s168
    %p182 = scmp.eq.s32.totalorder %s19, 1
    %p183 = por %p181, %p182
    %p185 = scmp.ne.s32.totalorder %s168, %s184
    %p186 = scmp.eq.s32.totalorder %s19, 0
    %p187 = por %p185, %p186
    %p188 = scmp.le.s32.totalorder 1, %s13
    %p189 = scmp.lt.s32.totalorder %s13, 3
    %p190 = pnand %p188, %p189
    %p191 = pneg %p190
    // Predicated region
    $region9: #{bottleneck_forward.4} parent=5 // pred_check
      _
    $region10: #{bottleneck_forward.4} parent=5 // pred_check_branch
      %193 = sbr.rel (%p190) target = $region12
    $region11: #{bottleneck_forward.4} parent=5 // pred_region
      %s194 = ssub.s32 %s13, 1
      // Predicated region
      $region13: #{bottleneck_forward.4} parent=11 // pred_check
        %p195 = pneg %p60
      $region14: #{bottleneck_forward.4} parent=11 // pred_check_branch
        %197 = sbr.rel (%p195) target = $region16
      $region15: #{bottleneck_forward.4} parent=11 // pred_region
        _
      $region16: #{bottleneck_forward.4} parent=11 // pred_fallthru
        _
      // Predicated region
      $region17: #{bottleneck_forward.4} parent=11 // pred_check
        %p198 = pneg %p81
      $region18: #{bottleneck_forward.4} parent=11 // pred_check_branch
        %200 = sbr.rel (%p198) target = $region20
      $region19: #{bottleneck_forward.4} parent=11 // pred_region
        _
      $region20: #{bottleneck_forward.4} parent=11 // pred_fallthru
        _
      // Predicated region
      $region21: #{bottleneck_forward.4} parent=11 // pred_check
        %p201 = pneg %p102
      $region22: #{bottleneck_forward.4} parent=11 // pred_check_branch
        %203 = sbr.rel (%p201) target = $region24
      $region23: #{bottleneck_forward.4} parent=11 // pred_region
        _
      $region24: #{bottleneck_forward.4} parent=11 // pred_fallthru
        _
    $region12: #{bottleneck_forward.4} parent=5 // pred_fallthru
      _
    %p204 = scmp.lt.s32.totalorder %s13, 2
    // Predicated region
    $region25: #{bottleneck_forward.4} parent=5 // pred_check
      %p205 = pneg %p204
    $region26: #{bottleneck_forward.4} parent=5 // pred_check_branch
      %207 = sbr.rel (%p205) target = $region28
    $region27: #{bottleneck_forward.4} parent=5 // pred_region
      // Predicated region
      $region29: #{bottleneck_forward.4} parent=27 // pred_check
        %p208 = pneg %p33
      $region30: #{bottleneck_forward.4} parent=27 // pred_check_branch
        %210 = sbr.rel (%p208) target = $region32
      $region31: #{bottleneck_forward.4} parent=27 // pred_region
        %p211 = scmp.lt.s32.totalorder %s13, 1
        %s212 = scalar_select %p211, %s13, 1
        %s213 = smul.addr %s212, 32
        %s214 = smul.addr %s213, 4
        %s215 = scalar_lea.vmem %s0, %s214
      $region32: #{bottleneck_forward.4} parent=27 // pred_fallthru
        _
    $region28: #{bottleneck_forward.4} parent=5 // pred_fallthru
      _
    %p216 = scmp.le.s32.totalorder 1, %s13
    %p217 = scmp.lt.s32.totalorder %s13, 3
    %p218 = pnand %p216, %p217
    %p219 = pneg %p218
    // Predicated region
    $region33: #{bottleneck_forward.4} parent=5 // pred_check
      _
    $region34: #{bottleneck_forward.4} parent=5 // pred_check_branch
      %221 = sbr.rel (%p218) target = $region36
    $region35: #{bottleneck_forward.4} parent=5 // pred_region
      %s222 = ssub.s32 %s13, 1
      %p223 = scmp.lt.s32.totalorder %s18, 1
      %s224 = scalar_select %p223, %s18, 1
      %s225 = smul.addr %s224, 32
      %s226 = smul.addr %s225, 4
      %s227 = scalar_lea.vmem %s0, %s226
      %p228 = pneg %p39
      %p229 = pneg %p36
      %p230 = pneg %p60
      %p231 = pneg %p57
      %p232 = pneg %p81
      %p233 = pneg %p78
      %p234 = pneg %p102
      %p235 = pneg %p99
      %p236 = pneg %p128
      %p237 = pneg %p125
      %p238 = scmp.lt.s32.totalorder %s18, 1
      %s239 = scalar_select %p238, %s18, 1
      %s240 = smul.addr %s239, 32
      %s241 = smul.addr %s240, 4
      %s242 = scalar_lea.vmem %s4, %s241
      %p243 = pneg %p154
      %p244 = pneg %p151
      %p245 = scmp.lt.s32.totalorder %s18, 1
      %s246 = scalar_select %p245, %s18, 1
      %s247 = scalar_lea.vmem %s5, %s246
      %p248 = pneg %p180
      %p249 = pneg %p177
      %p250 = scmp.lt.s32.totalorder %s18, 1
      %s251 = scalar_select %p250, %s18, 1
      %s252 = scalar_lea.vmem %s6, %s251
      %p253 = scmp.lt.s32.totalorder %s18, 1
      %s254 = scalar_select %p253, %s18, 1
      %s255 = smul.addr %s254, 32
      %s256 = smul.addr %s255, 4
      %s257 = scalar_lea.vmem %s0, %s256
      %p258 = scmp.lt.s32.totalorder %s18, 1
      %s259 = scalar_select %p258, %s18, 1
      %s260 = smul.addr %s259, 32
      %s261 = smul.addr %s260, 4
      %s262 = scalar_lea.vmem %s4, %s261
      %p263 = scmp.lt.s32.totalorder %s18, 1
      %s264 = scalar_select %p263, %s18, 1
      %s265 = scalar_lea.vmem %s5, %s264
      %p266 = scmp.lt.s32.totalorder %s18, 1
      %s267 = scalar_select %p266, %s18, 1
      %s268 = scalar_lea.vmem %s6, %s267
      %v270 = vld [vmem:[%s1] sm:$0x1]
      %v271 = vld [vmem:[%s2] sm:$0x1]
      %v272 = vld [vmem:[%s3] sm:$0xf]
      %s273 = scalar_lea.vmem %s3, 4
      %v274 = vld [vmem:[%s273] sm:$0xf]
      %s275 = scalar_lea.vmem %s3, 8
      %v276 = vld [vmem:[%s275] sm:$0xf]
      %s277 = scalar_lea.vmem %s3, 12
      %v278 = vld [vmem:[%s277] sm:$0xf]
      %s279 = scalar_lea.vmem %s3, 16
      %v280 = vld [vmem:[%s279] sm:$0xf]
      %s281 = scalar_lea.vmem %s3, 20
      %v282 = vld [vmem:[%s281] sm:$0xf]
      %s283 = scalar_lea.vmem %s3, 24
      %v284 = vld [vmem:[%s283] sm:$0xf]
      %s285 = scalar_lea.vmem %s3, 28
      %v286 = vld [vmem:[%s285] sm:$0xf]
      %s287 = scalar_lea.vmem %s3, 32
      %v288 = vld [vmem:[%s287] sm:$0xf]
      %vm289 = vcmask 60416
      %290 = vst.msk [vmem:[#allocation2] sm:$0xf] %vm289, 0
      %291 = vst.msk [vmem:[#allocation2 + $0x4] sm:$0xf] %vm289, 0
      %vm292 = vcmask 57344
      %293 = vst.msk [vmem:[#allocation2 + $0x8] sm:$0x1] %vm292, 0
      %s294 = scalar_lea.vmem [#allocation2], 204
      %295 = vst.msk [vmem:[%s294] sm:$0xf] %vm289, 0
      %296 = vst.msk [vmem:[%s294 + $0x4] sm:$0xf] %vm289, 0
      %297 = vst.msk [vmem:[%s294 + $0x8] sm:$0x1] %vm292, 0
      %vm298 = vcmask 57344
      %vm299 = vsmask.f32 256
      %vm300 = vmand %vm298, %vm299
      %v301 = vld [vmem:[#allocation2] sm:$0x1]
      %v302 = vsel %vm300, 0, %v301
      %303 = vst [vmem:[#allocation2] sm:$0x1] %v302
      %v304 = vld [vmem:[#allocation2 + $0xc] sm:$0x1]
      %v305 = vsel %vm300, 0, %v304
      %306 = vst [vmem:[#allocation2 + $0xc] sm:$0x1] %v305
      %v307 = vld [vmem:[#allocation2 + $0x18] sm:$0x1]
      %v308 = vsel %vm300, 0, %v307
      %309 = vst [vmem:[#allocation2 + $0x18] sm:$0x1] %v308
      %v310 = vld [vmem:[#allocation2 + $0x24] sm:$0x1]
      %v311 = vsel %vm300, 0, %v310
      %312 = vst [vmem:[#allocation2 + $0x24] sm:$0x1] %v311
      %v313 = vld [vmem:[#allocation2 + $0x30] sm:$0x1]
      %v314 = vsel %vm300, 0, %v313
      %315 = vst [vmem:[#allocation2 + $0x30] sm:$0x1] %v314
      %v316 = vld [vmem:[#allocation2 + $0x3c] sm:$0x1]
      %v317 = vsel %vm300, 0, %v316
      %318 = vst [vmem:[#allocation2 + $0x3c] sm:$0x1] %v317
      %v319 = vld [vmem:[#allocation2 + $0x48] sm:$0x1]
      %v320 = vsel %vm300, 0, %v319
      %321 = vst [vmem:[#allocation2 + $0x48] sm:$0x1] %v320
      %v322 = vld [vmem:[#allocation2 + $0x54] sm:$0x1]
      %v323 = vsel %vm300, 0, %v322
      %324 = vst [vmem:[#allocation2 + $0x54] sm:$0x1] %v323
      %v325 = vld [vmem:[#allocation2 + $0x60] sm:$0x1]
      %v326 = vsel %vm300, 0, %v325
      %327 = vst [vmem:[#allocation2 + $0x60] sm:$0x1] %v326
      %v328 = vld [vmem:[#allocation2 + $0x6c] sm:$0x1]
      %v329 = vsel %vm300, 0, %v328
      %330 = vst [vmem:[#allocation2 + $0x6c] sm:$0x1] %v329
      %v331 = vld [vmem:[#allocation2 + $0x78] sm:$0x1]
      %v332 = vsel %vm300, 0, %v331
      %333 = vst [vmem:[#allocation2 + $0x78] sm:$0x1] %v332
      %v334 = vld [vmem:[#allocation2 + $0x84] sm:$0x1]
      %v335 = vsel %vm300, 0, %v334
      %336 = vst [vmem:[#allocation2 + $0x84] sm:$0x1] %v335
      %v337 = vld [vmem:[#allocation2 + $0x90] sm:$0x1]
      %v338 = vsel %vm300, 0, %v337
      %339 = vst [vmem:[#allocation2 + $0x90] sm:$0x1] %v338
      %v340 = vld [vmem:[#allocation2 + $0x9c] sm:$0x1]
      %v341 = vsel %vm300, 0, %v340
      %342 = vst [vmem:[#allocation2 + $0x9c] sm:$0x1] %v341
      %v343 = vld [vmem:[#allocation2 + $0xa8] sm:$0x1]
      %v344 = vsel %vm300, 0, %v343
      %345 = vst [vmem:[#allocation2 + $0xa8] sm:$0x1] %v344
      %v346 = vld [vmem:[#allocation2 + $0xb4] sm:$0x1]
      %v347 = vsel %vm300, 0, %v346
      %348 = vst [vmem:[#allocation2 + $0xb4] sm:$0x1] %v347
      %v349 = vld [vmem:[#allocation2 + $0xc0] sm:$0x1]
      %v350 = vsel %vm300, 0, %v349
      %351 = vst [vmem:[#allocation2 + $0xc0] sm:$0x1] %v350
      %v352 = vld [vmem:[#allocation2 + $0xcc] sm:$0x1]
      %v353 = vsel %vm300, 0, %v352
      %354 = vst [vmem:[#allocation2 + $0xcc] sm:$0x1] %v353
      %vm355 = vsmask.f32 7938
      %vm356 = vmand %vm298, %vm355
      %v357 = vld [vmem:[#allocation2 + $0x8] sm:$0x1]
      %v358 = vsel %vm356, 0, %v357
      %359 = vst [vmem:[#allocation2 + $0x8] sm:$0x1] %v358
      %v360 = vld [vmem:[#allocation2 + $0x14] sm:$0x1]
      %v361 = vsel %vm356, 0, %v360
      %362 = vst [vmem:[#allocation2 + $0x14] sm:$0x1] %v361
      %v363 = vld [vmem:[#allocation2 + $0x20] sm:$0x1]
      %v364 = vsel %vm356, 0, %v363
      %365 = vst [vmem:[#allocation2 + $0x20] sm:$0x1] %v364
      %v366 = vld [vmem:[#allocation2 + $0x2c] sm:$0x1]
      %v367 = vsel %vm356, 0, %v366
      %368 = vst [vmem:[#allocation2 + $0x2c] sm:$0x1] %v367
      %v369 = vld [vmem:[#allocation2 + $0x38] sm:$0x1]
      %v370 = vsel %vm356, 0, %v369
      %371 = vst [vmem:[#allocation2 + $0x38] sm:$0x1] %v370
      %v372 = vld [vmem:[#allocation2 + $0x44] sm:$0x1]
      %v373 = vsel %vm356, 0, %v372
      %374 = vst [vmem:[#allocation2 + $0x44] sm:$0x1] %v373
      %v375 = vld [vmem:[#allocation2 + $0x50] sm:$0x1]
      %v376 = vsel %vm356, 0, %v375
      %377 = vst [vmem:[#allocation2 + $0x50] sm:$0x1] %v376
      %v378 = vld [vmem:[#allocation2 + $0x5c] sm:$0x1]
      %v379 = vsel %vm356, 0, %v378
      %380 = vst [vmem:[#allocation2 + $0x5c] sm:$0x1] %v379
      %v381 = vld [vmem:[#allocation2 + $0x68] sm:$0x1]
      %v382 = vsel %vm356, 0, %v381
      %383 = vst [vmem:[#allocation2 + $0x68] sm:$0x1] %v382
      %v384 = vld [vmem:[#allocation2 + $0x74] sm:$0x1]
      %v385 = vsel %vm356, 0, %v384
      %386 = vst [vmem:[#allocation2 + $0x74] sm:$0x1] %v385
      %v387 = vld [vmem:[#allocation2 + $0x80] sm:$0x1]
      %v388 = vsel %vm356, 0, %v387
      %389 = vst [vmem:[#allocation2 + $0x80] sm:$0x1] %v388
      %v390 = vld [vmem:[#allocation2 + $0x8c] sm:$0x1]
      %v391 = vsel %vm356, 0, %v390
      %392 = vst [vmem:[#allocation2 + $0x8c] sm:$0x1] %v391
      %v393 = vld [vmem:[#allocation2 + $0x98] sm:$0x1]
      %v394 = vsel %vm356, 0, %v393
      %395 = vst [vmem:[#allocation2 + $0x98] sm:$0x1] %v394
      %v396 = vld [vmem:[#allocation2 + $0xa4] sm:$0x1]
      %v397 = vsel %vm356, 0, %v396
      %398 = vst [vmem:[#allocation2 + $0xa4] sm:$0x1] %v397
      %v399 = vld [vmem:[#allocation2 + $0xb0] sm:$0x1]
      %v400 = vsel %vm356, 0, %v399
      %401 = vst [vmem:[#allocation2 + $0xb0] sm:$0x1] %v400
      %v402 = vld [vmem:[#allocation2 + $0xbc] sm:$0x1]
      %v403 = vsel %vm356, 0, %v402
      %404 = vst [vmem:[#allocation2 + $0xbc] sm:$0x1] %v403
      %v405 = vld [vmem:[#allocation2 + $0xc8] sm:$0x1]
      %v406 = vsel %vm356, 0, %v405
      %407 = vst [vmem:[#allocation2 + $0xc8] sm:$0x1] %v406
      %v408 = vld [vmem:[#allocation2 + $0xd4] sm:$0x1]
      %v409 = vsel %vm356, 0, %v408
      %410 = vst [vmem:[#allocation2 + $0xd4] sm:$0x1] %v409
      %v411 = vld [vmem:[%s257] sm:$0xf]
      %v412 = vld [vmem:[%s257 + $0x4] sm:$0xf]
      %v413 = vld [vmem:[%s257 + $0x8] sm:$0xf]
      %v414 = vld [vmem:[%s257 + $0xc] sm:$0xf]
      %v415 = vld [vmem:[%s257 + $0x10] sm:$0xf]
      %v416 = vld [vmem:[%s257 + $0x14] sm:$0xf]
      %v417 = vld [vmem:[%s257 + $0x18] sm:$0xf]
      %v418 = vld [vmem:[%s257 + $0x1c] sm:$0xf]
      %v419 = vld [vmem:[%s257 + $0x20] sm:$0xf]
      %v420 = vld [vmem:[%s257 + $0x24] sm:$0xf]
      %v421 = vld [vmem:[%s257 + $0x28] sm:$0xf]
      %v422 = vld [vmem:[%s257 + $0x2c] sm:$0xf]
      %v423 = vld [vmem:[%s257 + $0x30] sm:$0xf]
      %v424 = vld [vmem:[%s257 + $0x34] sm:$0xf]
      %v425 = vld [vmem:[%s257 + $0x38] sm:$0xf]
      %v426 = vld [vmem:[%s257 + $0x3c] sm:$0xf]
      %v427 = vunpack.c.l.bf16 %v411
      %v428 = vunpack.c.l.bf16 %v412
      %v429 = vunpack.c.l.bf16 %v413
      %v430 = vunpack.c.l.bf16 %v414
      %v431 = vunpack.c.l.bf16 %v415
      %v432 = vunpack.c.l.bf16 %v416
      %v433 = vunpack.c.l.bf16 %v417
      %v434 = vunpack.c.l.bf16 %v418
      %v435 = vunpack.c.l.bf16 %v419
      %v436 = vunpack.c.l.bf16 %v420
      %v437 = vunpack.c.l.bf16 %v421
      %v438 = vunpack.c.l.bf16 %v422
      %v439 = vunpack.c.l.bf16 %v423
      %v440 = vunpack.c.l.bf16 %v424
      %v441 = vunpack.c.l.bf16 %v425
      %v442 = vunpack.c.l.bf16 %v426
      %v444 = vlaneseq
      %v445 = vshrl.u32 %v444, 7
      %v446 = vsub.s32 0, %v445
      %v447 = vrot.slane %v270, %v446
      %v449 = vmul.f32 %v427, %v447
      %v450 = vmul.f32 %v428, %v447
      %v451 = vmul.f32 %v429, %v447
      %v452 = vmul.f32 %v430, %v447
      %v453 = vmul.f32 %v431, %v447
      %v454 = vmul.f32 %v432, %v447
      %v455 = vmul.f32 %v433, %v447
      %v456 = vmul.f32 %v434, %v447
      %v457 = vmul.f32 %v435, %v447
      %v458 = vmul.f32 %v436, %v447
      %v459 = vmul.f32 %v437, %v447
      %v460 = vmul.f32 %v438, %v447
      %v461 = vmul.f32 %v439, %v447
      %v462 = vmul.f32 %v440, %v447
      %v463 = vmul.f32 %v441, %v447
      %v464 = vmul.f32 %v442, %v447
      %v466 = vlaneseq
      %v467 = vshrl.u32 %v466, 7
      %v468 = vsub.s32 0, %v467
      %v469 = vrot.slane %v271, %v468
      %v471 = vadd.f32 %v449, %v469
      %v472 = vadd.f32 %v450, %v469
      %v473 = vadd.f32 %v451, %v469
      %v474 = vadd.f32 %v452, %v469
      %v475 = vadd.f32 %v453, %v469
      %v476 = vadd.f32 %v454, %v469
      %v477 = vadd.f32 %v455, %v469
      %v478 = vadd.f32 %v456, %v469
      %v479 = vadd.f32 %v457, %v469
      %v480 = vadd.f32 %v458, %v469
      %v481 = vadd.f32 %v459, %v469
      %v482 = vadd.f32 %v460, %v469
      %v483 = vadd.f32 %v461, %v469
      %v484 = vadd.f32 %v462, %v469
      %v485 = vadd.f32 %v463, %v469
      %v486 = vadd.f32 %v464, %v469
      %v487 = vmax.f32 %v471, 0.0
      %v488 = vmax.f32 %v472, 0.0
      %v489 = vmax.f32 %v473, 0.0
      %v490 = vmax.f32 %v474, 0.0
      %v491 = vmax.f32 %v475, 0.0
      %v492 = vmax.f32 %v476, 0.0
      %v493 = vmax.f32 %v477, 0.0
      %v494 = vmax.f32 %v478, 0.0
      %v495 = vmax.f32 %v479, 0.0
      %v496 = vmax.f32 %v480, 0.0
      %v497 = vmax.f32 %v481, 0.0
      %v498 = vmax.f32 %v482, 0.0
      %v499 = vmax.f32 %v483, 0.0
      %v500 = vmax.f32 %v484, 0.0
      %v501 = vmax.f32 %v485, 0.0
      %v502 = vmax.f32 %v486, 0.0
      %v503 = vpack.c.bf16 %v488, %v487
      %v504 = vpack.c.bf16 %v490, %v489
      %v505 = vpack.c.bf16 %v492, %v491
      %v506 = vpack.c.bf16 %v494, %v493
      %v507 = vpack.c.bf16 %v496, %v495
      %v508 = vpack.c.bf16 %v498, %v497
      %v509 = vpack.c.bf16 %v500, %v499
      %v510 = vpack.c.bf16 %v502, %v501
      %v519 = vunpack.c.l.b16 %v503
      %v520 = vunpack.c.h.b16 %v503
      %v521 = vunpack.c.l.b16 %v504
      %v522 = vunpack.c.h.b16 %v504
      %v523 = vunpack.c.l.b16 %v505
      %v524 = vunpack.c.h.b16 %v505
      %v525 = vunpack.c.l.b16 %v506
      %v526 = vunpack.c.h.b16 %v506
      %v527 = vunpack.c.l.b16 %v507
      %v528 = vunpack.c.h.b16 %v507
      %v529 = vunpack.c.l.b16 %v508
      %v530 = vunpack.c.h.b16 %v508
      %v531 = vunpack.c.l.b16 %v509
      %v532 = vunpack.c.h.b16 %v509
      %v533 = vunpack.c.l.b16 %v510
      %v534 = vunpack.c.h.b16 %v510
      %v535 = vpack.c.b16 %v519, %v519
      %v536 = vpack.c.b16 %v520, %v520
      %v537 = vpack.c.b16 %v521, %v521
      %v538 = vpack.c.b16 %v522, %v522
      %v539 = vpack.c.b16 %v523, %v523
      %v540 = vpack.c.b16 %v524, %v524
      %v541 = vpack.c.b16 %v525, %v525
      %v542 = vpack.c.b16 %v526, %v526
      %v543 = vpack.c.b16 %v527, %v527
      %v544 = vpack.c.b16 %v528, %v528
      %v545 = vpack.c.b16 %v529, %v529
      %v546 = vpack.c.b16 %v530, %v530
      %v547 = vpack.c.b16 %v531, %v531
      %v548 = vpack.c.b16 %v532, %v532
      %v549 = vpack.c.b16 %v533, %v533
      %v550 = vpack.c.b16 %v534, %v534
      %vm551 = vsmask.f32 4368
      %vm552 = vmor %vm299, %vm551
      %v554 = vshrl.u32 %v535, 16
      %v556 = vrot.slane %v554, 7
      %v557 = vshll.u32 %v535, 16
      %v559 = vor.u32 %v556, %v557
      %v560 = vrot.slane %v556, 4
      %v562 = vshrl.u32 %v536, 16
      %v564 = vrot.slane %v562, 7
      %v565 = vshll.u32 %v536, 16
      %v567 = vor.u32 %v564, %v565
      %v568 = vsel %vm552, %v560, %v567
      %v569 = vrot.slane %v564, 4
      %v571 = vshrl.u32 %v537, 16
      %v573 = vrot.slane %v571, 7
      %v574 = vshll.u32 %v537, 16
      %v576 = vor.u32 %v573, %v574
      %v577 = vrot.slane %v573, 4
      %v579 = vshrl.u32 %v538, 16
      %v581 = vrot.slane %v579, 7
      %v582 = vshll.u32 %v538, 16
      %v584 = vor.u32 %v581, %v582
      %v585 = vsel %vm552, %v577, %v584
      %v586 = vrot.slane %v581, 4
      %v588 = vshrl.u32 %v539, 16
      %v590 = vrot.slane %v588, 7
      %v591 = vshll.u32 %v539, 16
      %v593 = vor.u32 %v590, %v591
      %v594 = vrot.slane %v590, 4
      %v596 = vshrl.u32 %v540, 16
      %v598 = vrot.slane %v596, 7
      %v599 = vshll.u32 %v540, 16
      %v601 = vor.u32 %v598, %v599
      %v602 = vsel %vm552, %v594, %v601
      %v603 = vrot.slane %v598, 4
      %v605 = vshrl.u32 %v541, 16
      %v607 = vrot.slane %v605, 7
      %v608 = vshll.u32 %v541, 16
      %v610 = vor.u32 %v607, %v608
      %v611 = vrot.slane %v607, 4
      %v613 = vshrl.u32 %v542, 16
      %v615 = vrot.slane %v613, 7
      %v616 = vshll.u32 %v542, 16
      %v618 = vor.u32 %v615, %v616
      %v619 = vsel %vm552, %v611, %v618
      %v620 = vrot.slane %v615, 4
      %v622 = vshrl.u32 %v543, 16
      %v624 = vrot.slane %v622, 7
      %v625 = vshll.u32 %v543, 16
      %v627 = vor.u32 %v624, %v625
      %v628 = vrot.slane %v624, 4
      %v630 = vshrl.u32 %v544, 16
      %v632 = vrot.slane %v630, 7
      %v633 = vshll.u32 %v544, 16
      %v635 = vor.u32 %v632, %v633
      %v636 = vsel %vm552, %v628, %v635
      %v637 = vrot.slane %v632, 4
      %v639 = vshrl.u32 %v545, 16
      %v641 = vrot.slane %v639, 7
      %v642 = vshll.u32 %v545, 16
      %v644 = vor.u32 %v641, %v642
      %v645 = vrot.slane %v641, 4
      %v647 = vshrl.u32 %v546, 16
      %v649 = vrot.slane %v647, 7
      %v650 = vshll.u32 %v546, 16
      %v652 = vor.u32 %v649, %v650
      %v653 = vsel %vm552, %v645, %v652
      %v654 = vrot.slane %v649, 4
      %v656 = vshrl.u32 %v547, 16
      %v658 = vrot.slane %v656, 7
      %v659 = vshll.u32 %v547, 16
      %v661 = vor.u32 %v658, %v659
      %v662 = vrot.slane %v658, 4
      %v664 = vshrl.u32 %v548, 16
      %v666 = vrot.slane %v664, 7
      %v667 = vshll.u32 %v548, 16
      %v669 = vor.u32 %v666, %v667
      %v670 = vsel %vm552, %v662, %v669
      %v671 = vrot.slane %v666, 4
      %v673 = vshrl.u32 %v549, 16
      %v675 = vrot.slane %v673, 7
      %v676 = vshll.u32 %v549, 16
      %v678 = vor.u32 %v675, %v676
      %v679 = vrot.slane %v675, 4
      %v681 = vshrl.u32 %v550, 16
      %v683 = vrot.slane %v681, 7
      %v684 = vshll.u32 %v550, 16
      %v686 = vor.u32 %v683, %v684
      %v687 = vsel %vm552, %v679, %v686
      %v688 = vrot.slane %v683, 4
      %s713 = scalar_lea.vmem [#allocation2], 12
      %vm714 = vcmask 60416
      %vm715 = vmand %vm714, %vm355
      %v716 = vld [vmem:[%s713] sm:$0xf]
      %v717 = vsel %vm715, %v559, %v716
      %718 = vst [vmem:[%s713] sm:$0xf] %v717
      %719 = vst.msk [vmem:[%s713 + $0x4] sm:$0xf] %vm289, %v568
      %v720 = vld [vmem:[%s713 + $0x8] sm:$0x1]
      %v721 = vsel %vm300, %v569, %v720
      %722 = vst [vmem:[%s713 + $0x8] sm:$0x1] %v721
      %v723 = vld [vmem:[%s713 + $0xc] sm:$0xf]
      %v724 = vsel %vm715, %v576, %v723
      %725 = vst [vmem:[%s713 + $0xc] sm:$0xf] %v724
      %726 = vst.msk [vmem:[%s713 + $0x10] sm:$0xf] %vm289, %v585
      %v727 = vld [vmem:[%s713 + $0x14] sm:$0x1]
      %v728 = vsel %vm300, %v586, %v727
      %729 = vst [vmem:[%s713 + $0x14] sm:$0x1] %v728
      %v730 = vld [vmem:[%s713 + $0x18] sm:$0xf]
      %v731 = vsel %vm715, %v593, %v730
      %732 = vst [vmem:[%s713 + $0x18] sm:$0xf] %v731
      %733 = vst.msk [vmem:[%s713 + $0x1c] sm:$0xf] %vm289, %v602
      %v734 = vld [vmem:[%s713 + $0x20] sm:$0x1]
      %v735 = vsel %vm300, %v603, %v734
      %736 = vst [vmem:[%s713 + $0x20] sm:$0x1] %v735
      %v737 = vld [vmem:[%s713 + $0x24] sm:$0xf]
      %v738 = vsel %vm715, %v610, %v737
      %739 = vst [vmem:[%s713 + $0x24] sm:$0xf] %v738
      %740 = vst.msk [vmem:[%s713 + $0x28] sm:$0xf] %vm289, %v619
      %v741 = vld [vmem:[%s713 + $0x2c] sm:$0x1]
      %v742 = vsel %vm300, %v620, %v741
      %743 = vst [vmem:[%s713 + $0x2c] sm:$0x1] %v742
      %v744 = vld [vmem:[%s713 + $0x30] sm:$0xf]
      %v745 = vsel %vm715, %v627, %v744
      %746 = vst [vmem:[%s713 + $0x30] sm:$0xf] %v745
      %747 = vst.msk [vmem:[%s713 + $0x34] sm:$0xf] %vm289, %v636
      %v748 = vld [vmem:[%s713 + $0x38] sm:$0x1]
      %v749 = vsel %vm300, %v637, %v748
      %750 = vst [vmem:[%s713 + $0x38] sm:$0x1] %v749
      %v751 = vld [vmem:[%s713 + $0x3c] sm:$0xf]
      %v752 = vsel %vm715, %v644, %v751
      %753 = vst [vmem:[%s713 + $0x3c] sm:$0xf] %v752
      %754 = vst.msk [vmem:[%s713 + $0x40] sm:$0xf] %vm289, %v653
      %v755 = vld [vmem:[%s713 + $0x44] sm:$0x1]
      %v756 = vsel %vm300, %v654, %v755
      %757 = vst [vmem:[%s713 + $0x44] sm:$0x1] %v756
      %v758 = vld [vmem:[%s713 + $0x48] sm:$0xf]
      %v759 = vsel %vm715, %v661, %v758
      %760 = vst [vmem:[%s713 + $0x48] sm:$0xf] %v759
      %761 = vst.msk [vmem:[%s713 + $0x4c] sm:$0xf] %vm289, %v670
      %v762 = vld [vmem:[%s713 + $0x50] sm:$0x1]
      %v763 = vsel %vm300, %v671, %v762
      %764 = vst [vmem:[%s713 + $0x50] sm:$0x1] %v763
      %v765 = vld [vmem:[%s713 + $0x54] sm:$0xf]
      %v766 = vsel %vm715, %v678, %v765
      %767 = vst [vmem:[%s713 + $0x54] sm:$0xf] %v766
      %768 = vst.msk [vmem:[%s713 + $0x58] sm:$0xf] %vm289, %v687
      %v769 = vld [vmem:[%s713 + $0x5c] sm:$0x1]
      %v770 = vsel %vm300, %v688, %v769
      %771 = vst [vmem:[%s713 + $0x5c] sm:$0x1] %v770
      %s772 = scalar_lea.vmem %s257, 64
      %v773 = vld [vmem:[%s772] sm:$0xf]
      %v774 = vld [vmem:[%s772 + $0x4] sm:$0xf]
      %v775 = vld [vmem:[%s772 + $0x8] sm:$0xf]
      %v776 = vld [vmem:[%s772 + $0xc] sm:$0xf]
      %v777 = vld [vmem:[%s772 + $0x10] sm:$0xf]
      %v778 = vld [vmem:[%s772 + $0x14] sm:$0xf]
      %v779 = vld [vmem:[%s772 + $0x18] sm:$0xf]
      %v780 = vld [vmem:[%s772 + $0x1c] sm:$0xf]
      %v781 = vld [vmem:[%s772 + $0x20] sm:$0xf]
      %v782 = vld [vmem:[%s772 + $0x24] sm:$0xf]
      %v783 = vld [vmem:[%s772 + $0x28] sm:$0xf]
      %v784 = vld [vmem:[%s772 + $0x2c] sm:$0xf]
      %v785 = vld [vmem:[%s772 + $0x30] sm:$0xf]
      %v786 = vld [vmem:[%s772 + $0x34] sm:$0xf]
      %v787 = vld [vmem:[%s772 + $0x38] sm:$0xf]
      %v788 = vld [vmem:[%s772 + $0x3c] sm:$0xf]
      %v789 = vunpack.c.l.bf16 %v773
      %v790 = vunpack.c.l.bf16 %v774
      %v791 = vunpack.c.l.bf16 %v775
      %v792 = vunpack.c.l.bf16 %v776
      %v793 = vunpack.c.l.bf16 %v777
      %v794 = vunpack.c.l.bf16 %v778
      %v795 = vunpack.c.l.bf16 %v779
      %v796 = vunpack.c.l.bf16 %v780
      %v797 = vunpack.c.l.bf16 %v781
      %v798 = vunpack.c.l.bf16 %v782
      %v799 = vunpack.c.l.bf16 %v783
      %v800 = vunpack.c.l.bf16 %v784
      %v801 = vunpack.c.l.bf16 %v785
      %v802 = vunpack.c.l.bf16 %v786
      %v803 = vunpack.c.l.bf16 %v787
      %v804 = vunpack.c.l.bf16 %v788
      %v805 = vmul.f32 %v789, %v447
      %v806 = vmul.f32 %v790, %v447
      %v807 = vmul.f32 %v791, %v447
      %v808 = vmul.f32 %v792, %v447
      %v809 = vmul.f32 %v793, %v447
      %v810 = vmul.f32 %v794, %v447
      %v811 = vmul.f32 %v795, %v447
      %v812 = vmul.f32 %v796, %v447
      %v813 = vmul.f32 %v797, %v447
      %v814 = vmul.f32 %v798, %v447
      %v815 = vmul.f32 %v799, %v447
      %v816 = vmul.f32 %v800, %v447
      %v817 = vmul.f32 %v801, %v447
      %v818 = vmul.f32 %v802, %v447
      %v819 = vmul.f32 %v803, %v447
      %v820 = vmul.f32 %v804, %v447
      %v821 = vadd.f32 %v805, %v469
      %v822 = vadd.f32 %v806, %v469
      %v823 = vadd.f32 %v807, %v469
      %v824 = vadd.f32 %v808, %v469
      %v825 = vadd.f32 %v809, %v469
      %v826 = vadd.f32 %v810, %v469
      %v827 = vadd.f32 %v811, %v469
      %v828 = vadd.f32 %v812, %v469
      %v829 = vadd.f32 %v813, %v469
      %v830 = vadd.f32 %v814, %v469
      %v831 = vadd.f32 %v815, %v469
      %v832 = vadd.f32 %v816, %v469
      %v833 = vadd.f32 %v817, %v469
      %v834 = vadd.f32 %v818, %v469
      %v835 = vadd.f32 %v819, %v469
      %v836 = vadd.f32 %v820, %v469
      %v837 = vmax.f32 %v821, 0.0
      %v838 = vmax.f32 %v822, 0.0
      %v839 = vmax.f32 %v823, 0.0
      %v840 = vmax.f32 %v824, 0.0
      %v841 = vmax.f32 %v825, 0.0
      %v842 = vmax.f32 %v826, 0.0
      %v843 = vmax.f32 %v827, 0.0
      %v844 = vmax.f32 %v828, 0.0
      %v845 = vmax.f32 %v829, 0.0
      %v846 = vmax.f32 %v830, 0.0
      %v847 = vmax.f32 %v831, 0.0
      %v848 = vmax.f32 %v832, 0.0
      %v849 = vmax.f32 %v833, 0.0
      %v850 = vmax.f32 %v834, 0.0
      %v851 = vmax.f32 %v835, 0.0
      %v852 = vmax.f32 %v836, 0.0
      %v853 = vpack.c.bf16 %v838, %v837
      %v854 = vpack.c.bf16 %v840, %v839
      %v855 = vpack.c.bf16 %v842, %v841
      %v856 = vpack.c.bf16 %v844, %v843
      %v857 = vpack.c.bf16 %v846, %v845
      %v858 = vpack.c.bf16 %v848, %v847
      %v859 = vpack.c.bf16 %v850, %v849
      %v860 = vpack.c.bf16 %v852, %v851
      %v869 = vunpack.c.l.b16 %v853
      %v870 = vunpack.c.h.b16 %v853
      %v871 = vunpack.c.l.b16 %v854
      %v872 = vunpack.c.h.b16 %v854
      %v873 = vunpack.c.l.b16 %v855
      %v874 = vunpack.c.h.b16 %v855
      %v875 = vunpack.c.l.b16 %v856
      %v876 = vunpack.c.h.b16 %v856
      %v877 = vunpack.c.l.b16 %v857
      %v878 = vunpack.c.h.b16 %v857
      %v879 = vunpack.c.l.b16 %v858
      %v880 = vunpack.c.h.b16 %v858
      %v881 = vunpack.c.l.b16 %v859
      %v882 = vunpack.c.h.b16 %v859
      %v883 = vunpack.c.l.b16 %v860
      %v884 = vunpack.c.h.b16 %v860
      %v885 = vpack.c.b16 %v869, %v869
      %v886 = vpack.c.b16 %v870, %v870
      %v887 = vpack.c.b16 %v871, %v871
      %v888 = vpack.c.b16 %v872, %v872
      %v889 = vpack.c.b16 %v873, %v873
      %v890 = vpack.c.b16 %v874, %v874
      %v891 = vpack.c.b16 %v875, %v875
      %v892 = vpack.c.b16 %v876, %v876
      %v893 = vpack.c.b16 %v877, %v877
      %v894 = vpack.c.b16 %v878, %v878
      %v895 = vpack.c.b16 %v879, %v879
      %v896 = vpack.c.b16 %v880, %v880
      %v897 = vpack.c.b16 %v881, %v881
      %v898 = vpack.c.b16 %v882, %v882
      %v899 = vpack.c.b16 %v883, %v883
      %v900 = vpack.c.b16 %v884, %v884
      %v902 = vshrl.u32 %v885, 16
      %v904 = vrot.slane %v902, 7
      %v905 = vshll.u32 %v885, 16
      %v907 = vor.u32 %v904, %v905
      %v908 = vrot.slane %v904, 4
      %v910 = vshrl.u32 %v886, 16
      %v912 = vrot.slane %v910, 7
      %v913 = vshll.u32 %v886, 16
      %v915 = vor.u32 %v912, %v913
      %v916 = vsel %vm552, %v908, %v915
      %v917 = vrot.slane %v912, 4
      %v919 = vshrl.u32 %v887, 16
      %v921 = vrot.slane %v919, 7
      %v922 = vshll.u32 %v887, 16
      %v924 = vor.u32 %v921, %v922
      %v925 = vrot.slane %v921, 4
      %v927 = vshrl.u32 %v888, 16
      %v929 = vrot.slane %v927, 7
      %v930 = vshll.u32 %v888, 16
      %v932 = vor.u32 %v929, %v930
      %v933 = vsel %vm552, %v925, %v932
      %v934 = vrot.slane %v929, 4
      %v936 = vshrl.u32 %v889, 16
      %v938 = vrot.slane %v936, 7
      %v939 = vshll.u32 %v889, 16
      %v941 = vor.u32 %v938, %v939
      %v942 = vrot.slane %v938, 4
      %v944 = vshrl.u32 %v890, 16
      %v946 = vrot.slane %v944, 7
      %v947 = vshll.u32 %v890, 16
      %v949 = vor.u32 %v946, %v947
      %v950 = vsel %vm552, %v942, %v949
      %v951 = vrot.slane %v946, 4
      %v953 = vshrl.u32 %v891, 16
      %v955 = vrot.slane %v953, 7
      %v956 = vshll.u32 %v891, 16
      %v958 = vor.u32 %v955, %v956
      %v959 = vrot.slane %v955, 4
      %v961 = vshrl.u32 %v892, 16
      %v963 = vrot.slane %v961, 7
      %v964 = vshll.u32 %v892, 16
      %v966 = vor.u32 %v963, %v964
      %v967 = vsel %vm552, %v959, %v966
      %v968 = vrot.slane %v963, 4
      %v970 = vshrl.u32 %v893, 16
      %v972 = vrot.slane %v970, 7
      %v973 = vshll.u32 %v893, 16
      %v975 = vor.u32 %v972, %v973
      %v976 = vrot.slane %v972, 4
      %v978 = vshrl.u32 %v894, 16
      %v980 = vrot.slane %v978, 7
      %v981 = vshll.u32 %v894, 16
      %v983 = vor.u32 %v980, %v981
      %v984 = vsel %vm552, %v976, %v983
      %v985 = vrot.slane %v980, 4
      %v987 = vshrl.u32 %v895, 16
      %v989 = vrot.slane %v987, 7
      %v990 = vshll.u32 %v895, 16
      %v992 = vor.u32 %v989, %v990
      %v993 = vrot.slane %v989, 4
      %v995 = vshrl.u32 %v896, 16
      %v997 = vrot.slane %v995, 7
      %v998 = vshll.u32 %v896, 16
      %v1000 = vor.u32 %v997, %v998
      %v1001 = vsel %vm552, %v993, %v1000
      %v1002 = vrot.slane %v997, 4
      %v1004 = vshrl.u32 %v897, 16
      %v1006 = vrot.slane %v1004, 7
      %v1007 = vshll.u32 %v897, 16
      %v1009 = vor.u32 %v1006, %v1007
      %v1010 = vrot.slane %v1006, 4
      %v1012 = vshrl.u32 %v898, 16
      %v1014 = vrot.slane %v1012, 7
      %v1015 = vshll.u32 %v898, 16
      %v1017 = vor.u32 %v1014, %v1015
      %v1018 = vsel %vm552, %v1010, %v1017
      %v1019 = vrot.slane %v1014, 4
      %v1021 = vshrl.u32 %v899, 16
      %v1023 = vrot.slane %v1021, 7
      %v1024 = vshll.u32 %v899, 16
      %v1026 = vor.u32 %v1023, %v1024
      %v1027 = vrot.slane %v1023, 4
      %v1029 = vshrl.u32 %v900, 16
      %v1031 = vrot.slane %v1029, 7
      %v1032 = vshll.u32 %v900, 16
      %v1034 = vor.u32 %v1031, %v1032
      %v1035 = vsel %vm552, %v1027, %v1034
      %v1036 = vrot.slane %v1031, 4
      %s1061 = scalar_lea.vmem [#allocation2], 108
      %v1062 = vld [vmem:[%s1061] sm:$0xf]
      %v1063 = vsel %vm715, %v907, %v1062
      %1064 = vst [vmem:[%s1061] sm:$0xf] %v1063
      %1065 = vst.msk [vmem:[%s1061 + $0x4] sm:$0xf] %vm289, %v916
      %v1066 = vld [vmem:[%s1061 + $0x8] sm:$0x1]
      %v1067 = vsel %vm300, %v917, %v1066
      %1068 = vst [vmem:[%s1061 + $0x8] sm:$0x1] %v1067
      %v1069 = vld [vmem:[%s1061 + $0xc] sm:$0xf]
      %v1070 = vsel %vm715, %v924, %v1069
      %1071 = vst [vmem:[%s1061 + $0xc] sm:$0xf] %v1070
      %1072 = vst.msk [vmem:[%s1061 + $0x10] sm:$0xf] %vm289, %v933
      %v1073 = vld [vmem:[%s1061 + $0x14] sm:$0x1]
      %v1074 = vsel %vm300, %v934, %v1073
      %1075 = vst [vmem:[%s1061 + $0x14] sm:$0x1] %v1074
      %v1076 = vld [vmem:[%s1061 + $0x18] sm:$0xf]
      %v1077 = vsel %vm715, %v941, %v1076
      %1078 = vst [vmem:[%s1061 + $0x18] sm:$0xf] %v1077
      %1079 = vst.msk [vmem:[%s1061 + $0x1c] sm:$0xf] %vm289, %v950
      %v1080 = vld [vmem:[%s1061 + $0x20] sm:$0x1]
      %v1081 = vsel %vm300, %v951, %v1080
      %1082 = vst [vmem:[%s1061 + $0x20] sm:$0x1] %v1081
      %v1083 = vld [vmem:[%s1061 + $0x24] sm:$0xf]
      %v1084 = vsel %vm715, %v958, %v1083
      %1085 = vst [vmem:[%s1061 + $0x24] sm:$0xf] %v1084
      %1086 = vst.msk [vmem:[%s1061 + $0x28] sm:$0xf] %vm289, %v967
      %v1087 = vld [vmem:[%s1061 + $0x2c] sm:$0x1]
      %v1088 = vsel %vm300, %v968, %v1087
      %1089 = vst [vmem:[%s1061 + $0x2c] sm:$0x1] %v1088
      %v1090 = vld [vmem:[%s1061 + $0x30] sm:$0xf]
      %v1091 = vsel %vm715, %v975, %v1090
      %1092 = vst [vmem:[%s1061 + $0x30] sm:$0xf] %v1091
      %1093 = vst.msk [vmem:[%s1061 + $0x34] sm:$0xf] %vm289, %v984
      %v1094 = vld [vmem:[%s1061 + $0x38] sm:$0x1]
      %v1095 = vsel %vm300, %v985, %v1094
      %1096 = vst [vmem:[%s1061 + $0x38] sm:$0x1] %v1095
      %v1097 = vld [vmem:[%s1061 + $0x3c] sm:$0xf]
      %v1098 = vsel %vm715, %v992, %v1097
      %1099 = vst [vmem:[%s1061 + $0x3c] sm:$0xf] %v1098
      %1100 = vst.msk [vmem:[%s1061 + $0x40] sm:$0xf] %vm289, %v1001
      %v1101 = vld [vmem:[%s1061 + $0x44] sm:$0x1]
      %v1102 = vsel %vm300, %v1002, %v1101
      %1103 = vst [vmem:[%s1061 + $0x44] sm:$0x1] %v1102
      %v1104 = vld [vmem:[%s1061 + $0x48] sm:$0xf]
      %v1105 = vsel %vm715, %v1009, %v1104
      %1106 = vst [vmem:[%s1061 + $0x48] sm:$0xf] %v1105
      %1107 = vst.msk [vmem:[%s1061 + $0x4c] sm:$0xf] %vm289, %v1018
      %v1108 = vld [vmem:[%s1061 + $0x50] sm:$0x1]
      %v1109 = vsel %vm300, %v1019, %v1108
      %1110 = vst [vmem:[%s1061 + $0x50] sm:$0x1] %v1109
      %v1111 = vld [vmem:[%s1061 + $0x54] sm:$0xf]
      %v1112 = vsel %vm715, %v1026, %v1111
      %1113 = vst [vmem:[%s1061 + $0x54] sm:$0xf] %v1112
      %1114 = vst.msk [vmem:[%s1061 + $0x58] sm:$0xf] %vm289, %v1035
      %v1115 = vld [vmem:[%s1061 + $0x5c] sm:$0x1]
      %v1116 = vsel %vm300, %v1036, %v1115
      %1117 = vst [vmem:[%s1061 + $0x5c] sm:$0x1] %v1116
      %v1118 = vld [vmem:[#allocation2] sm:$0xf]
      %v1119 = vld [vmem:[#allocation2 + $0x4] sm:$0xf]
      %v1120 = vld [vmem:[#allocation2 + $0xc] sm:$0xf]
      %v1121 = vld [vmem:[#allocation2 + $0x10] sm:$0xf]
      %v1122 = vld [vmem:[#allocation2 + $0x18] sm:$0xf]
      %v1123 = vld [vmem:[#allocation2 + $0x1c] sm:$0xf]
      %v1124 = vld [vmem:[#allocation2 + $0x24] sm:$0xf]
      %v1125 = vld [vmem:[#allocation2 + $0x28] sm:$0xf]
      %v1126 = vld [vmem:[#allocation2 + $0x30] sm:$0xf]
      %v1127 = vld [vmem:[#allocation2 + $0x34] sm:$0xf]
      %v1128 = vld [vmem:[#allocation2 + $0x3c] sm:$0xf]
      %v1129 = vld [vmem:[#allocation2 + $0x40] sm:$0xf]
      %v1130 = vld [vmem:[#allocation2 + $0x48] sm:$0xf]
      %v1131 = vld [vmem:[#allocation2 + $0x4c] sm:$0xf]
      %v1132 = vld [vmem:[#allocation2 + $0x54] sm:$0xf]
      %v1133 = vld [vmem:[#allocation2 + $0x58] sm:$0xf]
      %v1134 = vld [vmem:[#allocation2 + $0x8] sm:$0x1]
      %v1135 = vld [vmem:[#allocation2 + $0x14] sm:$0x1]
      %v1136 = vld [vmem:[#allocation2 + $0x20] sm:$0x1]
      %v1137 = vld [vmem:[#allocation2 + $0x2c] sm:$0x1]
      %v1138 = vld [vmem:[#allocation2 + $0x38] sm:$0x1]
      %v1139 = vld [vmem:[#allocation2 + $0x44] sm:$0x1]
      %v1140 = vld [vmem:[#allocation2 + $0x50] sm:$0x1]
      %v1141 = vld [vmem:[#allocation2 + $0x5c] sm:$0x1]
      %vm1142 = vsmask.f32 3328
      %vm1143 = vsmask.f32 7440
      %vm1144 = vmor %vm1142, %vm1143
      %v1146 = vshrl.u32 %v1118, 16
      %v1148 = vrot.slane %v1146, 4
      %v1149 = vshll.u32 %v1118, 16
      %v1151 = vrot.slane %v1149, 5
      %v1152 = vor.u32 %v1148, %v1151
      %v1153 = vrot.slane %v1152, 4
      %v1155 = vshll.u32 %v1119, 16
      %v1157 = vrot.slane %v1155, 5
      %v1158 = vsel %vm1144, %v1153, %v1157
      %v1159 = vshrl.u32 %v1119, 16
      %v1161 = vrot.slane %v1159, 4
      %v1162 = vor.u32 %v1161, %v1157
      %v1163 = vrot.slane %v1162, 4
      %v1165 = vshll.u32 %v1134, 16
      %v1167 = vrot.slane %v1165, 5
      %v1168 = vsel %vm1144, %v1163, %v1167
      %v1170 = vshrl.u32 %v1120, 16
      %v1172 = vrot.slane %v1170, 4
      %v1173 = vshll.u32 %v1120, 16
      %v1175 = vrot.slane %v1173, 5
      %v1176 = vor.u32 %v1172, %v1175
      %v1177 = vrot.slane %v1176, 4
      %v1179 = vshll.u32 %v1121, 16
      %v1181 = vrot.slane %v1179, 5
      %v1182 = vsel %vm1144, %v1177, %v1181
      %v1183 = vshrl.u32 %v1121, 16
      %v1185 = vrot.slane %v1183, 4
      %v1186 = vor.u32 %v1185, %v1181
      %v1187 = vrot.slane %v1186, 4
      %v1189 = vshll.u32 %v1135, 16
      %v1191 = vrot.slane %v1189, 5
      %v1192 = vsel %vm1144, %v1187, %v1191
      %v1194 = vshrl.u32 %v1122, 16
      %v1196 = vrot.slane %v1194, 4
      %v1197 = vshll.u32 %v1122, 16
      %v1199 = vrot.slane %v1197, 5
      %v1200 = vor.u32 %v1196, %v1199
      %v1201 = vrot.slane %v1200, 4
      %v1203 = vshll.u32 %v1123, 16
      %v1205 = vrot.slane %v1203, 5
      %v1206 = vsel %vm1144, %v1201, %v1205
      %v1207 = vshrl.u32 %v1123, 16
      %v1209 = vrot.slane %v1207, 4
      %v1210 = vor.u32 %v1209, %v1205
      %v1211 = vrot.slane %v1210, 4
      %v1213 = vshll.u32 %v1136, 16
      %v1215 = vrot.slane %v1213, 5
      %v1216 = vsel %vm1144, %v1211, %v1215
      %v1218 = vshrl.u32 %v1124, 16
      %v1220 = vrot.slane %v1218, 4
      %v1221 = vshll.u32 %v1124, 16
      %v1223 = vrot.slane %v1221, 5
      %v1224 = vor.u32 %v1220, %v1223
      %v1225 = vrot.slane %v1224, 4
      %v1227 = vshll.u32 %v1125, 16
      %v1229 = vrot.slane %v1227, 5
      %v1230 = vsel %vm1144, %v1225, %v1229
      %v1231 = vshrl.u32 %v1125, 16
      %v1233 = vrot.slane %v1231, 4
      %v1234 = vor.u32 %v1233, %v1229
      %v1235 = vrot.slane %v1234, 4
      %v1237 = vshll.u32 %v1137, 16
      %v1239 = vrot.slane %v1237, 5
      %v1240 = vsel %vm1144, %v1235, %v1239
      %v1242 = vshrl.u32 %v1126, 16
      %v1244 = vrot.slane %v1242, 4
      %v1245 = vshll.u32 %v1126, 16
      %v1247 = vrot.slane %v1245, 5
      %v1248 = vor.u32 %v1244, %v1247
      %v1249 = vrot.slane %v1248, 4
      %v1251 = vshll.u32 %v1127, 16
      %v1253 = vrot.slane %v1251, 5
      %v1254 = vsel %vm1144, %v1249, %v1253
      %v1255 = vshrl.u32 %v1127, 16
      %v1257 = vrot.slane %v1255, 4
      %v1258 = vor.u32 %v1257, %v1253
      %v1259 = vrot.slane %v1258, 4
      %v1261 = vshll.u32 %v1138, 16
      %v1263 = vrot.slane %v1261, 5
      %v1264 = vsel %vm1144, %v1259, %v1263
      %v1266 = vshrl.u32 %v1128, 16
      %v1268 = vrot.slane %v1266, 4
      %v1269 = vshll.u32 %v1128, 16
      %v1271 = vrot.slane %v1269, 5
      %v1272 = vor.u32 %v1268, %v1271
      %v1273 = vrot.slane %v1272, 4
      %v1275 = vshll.u32 %v1129, 16
      %v1277 = vrot.slane %v1275, 5
      %v1278 = vsel %vm1144, %v1273, %v1277
      %v1279 = vshrl.u32 %v1129, 16
      %v1281 = vrot.slane %v1279, 4
      %v1282 = vor.u32 %v1281, %v1277
      %v1283 = vrot.slane %v1282, 4
      %v1285 = vshll.u32 %v1139, 16
      %v1287 = vrot.slane %v1285, 5
      %v1288 = vsel %vm1144, %v1283, %v1287
      %v1290 = vshrl.u32 %v1130, 16
      %v1292 = vrot.slane %v1290, 4
      %v1293 = vshll.u32 %v1130, 16
      %v1295 = vrot.slane %v1293, 5
      %v1296 = vor.u32 %v1292, %v1295
      %v1297 = vrot.slane %v1296, 4
      %v1299 = vshll.u32 %v1131, 16
      %v1301 = vrot.slane %v1299, 5
      %v1302 = vsel %vm1144, %v1297, %v1301
      %v1303 = vshrl.u32 %v1131, 16
      %v1305 = vrot.slane %v1303, 4
      %v1306 = vor.u32 %v1305, %v1301
      %v1307 = vrot.slane %v1306, 4
      %v1309 = vshll.u32 %v1140, 16
      %v1311 = vrot.slane %v1309, 5
      %v1312 = vsel %vm1144, %v1307, %v1311
      %v1314 = vshrl.u32 %v1132, 16
      %v1316 = vrot.slane %v1314, 4
      %v1317 = vshll.u32 %v1132, 16
      %v1319 = vrot.slane %v1317, 5
      %v1320 = vor.u32 %v1316, %v1319
      %v1321 = vrot.slane %v1320, 4
      %v1323 = vshll.u32 %v1133, 16
      %v1325 = vrot.slane %v1323, 5
      %v1326 = vsel %vm1144, %v1321, %v1325
      %v1327 = vshrl.u32 %v1133, 16
      %v1329 = vrot.slane %v1327, 4
      %v1330 = vor.u32 %v1329, %v1325
      %v1331 = vrot.slane %v1330, 4
      %v1333 = vshll.u32 %v1141, 16
      %v1335 = vrot.slane %v1333, 5
      %v1336 = vsel %vm1144, %v1331, %v1335
      %v1337 = vunpack.c.l.b16 %v1158
      %v1338 = vunpack.c.l.b16 %v1168
      %v1339 = vunpack.c.l.b16 %v1182
      %v1340 = vunpack.c.l.b16 %v1192
      %v1341 = vunpack.c.l.b16 %v1206
      %v1342 = vunpack.c.l.b16 %v1216
      %v1343 = vunpack.c.l.b16 %v1230
      %v1344 = vunpack.c.l.b16 %v1240
      %v1345 = vunpack.c.l.b16 %v1254
      %v1346 = vunpack.c.l.b16 %v1264
      %v1347 = vunpack.c.l.b16 %v1278
      %v1348 = vunpack.c.l.b16 %v1288
      %v1349 = vunpack.c.l.b16 %v1302
      %v1350 = vunpack.c.l.b16 %v1312
      %v1351 = vunpack.c.l.b16 %v1326
      %v1352 = vunpack.c.l.b16 %v1336
      %v1353 = vpack.c.b16 %v1338, %v1337
      %v1354 = vpack.c.b16 %v1340, %v1339
      %v1355 = vpack.c.b16 %v1342, %v1341
      %v1356 = vpack.c.b16 %v1344, %v1343
      %v1357 = vpack.c.b16 %v1346, %v1345
      %v1358 = vpack.c.b16 %v1348, %v1347
      %v1359 = vpack.c.b16 %v1350, %v1349
      %v1360 = vpack.c.b16 %v1352, %v1351
      %vm1361 = vcmask 64512
      %v1363 = vsel %vm1361, %v1353, 0
      %v1366 = vsel %vm1361, %v1354, 0
      %v1369 = vsel %vm1361, %v1355, 0
      %v1372 = vsel %vm1361, %v1356, 0
      %v1375 = vsel %vm1361, %v1357, 0
      %v1378 = vsel %vm1361, %v1358, 0
      %v1381 = vsel %vm1361, %v1359, 0
      %v1384 = vsel %vm1361, %v1360, 0
      %vm1386 = vcmask 1043456
      %v1388 = vsel %vm1386, %v274, 0
      %1390 = vmatprep.subr.bf16.mxu0 0
      %1391 = vmatpush1.bf16.msra.mxu0 0
      %1392 = vmatprep.subr.bf16.mxu0 0
      %1393 = vmatpush1.bf16.msra.mxu0 0
      %1394 = vmatprep.subr.bf16.mxu0 0
      %1395 = vmatpush1.bf16.msra.mxu0 0
      %1396 = vmatprep.subr.bf16.mxu0 0
      %1397 = vmatpush1.bf16.msra.mxu0 0
      %1398 = vmatprep.subr.bf16.mxu0 0
      %1399 = vmatpush1.bf16.msra.mxu0 0
      %1400 = vmatprep.subr.bf16.mxu0 0
      %1401 = vmatpush1.bf16.msra.mxu0 0
      %1402 = vmatprep.subr.bf16.mxu0 0
      %1403 = vmatpush1.bf16.msra.mxu0 0
      %1404 = vmatprep.subr.bf16.mxu0 0
      %1405 = vmatpush1.bf16.msra.mxu0 %v1388
      %1406 = vmatprep.subr.bf16.mxu0 0
      %1407 = vmatpush2.bf16.msra.mxu0 0
      %1408 = vmatprep.subr.bf16.mxu0 0
      %1409 = vmatpush2.bf16.msra.mxu0 0
      %1410 = vmatprep.subr.bf16.mxu0 0
      %1411 = vmatpush2.bf16.msra.mxu0 0
      %1412 = vmatprep.subr.bf16.mxu0 0
      %1413 = vmatpush2.bf16.msra.mxu0 0
      %1414 = vmatprep.subr.bf16.mxu0 0
      %1415 = vmatpush2.bf16.msra.mxu0 0
      %1416 = vmatprep.subr.bf16.mxu0 0
      %1417 = vmatpush2.bf16.msra.mxu0 0
      %1418 = vmatprep.subr.bf16.mxu0 0
      %1419 = vmatpush2.bf16.msra.mxu0 0
      %1420 = vmatprep.subr.bf16.mxu0 0
      %1421 = vmatpush2.bf16.msra.mxu0 0
      %1422 = vmatprep.mubr.bf16.mxu0 0
      %1423 = vmatmul.mubr.bf16.gmra.mxu0 %v1363
      %v1424 = vpop.f32.mrf.mxu0
      %v1425 = vadd.f32 0.0, %v1424
      %v1426 = vpop.f32.mrf.mxu0
      %v1427 = vpop.f32.mrf.mxu0
      %v1428 = vadd.f32 0.0, %v1427
      %v1429 = vpop.f32.mrf.mxu0
      %1430 = vmatprep.mubr.bf16.mxu0 0
      %1431 = vmatmul.mubr.bf16.gmra.mxu0 %v1366
      %v1432 = vpop.f32.mrf.mxu0
      %v1433 = vadd.f32 0.0, %v1432
      %v1434 = vpop.f32.mrf.mxu0
      %v1435 = vpop.f32.mrf.mxu0
      %v1436 = vadd.f32 0.0, %v1435
      %v1437 = vpop.f32.mrf.mxu0
      %1438 = vmatprep.mubr.bf16.mxu0 0
      %1439 = vmatmul.mubr.bf16.gmra.mxu0 %v1369
      %v1440 = vpop.f32.mrf.mxu0
      %v1441 = vadd.f32 0.0, %v1440
      %v1442 = vpop.f32.mrf.mxu0
      %v1443 = vpop.f32.mrf.mxu0
      %v1444 = vadd.f32 0.0, %v1443
      %v1445 = vpop.f32.mrf.mxu0
      %1446 = vmatprep.mubr.bf16.mxu0 0
      %1447 = vmatmul.mubr.bf16.gmra.mxu0 %v1372
      %v1448 = vpop.f32.mrf.mxu0
      %v1449 = vadd.f32 0.0, %v1448
      %v1450 = vpop.f32.mrf.mxu0
      %v1451 = vpop.f32.mrf.mxu0
      %v1452 = vadd.f32 0.0, %v1451
      %v1453 = vpop.f32.mrf.mxu0
      %1454 = vmatprep.mubr.bf16.mxu0 0
      %1455 = vmatmul.mubr.bf16.gmra.mxu0 %v1375
      %v1456 = vpop.f32.mrf.mxu0
      %v1457 = vadd.f32 0.0, %v1456
      %v1458 = vpop.f32.mrf.mxu0
      %v1459 = vpop.f32.mrf.mxu0
      %v1460 = vadd.f32 0.0, %v1459
      %v1461 = vpop.f32.mrf.mxu0
      %1462 = vmatprep.mubr.bf16.mxu0 0
      %1463 = vmatmul.mubr.bf16.gmra.mxu0 %v1378
      %v1464 = vpop.f32.mrf.mxu0
      %v1465 = vadd.f32 0.0, %v1464
      %v1466 = vpop.f32.mrf.mxu0
      %v1467 = vpop.f32.mrf.mxu0
      %v1468 = vadd.f32 0.0, %v1467
      %v1469 = vpop.f32.mrf.mxu0
      %1470 = vmatprep.mubr.bf16.mxu0 0
      %1471 = vmatmul.mubr.bf16.gmra.mxu0 %v1381
      %v1472 = vpop.f32.mrf.mxu0
      %v1473 = vadd.f32 0.0, %v1472
      %v1474 = vpop.f32.mrf.mxu0
      %v1475 = vpop.f32.mrf.mxu0
      %v1476 = vadd.f32 0.0, %v1475
      %v1477 = vpop.f32.mrf.mxu0
      %1478 = vmatprep.mubr.bf16.mxu0 0
      %1479 = vmatmul.mubr.bf16.gmra.mxu0 %v1384
      %v1480 = vpop.f32.mrf.mxu0
      %v1481 = vadd.f32 0.0, %v1480
      %v1482 = vpop.f32.mrf.mxu0
      %v1483 = vpop.f32.mrf.mxu0
      %v1484 = vadd.f32 0.0, %v1483
      %v1485 = vpop.f32.mrf.mxu0
      %1486 = vdwg.mxu0
      %v1503 = vunpack.c.l.b16 %v1118
      %v1504 = vunpack.c.l.b16 %v1119
      %v1505 = vunpack.c.l.b16 %v1120
      %v1506 = vunpack.c.l.b16 %v1121
      %v1507 = vunpack.c.l.b16 %v1122
      %v1508 = vunpack.c.l.b16 %v1123
      %v1509 = vunpack.c.l.b16 %v1124
      %v1510 = vunpack.c.l.b16 %v1125
      %v1511 = vunpack.c.l.b16 %v1126
      %v1512 = vunpack.c.l.b16 %v1127
      %v1513 = vunpack.c.l.b16 %v1128
      %v1514 = vunpack.c.l.b16 %v1129
      %v1515 = vunpack.c.l.b16 %v1130
      %v1516 = vunpack.c.l.b16 %v1131
      %v1517 = vunpack.c.l.b16 %v1132
      %v1518 = vunpack.c.l.b16 %v1133
      %v1519 = vpack.c.b16 %v1504, %v1503
      %v1520 = vpack.c.b16 %v1506, %v1505
      %v1521 = vpack.c.b16 %v1508, %v1507
      %v1522 = vpack.c.b16 %v1510, %v1509
      %v1523 = vpack.c.b16 %v1512, %v1511
      %v1524 = vpack.c.b16 %v1514, %v1513
      %v1525 = vpack.c.b16 %v1516, %v1515
      %v1526 = vpack.c.b16 %v1518, %v1517
      %v1528 = vsel %vm1361, %v1519, 0
      %v1531 = vsel %vm1361, %v1520, 0
      %v1534 = vsel %vm1361, %v1521, 0
      %v1537 = vsel %vm1361, %v1522, 0
      %v1540 = vsel %vm1361, %v1523, 0
      %v1543 = vsel %vm1361, %v1524, 0
      %v1546 = vsel %vm1361, %v1525, 0
      %v1549 = vsel %vm1361, %v1526, 0
      %v1552 = vsel %vm1386, %v272, 0
      %1554 = vmatprep.subr.bf16.mxu0 0
      %1555 = vmatpush1.bf16.msra.mxu0 0
      %1556 = vmatprep.subr.bf16.mxu0 0
      %1557 = vmatpush1.bf16.msra.mxu0 0
      %1558 = vmatprep.subr.bf16.mxu0 0
      %1559 = vmatpush1.bf16.msra.mxu0 0
      %1560 = vmatprep.subr.bf16.mxu0 0
      %1561 = vmatpush1.bf16.msra.mxu0 0
      %1562 = vmatprep.subr.bf16.mxu0 0
      %1563 = vmatpush1.bf16.msra.mxu0 0
      %1564 = vmatprep.subr.bf16.mxu0 0
      %1565 = vmatpush1.bf16.msra.mxu0 0
      %1566 = vmatprep.subr.bf16.mxu0 0
      %1567 = vmatpush1.bf16.msra.mxu0 0
      %1568 = vmatprep.subr.bf16.mxu0 0
      %1569 = vmatpush1.bf16.msra.mxu0 %v1552
      %1570 = vmatprep.subr.bf16.mxu0 0
      %1571 = vmatpush2.bf16.msra.mxu0 0
      %1572 = vmatprep.subr.bf16.mxu0 0
      %1573 = vmatpush2.bf16.msra.mxu0 0
      %1574 = vmatprep.subr.bf16.mxu0 0
      %1575 = vmatpush2.bf16.msra.mxu0 0
      %1576 = vmatprep.subr.bf16.mxu0 0
      %1577 = vmatpush2.bf16.msra.mxu0 0
      %1578 = vmatprep.subr.bf16.mxu0 0
      %1579 = vmatpush2.bf16.msra.mxu0 0
      %1580 = vmatprep.subr.bf16.mxu0 0
      %1581 = vmatpush2.bf16.msra.mxu0 0
      %1582 = vmatprep.subr.bf16.mxu0 0
      %1583 = vmatpush2.bf16.msra.mxu0 0
      %1584 = vmatprep.subr.bf16.mxu0 0
      %1585 = vmatpush2.bf16.msra.mxu0 0
      %1586 = vmatprep.mubr.bf16.mxu0 0
      %1587 = vmatmul.mubr.bf16.gmra.mxu0 %v1528
      %v1588 = vpop.f32.mrf.mxu0
      %v1589 = vadd.f32 %v1425, %v1588
      %v1590 = vpop.f32.mrf.mxu0
      %v1591 = vpop.f32.mrf.mxu0
      %v1592 = vadd.f32 %v1428, %v1591
      %v1593 = vpop.f32.mrf.mxu0
      %1594 = vmatprep.mubr.bf16.mxu0 0
      %1595 = vmatmul.mubr.bf16.gmra.mxu0 %v1531
      %v1596 = vpop.f32.mrf.mxu0
      %v1597 = vadd.f32 %v1433, %v1596
      %v1598 = vpop.f32.mrf.mxu0
      %v1599 = vpop.f32.mrf.mxu0
      %v1600 = vadd.f32 %v1436, %v1599
      %v1601 = vpop.f32.mrf.mxu0
      %1602 = vmatprep.mubr.bf16.mxu0 0
      %1603 = vmatmul.mubr.bf16.gmra.mxu0 %v1534
      %v1604 = vpop.f32.mrf.mxu0
      %v1605 = vadd.f32 %v1441, %v1604
      %v1606 = vpop.f32.mrf.mxu0
      %v1607 = vpop.f32.mrf.mxu0
      %v1608 = vadd.f32 %v1444, %v1607
      %v1609 = vpop.f32.mrf.mxu0
      %1610 = vmatprep.mubr.bf16.mxu0 0
      %1611 = vmatmul.mubr.bf16.gmra.mxu0 %v1537
      %v1612 = vpop.f32.mrf.mxu0
      %v1613 = vadd.f32 %v1449, %v1612
      %v1614 = vpop.f32.mrf.mxu0
      %v1615 = vpop.f32.mrf.mxu0
      %v1616 = vadd.f32 %v1452, %v1615
      %v1617 = vpop.f32.mrf.mxu0
      %1618 = vmatprep.mubr.bf16.mxu0 0
      %1619 = vmatmul.mubr.bf16.gmra.mxu0 %v1540
      %v1620 = vpop.f32.mrf.mxu0
      %v1621 = vadd.f32 %v1457, %v1620
      %v1622 = vpop.f32.mrf.mxu0
      %v1623 = vpop.f32.mrf.mxu0
      %v1624 = vadd.f32 %v1460, %v1623
      %v1625 = vpop.f32.mrf.mxu0
      %1626 = vmatprep.mubr.bf16.mxu0 0
      %1627 = vmatmul.mubr.bf16.gmra.mxu0 %v1543
      %v1628 = vpop.f32.mrf.mxu0
      %v1629 = vadd.f32 %v1465, %v1628
      %v1630 = vpop.f32.mrf.mxu0
      %v1631 = vpop.f32.mrf.mxu0
      %v1632 = vadd.f32 %v1468, %v1631
      %v1633 = vpop.f32.mrf.mxu0
      %1634 = vmatprep.mubr.bf16.mxu0 0
      %1635 = vmatmul.mubr.bf16.gmra.mxu0 %v1546
      %v1636 = vpop.f32.mrf.mxu0
      %v1637 = vadd.f32 %v1473, %v1636
      %v1638 = vpop.f32.mrf.mxu0
      %v1639 = vpop.f32.mrf.mxu0
      %v1640 = vadd.f32 %v1476, %v1639
      %v1641 = vpop.f32.mrf.mxu0
      %1642 = vmatprep.mubr.bf16.mxu0 0
      %1643 = vmatmul.mubr.bf16.gmra.mxu0 %v1549
      %v1644 = vpop.f32.mrf.mxu0
      %v1645 = vadd.f32 %v1481, %v1644
      %v1646 = vpop.f32.mrf.mxu0
      %v1647 = vpop.f32.mrf.mxu0
      %v1648 = vadd.f32 %v1484, %v1647
      %v1649 = vpop.f32.mrf.mxu0
      %1650 = vdwg.mxu0
      %v1651 = vld [vmem:[#allocation2] sm:$0xe]
      %v1652 = vld [vmem:[#allocation2 + $0xc] sm:$0xe]
      %v1653 = vld [vmem:[#allocation2 + $0x18] sm:$0xe]
      %v1654 = vld [vmem:[#allocation2 + $0x24] sm:$0xe]
      %v1655 = vld [vmem:[#allocation2 + $0x30] sm:$0xe]
      %v1656 = vld [vmem:[#allocation2 + $0x3c] sm:$0xe]
      %v1657 = vld [vmem:[#allocation2 + $0x48] sm:$0xe]
      %v1658 = vld [vmem:[#allocation2 + $0x54] sm:$0xe]
      %vm1675 = vcmask 1042432
      %vm1676 = vcmask 1046532
      %vm1677 = vmor %vm1675, %vm1676
      %v1678 = vrot.slane %v1651, 5
      %v1679 = vrot.slane %v1678, 4
      %v1680 = vrot.slane %v1119, 5
      %v1681 = vsel %vm1677, %v1679, %v1680
      %v1682 = vrot.slane %v1680, 4
      %v1683 = vrot.slane %v1134, 5
      %v1684 = vsel %vm1677, %v1682, %v1683
      %v1685 = vrot.slane %v1652, 5
      %v1686 = vrot.slane %v1685, 4
      %v1687 = vrot.slane %v1121, 5
      %v1688 = vsel %vm1677, %v1686, %v1687
      %v1689 = vrot.slane %v1687, 4
      %v1690 = vrot.slane %v1135, 5
      %v1691 = vsel %vm1677, %v1689, %v1690
      %v1692 = vrot.slane %v1653, 5
      %v1693 = vrot.slane %v1692, 4
      %v1694 = vrot.slane %v1123, 5
      %v1695 = vsel %vm1677, %v1693, %v1694
      %v1696 = vrot.slane %v1694, 4
      %v1697 = vrot.slane %v1136, 5
      %v1698 = vsel %vm1677, %v1696, %v1697
      %v1699 = vrot.slane %v1654, 5
      %v1700 = vrot.slane %v1699, 4
      %v1701 = vrot.slane %v1125, 5
      %v1702 = vsel %vm1677, %v1700, %v1701
      %v1703 = vrot.slane %v1701, 4
      %v1704 = vrot.slane %v1137, 5
      %v1705 = vsel %vm1677, %v1703, %v1704
      %v1706 = vrot.slane %v1655, 5
      %v1707 = vrot.slane %v1706, 4
      %v1708 = vrot.slane %v1127, 5
      %v1709 = vsel %vm1677, %v1707, %v1708
      %v1710 = vrot.slane %v1708, 4
      %v1711 = vrot.slane %v1138, 5
      %v1712 = vsel %vm1677, %v1710, %v1711
      %v1713 = vrot.slane %v1656, 5
      %v1714 = vrot.slane %v1713, 4
      %v1715 = vrot.slane %v1129, 5
      %v1716 = vsel %vm1677, %v1714, %v1715
      %v1717 = vrot.slane %v1715, 4
      %v1718 = vrot.slane %v1139, 5
      %v1719 = vsel %vm1677, %v1717, %v1718
      %v1720 = vrot.slane %v1657, 5
      %v1721 = vrot.slane %v1720, 4
      %v1722 = vrot.slane %v1131, 5
      %v1723 = vsel %vm1677, %v1721, %v1722
      %v1724 = vrot.slane %v1722, 4
      %v1725 = vrot.slane %v1140, 5
      %v1726 = vsel %vm1677, %v1724, %v1725
      %v1727 = vrot.slane %v1658, 5
      %v1728 = vrot.slane %v1727, 4
      %v1729 = vrot.slane %v1133, 5
      %v1730 = vsel %vm1677, %v1728, %v1729
      %v1731 = vrot.slane %v1729, 4
      %v1732 = vrot.slane %v1141, 5
      %v1733 = vsel %vm1677, %v1731, %v1732
      %v1734 = vunpack.c.l.b16 %v1681
      %v1735 = vunpack.c.l.b16 %v1684
      %v1736 = vunpack.c.l.b16 %v1688
      %v1737 = vunpack.c.l.b16 %v1691
      %v1738 = vunpack.c.l.b16 %v1695
      %v1739 = vunpack.c.l.b16 %v1698
      %v1740 = vunpack.c.l.b16 %v1702
      %v1741 = vunpack.c.l.b16 %v1705
      %v1742 = vunpack.c.l.b16 %v1709
      %v1743 = vunpack.c.l.b16 %v1712
      %v1744 = vunpack.c.l.b16 %v1716
      %v1745 = vunpack.c.l.b16 %v1719
      %v1746 = vunpack.c.l.b16 %v1723
      %v1747 = vunpack.c.l.b16 %v1726
      %v1748 = vunpack.c.l.b16 %v1730
      %v1749 = vunpack.c.l.b16 %v1733
      %v1750 = vpack.c.b16 %v1735, %v1734
      %v1751 = vpack.c.b16 %v1737, %v1736
      %v1752 = vpack.c.b16 %v1739, %v1738
      %v1753 = vpack.c.b16 %v1741, %v1740
      %v1754 = vpack.c.b16 %v1743, %v1742
      %v1755 = vpack.c.b16 %v1745, %v1744
      %v1756 = vpack.c.b16 %v1747, %v1746
      %v1757 = vpack.c.b16 %v1749, %v1748
      %v1759 = vsel %vm1361, %v1750, 0
      %v1762 = vsel %vm1361, %v1751, 0
      %v1765 = vsel %vm1361, %v1752, 0
      %v1768 = vsel %vm1361, %v1753, 0
      %v1771 = vsel %vm1361, %v1754, 0
      %v1774 = vsel %vm1361, %v1755, 0
      %v1777 = vsel %vm1361, %v1756, 0
      %v1780 = vsel %vm1361, %v1757, 0
      %v1783 = vsel %vm1386, %v276, 0
      %1785 = vmatprep.subr.bf16.mxu0 0
      %1786 = vmatpush1.bf16.msra.mxu0 0
      %1787 = vmatprep.subr.bf16.mxu0 0
      %1788 = vmatpush1.bf16.msra.mxu0 0
      %1789 = vmatprep.subr.bf16.mxu0 0
      %1790 = vmatpush1.bf16.msra.mxu0 0
      %1791 = vmatprep.subr.bf16.mxu0 0
      %1792 = vmatpush1.bf16.msra.mxu0 0
      %1793 = vmatprep.subr.bf16.mxu0 0
      %1794 = vmatpush1.bf16.msra.mxu0 0
      %1795 = vmatprep.subr.bf16.mxu0 0
      %1796 = vmatpush1.bf16.msra.mxu0 0
      %1797 = vmatprep.subr.bf16.mxu0 0
      %1798 = vmatpush1.bf16.msra.mxu0 0
      %1799 = vmatprep.subr.bf16.mxu0 0
      %1800 = vmatpush1.bf16.msra.mxu0 %v1783
      %1801 = vmatprep.subr.bf16.mxu0 0
      %1802 = vmatpush2.bf16.msra.mxu0 0
      %1803 = vmatprep.subr.bf16.mxu0 0
      %1804 = vmatpush2.bf16.msra.mxu0 0
      %1805 = vmatprep.subr.bf16.mxu0 0
      %1806 = vmatpush2.bf16.msra.mxu0 0
      %1807 = vmatprep.subr.bf16.mxu0 0
      %1808 = vmatpush2.bf16.msra.mxu0 0
      %1809 = vmatprep.subr.bf16.mxu0 0
      %1810 = vmatpush2.bf16.msra.mxu0 0
      %1811 = vmatprep.subr.bf16.mxu0 0
      %1812 = vmatpush2.bf16.msra.mxu0 0
      %1813 = vmatprep.subr.bf16.mxu0 0
      %1814 = vmatpush2.bf16.msra.mxu0 0
      %1815 = vmatprep.subr.bf16.mxu0 0
      %1816 = vmatpush2.bf16.msra.mxu0 0
      %1817 = vmatprep.mubr.bf16.mxu0 0
      %1818 = vmatmul.mubr.bf16.gmra.mxu0 %v1759
      %v1819 = vpop.f32.mrf.mxu0
      %v1820 = vadd.f32 0.0, %v1819
      %v1821 = vpop.f32.mrf.mxu0
      %v1822 = vpop.f32.mrf.mxu0
      %v1823 = vadd.f32 0.0, %v1822
      %v1824 = vpop.f32.mrf.mxu0
      %1825 = vmatprep.mubr.bf16.mxu0 0
      %1826 = vmatmul.mubr.bf16.gmra.mxu0 %v1762
      %v1827 = vpop.f32.mrf.mxu0
      %v1828 = vadd.f32 0.0, %v1827
      %v1829 = vpop.f32.mrf.mxu0
      %v1830 = vpop.f32.mrf.mxu0
      %v1831 = vadd.f32 0.0, %v1830
      %v1832 = vpop.f32.mrf.mxu0
      %1833 = vmatprep.mubr.bf16.mxu0 0
      %1834 = vmatmul.mubr.bf16.gmra.mxu0 %v1765
      %v1835 = vpop.f32.mrf.mxu0
      %v1836 = vadd.f32 0.0, %v1835
      %v1837 = vpop.f32.mrf.mxu0
      %v1838 = vpop.f32.mrf.mxu0
      %v1839 = vadd.f32 0.0, %v1838
      %v1840 = vpop.f32.mrf.mxu0
      %1841 = vmatprep.mubr.bf16.mxu0 0
      %1842 = vmatmul.mubr.bf16.gmra.mxu0 %v1768
      %v1843 = vpop.f32.mrf.mxu0
      %v1844 = vadd.f32 0.0, %v1843
      %v1845 = vpop.f32.mrf.mxu0
      %v1846 = vpop.f32.mrf.mxu0
      %v1847 = vadd.f32 0.0, %v1846
      %v1848 = vpop.f32.mrf.mxu0
      %1849 = vmatprep.mubr.bf16.mxu0 0
      %1850 = vmatmul.mubr.bf16.gmra.mxu0 %v1771
      %v1851 = vpop.f32.mrf.mxu0
      %v1852 = vadd.f32 0.0, %v1851
      %v1853 = vpop.f32.mrf.mxu0
      %v1854 = vpop.f32.mrf.mxu0
      %v1855 = vadd.f32 0.0, %v1854
      %v1856 = vpop.f32.mrf.mxu0
      %1857 = vmatprep.mubr.bf16.mxu0 0
      %1858 = vmatmul.mubr.bf16.gmra.mxu0 %v1774
      %v1859 = vpop.f32.mrf.mxu0
      %v1860 = vadd.f32 0.0, %v1859
      %v1861 = vpop.f32.mrf.mxu0
      %v1862 = vpop.f32.mrf.mxu0
      %v1863 = vadd.f32 0.0, %v1862
      %v1864 = vpop.f32.mrf.mxu0
      %1865 = vmatprep.mubr.bf16.mxu0 0
      %1866 = vmatmul.mubr.bf16.gmra.mxu0 %v1777
      %v1867 = vpop.f32.mrf.mxu0
      %v1868 = vadd.f32 0.0, %v1867
      %v1869 = vpop.f32.mrf.mxu0
      %v1870 = vpop.f32.mrf.mxu0
      %v1871 = vadd.f32 0.0, %v1870
      %v1872 = vpop.f32.mrf.mxu0
      %1873 = vmatprep.mubr.bf16.mxu0 0
      %1874 = vmatmul.mubr.bf16.gmra.mxu0 %v1780
      %v1875 = vpop.f32.mrf.mxu0
      %v1876 = vadd.f32 0.0, %v1875
      %v1877 = vpop.f32.mrf.mxu0
      %v1878 = vpop.f32.mrf.mxu0
      %v1879 = vadd.f32 0.0, %v1878
      %v1880 = vpop.f32.mrf.mxu0
      %1881 = vdwg.mxu0
      %v1882 = vadd.f32 %v1589, %v1820
      %v1883 = vadd.f32 %v1592, %v1823
      %v1884 = vadd.f32 %v1597, %v1828
      %v1885 = vadd.f32 %v1600, %v1831
      %v1886 = vadd.f32 %v1605, %v1836
      %v1887 = vadd.f32 %v1608, %v1839
      %v1888 = vadd.f32 %v1613, %v1844
      %v1889 = vadd.f32 %v1616, %v1847
      %v1890 = vadd.f32 %v1621, %v1852
      %v1891 = vadd.f32 %v1624, %v1855
      %v1892 = vadd.f32 %v1629, %v1860
      %v1893 = vadd.f32 %v1632, %v1863
      %v1894 = vadd.f32 %v1637, %v1868
      %v1895 = vadd.f32 %v1640, %v1871
      %v1896 = vadd.f32 %v1645, %v1876
      %v1897 = vadd.f32 %v1648, %v1879
      %v1898 = vld [vmem:[%s713] sm:$0xf]
      %v1899 = vld [vmem:[%s713 + $0x4] sm:$0xf]
      %v1900 = vld [vmem:[%s713 + $0xc] sm:$0xf]
      %v1901 = vld [vmem:[%s713 + $0x10] sm:$0xf]
      %v1902 = vld [vmem:[%s713 + $0x18] sm:$0xf]
      %v1903 = vld [vmem:[%s713 + $0x1c] sm:$0xf]
      %v1904 = vld [vmem:[%s713 + $0x24] sm:$0xf]
      %v1905 = vld [vmem:[%s713 + $0x28] sm:$0xf]
      %v1906 = vld [vmem:[%s713 + $0x30] sm:$0xf]
      %v1907 = vld [vmem:[%s713 + $0x34] sm:$0xf]
      %v1908 = vld [vmem:[%s713 + $0x3c] sm:$0xf]
      %v1909 = vld [vmem:[%s713 + $0x40] sm:$0xf]
      %v1910 = vld [vmem:[%s713 + $0x48] sm:$0xf]
      %v1911 = vld [vmem:[%s713 + $0x4c] sm:$0xf]
      %v1912 = vld [vmem:[%s713 + $0x54] sm:$0xf]
      %v1913 = vld [vmem:[%s713 + $0x58] sm:$0xf]
      %v1930 = vunpack.c.l.b16 %v1898
      %v1931 = vunpack.c.l.b16 %v1899
      %v1932 = vunpack.c.l.b16 %v1900
      %v1933 = vunpack.c.l.b16 %v1901
      %v1934 = vunpack.c.l.b16 %v1902
      %v1935 = vunpack.c.l.b16 %v1903
      %v1936 = vunpack.c.l.b16 %v1904
      %v1937 = vunpack.c.l.b16 %v1905
      %v1938 = vunpack.c.l.b16 %v1906
      %v1939 = vunpack.c.l.b16 %v1907
      %v1940 = vunpack.c.l.b16 %v1908
      %v1941 = vunpack.c.l.b16 %v1909
      %v1942 = vunpack.c.l.b16 %v1910
      %v1943 = vunpack.c.l.b16 %v1911
      %v1944 = vunpack.c.l.b16 %v1912
      %v1945 = vunpack.c.l.b16 %v1913
      %v1946 = vpack.c.b16 %v1931, %v1930
      %v1947 = vpack.c.b16 %v1933, %v1932
      %v1948 = vpack.c.b16 %v1935, %v1934
      %v1949 = vpack.c.b16 %v1937, %v1936
      %v1950 = vpack.c.b16 %v1939, %v1938
      %v1951 = vpack.c.b16 %v1941, %v1940
      %v1952 = vpack.c.b16 %v1943, %v1942
      %v1953 = vpack.c.b16 %v1945, %v1944
      %v1955 = vsel %vm1361, %v1946, 0
      %v1958 = vsel %vm1361, %v1947, 0
      %v1961 = vsel %vm1361, %v1948, 0
      %v1964 = vsel %vm1361, %v1949, 0
      %v1967 = vsel %vm1361, %v1950, 0
      %v1970 = vsel %vm1361, %v1951, 0
      %v1973 = vsel %vm1361, %v1952, 0
      %v1976 = vsel %vm1361, %v1953, 0
      %v1979 = vsel %vm1386, %v278, 0
      %1981 = vmatprep.subr.bf16.mxu0 0
      %1982 = vmatpush1.bf16.msra.mxu0 0
      %1983 = vmatprep.subr.bf16.mxu0 0
      %1984 = vmatpush1.bf16.msra.mxu0 0
      %1985 = vmatprep.subr.bf16.mxu0 0
      %1986 = vmatpush1.bf16.msra.mxu0 0
      %1987 = vmatprep.subr.bf16.mxu0 0
      %1988 = vmatpush1.bf16.msra.mxu0 0
      %1989 = vmatprep.subr.bf16.mxu0 0
      %1990 = vmatpush1.bf16.msra.mxu0 0
      %1991 = vmatprep.subr.bf16.mxu0 0
      %1992 = vmatpush1.bf16.msra.mxu0 0
      %1993 = vmatprep.subr.bf16.mxu0 0
      %1994 = vmatpush1.bf16.msra.mxu0 0
      %1995 = vmatprep.subr.bf16.mxu0 0
      %1996 = vmatpush1.bf16.msra.mxu0 %v1979
      %1997 = vmatprep.subr.bf16.mxu0 0
      %1998 = vmatpush2.bf16.msra.mxu0 0
      %1999 = vmatprep.subr.bf16.mxu0 0
      %2000 = vmatpush2.bf16.msra.mxu0 0
      %2001 = vmatprep.subr.bf16.mxu0 0
      %2002 = vmatpush2.bf16.msra.mxu0 0
      %2003 = vmatprep.subr.bf16.mxu0 0
      %2004 = vmatpush2.bf16.msra.mxu0 0
      %2005 = vmatprep.subr.bf16.mxu0 0
      %2006 = vmatpush2.bf16.msra.mxu0 0
      %2007 = vmatprep.subr.bf16.mxu0 0
      %2008 = vmatpush2.bf16.msra.mxu0 0
      %2009 = vmatprep.subr.bf16.mxu0 0
      %2010 = vmatpush2.bf16.msra.mxu0 0
      %2011 = vmatprep.subr.bf16.mxu0 0
      %2012 = vmatpush2.bf16.msra.mxu0 0
      %2013 = vmatprep.mubr.bf16.mxu0 0
      %2014 = vmatmul.mubr.bf16.gmra.mxu0 %v1955
      %v2015 = vpop.f32.mrf.mxu0
      %v2016 = vadd.f32 0.0, %v2015
      %v2017 = vpop.f32.mrf.mxu0
      %v2018 = vpop.f32.mrf.mxu0
      %v2019 = vadd.f32 0.0, %v2018
      %v2020 = vpop.f32.mrf.mxu0
      %2021 = vmatprep.mubr.bf16.mxu0 0
      %2022 = vmatmul.mubr.bf16.gmra.mxu0 %v1958
      %v2023 = vpop.f32.mrf.mxu0
      %v2024 = vadd.f32 0.0, %v2023
      %v2025 = vpop.f32.mrf.mxu0
      %v2026 = vpop.f32.mrf.mxu0
      %v2027 = vadd.f32 0.0, %v2026
      %v2028 = vpop.f32.mrf.mxu0
      %2029 = vmatprep.mubr.bf16.mxu0 0
      %2030 = vmatmul.mubr.bf16.gmra.mxu0 %v1961
      %v2031 = vpop.f32.mrf.mxu0
      %v2032 = vadd.f32 0.0, %v2031
      %v2033 = vpop.f32.mrf.mxu0
      %v2034 = vpop.f32.mrf.mxu0
      %v2035 = vadd.f32 0.0, %v2034
      %v2036 = vpop.f32.mrf.mxu0
      %2037 = vmatprep.mubr.bf16.mxu0 0
      %2038 = vmatmul.mubr.bf16.gmra.mxu0 %v1964
      %v2039 = vpop.f32.mrf.mxu0
      %v2040 = vadd.f32 0.0, %v2039
      %v2041 = vpop.f32.mrf.mxu0
      %v2042 = vpop.f32.mrf.mxu0
      %v2043 = vadd.f32 0.0, %v2042
      %v2044 = vpop.f32.mrf.mxu0
      %2045 = vmatprep.mubr.bf16.mxu0 0
      %2046 = vmatmul.mubr.bf16.gmra.mxu0 %v1967
      %v2047 = vpop.f32.mrf.mxu0
      %v2048 = vadd.f32 0.0, %v2047
      %v2049 = vpop.f32.mrf.mxu0
      %v2050 = vpop.f32.mrf.mxu0
      %v2051 = vadd.f32 0.0, %v2050
      %v2052 = vpop.f32.mrf.mxu0
      %2053 = vmatprep.mubr.bf16.mxu0 0
      %2054 = vmatmul.mubr.bf16.gmra.mxu0 %v1970
      %v2055 = vpop.f32.mrf.mxu0
      %v2056 = vadd.f32 0.0, %v2055
      %v2057 = vpop.f32.mrf.mxu0
      %v2058 = vpop.f32.mrf.mxu0
      %v2059 = vadd.f32 0.0, %v2058
      %v2060 = vpop.f32.mrf.mxu0
      %2061 = vmatprep.mubr.bf16.mxu0 0
      %2062 = vmatmul.mubr.bf16.gmra.mxu0 %v1973
      %v2063 = vpop.f32.mrf.mxu0
      %v2064 = vadd.f32 0.0, %v2063
      %v2065 = vpop.f32.mrf.mxu0
      %v2066 = vpop.f32.mrf.mxu0
      %v2067 = vadd.f32 0.0, %v2066
      %v2068 = vpop.f32.mrf.mxu0
      %2069 = vmatprep.mubr.bf16.mxu0 0
      %2070 = vmatmul.mubr.bf16.gmra.mxu0 %v1976
      %v2071 = vpop.f32.mrf.mxu0
      %v2072 = vadd.f32 0.0, %v2071
      %v2073 = vpop.f32.mrf.mxu0
      %v2074 = vpop.f32.mrf.mxu0
      %v2075 = vadd.f32 0.0, %v2074
      %v2076 = vpop.f32.mrf.mxu0
      %2077 = vdwg.mxu0
      %v2078 = vadd.f32 %v1882, %v2016
      %v2079 = vadd.f32 %v1883, %v2019
      %v2080 = vadd.f32 %v1884, %v2024
      %v2081 = vadd.f32 %v1885, %v2027
      %v2082 = vadd.f32 %v1886, %v2032
      %v2083 = vadd.f32 %v1887, %v2035
      %v2084 = vadd.f32 %v1888, %v2040
      %v2085 = vadd.f32 %v1889, %v2043
      %v2086 = vadd.f32 %v1890, %v2048
      %v2087 = vadd.f32 %v1891, %v2051
      %v2088 = vadd.f32 %v1892, %v2056
      %v2089 = vadd.f32 %v1893, %v2059
      %v2090 = vadd.f32 %v1894, %v2064
      %v2091 = vadd.f32 %v1895, %v2067
      %v2092 = vadd.f32 %v1896, %v2072
      %v2093 = vadd.f32 %v1897, %v2075
      %v2094 = vld [vmem:[%s713] sm:$0xf]
      %v2095 = vld [vmem:[%s713 + $0x4] sm:$0xf]
      %v2096 = vld [vmem:[%s713 + $0x8] sm:$0x1]
      %v2097 = vld [vmem:[%s713 + $0xc] sm:$0xf]
      %v2098 = vld [vmem:[%s713 + $0x10] sm:$0xf]
      %v2099 = vld [vmem:[%s713 + $0x14] sm:$0x1]
      %v2100 = vld [vmem:[%s713 + $0x18] sm:$0xf]
      %v2101 = vld [vmem:[%s713 + $0x1c] sm:$0xf]
      %v2102 = vld [vmem:[%s713 + $0x20] sm:$0x1]
      %v2103 = vld [vmem:[%s713 + $0x24] sm:$0xf]
      %v2104 = vld [vmem:[%s713 + $0x28] sm:$0xf]
      %v2105 = vld [vmem:[%s713 + $0x2c] sm:$0x1]
      %v2106 = vld [vmem:[%s713 + $0x30] sm:$0xf]
      %v2107 = vld [vmem:[%s713 + $0x34] sm:$0xf]
      %v2108 = vld [vmem:[%s713 + $0x38] sm:$0x1]
      %v2109 = vld [vmem:[%s713 + $0x3c] sm:$0xf]
      %v2110 = vld [vmem:[%s713 + $0x40] sm:$0xf]
      %v2111 = vld [vmem:[%s713 + $0x44] sm:$0x1]
      %v2112 = vld [vmem:[%s713 + $0x48] sm:$0xf]
      %v2113 = vld [vmem:[%s713 + $0x4c] sm:$0xf]
      %v2114 = vld [vmem:[%s713 + $0x50] sm:$0x1]
      %v2115 = vld [vmem:[%s713 + $0x54] sm:$0xf]
      %v2116 = vld [vmem:[%s713 + $0x58] sm:$0xf]
      %v2117 = vld [vmem:[%s713 + $0x5c] sm:$0x1]
      %v2119 = vshrl.u32 %v2094, 16
      %v2121 = vrot.slane %v2119, 4
      %v2122 = vshll.u32 %v2094, 16
      %v2124 = vrot.slane %v2122, 5
      %v2125 = vor.u32 %v2121, %v2124
      %v2126 = vrot.slane %v2125, 4
      %v2128 = vshll.u32 %v2095, 16
      %v2130 = vrot.slane %v2128, 5
      %v2131 = vsel %vm1144, %v2126, %v2130
      %v2132 = vshrl.u32 %v2095, 16
      %v2134 = vrot.slane %v2132, 4
      %v2135 = vor.u32 %v2134, %v2130
      %v2136 = vrot.slane %v2135, 4
      %v2138 = vshll.u32 %v2096, 16
      %v2140 = vrot.slane %v2138, 5
      %v2141 = vsel %vm1144, %v2136, %v2140
      %v2143 = vshrl.u32 %v2097, 16
      %v2145 = vrot.slane %v2143, 4
      %v2146 = vshll.u32 %v2097, 16
      %v2148 = vrot.slane %v2146, 5
      %v2149 = vor.u32 %v2145, %v2148
      %v2150 = vrot.slane %v2149, 4
      %v2152 = vshll.u32 %v2098, 16
      %v2154 = vrot.slane %v2152, 5
      %v2155 = vsel %vm1144, %v2150, %v2154
      %v2156 = vshrl.u32 %v2098, 16
      %v2158 = vrot.slane %v2156, 4
      %v2159 = vor.u32 %v2158, %v2154
      %v2160 = vrot.slane %v2159, 4
      %v2162 = vshll.u32 %v2099, 16
      %v2164 = vrot.slane %v2162, 5
      %v2165 = vsel %vm1144, %v2160, %v2164
      %v2167 = vshrl.u32 %v2100, 16
      %v2169 = vrot.slane %v2167, 4
      %v2170 = vshll.u32 %v2100, 16
      %v2172 = vrot.slane %v2170, 5
      %v2173 = vor.u32 %v2169, %v2172
      %v2174 = vrot.slane %v2173, 4
      %v2176 = vshll.u32 %v2101, 16
      %v2178 = vrot.slane %v2176, 5
      %v2179 = vsel %vm1144, %v2174, %v2178
      %v2180 = vshrl.u32 %v2101, 16
      %v2182 = vrot.slane %v2180, 4
      %v2183 = vor.u32 %v2182, %v2178
      %v2184 = vrot.slane %v2183, 4
      %v2186 = vshll.u32 %v2102, 16
      %v2188 = vrot.slane %v2186, 5
      %v2189 = vsel %vm1144, %v2184, %v2188
      %v2191 = vshrl.u32 %v2103, 16
      %v2193 = vrot.slane %v2191, 4
      %v2194 = vshll.u32 %v2103, 16
      %v2196 = vrot.slane %v2194, 5
      %v2197 = vor.u32 %v2193, %v2196
      %v2198 = vrot.slane %v2197, 4
      %v2200 = vshll.u32 %v2104, 16
      %v2202 = vrot.slane %v2200, 5
      %v2203 = vsel %vm1144, %v2198, %v2202
      %v2204 = vshrl.u32 %v2104, 16
      %v2206 = vrot.slane %v2204, 4
      %v2207 = vor.u32 %v2206, %v2202
      %v2208 = vrot.slane %v2207, 4
      %v2210 = vshll.u32 %v2105, 16
      %v2212 = vrot.slane %v2210, 5
      %v2213 = vsel %vm1144, %v2208, %v2212
      %v2215 = vshrl.u32 %v2106, 16
      %v2217 = vrot.slane %v2215, 4
      %v2218 = vshll.u32 %v2106, 16
      %v2220 = vrot.slane %v2218, 5
      %v2221 = vor.u32 %v2217, %v2220
      %v2222 = vrot.slane %v2221, 4
      %v2224 = vshll.u32 %v2107, 16
      %v2226 = vrot.slane %v2224, 5
      %v2227 = vsel %vm1144, %v2222, %v2226
      %v2228 = vshrl.u32 %v2107, 16
      %v2230 = vrot.slane %v2228, 4
      %v2231 = vor.u32 %v2230, %v2226
      %v2232 = vrot.slane %v2231, 4
      %v2234 = vshll.u32 %v2108, 16
      %v2236 = vrot.slane %v2234, 5
      %v2237 = vsel %vm1144, %v2232, %v2236
      %v2239 = vshrl.u32 %v2109, 16
      %v2241 = vrot.slane %v2239, 4
      %v2242 = vshll.u32 %v2109, 16
      %v2244 = vrot.slane %v2242, 5
      %v2245 = vor.u32 %v2241, %v2244
      %v2246 = vrot.slane %v2245, 4
      %v2248 = vshll.u32 %v2110, 16
      %v2250 = vrot.slane %v2248, 5
      %v2251 = vsel %vm1144, %v2246, %v2250
      %v2252 = vshrl.u32 %v2110, 16
      %v2254 = vrot.slane %v2252, 4
      %v2255 = vor.u32 %v2254, %v2250
      %v2256 = vrot.slane %v2255, 4
      %v2258 = vshll.u32 %v2111, 16
      %v2260 = vrot.slane %v2258, 5
      %v2261 = vsel %vm1144, %v2256, %v2260
      %v2263 = vshrl.u32 %v2112, 16
      %v2265 = vrot.slane %v2263, 4
      %v2266 = vshll.u32 %v2112, 16
      %v2268 = vrot.slane %v2266, 5
      %v2269 = vor.u32 %v2265, %v2268
      %v2270 = vrot.slane %v2269, 4
      %v2272 = vshll.u32 %v2113, 16
      %v2274 = vrot.slane %v2272, 5
      %v2275 = vsel %vm1144, %v2270, %v2274
      %v2276 = vshrl.u32 %v2113, 16
      %v2278 = vrot.slane %v2276, 4
      %v2279 = vor.u32 %v2278, %v2274
      %v2280 = vrot.slane %v2279, 4
      %v2282 = vshll.u32 %v2114, 16
      %v2284 = vrot.slane %v2282, 5
      %v2285 = vsel %vm1144, %v2280, %v2284
      %v2287 = vshrl.u32 %v2115, 16
      %v2289 = vrot.slane %v2287, 4
      %v2290 = vshll.u32 %v2115, 16
      %v2292 = vrot.slane %v2290, 5
      %v2293 = vor.u32 %v2289, %v2292
      %v2294 = vrot.slane %v2293, 4
      %v2296 = vshll.u32 %v2116, 16
      %v2298 = vrot.slane %v2296, 5
      %v2299 = vsel %vm1144, %v2294, %v2298
      %v2300 = vshrl.u32 %v2116, 16
      %v2302 = vrot.slane %v2300, 4
      %v2303 = vor.u32 %v2302, %v2298
      %v2304 = vrot.slane %v2303, 4
      %v2306 = vshll.u32 %v2117, 16
      %v2308 = vrot.slane %v2306, 5
      %v2309 = vsel %vm1144, %v2304, %v2308
      %v2310 = vunpack.c.l.b16 %v2131
      %v2311 = vunpack.c.l.b16 %v2141
      %v2312 = vunpack.c.l.b16 %v2155
      %v2313 = vunpack.c.l.b16 %v2165
      %v2314 = vunpack.c.l.b16 %v2179
      %v2315 = vunpack.c.l.b16 %v2189
      %v2316 = vunpack.c.l.b16 %v2203
      %v2317 = vunpack.c.l.b16 %v2213
      %v2318 = vunpack.c.l.b16 %v2227
      %v2319 = vunpack.c.l.b16 %v2237
      %v2320 = vunpack.c.l.b16 %v2251
      %v2321 = vunpack.c.l.b16 %v2261
      %v2322 = vunpack.c.l.b16 %v2275
      %v2323 = vunpack.c.l.b16 %v2285
      %v2324 = vunpack.c.l.b16 %v2299
      %v2325 = vunpack.c.l.b16 %v2309
      %v2326 = vpack.c.b16 %v2311, %v2310
      %v2327 = vpack.c.b16 %v2313, %v2312
      %v2328 = vpack.c.b16 %v2315, %v2314
      %v2329 = vpack.c.b16 %v2317, %v2316
      %v2330 = vpack.c.b16 %v2319, %v2318
      %v2331 = vpack.c.b16 %v2321, %v2320
      %v2332 = vpack.c.b16 %v2323, %v2322
      %v2333 = vpack.c.b16 %v2325, %v2324
      %v2335 = vsel %vm1361, %v2326, 0
      %v2338 = vsel %vm1361, %v2327, 0
      %v2341 = vsel %vm1361, %v2328, 0
      %v2344 = vsel %vm1361, %v2329, 0
      %v2347 = vsel %vm1361, %v2330, 0
      %v2350 = vsel %vm1361, %v2331, 0
      %v2353 = vsel %vm1361, %v2332, 0
      %v2356 = vsel %vm1361, %v2333, 0
      %v2359 = vsel %vm1386, %v280, 0
      %2361 = vmatprep.subr.bf16.mxu0 0
      %2362 = vmatpush1.bf16.msra.mxu0 0
      %2363 = vmatprep.subr.bf16.mxu0 0
      %2364 = vmatpush1.bf16.msra.mxu0 0
      %2365 = vmatprep.subr.bf16.mxu0 0
      %2366 = vmatpush1.bf16.msra.mxu0 0
      %2367 = vmatprep.subr.bf16.mxu0 0
      %2368 = vmatpush1.bf16.msra.mxu0 0
      %2369 = vmatprep.subr.bf16.mxu0 0
      %2370 = vmatpush1.bf16.msra.mxu0 0
      %2371 = vmatprep.subr.bf16.mxu0 0
      %2372 = vmatpush1.bf16.msra.mxu0 0
      %2373 = vmatprep.subr.bf16.mxu0 0
      %2374 = vmatpush1.bf16.msra.mxu0 0
      %2375 = vmatprep.subr.bf16.mxu0 0
      %2376 = vmatpush1.bf16.msra.mxu0 %v2359
      %2377 = vmatprep.subr.bf16.mxu0 0
      %2378 = vmatpush2.bf16.msra.mxu0 0
      %2379 = vmatprep.subr.bf16.mxu0 0
      %2380 = vmatpush2.bf16.msra.mxu0 0
      %2381 = vmatprep.subr.bf16.mxu0 0
      %2382 = vmatpush2.bf16.msra.mxu0 0
      %2383 = vmatprep.subr.bf16.mxu0 0
      %2384 = vmatpush2.bf16.msra.mxu0 0
      %2385 = vmatprep.subr.bf16.mxu0 0
      %2386 = vmatpush2.bf16.msra.mxu0 0
      %2387 = vmatprep.subr.bf16.mxu0 0
      %2388 = vmatpush2.bf16.msra.mxu0 0
      %2389 = vmatprep.subr.bf16.mxu0 0
      %2390 = vmatpush2.bf16.msra.mxu0 0
      %2391 = vmatprep.subr.bf16.mxu0 0
      %2392 = vmatpush2.bf16.msra.mxu0 0
      %2393 = vmatprep.mubr.bf16.mxu0 0
      %2394 = vmatmul.mubr.bf16.gmra.mxu0 %v2335
      %v2395 = vpop.f32.mrf.mxu0
      %v2396 = vadd.f32 0.0, %v2395
      %v2397 = vpop.f32.mrf.mxu0
      %v2398 = vpop.f32.mrf.mxu0
      %v2399 = vadd.f32 0.0, %v2398
      %v2400 = vpop.f32.mrf.mxu0
      %2401 = vmatprep.mubr.bf16.mxu0 0
      %2402 = vmatmul.mubr.bf16.gmra.mxu0 %v2338
      %v2403 = vpop.f32.mrf.mxu0
      %v2404 = vadd.f32 0.0, %v2403
      %v2405 = vpop.f32.mrf.mxu0
      %v2406 = vpop.f32.mrf.mxu0
      %v2407 = vadd.f32 0.0, %v2406
      %v2408 = vpop.f32.mrf.mxu0
      %2409 = vmatprep.mubr.bf16.mxu0 0
      %2410 = vmatmul.mubr.bf16.gmra.mxu0 %v2341
      %v2411 = vpop.f32.mrf.mxu0
      %v2412 = vadd.f32 0.0, %v2411
      %v2413 = vpop.f32.mrf.mxu0
      %v2414 = vpop.f32.mrf.mxu0
      %v2415 = vadd.f32 0.0, %v2414
      %v2416 = vpop.f32.mrf.mxu0
      %2417 = vmatprep.mubr.bf16.mxu0 0
      %2418 = vmatmul.mubr.bf16.gmra.mxu0 %v2344
      %v2419 = vpop.f32.mrf.mxu0
      %v2420 = vadd.f32 0.0, %v2419
      %v2421 = vpop.f32.mrf.mxu0
      %v2422 = vpop.f32.mrf.mxu0
      %v2423 = vadd.f32 0.0, %v2422
      %v2424 = vpop.f32.mrf.mxu0
      %2425 = vmatprep.mubr.bf16.mxu0 0
      %2426 = vmatmul.mubr.bf16.gmra.mxu0 %v2347
      %v2427 = vpop.f32.mrf.mxu0
      %v2428 = vadd.f32 0.0, %v2427
      %v2429 = vpop.f32.mrf.mxu0
      %v2430 = vpop.f32.mrf.mxu0
      %v2431 = vadd.f32 0.0, %v2430
      %v2432 = vpop.f32.mrf.mxu0
      %2433 = vmatprep.mubr.bf16.mxu0 0
      %2434 = vmatmul.mubr.bf16.gmra.mxu0 %v2350
      %v2435 = vpop.f32.mrf.mxu0
      %v2436 = vadd.f32 0.0, %v2435
      %v2437 = vpop.f32.mrf.mxu0
      %v2438 = vpop.f32.mrf.mxu0
      %v2439 = vadd.f32 0.0, %v2438
      %v2440 = vpop.f32.mrf.mxu0
      %2441 = vmatprep.mubr.bf16.mxu0 0
      %2442 = vmatmul.mubr.bf16.gmra.mxu0 %v2353
      %v2443 = vpop.f32.mrf.mxu0
      %v2444 = vadd.f32 0.0, %v2443
      %v2445 = vpop.f32.mrf.mxu0
      %v2446 = vpop.f32.mrf.mxu0
      %v2447 = vadd.f32 0.0, %v2446
      %v2448 = vpop.f32.mrf.mxu0
      %2449 = vmatprep.mubr.bf16.mxu0 0
      %2450 = vmatmul.mubr.bf16.gmra.mxu0 %v2356
      %v2451 = vpop.f32.mrf.mxu0
      %v2452 = vadd.f32 0.0, %v2451
      %v2453 = vpop.f32.mrf.mxu0
      %v2454 = vpop.f32.mrf.mxu0
      %v2455 = vadd.f32 0.0, %v2454
      %v2456 = vpop.f32.mrf.mxu0
      %2457 = vdwg.mxu0
      %v2458 = vadd.f32 %v2078, %v2396
      %v2459 = vadd.f32 %v2079, %v2399
      %v2460 = vadd.f32 %v2080, %v2404
      %v2461 = vadd.f32 %v2081, %v2407
      %v2462 = vadd.f32 %v2082, %v2412
      %v2463 = vadd.f32 %v2083, %v2415
      %v2464 = vadd.f32 %v2084, %v2420
      %v2465 = vadd.f32 %v2085, %v2423
      %v2466 = vadd.f32 %v2086, %v2428
      %v2467 = vadd.f32 %v2087, %v2431
      %v2468 = vadd.f32 %v2088, %v2436
      %v2469 = vadd.f32 %v2089, %v2439
      %v2470 = vadd.f32 %v2090, %v2444
      %v2471 = vadd.f32 %v2091, %v2447
      %v2472 = vadd.f32 %v2092, %v2452
      %v2473 = vadd.f32 %v2093, %v2455
      %v2474 = vld [vmem:[%s713] sm:$0xe]
      %v2475 = vld [vmem:[%s713 + $0xc] sm:$0xe]
      %v2476 = vld [vmem:[%s713 + $0x18] sm:$0xe]
      %v2477 = vld [vmem:[%s713 + $0x24] sm:$0xe]
      %v2478 = vld [vmem:[%s713 + $0x30] sm:$0xe]
      %v2479 = vld [vmem:[%s713 + $0x3c] sm:$0xe]
      %v2480 = vld [vmem:[%s713 + $0x48] sm:$0xe]
      %v2481 = vld [vmem:[%s713 + $0x54] sm:$0xe]
      %v2506 = vrot.slane %v2474, 5
      %v2507 = vrot.slane %v2506, 4
      %v2508 = vrot.slane %v2095, 5
      %v2509 = vsel %vm1677, %v2507, %v2508
      %v2510 = vrot.slane %v2508, 4
      %v2511 = vrot.slane %v2096, 5
      %v2512 = vsel %vm1677, %v2510, %v2511
      %v2513 = vrot.slane %v2475, 5
      %v2514 = vrot.slane %v2513, 4
      %v2515 = vrot.slane %v2098, 5
      %v2516 = vsel %vm1677, %v2514, %v2515
      %v2517 = vrot.slane %v2515, 4
      %v2518 = vrot.slane %v2099, 5
      %v2519 = vsel %vm1677, %v2517, %v2518
      %v2520 = vrot.slane %v2476, 5
      %v2521 = vrot.slane %v2520, 4
      %v2522 = vrot.slane %v2101, 5
      %v2523 = vsel %vm1677, %v2521, %v2522
      %v2524 = vrot.slane %v2522, 4
      %v2525 = vrot.slane %v2102, 5
      %v2526 = vsel %vm1677, %v2524, %v2525
      %v2527 = vrot.slane %v2477, 5
      %v2528 = vrot.slane %v2527, 4
      %v2529 = vrot.slane %v2104, 5
      %v2530 = vsel %vm1677, %v2528, %v2529
      %v2531 = vrot.slane %v2529, 4
      %v2532 = vrot.slane %v2105, 5
      %v2533 = vsel %vm1677, %v2531, %v2532
      %v2534 = vrot.slane %v2478, 5
      %v2535 = vrot.slane %v2534, 4
      %v2536 = vrot.slane %v2107, 5
      %v2537 = vsel %vm1677, %v2535, %v2536
      %v2538 = vrot.slane %v2536, 4
      %v2539 = vrot.slane %v2108, 5
      %v2540 = vsel %vm1677, %v2538, %v2539
      %v2541 = vrot.slane %v2479, 5
      %v2542 = vrot.slane %v2541, 4
      %v2543 = vrot.slane %v2110, 5
      %v2544 = vsel %vm1677, %v2542, %v2543
      %v2545 = vrot.slane %v2543, 4
      %v2546 = vrot.slane %v2111, 5
      %v2547 = vsel %vm1677, %v2545, %v2546
      %v2548 = vrot.slane %v2480, 5
      %v2549 = vrot.slane %v2548, 4
      %v2550 = vrot.slane %v2113, 5
      %v2551 = vsel %vm1677, %v2549, %v2550
      %v2552 = vrot.slane %v2550, 4
      %v2553 = vrot.slane %v2114, 5
      %v2554 = vsel %vm1677, %v2552, %v2553
      %v2555 = vrot.slane %v2481, 5
      %v2556 = vrot.slane %v2555, 4
      %v2557 = vrot.slane %v2116, 5
      %v2558 = vsel %vm1677, %v2556, %v2557
      %v2559 = vrot.slane %v2557, 4
      %v2560 = vrot.slane %v2117, 5
      %v2561 = vsel %vm1677, %v2559, %v2560
      %v2562 = vunpack.c.l.b16 %v2509
      %v2563 = vunpack.c.l.b16 %v2512
      %v2564 = vunpack.c.l.b16 %v2516
      %v2565 = vunpack.c.l.b16 %v2519
      %v2566 = vunpack.c.l.b16 %v2523
      %v2567 = vunpack.c.l.b16 %v2526
      %v2568 = vunpack.c.l.b16 %v2530
      %v2569 = vunpack.c.l.b16 %v2533
      %v2570 = vunpack.c.l.b16 %v2537
      %v2571 = vunpack.c.l.b16 %v2540
      %v2572 = vunpack.c.l.b16 %v2544
      %v2573 = vunpack.c.l.b16 %v2547
      %v2574 = vunpack.c.l.b16 %v2551
      %v2575 = vunpack.c.l.b16 %v2554
      %v2576 = vunpack.c.l.b16 %v2558
      %v2577 = vunpack.c.l.b16 %v2561
      %v2578 = vpack.c.b16 %v2563, %v2562
      %v2579 = vpack.c.b16 %v2565, %v2564
      %v2580 = vpack.c.b16 %v2567, %v2566
      %v2581 = vpack.c.b16 %v2569, %v2568
      %v2582 = vpack.c.b16 %v2571, %v2570
      %v2583 = vpack.c.b16 %v2573, %v2572
      %v2584 = vpack.c.b16 %v2575, %v2574
      %v2585 = vpack.c.b16 %v2577, %v2576
      %v2587 = vsel %vm1361, %v2578, 0
      %v2590 = vsel %vm1361, %v2579, 0
      %v2593 = vsel %vm1361, %v2580, 0
      %v2596 = vsel %vm1361, %v2581, 0
      %v2599 = vsel %vm1361, %v2582, 0
      %v2602 = vsel %vm1361, %v2583, 0
      %v2605 = vsel %vm1361, %v2584, 0
      %v2608 = vsel %vm1361, %v2585, 0
      %v2611 = vsel %vm1386, %v282, 0
      %2613 = vmatprep.subr.bf16.mxu0 0
      %2614 = vmatpush1.bf16.msra.mxu0 0
      %2615 = vmatprep.subr.bf16.mxu0 0
      %2616 = vmatpush1.bf16.msra.mxu0 0
      %2617 = vmatprep.subr.bf16.mxu0 0
      %2618 = vmatpush1.bf16.msra.mxu0 0
      %2619 = vmatprep.subr.bf16.mxu0 0
      %2620 = vmatpush1.bf16.msra.mxu0 0
      %2621 = vmatprep.subr.bf16.mxu0 0
      %2622 = vmatpush1.bf16.msra.mxu0 0
      %2623 = vmatprep.subr.bf16.mxu0 0
      %2624 = vmatpush1.bf16.msra.mxu0 0
      %2625 = vmatprep.subr.bf16.mxu0 0
      %2626 = vmatpush1.bf16.msra.mxu0 0
      %2627 = vmatprep.subr.bf16.mxu0 0
      %2628 = vmatpush1.bf16.msra.mxu0 %v2611
      %2629 = vmatprep.subr.bf16.mxu0 0
      %2630 = vmatpush2.bf16.msra.mxu0 0
      %2631 = vmatprep.subr.bf16.mxu0 0
      %2632 = vmatpush2.bf16.msra.mxu0 0
      %2633 = vmatprep.subr.bf16.mxu0 0
      %2634 = vmatpush2.bf16.msra.mxu0 0
      %2635 = vmatprep.subr.bf16.mxu0 0
      %2636 = vmatpush2.bf16.msra.mxu0 0
      %2637 = vmatprep.subr.bf16.mxu0 0
      %2638 = vmatpush2.bf16.msra.mxu0 0
      %2639 = vmatprep.subr.bf16.mxu0 0
      %2640 = vmatpush2.bf16.msra.mxu0 0
      %2641 = vmatprep.subr.bf16.mxu0 0
      %2642 = vmatpush2.bf16.msra.mxu0 0
      %2643 = vmatprep.subr.bf16.mxu0 0
      %2644 = vmatpush2.bf16.msra.mxu0 0
      %2645 = vmatprep.mubr.bf16.mxu0 0
      %2646 = vmatmul.mubr.bf16.gmra.mxu0 %v2587
      %v2647 = vpop.f32.mrf.mxu0
      %v2648 = vadd.f32 0.0, %v2647
      %v2649 = vpop.f32.mrf.mxu0
      %v2650 = vpop.f32.mrf.mxu0
      %v2651 = vadd.f32 0.0, %v2650
      %v2652 = vpop.f32.mrf.mxu0
      %2653 = vmatprep.mubr.bf16.mxu0 0
      %2654 = vmatmul.mubr.bf16.gmra.mxu0 %v2590
      %v2655 = vpop.f32.mrf.mxu0
      %v2656 = vadd.f32 0.0, %v2655
      %v2657 = vpop.f32.mrf.mxu0
      %v2658 = vpop.f32.mrf.mxu0
      %v2659 = vadd.f32 0.0, %v2658
      %v2660 = vpop.f32.mrf.mxu0
      %2661 = vmatprep.mubr.bf16.mxu0 0
      %2662 = vmatmul.mubr.bf16.gmra.mxu0 %v2593
      %v2663 = vpop.f32.mrf.mxu0
      %v2664 = vadd.f32 0.0, %v2663
      %v2665 = vpop.f32.mrf.mxu0
      %v2666 = vpop.f32.mrf.mxu0
      %v2667 = vadd.f32 0.0, %v2666
      %v2668 = vpop.f32.mrf.mxu0
      %2669 = vmatprep.mubr.bf16.mxu0 0
      %2670 = vmatmul.mubr.bf16.gmra.mxu0 %v2596
      %v2671 = vpop.f32.mrf.mxu0
      %v2672 = vadd.f32 0.0, %v2671
      %v2673 = vpop.f32.mrf.mxu0
      %v2674 = vpop.f32.mrf.mxu0
      %v2675 = vadd.f32 0.0, %v2674
      %v2676 = vpop.f32.mrf.mxu0
      %2677 = vmatprep.mubr.bf16.mxu0 0
      %2678 = vmatmul.mubr.bf16.gmra.mxu0 %v2599
      %v2679 = vpop.f32.mrf.mxu0
      %v2680 = vadd.f32 0.0, %v2679
      %v2681 = vpop.f32.mrf.mxu0
      %v2682 = vpop.f32.mrf.mxu0
      %v2683 = vadd.f32 0.0, %v2682
      %v2684 = vpop.f32.mrf.mxu0
      %2685 = vmatprep.mubr.bf16.mxu0 0
      %2686 = vmatmul.mubr.bf16.gmra.mxu0 %v2602
      %v2687 = vpop.f32.mrf.mxu0
      %v2688 = vadd.f32 0.0, %v2687
      %v2689 = vpop.f32.mrf.mxu0
      %v2690 = vpop.f32.mrf.mxu0
      %v2691 = vadd.f32 0.0, %v2690
      %v2692 = vpop.f32.mrf.mxu0
      %2693 = vmatprep.mubr.bf16.mxu0 0
      %2694 = vmatmul.mubr.bf16.gmra.mxu0 %v2605
      %v2695 = vpop.f32.mrf.mxu0
      %v2696 = vadd.f32 0.0, %v2695
      %v2697 = vpop.f32.mrf.mxu0
      %v2698 = vpop.f32.mrf.mxu0
      %v2699 = vadd.f32 0.0, %v2698
      %v2700 = vpop.f32.mrf.mxu0
      %2701 = vmatprep.mubr.bf16.mxu0 0
      %2702 = vmatmul.mubr.bf16.gmra.mxu0 %v2608
      %v2703 = vpop.f32.mrf.mxu0
      %v2704 = vadd.f32 0.0, %v2703
      %v2705 = vpop.f32.mrf.mxu0
      %v2706 = vpop.f32.mrf.mxu0
      %v2707 = vadd.f32 0.0, %v2706
      %v2708 = vpop.f32.mrf.mxu0
      %2709 = vdwg.mxu0
      %v2710 = vadd.f32 %v2458, %v2648
      %v2711 = vadd.f32 %v2459, %v2651
      %v2712 = vadd.f32 %v2460, %v2656
      %v2713 = vadd.f32 %v2461, %v2659
      %v2714 = vadd.f32 %v2462, %v2664
      %v2715 = vadd.f32 %v2463, %v2667
      %v2716 = vadd.f32 %v2464, %v2672
      %v2717 = vadd.f32 %v2465, %v2675
      %v2718 = vadd.f32 %v2466, %v2680
      %v2719 = vadd.f32 %v2467, %v2683
      %v2720 = vadd.f32 %v2468, %v2688
      %v2721 = vadd.f32 %v2469, %v2691
      %v2722 = vadd.f32 %v2470, %v2696
      %v2723 = vadd.f32 %v2471, %v2699
      %v2724 = vadd.f32 %v2472, %v2704
      %v2725 = vadd.f32 %v2473, %v2707
      %s2726 = scalar_lea.vmem [#allocation2], 24
      %v2727 = vld [vmem:[%s2726] sm:$0xf]
      %v2728 = vld [vmem:[%s2726 + $0x4] sm:$0xf]
      %v2729 = vld [vmem:[%s2726 + $0xc] sm:$0xf]
      %v2730 = vld [vmem:[%s2726 + $0x10] sm:$0xf]
      %v2731 = vld [vmem:[%s2726 + $0x18] sm:$0xf]
      %v2732 = vld [vmem:[%s2726 + $0x1c] sm:$0xf]
      %v2733 = vld [vmem:[%s2726 + $0x24] sm:$0xf]
      %v2734 = vld [vmem:[%s2726 + $0x28] sm:$0xf]
      %v2735 = vld [vmem:[%s2726 + $0x30] sm:$0xf]
      %v2736 = vld [vmem:[%s2726 + $0x34] sm:$0xf]
      %v2737 = vld [vmem:[%s2726 + $0x3c] sm:$0xf]
      %v2738 = vld [vmem:[%s2726 + $0x40] sm:$0xf]
      %v2739 = vld [vmem:[%s2726 + $0x48] sm:$0xf]
      %v2740 = vld [vmem:[%s2726 + $0x4c] sm:$0xf]
      %v2741 = vld [vmem:[%s2726 + $0x54] sm:$0xf]
      %v2742 = vld [vmem:[%s2726 + $0x58] sm:$0xf]
      %v2759 = vunpack.c.l.b16 %v2727
      %v2760 = vunpack.c.l.b16 %v2728
      %v2761 = vunpack.c.l.b16 %v2729
      %v2762 = vunpack.c.l.b16 %v2730
      %v2763 = vunpack.c.l.b16 %v2731
      %v2764 = vunpack.c.l.b16 %v2732
      %v2765 = vunpack.c.l.b16 %v2733
      %v2766 = vunpack.c.l.b16 %v2734
      %v2767 = vunpack.c.l.b16 %v2735
      %v2768 = vunpack.c.l.b16 %v2736
      %v2769 = vunpack.c.l.b16 %v2737
      %v2770 = vunpack.c.l.b16 %v2738
      %v2771 = vunpack.c.l.b16 %v2739
      %v2772 = vunpack.c.l.b16 %v2740
      %v2773 = vunpack.c.l.b16 %v2741
      %v2774 = vunpack.c.l.b16 %v2742
      %v2775 = vpack.c.b16 %v2760, %v2759
      %v2776 = vpack.c.b16 %v2762, %v2761
      %v2777 = vpack.c.b16 %v2764, %v2763
      %v2778 = vpack.c.b16 %v2766, %v2765
      %v2779 = vpack.c.b16 %v2768, %v2767
      %v2780 = vpack.c.b16 %v2770, %v2769
      %v2781 = vpack.c.b16 %v2772, %v2771
      %v2782 = vpack.c.b16 %v2774, %v2773
      %v2784 = vsel %vm1361, %v2775, 0
      %v2787 = vsel %vm1361, %v2776, 0
      %v2790 = vsel %vm1361, %v2777, 0
      %v2793 = vsel %vm1361, %v2778, 0
      %v2796 = vsel %vm1361, %v2779, 0
      %v2799 = vsel %vm1361, %v2780, 0
      %v2802 = vsel %vm1361, %v2781, 0
      %v2805 = vsel %vm1361, %v2782, 0
      %v2808 = vsel %vm1386, %v284, 0
      %2810 = vmatprep.subr.bf16.mxu0 0
      %2811 = vmatpush1.bf16.msra.mxu0 0
      %2812 = vmatprep.subr.bf16.mxu0 0
      %2813 = vmatpush1.bf16.msra.mxu0 0
      %2814 = vmatprep.subr.bf16.mxu0 0
      %2815 = vmatpush1.bf16.msra.mxu0 0
      %2816 = vmatprep.subr.bf16.mxu0 0
      %2817 = vmatpush1.bf16.msra.mxu0 0
      %2818 = vmatprep.subr.bf16.mxu0 0
      %2819 = vmatpush1.bf16.msra.mxu0 0
      %2820 = vmatprep.subr.bf16.mxu0 0
      %2821 = vmatpush1.bf16.msra.mxu0 0
      %2822 = vmatprep.subr.bf16.mxu0 0
      %2823 = vmatpush1.bf16.msra.mxu0 0
      %2824 = vmatprep.subr.bf16.mxu0 0
      %2825 = vmatpush1.bf16.msra.mxu0 %v2808
      %2826 = vmatprep.subr.bf16.mxu0 0
      %2827 = vmatpush2.bf16.msra.mxu0 0
      %2828 = vmatprep.subr.bf16.mxu0 0
      %2829 = vmatpush2.bf16.msra.mxu0 0
      %2830 = vmatprep.subr.bf16.mxu0 0
      %2831 = vmatpush2.bf16.msra.mxu0 0
      %2832 = vmatprep.subr.bf16.mxu0 0
      %2833 = vmatpush2.bf16.msra.mxu0 0
      %2834 = vmatprep.subr.bf16.mxu0 0
      %2835 = vmatpush2.bf16.msra.mxu0 0
      %2836 = vmatprep.subr.bf16.mxu0 0
      %2837 = vmatpush2.bf16.msra.mxu0 0
      %2838 = vmatprep.subr.bf16.mxu0 0
      %2839 = vmatpush2.bf16.msra.mxu0 0
      %2840 = vmatprep.subr.bf16.mxu0 0
      %2841 = vmatpush2.bf16.msra.mxu0 0
      %2842 = vmatprep.mubr.bf16.mxu0 0
      %2843 = vmatmul.mubr.bf16.gmra.mxu0 %v2784
      %v2844 = vpop.f32.mrf.mxu0
      %v2845 = vadd.f32 0.0, %v2844
      %v2846 = vpop.f32.mrf.mxu0
      %v2847 = vpop.f32.mrf.mxu0
      %v2848 = vadd.f32 0.0, %v2847
      %v2849 = vpop.f32.mrf.mxu0
      %2850 = vmatprep.mubr.bf16.mxu0 0
      %2851 = vmatmul.mubr.bf16.gmra.mxu0 %v2787
      %v2852 = vpop.f32.mrf.mxu0
      %v2853 = vadd.f32 0.0, %v2852
      %v2854 = vpop.f32.mrf.mxu0
      %v2855 = vpop.f32.mrf.mxu0
      %v2856 = vadd.f32 0.0, %v2855
      %v2857 = vpop.f32.mrf.mxu0
      %2858 = vmatprep.mubr.bf16.mxu0 0
      %2859 = vmatmul.mubr.bf16.gmra.mxu0 %v2790
      %v2860 = vpop.f32.mrf.mxu0
      %v2861 = vadd.f32 0.0, %v2860
      %v2862 = vpop.f32.mrf.mxu0
      %v2863 = vpop.f32.mrf.mxu0
      %v2864 = vadd.f32 0.0, %v2863
      %v2865 = vpop.f32.mrf.mxu0
      %2866 = vmatprep.mubr.bf16.mxu0 0
      %2867 = vmatmul.mubr.bf16.gmra.mxu0 %v2793
      %v2868 = vpop.f32.mrf.mxu0
      %v2869 = vadd.f32 0.0, %v2868
      %v2870 = vpop.f32.mrf.mxu0
      %v2871 = vpop.f32.mrf.mxu0
      %v2872 = vadd.f32 0.0, %v2871
      %v2873 = vpop.f32.mrf.mxu0
      %2874 = vmatprep.mubr.bf16.mxu0 0
      %2875 = vmatmul.mubr.bf16.gmra.mxu0 %v2796
      %v2876 = vpop.f32.mrf.mxu0
      %v2877 = vadd.f32 0.0, %v2876
      %v2878 = vpop.f32.mrf.mxu0
      %v2879 = vpop.f32.mrf.mxu0
      %v2880 = vadd.f32 0.0, %v2879
      %v2881 = vpop.f32.mrf.mxu0
      %2882 = vmatprep.mubr.bf16.mxu0 0
      %2883 = vmatmul.mubr.bf16.gmra.mxu0 %v2799
      %v2884 = vpop.f32.mrf.mxu0
      %v2885 = vadd.f32 0.0, %v2884
      %v2886 = vpop.f32.mrf.mxu0
      %v2887 = vpop.f32.mrf.mxu0
      %v2888 = vadd.f32 0.0, %v2887
      %v2889 = vpop.f32.mrf.mxu0
      %2890 = vmatprep.mubr.bf16.mxu0 0
      %2891 = vmatmul.mubr.bf16.gmra.mxu0 %v2802
      %v2892 = vpop.f32.mrf.mxu0
      %v2893 = vadd.f32 0.0, %v2892
      %v2894 = vpop.f32.mrf.mxu0
      %v2895 = vpop.f32.mrf.mxu0
      %v2896 = vadd.f32 0.0, %v2895
      %v2897 = vpop.f32.mrf.mxu0
      %2898 = vmatprep.mubr.bf16.mxu0 0
      %2899 = vmatmul.mubr.bf16.gmra.mxu0 %v2805
      %v2900 = vpop.f32.mrf.mxu0
      %v2901 = vadd.f32 0.0, %v2900
      %v2902 = vpop.f32.mrf.mxu0
      %v2903 = vpop.f32.mrf.mxu0
      %v2904 = vadd.f32 0.0, %v2903
      %v2905 = vpop.f32.mrf.mxu0
      %2906 = vdwg.mxu0
      %v2907 = vadd.f32 %v2710, %v2845
      %v2908 = vadd.f32 %v2711, %v2848
      %v2909 = vadd.f32 %v2712, %v2853
      %v2910 = vadd.f32 %v2713, %v2856
      %v2911 = vadd.f32 %v2714, %v2861
      %v2912 = vadd.f32 %v2715, %v2864
      %v2913 = vadd.f32 %v2716, %v2869
      %v2914 = vadd.f32 %v2717, %v2872
      %v2915 = vadd.f32 %v2718, %v2877
      %v2916 = vadd.f32 %v2719, %v2880
      %v2917 = vadd.f32 %v2720, %v2885
      %v2918 = vadd.f32 %v2721, %v2888
      %v2919 = vadd.f32 %v2722, %v2893
      %v2920 = vadd.f32 %v2723, %v2896
      %v2921 = vadd.f32 %v2724, %v2901
      %v2922 = vadd.f32 %v2725, %v2904
      %v2923 = vld [vmem:[%s2726] sm:$0xf]
      %v2924 = vld [vmem:[%s2726 + $0x4] sm:$0xf]
      %v2925 = vld [vmem:[%s2726 + $0x8] sm:$0x1]
      %v2926 = vld [vmem:[%s2726 + $0xc] sm:$0xf]
      %v2927 = vld [vmem:[%s2726 + $0x10] sm:$0xf]
      %v2928 = vld [vmem:[%s2726 + $0x14] sm:$0x1]
      %v2929 = vld [vmem:[%s2726 + $0x18] sm:$0xf]
      %v2930 = vld [vmem:[%s2726 + $0x1c] sm:$0xf]
      %v2931 = vld [vmem:[%s2726 + $0x20] sm:$0x1]
      %v2932 = vld [vmem:[%s2726 + $0x24] sm:$0xf]
      %v2933 = vld [vmem:[%s2726 + $0x28] sm:$0xf]
      %v2934 = vld [vmem:[%s2726 + $0x2c] sm:$0x1]
      %v2935 = vld [vmem:[%s2726 + $0x30] sm:$0xf]
      %v2936 = vld [vmem:[%s2726 + $0x34] sm:$0xf]
      %v2937 = vld [vmem:[%s2726 + $0x38] sm:$0x1]
      %v2938 = vld [vmem:[%s2726 + $0x3c] sm:$0xf]
      %v2939 = vld [vmem:[%s2726 + $0x40] sm:$0xf]
      %v2940 = vld [vmem:[%s2726 + $0x44] sm:$0x1]
      %v2941 = vld [vmem:[%s2726 + $0x48] sm:$0xf]
      %v2942 = vld [vmem:[%s2726 + $0x4c] sm:$0xf]
      %v2943 = vld [vmem:[%s2726 + $0x50] sm:$0x1]
      %v2944 = vld [vmem:[%s2726 + $0x54] sm:$0xf]
      %v2945 = vld [vmem:[%s2726 + $0x58] sm:$0xf]
      %v2946 = vld [vmem:[%s2726 + $0x5c] sm:$0x1]
      %v2948 = vshrl.u32 %v2923, 16
      %v2950 = vrot.slane %v2948, 4
      %v2951 = vshll.u32 %v2923, 16
      %v2953 = vrot.slane %v2951, 5
      %v2954 = vor.u32 %v2950, %v2953
      %v2955 = vrot.slane %v2954, 4
      %v2957 = vshll.u32 %v2924, 16
      %v2959 = vrot.slane %v2957, 5
      %v2960 = vsel %vm1144, %v2955, %v2959
      %v2961 = vshrl.u32 %v2924, 16
      %v2963 = vrot.slane %v2961, 4
      %v2964 = vor.u32 %v2963, %v2959
      %v2965 = vrot.slane %v2964, 4
      %v2967 = vshll.u32 %v2925, 16
      %v2969 = vrot.slane %v2967, 5
      %v2970 = vsel %vm1144, %v2965, %v2969
      %v2972 = vshrl.u32 %v2926, 16
      %v2974 = vrot.slane %v2972, 4
      %v2975 = vshll.u32 %v2926, 16
      %v2977 = vrot.slane %v2975, 5
      %v2978 = vor.u32 %v2974, %v2977
      %v2979 = vrot.slane %v2978, 4
      %v2981 = vshll.u32 %v2927, 16
      %v2983 = vrot.slane %v2981, 5
      %v2984 = vsel %vm1144, %v2979, %v2983
      %v2985 = vshrl.u32 %v2927, 16
      %v2987 = vrot.slane %v2985, 4
      %v2988 = vor.u32 %v2987, %v2983
      %v2989 = vrot.slane %v2988, 4
      %v2991 = vshll.u32 %v2928, 16
      %v2993 = vrot.slane %v2991, 5
      %v2994 = vsel %vm1144, %v2989, %v2993
      %v2996 = vshrl.u32 %v2929, 16
      %v2998 = vrot.slane %v2996, 4
      %v2999 = vshll.u32 %v2929, 16
      %v3001 = vrot.slane %v2999, 5
      %v3002 = vor.u32 %v2998, %v3001
      %v3003 = vrot.slane %v3002, 4
      %v3005 = vshll.u32 %v2930, 16
      %v3007 = vrot.slane %v3005, 5
      %v3008 = vsel %vm1144, %v3003, %v3007
      %v3009 = vshrl.u32 %v2930, 16
      %v3011 = vrot.slane %v3009, 4
      %v3012 = vor.u32 %v3011, %v3007
      %v3013 = vrot.slane %v3012, 4
      %v3015 = vshll.u32 %v2931, 16
      %v3017 = vrot.slane %v3015, 5
      %v3018 = vsel %vm1144, %v3013, %v3017
      %v3020 = vshrl.u32 %v2932, 16
      %v3022 = vrot.slane %v3020, 4
      %v3023 = vshll.u32 %v2932, 16
      %v3025 = vrot.slane %v3023, 5
      %v3026 = vor.u32 %v3022, %v3025
      %v3027 = vrot.slane %v3026, 4
      %v3029 = vshll.u32 %v2933, 16
      %v3031 = vrot.slane %v3029, 5
      %v3032 = vsel %vm1144, %v3027, %v3031
      %v3033 = vshrl.u32 %v2933, 16
      %v3035 = vrot.slane %v3033, 4
      %v3036 = vor.u32 %v3035, %v3031
      %v3037 = vrot.slane %v3036, 4
      %v3039 = vshll.u32 %v2934, 16
      %v3041 = vrot.slane %v3039, 5
      %v3042 = vsel %vm1144, %v3037, %v3041
      %v3044 = vshrl.u32 %v2935, 16
      %v3046 = vrot.slane %v3044, 4
      %v3047 = vshll.u32 %v2935, 16
      %v3049 = vrot.slane %v3047, 5
      %v3050 = vor.u32 %v3046, %v3049
      %v3051 = vrot.slane %v3050, 4
      %v3053 = vshll.u32 %v2936, 16
      %v3055 = vrot.slane %v3053, 5
      %v3056 = vsel %vm1144, %v3051, %v3055
      %v3057 = vshrl.u32 %v2936, 16
      %v3059 = vrot.slane %v3057, 4
      %v3060 = vor.u32 %v3059, %v3055
      %v3061 = vrot.slane %v3060, 4
      %v3063 = vshll.u32 %v2937, 16
      %v3065 = vrot.slane %v3063, 5
      %v3066 = vsel %vm1144, %v3061, %v3065
      %v3068 = vshrl.u32 %v2938, 16
      %v3070 = vrot.slane %v3068, 4
      %v3071 = vshll.u32 %v2938, 16
      %v3073 = vrot.slane %v3071, 5
      %v3074 = vor.u32 %v3070, %v3073
      %v3075 = vrot.slane %v3074, 4
      %v3077 = vshll.u32 %v2939, 16
      %v3079 = vrot.slane %v3077, 5
      %v3080 = vsel %vm1144, %v3075, %v3079
      %v3081 = vshrl.u32 %v2939, 16
      %v3083 = vrot.slane %v3081, 4
      %v3084 = vor.u32 %v3083, %v3079
      %v3085 = vrot.slane %v3084, 4
      %v3087 = vshll.u32 %v2940, 16
      %v3089 = vrot.slane %v3087, 5
      %v3090 = vsel %vm1144, %v3085, %v3089
      %v3092 = vshrl.u32 %v2941, 16
      %v3094 = vrot.slane %v3092, 4
      %v3095 = vshll.u32 %v2941, 16
      %v3097 = vrot.slane %v3095, 5
      %v3098 = vor.u32 %v3094, %v3097
      %v3099 = vrot.slane %v3098, 4
      %v3101 = vshll.u32 %v2942, 16
      %v3103 = vrot.slane %v3101, 5
      %v3104 = vsel %vm1144, %v3099, %v3103
      %v3105 = vshrl.u32 %v2942, 16
      %v3107 = vrot.slane %v3105, 4
      %v3108 = vor.u32 %v3107, %v3103
      %v3109 = vrot.slane %v3108, 4
      %v3111 = vshll.u32 %v2943, 16
      %v3113 = vrot.slane %v3111, 5
      %v3114 = vsel %vm1144, %v3109, %v3113
      %v3116 = vshrl.u32 %v2944, 16
      %v3118 = vrot.slane %v3116, 4
      %v3119 = vshll.u32 %v2944, 16
      %v3121 = vrot.slane %v3119, 5
      %v3122 = vor.u32 %v3118, %v3121
      %v3123 = vrot.slane %v3122, 4
      %v3125 = vshll.u32 %v2945, 16
      %v3127 = vrot.slane %v3125, 5
      %v3128 = vsel %vm1144, %v3123, %v3127
      %v3129 = vshrl.u32 %v2945, 16
      %v3131 = vrot.slane %v3129, 4
      %v3132 = vor.u32 %v3131, %v3127
      %v3133 = vrot.slane %v3132, 4
      %v3135 = vshll.u32 %v2946, 16
      %v3137 = vrot.slane %v3135, 5
      %v3138 = vsel %vm1144, %v3133, %v3137
      %v3139 = vunpack.c.l.b16 %v2960
      %v3140 = vunpack.c.l.b16 %v2970
      %v3141 = vunpack.c.l.b16 %v2984
      %v3142 = vunpack.c.l.b16 %v2994
      %v3143 = vunpack.c.l.b16 %v3008
      %v3144 = vunpack.c.l.b16 %v3018
      %v3145 = vunpack.c.l.b16 %v3032
      %v3146 = vunpack.c.l.b16 %v3042
      %v3147 = vunpack.c.l.b16 %v3056
      %v3148 = vunpack.c.l.b16 %v3066
      %v3149 = vunpack.c.l.b16 %v3080
      %v3150 = vunpack.c.l.b16 %v3090
      %v3151 = vunpack.c.l.b16 %v3104
      %v3152 = vunpack.c.l.b16 %v3114
      %v3153 = vunpack.c.l.b16 %v3128
      %v3154 = vunpack.c.l.b16 %v3138
      %v3155 = vpack.c.b16 %v3140, %v3139
      %v3156 = vpack.c.b16 %v3142, %v3141
      %v3157 = vpack.c.b16 %v3144, %v3143
      %v3158 = vpack.c.b16 %v3146, %v3145
      %v3159 = vpack.c.b16 %v3148, %v3147
      %v3160 = vpack.c.b16 %v3150, %v3149
      %v3161 = vpack.c.b16 %v3152, %v3151
      %v3162 = vpack.c.b16 %v3154, %v3153
      %v3164 = vsel %vm1361, %v3155, 0
      %v3167 = vsel %vm1361, %v3156, 0
      %v3170 = vsel %vm1361, %v3157, 0
      %v3173 = vsel %vm1361, %v3158, 0
      %v3176 = vsel %vm1361, %v3159, 0
      %v3179 = vsel %vm1361, %v3160, 0
      %v3182 = vsel %vm1361, %v3161, 0
      %v3185 = vsel %vm1361, %v3162, 0
      %v3188 = vsel %vm1386, %v286, 0
      %3190 = vmatprep.subr.bf16.mxu0 0
      %3191 = vmatpush1.bf16.msra.mxu0 0
      %3192 = vmatprep.subr.bf16.mxu0 0
      %3193 = vmatpush1.bf16.msra.mxu0 0
      %3194 = vmatprep.subr.bf16.mxu0 0
      %3195 = vmatpush1.bf16.msra.mxu0 0
      %3196 = vmatprep.subr.bf16.mxu0 0
      %3197 = vmatpush1.bf16.msra.mxu0 0
      %3198 = vmatprep.subr.bf16.mxu0 0
      %3199 = vmatpush1.bf16.msra.mxu0 0
      %3200 = vmatprep.subr.bf16.mxu0 0
      %3201 = vmatpush1.bf16.msra.mxu0 0
      %3202 = vmatprep.subr.bf16.mxu0 0
      %3203 = vmatpush1.bf16.msra.mxu0 0
      %3204 = vmatprep.subr.bf16.mxu0 0
      %3205 = vmatpush1.bf16.msra.mxu0 %v3188
      %3206 = vmatprep.subr.bf16.mxu0 0
      %3207 = vmatpush2.bf16.msra.mxu0 0
      %3208 = vmatprep.subr.bf16.mxu0 0
      %3209 = vmatpush2.bf16.msra.mxu0 0
      %3210 = vmatprep.subr.bf16.mxu0 0
      %3211 = vmatpush2.bf16.msra.mxu0 0
      %3212 = vmatprep.subr.bf16.mxu0 0
      %3213 = vmatpush2.bf16.msra.mxu0 0
      %3214 = vmatprep.subr.bf16.mxu0 0
      %3215 = vmatpush2.bf16.msra.mxu0 0
      %3216 = vmatprep.subr.bf16.mxu0 0
      %3217 = vmatpush2.bf16.msra.mxu0 0
      %3218 = vmatprep.subr.bf16.mxu0 0
      %3219 = vmatpush2.bf16.msra.mxu0 0
      %3220 = vmatprep.subr.bf16.mxu0 0
      %3221 = vmatpush2.bf16.msra.mxu0 0
      %3222 = vmatprep.mubr.bf16.mxu0 0
      %3223 = vmatmul.mubr.bf16.gmra.mxu0 %v3164
      %v3224 = vpop.f32.mrf.mxu0
      %v3225 = vadd.f32 0.0, %v3224
      %v3226 = vpop.f32.mrf.mxu0
      %v3227 = vpop.f32.mrf.mxu0
      %v3228 = vadd.f32 0.0, %v3227
      %v3229 = vpop.f32.mrf.mxu0
      %3230 = vmatprep.mubr.bf16.mxu0 0
      %3231 = vmatmul.mubr.bf16.gmra.mxu0 %v3167
      %v3232 = vpop.f32.mrf.mxu0
      %v3233 = vadd.f32 0.0, %v3232
      %v3234 = vpop.f32.mrf.mxu0
      %v3235 = vpop.f32.mrf.mxu0
      %v3236 = vadd.f32 0.0, %v3235
      %v3237 = vpop.f32.mrf.mxu0
      %3238 = vmatprep.mubr.bf16.mxu0 0
      %3239 = vmatmul.mubr.bf16.gmra.mxu0 %v3170
      %v3240 = vpop.f32.mrf.mxu0
      %v3241 = vadd.f32 0.0, %v3240
      %v3242 = vpop.f32.mrf.mxu0
      %v3243 = vpop.f32.mrf.mxu0
      %v3244 = vadd.f32 0.0, %v3243
      %v3245 = vpop.f32.mrf.mxu0
      %3246 = vmatprep.mubr.bf16.mxu0 0
      %3247 = vmatmul.mubr.bf16.gmra.mxu0 %v3173
      %v3248 = vpop.f32.mrf.mxu0
      %v3249 = vadd.f32 0.0, %v3248
      %v3250 = vpop.f32.mrf.mxu0
      %v3251 = vpop.f32.mrf.mxu0
      %v3252 = vadd.f32 0.0, %v3251
      %v3253 = vpop.f32.mrf.mxu0
      %3254 = vmatprep.mubr.bf16.mxu0 0
      %3255 = vmatmul.mubr.bf16.gmra.mxu0 %v3176
      %v3256 = vpop.f32.mrf.mxu0
      %v3257 = vadd.f32 0.0, %v3256
      %v3258 = vpop.f32.mrf.mxu0
      %v3259 = vpop.f32.mrf.mxu0
      %v3260 = vadd.f32 0.0, %v3259
      %v3261 = vpop.f32.mrf.mxu0
      %3262 = vmatprep.mubr.bf16.mxu0 0
      %3263 = vmatmul.mubr.bf16.gmra.mxu0 %v3179
      %v3264 = vpop.f32.mrf.mxu0
      %v3265 = vadd.f32 0.0, %v3264
      %v3266 = vpop.f32.mrf.mxu0
      %v3267 = vpop.f32.mrf.mxu0
      %v3268 = vadd.f32 0.0, %v3267
      %v3269 = vpop.f32.mrf.mxu0
      %3270 = vmatprep.mubr.bf16.mxu0 0
      %3271 = vmatmul.mubr.bf16.gmra.mxu0 %v3182
      %v3272 = vpop.f32.mrf.mxu0
      %v3273 = vadd.f32 0.0, %v3272
      %v3274 = vpop.f32.mrf.mxu0
      %v3275 = vpop.f32.mrf.mxu0
      %v3276 = vadd.f32 0.0, %v3275
      %v3277 = vpop.f32.mrf.mxu0
      %3278 = vmatprep.mubr.bf16.mxu0 0
      %3279 = vmatmul.mubr.bf16.gmra.mxu0 %v3185
      %v3280 = vpop.f32.mrf.mxu0
      %v3281 = vadd.f32 0.0, %v3280
      %v3282 = vpop.f32.mrf.mxu0
      %v3283 = vpop.f32.mrf.mxu0
      %v3284 = vadd.f32 0.0, %v3283
      %v3285 = vpop.f32.mrf.mxu0
      %3286 = vdwg.mxu0
      %v3287 = vadd.f32 %v2907, %v3225
      %v3288 = vadd.f32 %v2908, %v3228
      %v3289 = vadd.f32 %v2909, %v3233
      %v3290 = vadd.f32 %v2910, %v3236
      %v3291 = vadd.f32 %v2911, %v3241
      %v3292 = vadd.f32 %v2912, %v3244
      %v3293 = vadd.f32 %v2913, %v3249
      %v3294 = vadd.f32 %v2914, %v3252
      %v3295 = vadd.f32 %v2915, %v3257
      %v3296 = vadd.f32 %v2916, %v3260
      %v3297 = vadd.f32 %v2917, %v3265
      %v3298 = vadd.f32 %v2918, %v3268
      %v3299 = vadd.f32 %v2919, %v3273
      %v3300 = vadd.f32 %v2920, %v3276
      %v3301 = vadd.f32 %v2921, %v3281
      %v3302 = vadd.f32 %v2922, %v3284
      %v3303 = vld [vmem:[%s2726] sm:$0xe]
      %v3304 = vld [vmem:[%s2726 + $0xc] sm:$0xe]
      %v3305 = vld [vmem:[%s2726 + $0x18] sm:$0xe]
      %v3306 = vld [vmem:[%s2726 + $0x24] sm:$0xe]
      %v3307 = vld [vmem:[%s2726 + $0x30] sm:$0xe]
      %v3308 = vld [vmem:[%s2726 + $0x3c] sm:$0xe]
      %v3309 = vld [vmem:[%s2726 + $0x48] sm:$0xe]
      %v3310 = vld [vmem:[%s2726 + $0x54] sm:$0xe]
      %v3335 = vrot.slane %v3303, 5
      %v3336 = vrot.slane %v3335, 4
      %v3337 = vrot.slane %v2924, 5
      %v3338 = vsel %vm1677, %v3336, %v3337
      %v3339 = vrot.slane %v3337, 4
      %v3340 = vrot.slane %v2925, 5
      %v3341 = vsel %vm1677, %v3339, %v3340
      %v3342 = vrot.slane %v3304, 5
      %v3343 = vrot.slane %v3342, 4
      %v3344 = vrot.slane %v2927, 5
      %v3345 = vsel %vm1677, %v3343, %v3344
      %v3346 = vrot.slane %v3344, 4
      %v3347 = vrot.slane %v2928, 5
      %v3348 = vsel %vm1677, %v3346, %v3347
      %v3349 = vrot.slane %v3305, 5
      %v3350 = vrot.slane %v3349, 4
      %v3351 = vrot.slane %v2930, 5
      %v3352 = vsel %vm1677, %v3350, %v3351
      %v3353 = vrot.slane %v3351, 4
      %v3354 = vrot.slane %v2931, 5
      %v3355 = vsel %vm1677, %v3353, %v3354
      %v3356 = vrot.slane %v3306, 5
      %v3357 = vrot.slane %v3356, 4
      %v3358 = vrot.slane %v2933, 5
      %v3359 = vsel %vm1677, %v3357, %v3358
      %v3360 = vrot.slane %v3358, 4
      %v3361 = vrot.slane %v2934, 5
      %v3362 = vsel %vm1677, %v3360, %v3361
      %v3363 = vrot.slane %v3307, 5
      %v3364 = vrot.slane %v3363, 4
      %v3365 = vrot.slane %v2936, 5
      %v3366 = vsel %vm1677, %v3364, %v3365
      %v3367 = vrot.slane %v3365, 4
      %v3368 = vrot.slane %v2937, 5
      %v3369 = vsel %vm1677, %v3367, %v3368
      %v3370 = vrot.slane %v3308, 5
      %v3371 = vrot.slane %v3370, 4
      %v3372 = vrot.slane %v2939, 5
      %v3373 = vsel %vm1677, %v3371, %v3372
      %v3374 = vrot.slane %v3372, 4
      %v3375 = vrot.slane %v2940, 5
      %v3376 = vsel %vm1677, %v3374, %v3375
      %v3377 = vrot.slane %v3309, 5
      %v3378 = vrot.slane %v3377, 4
      %v3379 = vrot.slane %v2942, 5
      %v3380 = vsel %vm1677, %v3378, %v3379
      %v3381 = vrot.slane %v3379, 4
      %v3382 = vrot.slane %v2943, 5
      %v3383 = vsel %vm1677, %v3381, %v3382
      %v3384 = vrot.slane %v3310, 5
      %v3385 = vrot.slane %v3384, 4
      %v3386 = vrot.slane %v2945, 5
      %v3387 = vsel %vm1677, %v3385, %v3386
      %v3388 = vrot.slane %v3386, 4
      %v3389 = vrot.slane %v2946, 5
      %v3390 = vsel %vm1677, %v3388, %v3389
      %v3391 = vunpack.c.l.b16 %v3338
      %v3392 = vunpack.c.l.b16 %v3341
      %v3393 = vunpack.c.l.b16 %v3345
      %v3394 = vunpack.c.l.b16 %v3348
      %v3395 = vunpack.c.l.b16 %v3352
      %v3396 = vunpack.c.l.b16 %v3355
      %v3397 = vunpack.c.l.b16 %v3359
      %v3398 = vunpack.c.l.b16 %v3362
      %v3399 = vunpack.c.l.b16 %v3366
      %v3400 = vunpack.c.l.b16 %v3369
      %v3401 = vunpack.c.l.b16 %v3373
      %v3402 = vunpack.c.l.b16 %v3376
      %v3403 = vunpack.c.l.b16 %v3380
      %v3404 = vunpack.c.l.b16 %v3383
      %v3405 = vunpack.c.l.b16 %v3387
      %v3406 = vunpack.c.l.b16 %v3390
      %v3407 = vpack.c.b16 %v3392, %v3391
      %v3408 = vpack.c.b16 %v3394, %v3393
      %v3409 = vpack.c.b16 %v3396, %v3395
      %v3410 = vpack.c.b16 %v3398, %v3397
      %v3411 = vpack.c.b16 %v3400, %v3399
      %v3412 = vpack.c.b16 %v3402, %v3401
      %v3413 = vpack.c.b16 %v3404, %v3403
      %v3414 = vpack.c.b16 %v3406, %v3405
      %v3416 = vsel %vm1361, %v3407, 0
      %v3419 = vsel %vm1361, %v3408, 0
      %v3422 = vsel %vm1361, %v3409, 0
      %v3425 = vsel %vm1361, %v3410, 0
      %v3428 = vsel %vm1361, %v3411, 0
      %v3431 = vsel %vm1361, %v3412, 0
      %v3434 = vsel %vm1361, %v3413, 0
      %v3437 = vsel %vm1361, %v3414, 0
      %v3440 = vsel %vm1386, %v288, 0
      %3442 = vmatprep.subr.bf16.mxu0 0
      %3443 = vmatpush1.bf16.msra.mxu0 0
      %3444 = vmatprep.subr.bf16.mxu0 0
      %3445 = vmatpush1.bf16.msra.mxu0 0
      %3446 = vmatprep.subr.bf16.mxu0 0
      %3447 = vmatpush1.bf16.msra.mxu0 0
      %3448 = vmatprep.subr.bf16.mxu0 0
      %3449 = vmatpush1.bf16.msra.mxu0 0
      %3450 = vmatprep.subr.bf16.mxu0 0
      %3451 = vmatpush1.bf16.msra.mxu0 0
      %3452 = vmatprep.subr.bf16.mxu0 0
      %3453 = vmatpush1.bf16.msra.mxu0 0
      %3454 = vmatprep.subr.bf16.mxu0 0
      %3455 = vmatpush1.bf16.msra.mxu0 0
      %3456 = vmatprep.subr.bf16.mxu0 0
      %3457 = vmatpush1.bf16.msra.mxu0 %v3440
      %3458 = vmatprep.subr.bf16.mxu0 0
      %3459 = vmatpush2.bf16.msra.mxu0 0
      %3460 = vmatprep.subr.bf16.mxu0 0
      %3461 = vmatpush2.bf16.msra.mxu0 0
      %3462 = vmatprep.subr.bf16.mxu0 0
      %3463 = vmatpush2.bf16.msra.mxu0 0
      %3464 = vmatprep.subr.bf16.mxu0 0
      %3465 = vmatpush2.bf16.msra.mxu0 0
      %3466 = vmatprep.subr.bf16.mxu0 0
      %3467 = vmatpush2.bf16.msra.mxu0 0
      %3468 = vmatprep.subr.bf16.mxu0 0
      %3469 = vmatpush2.bf16.msra.mxu0 0
      %3470 = vmatprep.subr.bf16.mxu0 0
      %3471 = vmatpush2.bf16.msra.mxu0 0
      %3472 = vmatprep.subr.bf16.mxu0 0
      %3473 = vmatpush2.bf16.msra.mxu0 0
      %3474 = vmatprep.mubr.bf16.mxu0 0
      %3475 = vmatmul.mubr.bf16.gmra.mxu0 %v3416
      %v3476 = vpop.f32.mrf.mxu0
      %v3477 = vadd.f32 0.0, %v3476
      %v3478 = vpop.f32.mrf.mxu0
      %v3479 = vpop.f32.mrf.mxu0
      %v3480 = vadd.f32 0.0, %v3479
      %v3481 = vpop.f32.mrf.mxu0
      %3482 = vmatprep.mubr.bf16.mxu0 0
      %3483 = vmatmul.mubr.bf16.gmra.mxu0 %v3419
      %v3484 = vpop.f32.mrf.mxu0
      %v3485 = vadd.f32 0.0, %v3484
      %v3486 = vpop.f32.mrf.mxu0
      %v3487 = vpop.f32.mrf.mxu0
      %v3488 = vadd.f32 0.0, %v3487
      %v3489 = vpop.f32.mrf.mxu0
      %3490 = vmatprep.mubr.bf16.mxu0 0
      %3491 = vmatmul.mubr.bf16.gmra.mxu0 %v3422
      %v3492 = vpop.f32.mrf.mxu0
      %v3493 = vadd.f32 0.0, %v3492
      %v3494 = vpop.f32.mrf.mxu0
      %v3495 = vpop.f32.mrf.mxu0
      %v3496 = vadd.f32 0.0, %v3495
      %v3497 = vpop.f32.mrf.mxu0
      %3498 = vmatprep.mubr.bf16.mxu0 0
      %3499 = vmatmul.mubr.bf16.gmra.mxu0 %v3425
      %v3500 = vpop.f32.mrf.mxu0
      %v3501 = vadd.f32 0.0, %v3500
      %v3502 = vpop.f32.mrf.mxu0
      %v3503 = vpop.f32.mrf.mxu0
      %v3504 = vadd.f32 0.0, %v3503
      %v3505 = vpop.f32.mrf.mxu0
      %3506 = vmatprep.mubr.bf16.mxu0 0
      %3507 = vmatmul.mubr.bf16.gmra.mxu0 %v3428
      %v3508 = vpop.f32.mrf.mxu0
      %v3509 = vadd.f32 0.0, %v3508
      %v3510 = vpop.f32.mrf.mxu0
      %v3511 = vpop.f32.mrf.mxu0
      %v3512 = vadd.f32 0.0, %v3511
      %v3513 = vpop.f32.mrf.mxu0
      %3514 = vmatprep.mubr.bf16.mxu0 0
      %3515 = vmatmul.mubr.bf16.gmra.mxu0 %v3431
      %v3516 = vpop.f32.mrf.mxu0
      %v3517 = vadd.f32 0.0, %v3516
      %v3518 = vpop.f32.mrf.mxu0
      %v3519 = vpop.f32.mrf.mxu0
      %v3520 = vadd.f32 0.0, %v3519
      %v3521 = vpop.f32.mrf.mxu0
      %3522 = vmatprep.mubr.bf16.mxu0 0
      %3523 = vmatmul.mubr.bf16.gmra.mxu0 %v3434
      %v3524 = vpop.f32.mrf.mxu0
      %v3525 = vadd.f32 0.0, %v3524
      %v3526 = vpop.f32.mrf.mxu0
      %v3527 = vpop.f32.mrf.mxu0
      %v3528 = vadd.f32 0.0, %v3527
      %v3529 = vpop.f32.mrf.mxu0
      %3530 = vmatprep.mubr.bf16.mxu0 0
      %3531 = vmatmul.mubr.bf16.gmra.mxu0 %v3437
      %v3532 = vpop.f32.mrf.mxu0
      %v3533 = vadd.f32 0.0, %v3532
      %v3534 = vpop.f32.mrf.mxu0
      %v3535 = vpop.f32.mrf.mxu0
      %v3536 = vadd.f32 0.0, %v3535
      %v3537 = vpop.f32.mrf.mxu0
      %3538 = vdwg.mxu0
      %v3539 = vadd.f32 %v3287, %v3477
      %v3540 = vadd.f32 %v3288, %v3480
      %v3541 = vadd.f32 %v3289, %v3485
      %v3542 = vadd.f32 %v3290, %v3488
      %v3543 = vadd.f32 %v3291, %v3493
      %v3544 = vadd.f32 %v3292, %v3496
      %v3545 = vadd.f32 %v3293, %v3501
      %v3546 = vadd.f32 %v3294, %v3504
      %v3547 = vadd.f32 %v3295, %v3509
      %v3548 = vadd.f32 %v3296, %v3512
      %v3549 = vadd.f32 %v3297, %v3517
      %v3550 = vadd.f32 %v3298, %v3520
      %v3551 = vadd.f32 %v3299, %v3525
      %v3552 = vadd.f32 %v3300, %v3528
      %v3553 = vadd.f32 %v3301, %v3533
      %v3554 = vadd.f32 %v3302, %v3536
      %v3555 = vsel %vm1361, %v3539, 0.0
      %v3556 = vsel %vm1361, %v3540, 0.0
      %v3557 = vadd.f32 %v3555, %v3556
      %v3558 = vsel %vm1361, %v3541, 0.0
      %v3559 = vadd.f32 %v3557, %v3558
      %v3560 = vsel %vm1361, %v3542, 0.0
      %v3561 = vadd.f32 %v3559, %v3560
      %v3562 = vsel %vm1361, %v3543, 0.0
      %v3563 = vadd.f32 %v3561, %v3562
      %v3564 = vsel %vm1361, %v3544, 0.0
      %v3565 = vadd.f32 %v3563, %v3564
      %v3566 = vsel %vm1361, %v3545, 0.0
      %v3567 = vadd.f32 %v3565, %v3566
      %v3568 = vsel %vm1361, %v3546, 0.0
      %v3569 = vadd.f32 %v3567, %v3568
      %v3570 = vsel %vm1361, %v3547, 0.0
      %v3571 = vadd.f32 %v3569, %v3570
      %v3572 = vsel %vm1361, %v3548, 0.0
      %v3573 = vadd.f32 %v3571, %v3572
      %v3574 = vsel %vm1361, %v3549, 0.0
      %v3575 = vadd.f32 %v3573, %v3574
      %v3576 = vsel %vm1361, %v3550, 0.0
      %v3577 = vadd.f32 %v3575, %v3576
      %v3578 = vsel %vm1361, %v3551, 0.0
      %v3579 = vadd.f32 %v3577, %v3578
      %v3580 = vsel %vm1361, %v3552, 0.0
      %v3581 = vadd.f32 %v3579, %v3580
      %v3582 = vsel %vm1361, %v3553, 0.0
      %v3583 = vadd.f32 %v3581, %v3582
      %v3584 = vsel %vm1361, %v3554, 0.0
      %v3585 = vadd.f32 %v3583, %v3584
      %v3586 = vrot.slane %v3585, 4
      %v3587 = vadd.f32 %v3585, %v3586
      %v3588 = vrot.slane %v3587, 2
      %v3589 = vadd.f32 %v3587, %v3588
      %v3590 = vrot.slane %v3589, 1
      %v3591 = vadd.f32 %v3589, %v3590
      %v3592 = vadd.f32 %v3591, 0.0
      %v3593 = vmul.f32 %v3539, %v3539
      %v3594 = vmul.f32 %v3540, %v3540
      %v3595 = vmul.f32 %v3541, %v3541
      %v3596 = vmul.f32 %v3542, %v3542
      %v3597 = vmul.f32 %v3543, %v3543
      %v3598 = vmul.f32 %v3544, %v3544
      %v3599 = vmul.f32 %v3545, %v3545
      %v3600 = vmul.f32 %v3546, %v3546
      %v3601 = vmul.f32 %v3547, %v3547
      %v3602 = vmul.f32 %v3548, %v3548
      %v3603 = vmul.f32 %v3549, %v3549
      %v3604 = vmul.f32 %v3550, %v3550
      %v3605 = vmul.f32 %v3551, %v3551
      %v3606 = vmul.f32 %v3552, %v3552
      %v3607 = vmul.f32 %v3553, %v3553
      %v3608 = vmul.f32 %v3554, %v3554
      %v3609 = vsel %vm1361, %v3593, 0.0
      %v3610 = vsel %vm1361, %v3594, 0.0
      %v3611 = vadd.f32 %v3609, %v3610
      %v3612 = vsel %vm1361, %v3595, 0.0
      %v3613 = vadd.f32 %v3611, %v3612
      %v3614 = vsel %vm1361, %v3596, 0.0
      %v3615 = vadd.f32 %v3613, %v3614
      %v3616 = vsel %vm1361, %v3597, 0.0
      %v3617 = vadd.f32 %v3615, %v3616
      %v3618 = vsel %vm1361, %v3598, 0.0
      %v3619 = vadd.f32 %v3617, %v3618
      %v3620 = vsel %vm1361, %v3599, 0.0
      %v3621 = vadd.f32 %v3619, %v3620
      %v3622 = vsel %vm1361, %v3600, 0.0
      %v3623 = vadd.f32 %v3621, %v3622
      %v3624 = vsel %vm1361, %v3601, 0.0
      %v3625 = vadd.f32 %v3623, %v3624
      %v3626 = vsel %vm1361, %v3602, 0.0
      %v3627 = vadd.f32 %v3625, %v3626
      %v3628 = vsel %vm1361, %v3603, 0.0
      %v3629 = vadd.f32 %v3627, %v3628
      %v3630 = vsel %vm1361, %v3604, 0.0
      %v3631 = vadd.f32 %v3629, %v3630
      %v3632 = vsel %vm1361, %v3605, 0.0
      %v3633 = vadd.f32 %v3631, %v3632
      %v3634 = vsel %vm1361, %v3606, 0.0
      %v3635 = vadd.f32 %v3633, %v3634
      %v3636 = vsel %vm1361, %v3607, 0.0
      %v3637 = vadd.f32 %v3635, %v3636
      %v3638 = vsel %vm1361, %v3608, 0.0
      %v3639 = vadd.f32 %v3637, %v3638
      %v3640 = vrot.slane %v3639, 4
      %v3641 = vadd.f32 %v3639, %v3640
      %v3642 = vrot.slane %v3641, 2
      %v3643 = vadd.f32 %v3641, %v3642
      %v3644 = vrot.slane %v3643, 1
      %v3645 = vadd.f32 %v3643, %v3644
      %v3646 = vadd.f32 %v3645, 0.0
      %v3647 = vpack.c.bf16 %v3540, %v3539
      %v3648 = vpack.c.bf16 %v3542, %v3541
      %v3649 = vpack.c.bf16 %v3544, %v3543
      %v3650 = vpack.c.bf16 %v3546, %v3545
      %v3651 = vpack.c.bf16 %v3548, %v3547
      %v3652 = vpack.c.bf16 %v3550, %v3549
      %v3653 = vpack.c.bf16 %v3552, %v3551
      %v3654 = vpack.c.bf16 %v3554, %v3553
      %v3663 = vunpack.c.l.b16 %v3647
      %v3664 = vunpack.c.h.b16 %v3647
      %v3665 = vunpack.c.l.b16 %v3648
      %v3666 = vunpack.c.h.b16 %v3648
      %v3667 = vunpack.c.l.b16 %v3649
      %v3668 = vunpack.c.h.b16 %v3649
      %v3669 = vunpack.c.l.b16 %v3650
      %v3670 = vunpack.c.h.b16 %v3650
      %v3671 = vunpack.c.l.b16 %v3651
      %v3672 = vunpack.c.h.b16 %v3651
      %v3673 = vunpack.c.l.b16 %v3652
      %v3674 = vunpack.c.h.b16 %v3652
      %v3675 = vunpack.c.l.b16 %v3653
      %v3676 = vunpack.c.h.b16 %v3653
      %v3677 = vunpack.c.l.b16 %v3654
      %v3678 = vunpack.c.h.b16 %v3654
      %v3679 = vpack.c.b16 %v3663, %v3663
      %v3680 = vpack.c.b16 %v3664, %v3664
      %v3681 = vpack.c.b16 %v3665, %v3665
      %v3682 = vpack.c.b16 %v3666, %v3666
      %v3683 = vpack.c.b16 %v3667, %v3667
      %v3684 = vpack.c.b16 %v3668, %v3668
      %v3685 = vpack.c.b16 %v3669, %v3669
      %v3686 = vpack.c.b16 %v3670, %v3670
      %v3687 = vpack.c.b16 %v3671, %v3671
      %v3688 = vpack.c.b16 %v3672, %v3672
      %v3689 = vpack.c.b16 %v3673, %v3673
      %v3690 = vpack.c.b16 %v3674, %v3674
      %v3691 = vpack.c.b16 %v3675, %v3675
      %v3692 = vpack.c.b16 %v3676, %v3676
      %v3693 = vpack.c.b16 %v3677, %v3677
      %v3694 = vpack.c.b16 %v3678, %v3678
      %3711 = vst.msk [vmem:[%s262] sm:$0xf] %vm289, %v3679
      %3712 = vst.msk [vmem:[%s262 + $0x4] sm:$0xf] %vm289, %v3680
      %3713 = vst.msk [vmem:[%s262 + $0x8] sm:$0xf] %vm289, %v3681
      %3714 = vst.msk [vmem:[%s262 + $0xc] sm:$0xf] %vm289, %v3682
      %3715 = vst.msk [vmem:[%s262 + $0x10] sm:$0xf] %vm289, %v3683
      %3716 = vst.msk [vmem:[%s262 + $0x14] sm:$0xf] %vm289, %v3684
      %3717 = vst.msk [vmem:[%s262 + $0x18] sm:$0xf] %vm289, %v3685
      %3718 = vst.msk [vmem:[%s262 + $0x1c] sm:$0xf] %vm289, %v3686
      %3719 = vst.msk [vmem:[%s262 + $0x20] sm:$0xf] %vm289, %v3687
      %3720 = vst.msk [vmem:[%s262 + $0x24] sm:$0xf] %vm289, %v3688
      %3721 = vst.msk [vmem:[%s262 + $0x28] sm:$0xf] %vm289, %v3689
      %3722 = vst.msk [vmem:[%s262 + $0x2c] sm:$0xf] %vm289, %v3690
      %3723 = vst.msk [vmem:[%s262 + $0x30] sm:$0xf] %vm289, %v3691
      %3724 = vst.msk [vmem:[%s262 + $0x34] sm:$0xf] %vm289, %v3692
      %3725 = vst.msk [vmem:[%s262 + $0x38] sm:$0xf] %vm289, %v3693
      %3726 = vst.msk [vmem:[%s262 + $0x3c] sm:$0xf] %vm289, %v3694
      %s3727 = scalar_lea.vmem [#allocation2], 96
      %v3728 = vld [vmem:[%s3727] sm:$0xf]
      %v3729 = vld [vmem:[%s3727 + $0x4] sm:$0xf]
      %v3730 = vld [vmem:[%s3727 + $0xc] sm:$0xf]
      %v3731 = vld [vmem:[%s3727 + $0x10] sm:$0xf]
      %v3732 = vld [vmem:[%s3727 + $0x18] sm:$0xf]
      %v3733 = vld [vmem:[%s3727 + $0x1c] sm:$0xf]
      %v3734 = vld [vmem:[%s3727 + $0x24] sm:$0xf]
      %v3735 = vld [vmem:[%s3727 + $0x28] sm:$0xf]
      %v3736 = vld [vmem:[%s3727 + $0x30] sm:$0xf]
      %v3737 = vld [vmem:[%s3727 + $0x34] sm:$0xf]
      %v3738 = vld [vmem:[%s3727 + $0x3c] sm:$0xf]
      %v3739 = vld [vmem:[%s3727 + $0x40] sm:$0xf]
      %v3740 = vld [vmem:[%s3727 + $0x48] sm:$0xf]
      %v3741 = vld [vmem:[%s3727 + $0x4c] sm:$0xf]
      %v3742 = vld [vmem:[%s3727 + $0x54] sm:$0xf]
      %v3743 = vld [vmem:[%s3727 + $0x58] sm:$0xf]
      %v3744 = vld [vmem:[%s3727 + $0x8] sm:$0x1]
      %v3745 = vld [vmem:[%s3727 + $0x14] sm:$0x1]
      %v3746 = vld [vmem:[%s3727 + $0x20] sm:$0x1]
      %v3747 = vld [vmem:[%s3727 + $0x2c] sm:$0x1]
      %v3748 = vld [vmem:[%s3727 + $0x38] sm:$0x1]
      %v3749 = vld [vmem:[%s3727 + $0x44] sm:$0x1]
      %v3750 = vld [vmem:[%s3727 + $0x50] sm:$0x1]
      %v3751 = vld [vmem:[%s3727 + $0x5c] sm:$0x1]
      %v3753 = vshrl.u32 %v3728, 16
      %v3755 = vrot.slane %v3753, 4
      %v3756 = vshll.u32 %v3728, 16
      %v3758 = vrot.slane %v3756, 5
      %v3759 = vor.u32 %v3755, %v3758
      %v3760 = vrot.slane %v3759, 4
      %v3762 = vshll.u32 %v3729, 16
      %v3764 = vrot.slane %v3762, 5
      %v3765 = vsel %vm1144, %v3760, %v3764
      %v3766 = vshrl.u32 %v3729, 16
      %v3768 = vrot.slane %v3766, 4
      %v3769 = vor.u32 %v3768, %v3764
      %v3770 = vrot.slane %v3769, 4
      %v3772 = vshll.u32 %v3744, 16
      %v3774 = vrot.slane %v3772, 5
      %v3775 = vsel %vm1144, %v3770, %v3774
      %v3777 = vshrl.u32 %v3730, 16
      %v3779 = vrot.slane %v3777, 4
      %v3780 = vshll.u32 %v3730, 16
      %v3782 = vrot.slane %v3780, 5
      %v3783 = vor.u32 %v3779, %v3782
      %v3784 = vrot.slane %v3783, 4
      %v3786 = vshll.u32 %v3731, 16
      %v3788 = vrot.slane %v3786, 5
      %v3789 = vsel %vm1144, %v3784, %v3788
      %v3790 = vshrl.u32 %v3731, 16
      %v3792 = vrot.slane %v3790, 4
      %v3793 = vor.u32 %v3792, %v3788
      %v3794 = vrot.slane %v3793, 4
      %v3796 = vshll.u32 %v3745, 16
      %v3798 = vrot.slane %v3796, 5
      %v3799 = vsel %vm1144, %v3794, %v3798
      %v3801 = vshrl.u32 %v3732, 16
      %v3803 = vrot.slane %v3801, 4
      %v3804 = vshll.u32 %v3732, 16
      %v3806 = vrot.slane %v3804, 5
      %v3807 = vor.u32 %v3803, %v3806
      %v3808 = vrot.slane %v3807, 4
      %v3810 = vshll.u32 %v3733, 16
      %v3812 = vrot.slane %v3810, 5
      %v3813 = vsel %vm1144, %v3808, %v3812
      %v3814 = vshrl.u32 %v3733, 16
      %v3816 = vrot.slane %v3814, 4
      %v3817 = vor.u32 %v3816, %v3812
      %v3818 = vrot.slane %v3817, 4
      %v3820 = vshll.u32 %v3746, 16
      %v3822 = vrot.slane %v3820, 5
      %v3823 = vsel %vm1144, %v3818, %v3822
      %v3825 = vshrl.u32 %v3734, 16
      %v3827 = vrot.slane %v3825, 4
      %v3828 = vshll.u32 %v3734, 16
      %v3830 = vrot.slane %v3828, 5
      %v3831 = vor.u32 %v3827, %v3830
      %v3832 = vrot.slane %v3831, 4
      %v3834 = vshll.u32 %v3735, 16
      %v3836 = vrot.slane %v3834, 5
      %v3837 = vsel %vm1144, %v3832, %v3836
      %v3838 = vshrl.u32 %v3735, 16
      %v3840 = vrot.slane %v3838, 4
      %v3841 = vor.u32 %v3840, %v3836
      %v3842 = vrot.slane %v3841, 4
      %v3844 = vshll.u32 %v3747, 16
      %v3846 = vrot.slane %v3844, 5
      %v3847 = vsel %vm1144, %v3842, %v3846
      %v3849 = vshrl.u32 %v3736, 16
      %v3851 = vrot.slane %v3849, 4
      %v3852 = vshll.u32 %v3736, 16
      %v3854 = vrot.slane %v3852, 5
      %v3855 = vor.u32 %v3851, %v3854
      %v3856 = vrot.slane %v3855, 4
      %v3858 = vshll.u32 %v3737, 16
      %v3860 = vrot.slane %v3858, 5
      %v3861 = vsel %vm1144, %v3856, %v3860
      %v3862 = vshrl.u32 %v3737, 16
      %v3864 = vrot.slane %v3862, 4
      %v3865 = vor.u32 %v3864, %v3860
      %v3866 = vrot.slane %v3865, 4
      %v3868 = vshll.u32 %v3748, 16
      %v3870 = vrot.slane %v3868, 5
      %v3871 = vsel %vm1144, %v3866, %v3870
      %v3873 = vshrl.u32 %v3738, 16
      %v3875 = vrot.slane %v3873, 4
      %v3876 = vshll.u32 %v3738, 16
      %v3878 = vrot.slane %v3876, 5
      %v3879 = vor.u32 %v3875, %v3878
      %v3880 = vrot.slane %v3879, 4
      %v3882 = vshll.u32 %v3739, 16
      %v3884 = vrot.slane %v3882, 5
      %v3885 = vsel %vm1144, %v3880, %v3884
      %v3886 = vshrl.u32 %v3739, 16
      %v3888 = vrot.slane %v3886, 4
      %v3889 = vor.u32 %v3888, %v3884
      %v3890 = vrot.slane %v3889, 4
      %v3892 = vshll.u32 %v3749, 16
      %v3894 = vrot.slane %v3892, 5
      %v3895 = vsel %vm1144, %v3890, %v3894
      %v3897 = vshrl.u32 %v3740, 16
      %v3899 = vrot.slane %v3897, 4
      %v3900 = vshll.u32 %v3740, 16
      %v3902 = vrot.slane %v3900, 5
      %v3903 = vor.u32 %v3899, %v3902
      %v3904 = vrot.slane %v3903, 4
      %v3906 = vshll.u32 %v3741, 16
      %v3908 = vrot.slane %v3906, 5
      %v3909 = vsel %vm1144, %v3904, %v3908
      %v3910 = vshrl.u32 %v3741, 16
      %v3912 = vrot.slane %v3910, 4
      %v3913 = vor.u32 %v3912, %v3908
      %v3914 = vrot.slane %v3913, 4
      %v3916 = vshll.u32 %v3750, 16
      %v3918 = vrot.slane %v3916, 5
      %v3919 = vsel %vm1144, %v3914, %v3918
      %v3921 = vshrl.u32 %v3742, 16
      %v3923 = vrot.slane %v3921, 4
      %v3924 = vshll.u32 %v3742, 16
      %v3926 = vrot.slane %v3924, 5
      %v3927 = vor.u32 %v3923, %v3926
      %v3928 = vrot.slane %v3927, 4
      %v3930 = vshll.u32 %v3743, 16
      %v3932 = vrot.slane %v3930, 5
      %v3933 = vsel %vm1144, %v3928, %v3932
      %v3934 = vshrl.u32 %v3743, 16
      %v3936 = vrot.slane %v3934, 4
      %v3937 = vor.u32 %v3936, %v3932
      %v3938 = vrot.slane %v3937, 4
      %v3940 = vshll.u32 %v3751, 16
      %v3942 = vrot.slane %v3940, 5
      %v3943 = vsel %vm1144, %v3938, %v3942
      %v3944 = vunpack.c.l.b16 %v3765
      %v3945 = vunpack.c.l.b16 %v3775
      %v3946 = vunpack.c.l.b16 %v3789
      %v3947 = vunpack.c.l.b16 %v3799
      %v3948 = vunpack.c.l.b16 %v3813
      %v3949 = vunpack.c.l.b16 %v3823
      %v3950 = vunpack.c.l.b16 %v3837
      %v3951 = vunpack.c.l.b16 %v3847
      %v3952 = vunpack.c.l.b16 %v3861
      %v3953 = vunpack.c.l.b16 %v3871
      %v3954 = vunpack.c.l.b16 %v3885
      %v3955 = vunpack.c.l.b16 %v3895
      %v3956 = vunpack.c.l.b16 %v3909
      %v3957 = vunpack.c.l.b16 %v3919
      %v3958 = vunpack.c.l.b16 %v3933
      %v3959 = vunpack.c.l.b16 %v3943
      %v3960 = vpack.c.b16 %v3945, %v3944
      %v3961 = vpack.c.b16 %v3947, %v3946
      %v3962 = vpack.c.b16 %v3949, %v3948
      %v3963 = vpack.c.b16 %v3951, %v3950
      %v3964 = vpack.c.b16 %v3953, %v3952
      %v3965 = vpack.c.b16 %v3955, %v3954
      %v3966 = vpack.c.b16 %v3957, %v3956
      %v3967 = vpack.c.b16 %v3959, %v3958
      %v3969 = vsel %vm1361, %v3960, 0
      %v3972 = vsel %vm1361, %v3961, 0
      %v3975 = vsel %vm1361, %v3962, 0
      %v3978 = vsel %vm1361, %v3963, 0
      %v3981 = vsel %vm1361, %v3964, 0
      %v3984 = vsel %vm1361, %v3965, 0
      %v3987 = vsel %vm1361, %v3966, 0
      %v3990 = vsel %vm1361, %v3967, 0
      %3992 = vmatprep.subr.bf16.mxu0 0
      %3993 = vmatpush1.bf16.msra.mxu0 0
      %3994 = vmatprep.subr.bf16.mxu0 0
      %3995 = vmatpush1.bf16.msra.mxu0 0
      %3996 = vmatprep.subr.bf16.mxu0 0
      %3997 = vmatpush1.bf16.msra.mxu0 0
      %3998 = vmatprep.subr.bf16.mxu0 0
      %3999 = vmatpush1.bf16.msra.mxu0 0
      %4000 = vmatprep.subr.bf16.mxu0 0
      %4001 = vmatpush1.bf16.msra.mxu0 0
      %4002 = vmatprep.subr.bf16.mxu0 0
      %4003 = vmatpush1.bf16.msra.mxu0 0
      %4004 = vmatprep.subr.bf16.mxu0 0
      %4005 = vmatpush1.bf16.msra.mxu0 0
      %4006 = vmatprep.subr.bf16.mxu0 0
      %4007 = vmatpush1.bf16.msra.mxu0 %v1388
      %4008 = vmatprep.subr.bf16.mxu0 0
      %4009 = vmatpush2.bf16.msra.mxu0 0
      %4010 = vmatprep.subr.bf16.mxu0 0
      %4011 = vmatpush2.bf16.msra.mxu0 0
      %4012 = vmatprep.subr.bf16.mxu0 0
      %4013 = vmatpush2.bf16.msra.mxu0 0
      %4014 = vmatprep.subr.bf16.mxu0 0
      %4015 = vmatpush2.bf16.msra.mxu0 0
      %4016 = vmatprep.subr.bf16.mxu0 0
      %4017 = vmatpush2.bf16.msra.mxu0 0
      %4018 = vmatprep.subr.bf16.mxu0 0
      %4019 = vmatpush2.bf16.msra.mxu0 0
      %4020 = vmatprep.subr.bf16.mxu0 0
      %4021 = vmatpush2.bf16.msra.mxu0 0
      %4022 = vmatprep.subr.bf16.mxu0 0
      %4023 = vmatpush2.bf16.msra.mxu0 0
      %4024 = vmatprep.mubr.bf16.mxu0 0
      %4025 = vmatmul.mubr.bf16.gmra.mxu0 %v3969
      %v4026 = vpop.f32.mrf.mxu0
      %v4027 = vadd.f32 0.0, %v4026
      %v4028 = vpop.f32.mrf.mxu0
      %v4029 = vpop.f32.mrf.mxu0
      %v4030 = vadd.f32 0.0, %v4029
      %v4031 = vpop.f32.mrf.mxu0
      %4032 = vmatprep.mubr.bf16.mxu0 0
      %4033 = vmatmul.mubr.bf16.gmra.mxu0 %v3972
      %v4034 = vpop.f32.mrf.mxu0
      %v4035 = vadd.f32 0.0, %v4034
      %v4036 = vpop.f32.mrf.mxu0
      %v4037 = vpop.f32.mrf.mxu0
      %v4038 = vadd.f32 0.0, %v4037
      %v4039 = vpop.f32.mrf.mxu0
      %4040 = vmatprep.mubr.bf16.mxu0 0
      %4041 = vmatmul.mubr.bf16.gmra.mxu0 %v3975
      %v4042 = vpop.f32.mrf.mxu0
      %v4043 = vadd.f32 0.0, %v4042
      %v4044 = vpop.f32.mrf.mxu0
      %v4045 = vpop.f32.mrf.mxu0
      %v4046 = vadd.f32 0.0, %v4045
      %v4047 = vpop.f32.mrf.mxu0
      %4048 = vmatprep.mubr.bf16.mxu0 0
      %4049 = vmatmul.mubr.bf16.gmra.mxu0 %v3978
      %v4050 = vpop.f32.mrf.mxu0
      %v4051 = vadd.f32 0.0, %v4050
      %v4052 = vpop.f32.mrf.mxu0
      %v4053 = vpop.f32.mrf.mxu0
      %v4054 = vadd.f32 0.0, %v4053
      %v4055 = vpop.f32.mrf.mxu0
      %4056 = vmatprep.mubr.bf16.mxu0 0
      %4057 = vmatmul.mubr.bf16.gmra.mxu0 %v3981
      %v4058 = vpop.f32.mrf.mxu0
      %v4059 = vadd.f32 0.0, %v4058
      %v4060 = vpop.f32.mrf.mxu0
      %v4061 = vpop.f32.mrf.mxu0
      %v4062 = vadd.f32 0.0, %v4061
      %v4063 = vpop.f32.mrf.mxu0
      %4064 = vmatprep.mubr.bf16.mxu0 0
      %4065 = vmatmul.mubr.bf16.gmra.mxu0 %v3984
      %v4066 = vpop.f32.mrf.mxu0
      %v4067 = vadd.f32 0.0, %v4066
      %v4068 = vpop.f32.mrf.mxu0
      %v4069 = vpop.f32.mrf.mxu0
      %v4070 = vadd.f32 0.0, %v4069
      %v4071 = vpop.f32.mrf.mxu0
      %4072 = vmatprep.mubr.bf16.mxu0 0
      %4073 = vmatmul.mubr.bf16.gmra.mxu0 %v3987
      %v4074 = vpop.f32.mrf.mxu0
      %v4075 = vadd.f32 0.0, %v4074
      %v4076 = vpop.f32.mrf.mxu0
      %v4077 = vpop.f32.mrf.mxu0
      %v4078 = vadd.f32 0.0, %v4077
      %v4079 = vpop.f32.mrf.mxu0
      %4080 = vmatprep.mubr.bf16.mxu0 0
      %4081 = vmatmul.mubr.bf16.gmra.mxu0 %v3990
      %v4082 = vpop.f32.mrf.mxu0
      %v4083 = vadd.f32 0.0, %v4082
      %v4084 = vpop.f32.mrf.mxu0
      %v4085 = vpop.f32.mrf.mxu0
      %v4086 = vadd.f32 0.0, %v4085
      %v4087 = vpop.f32.mrf.mxu0
      %4088 = vdwg.mxu0
      %v4105 = vunpack.c.l.b16 %v3728
      %v4106 = vunpack.c.l.b16 %v3729
      %v4107 = vunpack.c.l.b16 %v3730
      %v4108 = vunpack.c.l.b16 %v3731
      %v4109 = vunpack.c.l.b16 %v3732
      %v4110 = vunpack.c.l.b16 %v3733
      %v4111 = vunpack.c.l.b16 %v3734
      %v4112 = vunpack.c.l.b16 %v3735
      %v4113 = vunpack.c.l.b16 %v3736
      %v4114 = vunpack.c.l.b16 %v3737
      %v4115 = vunpack.c.l.b16 %v3738
      %v4116 = vunpack.c.l.b16 %v3739
      %v4117 = vunpack.c.l.b16 %v3740
      %v4118 = vunpack.c.l.b16 %v3741
      %v4119 = vunpack.c.l.b16 %v3742
      %v4120 = vunpack.c.l.b16 %v3743
      %v4121 = vpack.c.b16 %v4106, %v4105
      %v4122 = vpack.c.b16 %v4108, %v4107
      %v4123 = vpack.c.b16 %v4110, %v4109
      %v4124 = vpack.c.b16 %v4112, %v4111
      %v4125 = vpack.c.b16 %v4114, %v4113
      %v4126 = vpack.c.b16 %v4116, %v4115
      %v4127 = vpack.c.b16 %v4118, %v4117
      %v4128 = vpack.c.b16 %v4120, %v4119
      %v4130 = vsel %vm1361, %v4121, 0
      %v4133 = vsel %vm1361, %v4122, 0
      %v4136 = vsel %vm1361, %v4123, 0
      %v4139 = vsel %vm1361, %v4124, 0
      %v4142 = vsel %vm1361, %v4125, 0
      %v4145 = vsel %vm1361, %v4126, 0
      %v4148 = vsel %vm1361, %v4127, 0
      %v4151 = vsel %vm1361, %v4128, 0
      %4153 = vmatprep.subr.bf16.mxu0 0
      %4154 = vmatpush1.bf16.msra.mxu0 0
      %4155 = vmatprep.subr.bf16.mxu0 0
      %4156 = vmatpush1.bf16.msra.mxu0 0
      %4157 = vmatprep.subr.bf16.mxu0 0
      %4158 = vmatpush1.bf16.msra.mxu0 0
      %4159 = vmatprep.subr.bf16.mxu0 0
      %4160 = vmatpush1.bf16.msra.mxu0 0
      %4161 = vmatprep.subr.bf16.mxu0 0
      %4162 = vmatpush1.bf16.msra.mxu0 0
      %4163 = vmatprep.subr.bf16.mxu0 0
      %4164 = vmatpush1.bf16.msra.mxu0 0
      %4165 = vmatprep.subr.bf16.mxu0 0
      %4166 = vmatpush1.bf16.msra.mxu0 0
      %4167 = vmatprep.subr.bf16.mxu0 0
      %4168 = vmatpush1.bf16.msra.mxu0 %v1552
      %4169 = vmatprep.subr.bf16.mxu0 0
      %4170 = vmatpush2.bf16.msra.mxu0 0
      %4171 = vmatprep.subr.bf16.mxu0 0
      %4172 = vmatpush2.bf16.msra.mxu0 0
      %4173 = vmatprep.subr.bf16.mxu0 0
      %4174 = vmatpush2.bf16.msra.mxu0 0
      %4175 = vmatprep.subr.bf16.mxu0 0
      %4176 = vmatpush2.bf16.msra.mxu0 0
      %4177 = vmatprep.subr.bf16.mxu0 0
      %4178 = vmatpush2.bf16.msra.mxu0 0
      %4179 = vmatprep.subr.bf16.mxu0 0
      %4180 = vmatpush2.bf16.msra.mxu0 0
      %4181 = vmatprep.subr.bf16.mxu0 0
      %4182 = vmatpush2.bf16.msra.mxu0 0
      %4183 = vmatprep.subr.bf16.mxu0 0
      %4184 = vmatpush2.bf16.msra.mxu0 0
      %4185 = vmatprep.mubr.bf16.mxu0 0
      %4186 = vmatmul.mubr.bf16.gmra.mxu0 %v4130
      %v4187 = vpop.f32.mrf.mxu0
      %v4188 = vadd.f32 %v4027, %v4187
      %v4189 = vpop.f32.mrf.mxu0
      %v4190 = vpop.f32.mrf.mxu0
      %v4191 = vadd.f32 %v4030, %v4190
      %v4192 = vpop.f32.mrf.mxu0
      %4193 = vmatprep.mubr.bf16.mxu0 0
      %4194 = vmatmul.mubr.bf16.gmra.mxu0 %v4133
      %v4195 = vpop.f32.mrf.mxu0
      %v4196 = vadd.f32 %v4035, %v4195
      %v4197 = vpop.f32.mrf.mxu0
      %v4198 = vpop.f32.mrf.mxu0
      %v4199 = vadd.f32 %v4038, %v4198
      %v4200 = vpop.f32.mrf.mxu0
      %4201 = vmatprep.mubr.bf16.mxu0 0
      %4202 = vmatmul.mubr.bf16.gmra.mxu0 %v4136
      %v4203 = vpop.f32.mrf.mxu0
      %v4204 = vadd.f32 %v4043, %v4203
      %v4205 = vpop.f32.mrf.mxu0
      %v4206 = vpop.f32.mrf.mxu0
      %v4207 = vadd.f32 %v4046, %v4206
      %v4208 = vpop.f32.mrf.mxu0
      %4209 = vmatprep.mubr.bf16.mxu0 0
      %4210 = vmatmul.mubr.bf16.gmra.mxu0 %v4139
      %v4211 = vpop.f32.mrf.mxu0
      %v4212 = vadd.f32 %v4051, %v4211
      %v4213 = vpop.f32.mrf.mxu0
      %v4214 = vpop.f32.mrf.mxu0
      %v4215 = vadd.f32 %v4054, %v4214
      %v4216 = vpop.f32.mrf.mxu0
      %4217 = vmatprep.mubr.bf16.mxu0 0
      %4218 = vmatmul.mubr.bf16.gmra.mxu0 %v4142
      %v4219 = vpop.f32.mrf.mxu0
      %v4220 = vadd.f32 %v4059, %v4219
      %v4221 = vpop.f32.mrf.mxu0
      %v4222 = vpop.f32.mrf.mxu0
      %v4223 = vadd.f32 %v4062, %v4222
      %v4224 = vpop.f32.mrf.mxu0
      %4225 = vmatprep.mubr.bf16.mxu0 0
      %4226 = vmatmul.mubr.bf16.gmra.mxu0 %v4145
      %v4227 = vpop.f32.mrf.mxu0
      %v4228 = vadd.f32 %v4067, %v4227
      %v4229 = vpop.f32.mrf.mxu0
      %v4230 = vpop.f32.mrf.mxu0
      %v4231 = vadd.f32 %v4070, %v4230
      %v4232 = vpop.f32.mrf.mxu0
      %4233 = vmatprep.mubr.bf16.mxu0 0
      %4234 = vmatmul.mubr.bf16.gmra.mxu0 %v4148
      %v4235 = vpop.f32.mrf.mxu0
      %v4236 = vadd.f32 %v4075, %v4235
      %v4237 = vpop.f32.mrf.mxu0
      %v4238 = vpop.f32.mrf.mxu0
      %v4239 = vadd.f32 %v4078, %v4238
      %v4240 = vpop.f32.mrf.mxu0
      %4241 = vmatprep.mubr.bf16.mxu0 0
      %4242 = vmatmul.mubr.bf16.gmra.mxu0 %v4151
      %v4243 = vpop.f32.mrf.mxu0
      %v4244 = vadd.f32 %v4083, %v4243
      %v4245 = vpop.f32.mrf.mxu0
      %v4246 = vpop.f32.mrf.mxu0
      %v4247 = vadd.f32 %v4086, %v4246
      %v4248 = vpop.f32.mrf.mxu0
      %4249 = vdwg.mxu0
      %v4250 = vld [vmem:[%s3727] sm:$0xe]
      %v4251 = vld [vmem:[%s3727 + $0xc] sm:$0xe]
      %v4252 = vld [vmem:[%s3727 + $0x18] sm:$0xe]
      %v4253 = vld [vmem:[%s3727 + $0x24] sm:$0xe]
      %v4254 = vld [vmem:[%s3727 + $0x30] sm:$0xe]
      %v4255 = vld [vmem:[%s3727 + $0x3c] sm:$0xe]
      %v4256 = vld [vmem:[%s3727 + $0x48] sm:$0xe]
      %v4257 = vld [vmem:[%s3727 + $0x54] sm:$0xe]
      %v4274 = vrot.slane %v4250, 5
      %v4275 = vrot.slane %v4274, 4
      %v4276 = vrot.slane %v3729, 5
      %v4277 = vsel %vm1677, %v4275, %v4276
      %v4278 = vrot.slane %v4276, 4
      %v4279 = vrot.slane %v3744, 5
      %v4280 = vsel %vm1677, %v4278, %v4279
      %v4281 = vrot.slane %v4251, 5
      %v4282 = vrot.slane %v4281, 4
      %v4283 = vrot.slane %v3731, 5
      %v4284 = vsel %vm1677, %v4282, %v4283
      %v4285 = vrot.slane %v4283, 4
      %v4286 = vrot.slane %v3745, 5
      %v4287 = vsel %vm1677, %v4285, %v4286
      %v4288 = vrot.slane %v4252, 5
      %v4289 = vrot.slane %v4288, 4
      %v4290 = vrot.slane %v3733, 5
      %v4291 = vsel %vm1677, %v4289, %v4290
      %v4292 = vrot.slane %v4290, 4
      %v4293 = vrot.slane %v3746, 5
      %v4294 = vsel %vm1677, %v4292, %v4293
      %v4295 = vrot.slane %v4253, 5
      %v4296 = vrot.slane %v4295, 4
      %v4297 = vrot.slane %v3735, 5
      %v4298 = vsel %vm1677, %v4296, %v4297
      %v4299 = vrot.slane %v4297, 4
      %v4300 = vrot.slane %v3747, 5
      %v4301 = vsel %vm1677, %v4299, %v4300
      %v4302 = vrot.slane %v4254, 5
      %v4303 = vrot.slane %v4302, 4
      %v4304 = vrot.slane %v3737, 5
      %v4305 = vsel %vm1677, %v4303, %v4304
      %v4306 = vrot.slane %v4304, 4
      %v4307 = vrot.slane %v3748, 5
      %v4308 = vsel %vm1677, %v4306, %v4307
      %v4309 = vrot.slane %v4255, 5
      %v4310 = vrot.slane %v4309, 4
      %v4311 = vrot.slane %v3739, 5
      %v4312 = vsel %vm1677, %v4310, %v4311
      %v4313 = vrot.slane %v4311, 4
      %v4314 = vrot.slane %v3749, 5
      %v4315 = vsel %vm1677, %v4313, %v4314
      %v4316 = vrot.slane %v4256, 5
      %v4317 = vrot.slane %v4316, 4
      %v4318 = vrot.slane %v3741, 5
      %v4319 = vsel %vm1677, %v4317, %v4318
      %v4320 = vrot.slane %v4318, 4
      %v4321 = vrot.slane %v3750, 5
      %v4322 = vsel %vm1677, %v4320, %v4321
      %v4323 = vrot.slane %v4257, 5
      %v4324 = vrot.slane %v4323, 4
      %v4325 = vrot.slane %v3743, 5
      %v4326 = vsel %vm1677, %v4324, %v4325
      %v4327 = vrot.slane %v4325, 4
      %v4328 = vrot.slane %v3751, 5
      %v4329 = vsel %vm1677, %v4327, %v4328
      %v4330 = vunpack.c.l.b16 %v4277
      %v4331 = vunpack.c.l.b16 %v4280
      %v4332 = vunpack.c.l.b16 %v4284
      %v4333 = vunpack.c.l.b16 %v4287
      %v4334 = vunpack.c.l.b16 %v4291
      %v4335 = vunpack.c.l.b16 %v4294
      %v4336 = vunpack.c.l.b16 %v4298
      %v4337 = vunpack.c.l.b16 %v4301
      %v4338 = vunpack.c.l.b16 %v4305
      %v4339 = vunpack.c.l.b16 %v4308
      %v4340 = vunpack.c.l.b16 %v4312
      %v4341 = vunpack.c.l.b16 %v4315
      %v4342 = vunpack.c.l.b16 %v4319
      %v4343 = vunpack.c.l.b16 %v4322
      %v4344 = vunpack.c.l.b16 %v4326
      %v4345 = vunpack.c.l.b16 %v4329
      %v4346 = vpack.c.b16 %v4331, %v4330
      %v4347 = vpack.c.b16 %v4333, %v4332
      %v4348 = vpack.c.b16 %v4335, %v4334
      %v4349 = vpack.c.b16 %v4337, %v4336
      %v4350 = vpack.c.b16 %v4339, %v4338
      %v4351 = vpack.c.b16 %v4341, %v4340
      %v4352 = vpack.c.b16 %v4343, %v4342
      %v4353 = vpack.c.b16 %v4345, %v4344
      %v4355 = vsel %vm1361, %v4346, 0
      %v4358 = vsel %vm1361, %v4347, 0
      %v4361 = vsel %vm1361, %v4348, 0
      %v4364 = vsel %vm1361, %v4349, 0
      %v4367 = vsel %vm1361, %v4350, 0
      %v4370 = vsel %vm1361, %v4351, 0
      %v4373 = vsel %vm1361, %v4352, 0
      %v4376 = vsel %vm1361, %v4353, 0
      %4378 = vmatprep.subr.bf16.mxu0 0
      %4379 = vmatpush1.bf16.msra.mxu0 0
      %4380 = vmatprep.subr.bf16.mxu0 0
      %4381 = vmatpush1.bf16.msra.mxu0 0
      %4382 = vmatprep.subr.bf16.mxu0 0
      %4383 = vmatpush1.bf16.msra.mxu0 0
      %4384 = vmatprep.subr.bf16.mxu0 0
      %4385 = vmatpush1.bf16.msra.mxu0 0
      %4386 = vmatprep.subr.bf16.mxu0 0
      %4387 = vmatpush1.bf16.msra.mxu0 0
      %4388 = vmatprep.subr.bf16.mxu0 0
      %4389 = vmatpush1.bf16.msra.mxu0 0
      %4390 = vmatprep.subr.bf16.mxu0 0
      %4391 = vmatpush1.bf16.msra.mxu0 0
      %4392 = vmatprep.subr.bf16.mxu0 0
      %4393 = vmatpush1.bf16.msra.mxu0 %v1783
      %4394 = vmatprep.subr.bf16.mxu0 0
      %4395 = vmatpush2.bf16.msra.mxu0 0
      %4396 = vmatprep.subr.bf16.mxu0 0
      %4397 = vmatpush2.bf16.msra.mxu0 0
      %4398 = vmatprep.subr.bf16.mxu0 0
      %4399 = vmatpush2.bf16.msra.mxu0 0
      %4400 = vmatprep.subr.bf16.mxu0 0
      %4401 = vmatpush2.bf16.msra.mxu0 0
      %4402 = vmatprep.subr.bf16.mxu0 0
      %4403 = vmatpush2.bf16.msra.mxu0 0
      %4404 = vmatprep.subr.bf16.mxu0 0
      %4405 = vmatpush2.bf16.msra.mxu0 0
      %4406 = vmatprep.subr.bf16.mxu0 0
      %4407 = vmatpush2.bf16.msra.mxu0 0
      %4408 = vmatprep.subr.bf16.mxu0 0
      %4409 = vmatpush2.bf16.msra.mxu0 0
      %4410 = vmatprep.mubr.bf16.mxu0 0
      %4411 = vmatmul.mubr.bf16.gmra.mxu0 %v4355
      %v4412 = vpop.f32.mrf.mxu0
      %v4413 = vadd.f32 0.0, %v4412
      %v4414 = vpop.f32.mrf.mxu0
      %v4415 = vpop.f32.mrf.mxu0
      %v4416 = vadd.f32 0.0, %v4415
      %v4417 = vpop.f32.mrf.mxu0
      %4418 = vmatprep.mubr.bf16.mxu0 0
      %4419 = vmatmul.mubr.bf16.gmra.mxu0 %v4358
      %v4420 = vpop.f32.mrf.mxu0
      %v4421 = vadd.f32 0.0, %v4420
      %v4422 = vpop.f32.mrf.mxu0
      %v4423 = vpop.f32.mrf.mxu0
      %v4424 = vadd.f32 0.0, %v4423
      %v4425 = vpop.f32.mrf.mxu0
      %4426 = vmatprep.mubr.bf16.mxu0 0
      %4427 = vmatmul.mubr.bf16.gmra.mxu0 %v4361
      %v4428 = vpop.f32.mrf.mxu0
      %v4429 = vadd.f32 0.0, %v4428
      %v4430 = vpop.f32.mrf.mxu0
      %v4431 = vpop.f32.mrf.mxu0
      %v4432 = vadd.f32 0.0, %v4431
      %v4433 = vpop.f32.mrf.mxu0
      %4434 = vmatprep.mubr.bf16.mxu0 0
      %4435 = vmatmul.mubr.bf16.gmra.mxu0 %v4364
      %v4436 = vpop.f32.mrf.mxu0
      %v4437 = vadd.f32 0.0, %v4436
      %v4438 = vpop.f32.mrf.mxu0
      %v4439 = vpop.f32.mrf.mxu0
      %v4440 = vadd.f32 0.0, %v4439
      %v4441 = vpop.f32.mrf.mxu0
      %4442 = vmatprep.mubr.bf16.mxu0 0
      %4443 = vmatmul.mubr.bf16.gmra.mxu0 %v4367
      %v4444 = vpop.f32.mrf.mxu0
      %v4445 = vadd.f32 0.0, %v4444
      %v4446 = vpop.f32.mrf.mxu0
      %v4447 = vpop.f32.mrf.mxu0
      %v4448 = vadd.f32 0.0, %v4447
      %v4449 = vpop.f32.mrf.mxu0
      %4450 = vmatprep.mubr.bf16.mxu0 0
      %4451 = vmatmul.mubr.bf16.gmra.mxu0 %v4370
      %v4452 = vpop.f32.mrf.mxu0
      %v4453 = vadd.f32 0.0, %v4452
      %v4454 = vpop.f32.mrf.mxu0
      %v4455 = vpop.f32.mrf.mxu0
      %v4456 = vadd.f32 0.0, %v4455
      %v4457 = vpop.f32.mrf.mxu0
      %4458 = vmatprep.mubr.bf16.mxu0 0
      %4459 = vmatmul.mubr.bf16.gmra.mxu0 %v4373
      %v4460 = vpop.f32.mrf.mxu0
      %v4461 = vadd.f32 0.0, %v4460
      %v4462 = vpop.f32.mrf.mxu0
      %v4463 = vpop.f32.mrf.mxu0
      %v4464 = vadd.f32 0.0, %v4463
      %v4465 = vpop.f32.mrf.mxu0
      %4466 = vmatprep.mubr.bf16.mxu0 0
      %4467 = vmatmul.mubr.bf16.gmra.mxu0 %v4376
      %v4468 = vpop.f32.mrf.mxu0
      %v4469 = vadd.f32 0.0, %v4468
      %v4470 = vpop.f32.mrf.mxu0
      %v4471 = vpop.f32.mrf.mxu0
      %v4472 = vadd.f32 0.0, %v4471
      %v4473 = vpop.f32.mrf.mxu0
      %4474 = vdwg.mxu0
      %v4475 = vadd.f32 %v4188, %v4413
      %v4476 = vadd.f32 %v4191, %v4416
      %v4477 = vadd.f32 %v4196, %v4421
      %v4478 = vadd.f32 %v4199, %v4424
      %v4479 = vadd.f32 %v4204, %v4429
      %v4480 = vadd.f32 %v4207, %v4432
      %v4481 = vadd.f32 %v4212, %v4437
      %v4482 = vadd.f32 %v4215, %v4440
      %v4483 = vadd.f32 %v4220, %v4445
      %v4484 = vadd.f32 %v4223, %v4448
      %v4485 = vadd.f32 %v4228, %v4453
      %v4486 = vadd.f32 %v4231, %v4456
      %v4487 = vadd.f32 %v4236, %v4461
      %v4488 = vadd.f32 %v4239, %v4464
      %v4489 = vadd.f32 %v4244, %v4469
      %v4490 = vadd.f32 %v4247, %v4472
      %v4491 = vld [vmem:[%s1061] sm:$0xf]
      %v4492 = vld [vmem:[%s1061 + $0x4] sm:$0xf]
      %v4493 = vld [vmem:[%s1061 + $0xc] sm:$0xf]
      %v4494 = vld [vmem:[%s1061 + $0x10] sm:$0xf]
      %v4495 = vld [vmem:[%s1061 + $0x18] sm:$0xf]
      %v4496 = vld [vmem:[%s1061 + $0x1c] sm:$0xf]
      %v4497 = vld [vmem:[%s1061 + $0x24] sm:$0xf]
      %v4498 = vld [vmem:[%s1061 + $0x28] sm:$0xf]
      %v4499 = vld [vmem:[%s1061 + $0x30] sm:$0xf]
      %v4500 = vld [vmem:[%s1061 + $0x34] sm:$0xf]
      %v4501 = vld [vmem:[%s1061 + $0x3c] sm:$0xf]
      %v4502 = vld [vmem:[%s1061 + $0x40] sm:$0xf]
      %v4503 = vld [vmem:[%s1061 + $0x48] sm:$0xf]
      %v4504 = vld [vmem:[%s1061 + $0x4c] sm:$0xf]
      %v4505 = vld [vmem:[%s1061 + $0x54] sm:$0xf]
      %v4506 = vld [vmem:[%s1061 + $0x58] sm:$0xf]
      %v4523 = vunpack.c.l.b16 %v4491
      %v4524 = vunpack.c.l.b16 %v4492
      %v4525 = vunpack.c.l.b16 %v4493
      %v4526 = vunpack.c.l.b16 %v4494
      %v4527 = vunpack.c.l.b16 %v4495
      %v4528 = vunpack.c.l.b16 %v4496
      %v4529 = vunpack.c.l.b16 %v4497
      %v4530 = vunpack.c.l.b16 %v4498
      %v4531 = vunpack.c.l.b16 %v4499
      %v4532 = vunpack.c.l.b16 %v4500
      %v4533 = vunpack.c.l.b16 %v4501
      %v4534 = vunpack.c.l.b16 %v4502
      %v4535 = vunpack.c.l.b16 %v4503
      %v4536 = vunpack.c.l.b16 %v4504
      %v4537 = vunpack.c.l.b16 %v4505
      %v4538 = vunpack.c.l.b16 %v4506
      %v4539 = vpack.c.b16 %v4524, %v4523
      %v4540 = vpack.c.b16 %v4526, %v4525
      %v4541 = vpack.c.b16 %v4528, %v4527
      %v4542 = vpack.c.b16 %v4530, %v4529
      %v4543 = vpack.c.b16 %v4532, %v4531
      %v4544 = vpack.c.b16 %v4534, %v4533
      %v4545 = vpack.c.b16 %v4536, %v4535
      %v4546 = vpack.c.b16 %v4538, %v4537
      %v4548 = vsel %vm1361, %v4539, 0
      %v4551 = vsel %vm1361, %v4540, 0
      %v4554 = vsel %vm1361, %v4541, 0
      %v4557 = vsel %vm1361, %v4542, 0
      %v4560 = vsel %vm1361, %v4543, 0
      %v4563 = vsel %vm1361, %v4544, 0
      %v4566 = vsel %vm1361, %v4545, 0
      %v4569 = vsel %vm1361, %v4546, 0
      %4571 = vmatprep.subr.bf16.mxu0 0
      %4572 = vmatpush1.bf16.msra.mxu0 0
      %4573 = vmatprep.subr.bf16.mxu0 0
      %4574 = vmatpush1.bf16.msra.mxu0 0
      %4575 = vmatprep.subr.bf16.mxu0 0
      %4576 = vmatpush1.bf16.msra.mxu0 0
      %4577 = vmatprep.subr.bf16.mxu0 0
      %4578 = vmatpush1.bf16.msra.mxu0 0
      %4579 = vmatprep.subr.bf16.mxu0 0
      %4580 = vmatpush1.bf16.msra.mxu0 0
      %4581 = vmatprep.subr.bf16.mxu0 0
      %4582 = vmatpush1.bf16.msra.mxu0 0
      %4583 = vmatprep.subr.bf16.mxu0 0
      %4584 = vmatpush1.bf16.msra.mxu0 0
      %4585 = vmatprep.subr.bf16.mxu0 0
      %4586 = vmatpush1.bf16.msra.mxu0 %v1979
      %4587 = vmatprep.subr.bf16.mxu0 0
      %4588 = vmatpush2.bf16.msra.mxu0 0
      %4589 = vmatprep.subr.bf16.mxu0 0
      %4590 = vmatpush2.bf16.msra.mxu0 0
      %4591 = vmatprep.subr.bf16.mxu0 0
      %4592 = vmatpush2.bf16.msra.mxu0 0
      %4593 = vmatprep.subr.bf16.mxu0 0
      %4594 = vmatpush2.bf16.msra.mxu0 0
      %4595 = vmatprep.subr.bf16.mxu0 0
      %4596 = vmatpush2.bf16.msra.mxu0 0
      %4597 = vmatprep.subr.bf16.mxu0 0
      %4598 = vmatpush2.bf16.msra.mxu0 0
      %4599 = vmatprep.subr.bf16.mxu0 0
      %4600 = vmatpush2.bf16.msra.mxu0 0
      %4601 = vmatprep.subr.bf16.mxu0 0
      %4602 = vmatpush2.bf16.msra.mxu0 0
      %4603 = vmatprep.mubr.bf16.mxu0 0
      %4604 = vmatmul.mubr.bf16.gmra.mxu0 %v4548
      %v4605 = vpop.f32.mrf.mxu0
      %v4606 = vadd.f32 0.0, %v4605
      %v4607 = vpop.f32.mrf.mxu0
      %v4608 = vpop.f32.mrf.mxu0
      %v4609 = vadd.f32 0.0, %v4608
      %v4610 = vpop.f32.mrf.mxu0
      %4611 = vmatprep.mubr.bf16.mxu0 0
      %4612 = vmatmul.mubr.bf16.gmra.mxu0 %v4551
      %v4613 = vpop.f32.mrf.mxu0
      %v4614 = vadd.f32 0.0, %v4613
      %v4615 = vpop.f32.mrf.mxu0
      %v4616 = vpop.f32.mrf.mxu0
      %v4617 = vadd.f32 0.0, %v4616
      %v4618 = vpop.f32.mrf.mxu0
      %4619 = vmatprep.mubr.bf16.mxu0 0
      %4620 = vmatmul.mubr.bf16.gmra.mxu0 %v4554
      %v4621 = vpop.f32.mrf.mxu0
      %v4622 = vadd.f32 0.0, %v4621
      %v4623 = vpop.f32.mrf.mxu0
      %v4624 = vpop.f32.mrf.mxu0
      %v4625 = vadd.f32 0.0, %v4624
      %v4626 = vpop.f32.mrf.mxu0
      %4627 = vmatprep.mubr.bf16.mxu0 0
      %4628 = vmatmul.mubr.bf16.gmra.mxu0 %v4557
      %v4629 = vpop.f32.mrf.mxu0
      %v4630 = vadd.f32 0.0, %v4629
      %v4631 = vpop.f32.mrf.mxu0
      %v4632 = vpop.f32.mrf.mxu0
      %v4633 = vadd.f32 0.0, %v4632
      %v4634 = vpop.f32.mrf.mxu0
      %4635 = vmatprep.mubr.bf16.mxu0 0
      %4636 = vmatmul.mubr.bf16.gmra.mxu0 %v4560
      %v4637 = vpop.f32.mrf.mxu0
      %v4638 = vadd.f32 0.0, %v4637
      %v4639 = vpop.f32.mrf.mxu0
      %v4640 = vpop.f32.mrf.mxu0
      %v4641 = vadd.f32 0.0, %v4640
      %v4642 = vpop.f32.mrf.mxu0
      %4643 = vmatprep.mubr.bf16.mxu0 0
      %4644 = vmatmul.mubr.bf16.gmra.mxu0 %v4563
      %v4645 = vpop.f32.mrf.mxu0
      %v4646 = vadd.f32 0.0, %v4645
      %v4647 = vpop.f32.mrf.mxu0
      %v4648 = vpop.f32.mrf.mxu0
      %v4649 = vadd.f32 0.0, %v4648
      %v4650 = vpop.f32.mrf.mxu0
      %4651 = vmatprep.mubr.bf16.mxu0 0
      %4652 = vmatmul.mubr.bf16.gmra.mxu0 %v4566
      %v4653 = vpop.f32.mrf.mxu0
      %v4654 = vadd.f32 0.0, %v4653
      %v4655 = vpop.f32.mrf.mxu0
      %v4656 = vpop.f32.mrf.mxu0
      %v4657 = vadd.f32 0.0, %v4656
      %v4658 = vpop.f32.mrf.mxu0
      %4659 = vmatprep.mubr.bf16.mxu0 0
      %4660 = vmatmul.mubr.bf16.gmra.mxu0 %v4569
      %v4661 = vpop.f32.mrf.mxu0
      %v4662 = vadd.f32 0.0, %v4661
      %v4663 = vpop.f32.mrf.mxu0
      %v4664 = vpop.f32.mrf.mxu0
      %v4665 = vadd.f32 0.0, %v4664
      %v4666 = vpop.f32.mrf.mxu0
      %4667 = vdwg.mxu0
      %v4668 = vadd.f32 %v4475, %v4606
      %v4669 = vadd.f32 %v4476, %v4609
      %v4670 = vadd.f32 %v4477, %v4614
      %v4671 = vadd.f32 %v4478, %v4617
      %v4672 = vadd.f32 %v4479, %v4622
      %v4673 = vadd.f32 %v4480, %v4625
      %v4674 = vadd.f32 %v4481, %v4630
      %v4675 = vadd.f32 %v4482, %v4633
      %v4676 = vadd.f32 %v4483, %v4638
      %v4677 = vadd.f32 %v4484, %v4641
      %v4678 = vadd.f32 %v4485, %v4646
      %v4679 = vadd.f32 %v4486, %v4649
      %v4680 = vadd.f32 %v4487, %v4654
      %v4681 = vadd.f32 %v4488, %v4657
      %v4682 = vadd.f32 %v4489, %v4662
      %v4683 = vadd.f32 %v4490, %v4665
      %v4684 = vld [vmem:[%s1061] sm:$0xf]
      %v4685 = vld [vmem:[%s1061 + $0x4] sm:$0xf]
      %v4686 = vld [vmem:[%s1061 + $0x8] sm:$0x1]
      %v4687 = vld [vmem:[%s1061 + $0xc] sm:$0xf]
      %v4688 = vld [vmem:[%s1061 + $0x10] sm:$0xf]
      %v4689 = vld [vmem:[%s1061 + $0x14] sm:$0x1]
      %v4690 = vld [vmem:[%s1061 + $0x18] sm:$0xf]
      %v4691 = vld [vmem:[%s1061 + $0x1c] sm:$0xf]
      %v4692 = vld [vmem:[%s1061 + $0x20] sm:$0x1]
      %v4693 = vld [vmem:[%s1061 + $0x24] sm:$0xf]
      %v4694 = vld [vmem:[%s1061 + $0x28] sm:$0xf]
      %v4695 = vld [vmem:[%s1061 + $0x2c] sm:$0x1]
      %v4696 = vld [vmem:[%s1061 + $0x30] sm:$0xf]
      %v4697 = vld [vmem:[%s1061 + $0x34] sm:$0xf]
      %v4698 = vld [vmem:[%s1061 + $0x38] sm:$0x1]
      %v4699 = vld [vmem:[%s1061 + $0x3c] sm:$0xf]
      %v4700 = vld [vmem:[%s1061 + $0x40] sm:$0xf]
      %v4701 = vld [vmem:[%s1061 + $0x44] sm:$0x1]
      %v4702 = vld [vmem:[%s1061 + $0x48] sm:$0xf]
      %v4703 = vld [vmem:[%s1061 + $0x4c] sm:$0xf]
      %v4704 = vld [vmem:[%s1061 + $0x50] sm:$0x1]
      %v4705 = vld [vmem:[%s1061 + $0x54] sm:$0xf]
      %v4706 = vld [vmem:[%s1061 + $0x58] sm:$0xf]
      %v4707 = vld [vmem:[%s1061 + $0x5c] sm:$0x1]
      %v4709 = vshrl.u32 %v4684, 16
      %v4711 = vrot.slane %v4709, 4
      %v4712 = vshll.u32 %v4684, 16
      %v4714 = vrot.slane %v4712, 5
      %v4715 = vor.u32 %v4711, %v4714
      %v4716 = vrot.slane %v4715, 4
      %v4718 = vshll.u32 %v4685, 16
      %v4720 = vrot.slane %v4718, 5
      %v4721 = vsel %vm1144, %v4716, %v4720
      %v4722 = vshrl.u32 %v4685, 16
      %v4724 = vrot.slane %v4722, 4
      %v4725 = vor.u32 %v4724, %v4720
      %v4726 = vrot.slane %v4725, 4
      %v4728 = vshll.u32 %v4686, 16
      %v4730 = vrot.slane %v4728, 5
      %v4731 = vsel %vm1144, %v4726, %v4730
      %v4733 = vshrl.u32 %v4687, 16
      %v4735 = vrot.slane %v4733, 4
      %v4736 = vshll.u32 %v4687, 16
      %v4738 = vrot.slane %v4736, 5
      %v4739 = vor.u32 %v4735, %v4738
      %v4740 = vrot.slane %v4739, 4
      %v4742 = vshll.u32 %v4688, 16
      %v4744 = vrot.slane %v4742, 5
      %v4745 = vsel %vm1144, %v4740, %v4744
      %v4746 = vshrl.u32 %v4688, 16
      %v4748 = vrot.slane %v4746, 4
      %v4749 = vor.u32 %v4748, %v4744
      %v4750 = vrot.slane %v4749, 4
      %v4752 = vshll.u32 %v4689, 16
      %v4754 = vrot.slane %v4752, 5
      %v4755 = vsel %vm1144, %v4750, %v4754
      %v4757 = vshrl.u32 %v4690, 16
      %v4759 = vrot.slane %v4757, 4
      %v4760 = vshll.u32 %v4690, 16
      %v4762 = vrot.slane %v4760, 5
      %v4763 = vor.u32 %v4759, %v4762
      %v4764 = vrot.slane %v4763, 4
      %v4766 = vshll.u32 %v4691, 16
      %v4768 = vrot.slane %v4766, 5
      %v4769 = vsel %vm1144, %v4764, %v4768
      %v4770 = vshrl.u32 %v4691, 16
      %v4772 = vrot.slane %v4770, 4
      %v4773 = vor.u32 %v4772, %v4768
      %v4774 = vrot.slane %v4773, 4
      %v4776 = vshll.u32 %v4692, 16
      %v4778 = vrot.slane %v4776, 5
      %v4779 = vsel %vm1144, %v4774, %v4778
      %v4781 = vshrl.u32 %v4693, 16
      %v4783 = vrot.slane %v4781, 4
      %v4784 = vshll.u32 %v4693, 16
      %v4786 = vrot.slane %v4784, 5
      %v4787 = vor.u32 %v4783, %v4786
      %v4788 = vrot.slane %v4787, 4
      %v4790 = vshll.u32 %v4694, 16
      %v4792 = vrot.slane %v4790, 5
      %v4793 = vsel %vm1144, %v4788, %v4792
      %v4794 = vshrl.u32 %v4694, 16
      %v4796 = vrot.slane %v4794, 4
      %v4797 = vor.u32 %v4796, %v4792
      %v4798 = vrot.slane %v4797, 4
      %v4800 = vshll.u32 %v4695, 16
      %v4802 = vrot.slane %v4800, 5
      %v4803 = vsel %vm1144, %v4798, %v4802
      %v4805 = vshrl.u32 %v4696, 16
      %v4807 = vrot.slane %v4805, 4
      %v4808 = vshll.u32 %v4696, 16
      %v4810 = vrot.slane %v4808, 5
      %v4811 = vor.u32 %v4807, %v4810
      %v4812 = vrot.slane %v4811, 4
      %v4814 = vshll.u32 %v4697, 16
      %v4816 = vrot.slane %v4814, 5
      %v4817 = vsel %vm1144, %v4812, %v4816
      %v4818 = vshrl.u32 %v4697, 16
      %v4820 = vrot.slane %v4818, 4
      %v4821 = vor.u32 %v4820, %v4816
      %v4822 = vrot.slane %v4821, 4
      %v4824 = vshll.u32 %v4698, 16
      %v4826 = vrot.slane %v4824, 5
      %v4827 = vsel %vm1144, %v4822, %v4826
      %v4829 = vshrl.u32 %v4699, 16
      %v4831 = vrot.slane %v4829, 4
      %v4832 = vshll.u32 %v4699, 16
      %v4834 = vrot.slane %v4832, 5
      %v4835 = vor.u32 %v4831, %v4834
      %v4836 = vrot.slane %v4835, 4
      %v4838 = vshll.u32 %v4700, 16
      %v4840 = vrot.slane %v4838, 5
      %v4841 = vsel %vm1144, %v4836, %v4840
      %v4842 = vshrl.u32 %v4700, 16
      %v4844 = vrot.slane %v4842, 4
      %v4845 = vor.u32 %v4844, %v4840
      %v4846 = vrot.slane %v4845, 4
      %v4848 = vshll.u32 %v4701, 16
      %v4850 = vrot.slane %v4848, 5
      %v4851 = vsel %vm1144, %v4846, %v4850
      %v4853 = vshrl.u32 %v4702, 16
      %v4855 = vrot.slane %v4853, 4
      %v4856 = vshll.u32 %v4702, 16
      %v4858 = vrot.slane %v4856, 5
      %v4859 = vor.u32 %v4855, %v4858
      %v4860 = vrot.slane %v4859, 4
      %v4862 = vshll.u32 %v4703, 16
      %v4864 = vrot.slane %v4862, 5
      %v4865 = vsel %vm1144, %v4860, %v4864
      %v4866 = vshrl.u32 %v4703, 16
      %v4868 = vrot.slane %v4866, 4
      %v4869 = vor.u32 %v4868, %v4864
      %v4870 = vrot.slane %v4869, 4
      %v4872 = vshll.u32 %v4704, 16
      %v4874 = vrot.slane %v4872, 5
      %v4875 = vsel %vm1144, %v4870, %v4874
      %v4877 = vshrl.u32 %v4705, 16
      %v4879 = vrot.slane %v4877, 4
      %v4880 = vshll.u32 %v4705, 16
      %v4882 = vrot.slane %v4880, 5
      %v4883 = vor.u32 %v4879, %v4882
      %v4884 = vrot.slane %v4883, 4
      %v4886 = vshll.u32 %v4706, 16
      %v4888 = vrot.slane %v4886, 5
      %v4889 = vsel %vm1144, %v4884, %v4888
      %v4890 = vshrl.u32 %v4706, 16
      %v4892 = vrot.slane %v4890, 4
      %v4893 = vor.u32 %v4892, %v4888
      %v4894 = vrot.slane %v4893, 4
      %v4896 = vshll.u32 %v4707, 16
      %v4898 = vrot.slane %v4896, 5
      %v4899 = vsel %vm1144, %v4894, %v4898
      %v4900 = vunpack.c.l.b16 %v4721
      %v4901 = vunpack.c.l.b16 %v4731
      %v4902 = vunpack.c.l.b16 %v4745
      %v4903 = vunpack.c.l.b16 %v4755
      %v4904 = vunpack.c.l.b16 %v4769
      %v4905 = vunpack.c.l.b16 %v4779
      %v4906 = vunpack.c.l.b16 %v4793
      %v4907 = vunpack.c.l.b16 %v4803
      %v4908 = vunpack.c.l.b16 %v4817
      %v4909 = vunpack.c.l.b16 %v4827
      %v4910 = vunpack.c.l.b16 %v4841
      %v4911 = vunpack.c.l.b16 %v4851
      %v4912 = vunpack.c.l.b16 %v4865
      %v4913 = vunpack.c.l.b16 %v4875
      %v4914 = vunpack.c.l.b16 %v4889
      %v4915 = vunpack.c.l.b16 %v4899
      %v4916 = vpack.c.b16 %v4901, %v4900
      %v4917 = vpack.c.b16 %v4903, %v4902
      %v4918 = vpack.c.b16 %v4905, %v4904
      %v4919 = vpack.c.b16 %v4907, %v4906
      %v4920 = vpack.c.b16 %v4909, %v4908
      %v4921 = vpack.c.b16 %v4911, %v4910
      %v4922 = vpack.c.b16 %v4913, %v4912
      %v4923 = vpack.c.b16 %v4915, %v4914
      %v4925 = vsel %vm1361, %v4916, 0
      %v4928 = vsel %vm1361, %v4917, 0
      %v4931 = vsel %vm1361, %v4918, 0
      %v4934 = vsel %vm1361, %v4919, 0
      %v4937 = vsel %vm1361, %v4920, 0
      %v4940 = vsel %vm1361, %v4921, 0
      %v4943 = vsel %vm1361, %v4922, 0
      %v4946 = vsel %vm1361, %v4923, 0
      %4948 = vmatprep.subr.bf16.mxu0 0
      %4949 = vmatpush1.bf16.msra.mxu0 0
      %4950 = vmatprep.subr.bf16.mxu0 0
      %4951 = vmatpush1.bf16.msra.mxu0 0
      %4952 = vmatprep.subr.bf16.mxu0 0
      %4953 = vmatpush1.bf16.msra.mxu0 0
      %4954 = vmatprep.subr.bf16.mxu0 0
      %4955 = vmatpush1.bf16.msra.mxu0 0
      %4956 = vmatprep.subr.bf16.mxu0 0
      %4957 = vmatpush1.bf16.msra.mxu0 0
      %4958 = vmatprep.subr.bf16.mxu0 0
      %4959 = vmatpush1.bf16.msra.mxu0 0
      %4960 = vmatprep.subr.bf16.mxu0 0
      %4961 = vmatpush1.bf16.msra.mxu0 0
      %4962 = vmatprep.subr.bf16.mxu0 0
      %4963 = vmatpush1.bf16.msra.mxu0 %v2359
      %4964 = vmatprep.subr.bf16.mxu0 0
      %4965 = vmatpush2.bf16.msra.mxu0 0
      %4966 = vmatprep.subr.bf16.mxu0 0
      %4967 = vmatpush2.bf16.msra.mxu0 0
      %4968 = vmatprep.subr.bf16.mxu0 0
      %4969 = vmatpush2.bf16.msra.mxu0 0
      %4970 = vmatprep.subr.bf16.mxu0 0
      %4971 = vmatpush2.bf16.msra.mxu0 0
      %4972 = vmatprep.subr.bf16.mxu0 0
      %4973 = vmatpush2.bf16.msra.mxu0 0
      %4974 = vmatprep.subr.bf16.mxu0 0
      %4975 = vmatpush2.bf16.msra.mxu0 0
      %4976 = vmatprep.subr.bf16.mxu0 0
      %4977 = vmatpush2.bf16.msra.mxu0 0
      %4978 = vmatprep.subr.bf16.mxu0 0
      %4979 = vmatpush2.bf16.msra.mxu0 0
      %4980 = vmatprep.mubr.bf16.mxu0 0
      %4981 = vmatmul.mubr.bf16.gmra.mxu0 %v4925
      %v4982 = vpop.f32.mrf.mxu0
      %v4983 = vadd.f32 0.0, %v4982
      %v4984 = vpop.f32.mrf.mxu0
      %v4985 = vpop.f32.mrf.mxu0
      %v4986 = vadd.f32 0.0, %v4985
      %v4987 = vpop.f32.mrf.mxu0
      %4988 = vmatprep.mubr.bf16.mxu0 0
      %4989 = vmatmul.mubr.bf16.gmra.mxu0 %v4928
      %v4990 = vpop.f32.mrf.mxu0
      %v4991 = vadd.f32 0.0, %v4990
      %v4992 = vpop.f32.mrf.mxu0
      %v4993 = vpop.f32.mrf.mxu0
      %v4994 = vadd.f32 0.0, %v4993
      %v4995 = vpop.f32.mrf.mxu0
      %4996 = vmatprep.mubr.bf16.mxu0 0
      %4997 = vmatmul.mubr.bf16.gmra.mxu0 %v4931
      %v4998 = vpop.f32.mrf.mxu0
      %v4999 = vadd.f32 0.0, %v4998
      %v5000 = vpop.f32.mrf.mxu0
      %v5001 = vpop.f32.mrf.mxu0
      %v5002 = vadd.f32 0.0, %v5001
      %v5003 = vpop.f32.mrf.mxu0
      %5004 = vmatprep.mubr.bf16.mxu0 0
      %5005 = vmatmul.mubr.bf16.gmra.mxu0 %v4934
      %v5006 = vpop.f32.mrf.mxu0
      %v5007 = vadd.f32 0.0, %v5006
      %v5008 = vpop.f32.mrf.mxu0
      %v5009 = vpop.f32.mrf.mxu0
      %v5010 = vadd.f32 0.0, %v5009
      %v5011 = vpop.f32.mrf.mxu0
      %5012 = vmatprep.mubr.bf16.mxu0 0
      %5013 = vmatmul.mubr.bf16.gmra.mxu0 %v4937
      %v5014 = vpop.f32.mrf.mxu0
      %v5015 = vadd.f32 0.0, %v5014
      %v5016 = vpop.f32.mrf.mxu0
      %v5017 = vpop.f32.mrf.mxu0
      %v5018 = vadd.f32 0.0, %v5017
      %v5019 = vpop.f32.mrf.mxu0
      %5020 = vmatprep.mubr.bf16.mxu0 0
      %5021 = vmatmul.mubr.bf16.gmra.mxu0 %v4940
      %v5022 = vpop.f32.mrf.mxu0
      %v5023 = vadd.f32 0.0, %v5022
      %v5024 = vpop.f32.mrf.mxu0
      %v5025 = vpop.f32.mrf.mxu0
      %v5026 = vadd.f32 0.0, %v5025
      %v5027 = vpop.f32.mrf.mxu0
      %5028 = vmatprep.mubr.bf16.mxu0 0
      %5029 = vmatmul.mubr.bf16.gmra.mxu0 %v4943
      %v5030 = vpop.f32.mrf.mxu0
      %v5031 = vadd.f32 0.0, %v5030
      %v5032 = vpop.f32.mrf.mxu0
      %v5033 = vpop.f32.mrf.mxu0
      %v5034 = vadd.f32 0.0, %v5033
      %v5035 = vpop.f32.mrf.mxu0
      %5036 = vmatprep.mubr.bf16.mxu0 0
      %5037 = vmatmul.mubr.bf16.gmra.mxu0 %v4946
      %v5038 = vpop.f32.mrf.mxu0
      %v5039 = vadd.f32 0.0, %v5038
      %v5040 = vpop.f32.mrf.mxu0
      %v5041 = vpop.f32.mrf.mxu0
      %v5042 = vadd.f32 0.0, %v5041
      %v5043 = vpop.f32.mrf.mxu0
      %5044 = vdwg.mxu0
      %v5045 = vadd.f32 %v4668, %v4983
      %v5046 = vadd.f32 %v4669, %v4986
      %v5047 = vadd.f32 %v4670, %v4991
      %v5048 = vadd.f32 %v4671, %v4994
      %v5049 = vadd.f32 %v4672, %v4999
      %v5050 = vadd.f32 %v4673, %v5002
      %v5051 = vadd.f32 %v4674, %v5007
      %v5052 = vadd.f32 %v4675, %v5010
      %v5053 = vadd.f32 %v4676, %v5015
      %v5054 = vadd.f32 %v4677, %v5018
      %v5055 = vadd.f32 %v4678, %v5023
      %v5056 = vadd.f32 %v4679, %v5026
      %v5057 = vadd.f32 %v4680, %v5031
      %v5058 = vadd.f32 %v4681, %v5034
      %v5059 = vadd.f32 %v4682, %v5039
      %v5060 = vadd.f32 %v4683, %v5042
      %v5061 = vld [vmem:[%s1061] sm:$0xe]
      %v5062 = vld [vmem:[%s1061 + $0xc] sm:$0xe]
      %v5063 = vld [vmem:[%s1061 + $0x18] sm:$0xe]
      %v5064 = vld [vmem:[%s1061 + $0x24] sm:$0xe]
      %v5065 = vld [vmem:[%s1061 + $0x30] sm:$0xe]
      %v5066 = vld [vmem:[%s1061 + $0x3c] sm:$0xe]
      %v5067 = vld [vmem:[%s1061 + $0x48] sm:$0xe]
      %v5068 = vld [vmem:[%s1061 + $0x54] sm:$0xe]
      %v5093 = vrot.slane %v5061, 5
      %v5094 = vrot.slane %v5093, 4
      %v5095 = vrot.slane %v4685, 5
      %v5096 = vsel %vm1677, %v5094, %v5095
      %v5097 = vrot.slane %v5095, 4
      %v5098 = vrot.slane %v4686, 5
      %v5099 = vsel %vm1677, %v5097, %v5098
      %v5100 = vrot.slane %v5062, 5
      %v5101 = vrot.slane %v5100, 4
      %v5102 = vrot.slane %v4688, 5
      %v5103 = vsel %vm1677, %v5101, %v5102
      %v5104 = vrot.slane %v5102, 4
      %v5105 = vrot.slane %v4689, 5
      %v5106 = vsel %vm1677, %v5104, %v5105
      %v5107 = vrot.slane %v5063, 5
      %v5108 = vrot.slane %v5107, 4
      %v5109 = vrot.slane %v4691, 5
      %v5110 = vsel %vm1677, %v5108, %v5109
      %v5111 = vrot.slane %v5109, 4
      %v5112 = vrot.slane %v4692, 5
      %v5113 = vsel %vm1677, %v5111, %v5112
      %v5114 = vrot.slane %v5064, 5
      %v5115 = vrot.slane %v5114, 4
      %v5116 = vrot.slane %v4694, 5
      %v5117 = vsel %vm1677, %v5115, %v5116
      %v5118 = vrot.slane %v5116, 4
      %v5119 = vrot.slane %v4695, 5
      %v5120 = vsel %vm1677, %v5118, %v5119
      %v5121 = vrot.slane %v5065, 5
      %v5122 = vrot.slane %v5121, 4
      %v5123 = vrot.slane %v4697, 5
      %v5124 = vsel %vm1677, %v5122, %v5123
      %v5125 = vrot.slane %v5123, 4
      %v5126 = vrot.slane %v4698, 5
      %v5127 = vsel %vm1677, %v5125, %v5126
      %v5128 = vrot.slane %v5066, 5
      %v5129 = vrot.slane %v5128, 4
      %v5130 = vrot.slane %v4700, 5
      %v5131 = vsel %vm1677, %v5129, %v5130
      %v5132 = vrot.slane %v5130, 4
      %v5133 = vrot.slane %v4701, 5
      %v5134 = vsel %vm1677, %v5132, %v5133
      %v5135 = vrot.slane %v5067, 5
      %v5136 = vrot.slane %v5135, 4
      %v5137 = vrot.slane %v4703, 5
      %v5138 = vsel %vm1677, %v5136, %v5137
      %v5139 = vrot.slane %v5137, 4
      %v5140 = vrot.slane %v4704, 5
      %v5141 = vsel %vm1677, %v5139, %v5140
      %v5142 = vrot.slane %v5068, 5
      %v5143 = vrot.slane %v5142, 4
      %v5144 = vrot.slane %v4706, 5
      %v5145 = vsel %vm1677, %v5143, %v5144
      %v5146 = vrot.slane %v5144, 4
      %v5147 = vrot.slane %v4707, 5
      %v5148 = vsel %vm1677, %v5146, %v5147
      %v5149 = vunpack.c.l.b16 %v5096
      %v5150 = vunpack.c.l.b16 %v5099
      %v5151 = vunpack.c.l.b16 %v5103
      %v5152 = vunpack.c.l.b16 %v5106
      %v5153 = vunpack.c.l.b16 %v5110
      %v5154 = vunpack.c.l.b16 %v5113
      %v5155 = vunpack.c.l.b16 %v5117
      %v5156 = vunpack.c.l.b16 %v5120
      %v5157 = vunpack.c.l.b16 %v5124
      %v5158 = vunpack.c.l.b16 %v5127
      %v5159 = vunpack.c.l.b16 %v5131
      %v5160 = vunpack.c.l.b16 %v5134
      %v5161 = vunpack.c.l.b16 %v5138
      %v5162 = vunpack.c.l.b16 %v5141
      %v5163 = vunpack.c.l.b16 %v5145
      %v5164 = vunpack.c.l.b16 %v5148
      %v5165 = vpack.c.b16 %v5150, %v5149
      %v5166 = vpack.c.b16 %v5152, %v5151
      %v5167 = vpack.c.b16 %v5154, %v5153
      %v5168 = vpack.c.b16 %v5156, %v5155
      %v5169 = vpack.c.b16 %v5158, %v5157
      %v5170 = vpack.c.b16 %v5160, %v5159
      %v5171 = vpack.c.b16 %v5162, %v5161
      %v5172 = vpack.c.b16 %v5164, %v5163
      %v5174 = vsel %vm1361, %v5165, 0
      %v5177 = vsel %vm1361, %v5166, 0
      %v5180 = vsel %vm1361, %v5167, 0
      %v5183 = vsel %vm1361, %v5168, 0
      %v5186 = vsel %vm1361, %v5169, 0
      %v5189 = vsel %vm1361, %v5170, 0
      %v5192 = vsel %vm1361, %v5171, 0
      %v5195 = vsel %vm1361, %v5172, 0
      %5197 = vmatprep.subr.bf16.mxu0 0
      %5198 = vmatpush1.bf16.msra.mxu0 0
      %5199 = vmatprep.subr.bf16.mxu0 0
      %5200 = vmatpush1.bf16.msra.mxu0 0
      %5201 = vmatprep.subr.bf16.mxu0 0
      %5202 = vmatpush1.bf16.msra.mxu0 0
      %5203 = vmatprep.subr.bf16.mxu0 0
      %5204 = vmatpush1.bf16.msra.mxu0 0
      %5205 = vmatprep.subr.bf16.mxu0 0
      %5206 = vmatpush1.bf16.msra.mxu0 0
      %5207 = vmatprep.subr.bf16.mxu0 0
      %5208 = vmatpush1.bf16.msra.mxu0 0
      %5209 = vmatprep.subr.bf16.mxu0 0
      %5210 = vmatpush1.bf16.msra.mxu0 0
      %5211 = vmatprep.subr.bf16.mxu0 0
      %5212 = vmatpush1.bf16.msra.mxu0 %v2611
      %5213 = vmatprep.subr.bf16.mxu0 0
      %5214 = vmatpush2.bf16.msra.mxu0 0
      %5215 = vmatprep.subr.bf16.mxu0 0
      %5216 = vmatpush2.bf16.msra.mxu0 0
      %5217 = vmatprep.subr.bf16.mxu0 0
      %5218 = vmatpush2.bf16.msra.mxu0 0
      %5219 = vmatprep.subr.bf16.mxu0 0
      %5220 = vmatpush2.bf16.msra.mxu0 0
      %5221 = vmatprep.subr.bf16.mxu0 0
      %5222 = vmatpush2.bf16.msra.mxu0 0
      %5223 = vmatprep.subr.bf16.mxu0 0
      %5224 = vmatpush2.bf16.msra.mxu0 0
      %5225 = vmatprep.subr.bf16.mxu0 0
      %5226 = vmatpush2.bf16.msra.mxu0 0
      %5227 = vmatprep.subr.bf16.mxu0 0
      %5228 = vmatpush2.bf16.msra.mxu0 0
      %5229 = vmatprep.mubr.bf16.mxu0 0
      %5230 = vmatmul.mubr.bf16.gmra.mxu0 %v5174
      %v5231 = vpop.f32.mrf.mxu0
      %v5232 = vadd.f32 0.0, %v5231
      %v5233 = vpop.f32.mrf.mxu0
      %v5234 = vpop.f32.mrf.mxu0
      %v5235 = vadd.f32 0.0, %v5234
      %v5236 = vpop.f32.mrf.mxu0
      %5237 = vmatprep.mubr.bf16.mxu0 0
      %5238 = vmatmul.mubr.bf16.gmra.mxu0 %v5177
      %v5239 = vpop.f32.mrf.mxu0
      %v5240 = vadd.f32 0.0, %v5239
      %v5241 = vpop.f32.mrf.mxu0
      %v5242 = vpop.f32.mrf.mxu0
      %v5243 = vadd.f32 0.0, %v5242
      %v5244 = vpop.f32.mrf.mxu0
      %5245 = vmatprep.mubr.bf16.mxu0 0
      %5246 = vmatmul.mubr.bf16.gmra.mxu0 %v5180
      %v5247 = vpop.f32.mrf.mxu0
      %v5248 = vadd.f32 0.0, %v5247
      %v5249 = vpop.f32.mrf.mxu0
      %v5250 = vpop.f32.mrf.mxu0
      %v5251 = vadd.f32 0.0, %v5250
      %v5252 = vpop.f32.mrf.mxu0
      %5253 = vmatprep.mubr.bf16.mxu0 0
      %5254 = vmatmul.mubr.bf16.gmra.mxu0 %v5183
      %v5255 = vpop.f32.mrf.mxu0
      %v5256 = vadd.f32 0.0, %v5255
      %v5257 = vpop.f32.mrf.mxu0
      %v5258 = vpop.f32.mrf.mxu0
      %v5259 = vadd.f32 0.0, %v5258
      %v5260 = vpop.f32.mrf.mxu0
      %5261 = vmatprep.mubr.bf16.mxu0 0
      %5262 = vmatmul.mubr.bf16.gmra.mxu0 %v5186
      %v5263 = vpop.f32.mrf.mxu0
      %v5264 = vadd.f32 0.0, %v5263
      %v5265 = vpop.f32.mrf.mxu0
      %v5266 = vpop.f32.mrf.mxu0
      %v5267 = vadd.f32 0.0, %v5266
      %v5268 = vpop.f32.mrf.mxu0
      %5269 = vmatprep.mubr.bf16.mxu0 0
      %5270 = vmatmul.mubr.bf16.gmra.mxu0 %v5189
      %v5271 = vpop.f32.mrf.mxu0
      %v5272 = vadd.f32 0.0, %v5271
      %v5273 = vpop.f32.mrf.mxu0
      %v5274 = vpop.f32.mrf.mxu0
      %v5275 = vadd.f32 0.0, %v5274
      %v5276 = vpop.f32.mrf.mxu0
      %5277 = vmatprep.mubr.bf16.mxu0 0
      %5278 = vmatmul.mubr.bf16.gmra.mxu0 %v5192
      %v5279 = vpop.f32.mrf.mxu0
      %v5280 = vadd.f32 0.0, %v5279
      %v5281 = vpop.f32.mrf.mxu0
      %v5282 = vpop.f32.mrf.mxu0
      %v5283 = vadd.f32 0.0, %v5282
      %v5284 = vpop.f32.mrf.mxu0
      %5285 = vmatprep.mubr.bf16.mxu0 0
      %5286 = vmatmul.mubr.bf16.gmra.mxu0 %v5195
      %v5287 = vpop.f32.mrf.mxu0
      %v5288 = vadd.f32 0.0, %v5287
      %v5289 = vpop.f32.mrf.mxu0
      %v5290 = vpop.f32.mrf.mxu0
      %v5291 = vadd.f32 0.0, %v5290
      %v5292 = vpop.f32.mrf.mxu0
      %5293 = vdwg.mxu0
      %v5294 = vadd.f32 %v5045, %v5232
      %v5295 = vadd.f32 %v5046, %v5235
      %v5296 = vadd.f32 %v5047, %v5240
      %v5297 = vadd.f32 %v5048, %v5243
      %v5298 = vadd.f32 %v5049, %v5248
      %v5299 = vadd.f32 %v5050, %v5251
      %v5300 = vadd.f32 %v5051, %v5256
      %v5301 = vadd.f32 %v5052, %v5259
      %v5302 = vadd.f32 %v5053, %v5264
      %v5303 = vadd.f32 %v5054, %v5267
      %v5304 = vadd.f32 %v5055, %v5272
      %v5305 = vadd.f32 %v5056, %v5275
      %v5306 = vadd.f32 %v5057, %v5280
      %v5307 = vadd.f32 %v5058, %v5283
      %v5308 = vadd.f32 %v5059, %v5288
      %v5309 = vadd.f32 %v5060, %v5291
      %s5310 = scalar_lea.vmem [#allocation2], 120
      %v5311 = vld [vmem:[%s5310] sm:$0xf]
      %v5312 = vld [vmem:[%s5310 + $0x4] sm:$0xf]
      %v5313 = vld [vmem:[%s5310 + $0xc] sm:$0xf]
      %v5314 = vld [vmem:[%s5310 + $0x10] sm:$0xf]
      %v5315 = vld [vmem:[%s5310 + $0x18] sm:$0xf]
      %v5316 = vld [vmem:[%s5310 + $0x1c] sm:$0xf]
      %v5317 = vld [vmem:[%s5310 + $0x24] sm:$0xf]
      %v5318 = vld [vmem:[%s5310 + $0x28] sm:$0xf]
      %v5319 = vld [vmem:[%s5310 + $0x30] sm:$0xf]
      %v5320 = vld [vmem:[%s5310 + $0x34] sm:$0xf]
      %v5321 = vld [vmem:[%s5310 + $0x3c] sm:$0xf]
      %v5322 = vld [vmem:[%s5310 + $0x40] sm:$0xf]
      %v5323 = vld [vmem:[%s5310 + $0x48] sm:$0xf]
      %v5324 = vld [vmem:[%s5310 + $0x4c] sm:$0xf]
      %v5325 = vld [vmem:[%s5310 + $0x54] sm:$0xf]
      %v5326 = vld [vmem:[%s5310 + $0x58] sm:$0xf]
      %v5343 = vunpack.c.l.b16 %v5311
      %v5344 = vunpack.c.l.b16 %v5312
      %v5345 = vunpack.c.l.b16 %v5313
      %v5346 = vunpack.c.l.b16 %v5314
      %v5347 = vunpack.c.l.b16 %v5315
      %v5348 = vunpack.c.l.b16 %v5316
      %v5349 = vunpack.c.l.b16 %v5317
      %v5350 = vunpack.c.l.b16 %v5318
      %v5351 = vunpack.c.l.b16 %v5319
      %v5352 = vunpack.c.l.b16 %v5320
      %v5353 = vunpack.c.l.b16 %v5321
      %v5354 = vunpack.c.l.b16 %v5322
      %v5355 = vunpack.c.l.b16 %v5323
      %v5356 = vunpack.c.l.b16 %v5324
      %v5357 = vunpack.c.l.b16 %v5325
      %v5358 = vunpack.c.l.b16 %v5326
      %v5359 = vpack.c.b16 %v5344, %v5343
      %v5360 = vpack.c.b16 %v5346, %v5345
      %v5361 = vpack.c.b16 %v5348, %v5347
      %v5362 = vpack.c.b16 %v5350, %v5349
      %v5363 = vpack.c.b16 %v5352, %v5351
      %v5364 = vpack.c.b16 %v5354, %v5353
      %v5365 = vpack.c.b16 %v5356, %v5355
      %v5366 = vpack.c.b16 %v5358, %v5357
      %v5368 = vsel %vm1361, %v5359, 0
      %v5371 = vsel %vm1361, %v5360, 0
      %v5374 = vsel %vm1361, %v5361, 0
      %v5377 = vsel %vm1361, %v5362, 0
      %v5380 = vsel %vm1361, %v5363, 0
      %v5383 = vsel %vm1361, %v5364, 0
      %v5386 = vsel %vm1361, %v5365, 0
      %v5389 = vsel %vm1361, %v5366, 0
      %5391 = vmatprep.subr.bf16.mxu0 0
      %5392 = vmatpush1.bf16.msra.mxu0 0
      %5393 = vmatprep.subr.bf16.mxu0 0
      %5394 = vmatpush1.bf16.msra.mxu0 0
      %5395 = vmatprep.subr.bf16.mxu0 0
      %5396 = vmatpush1.bf16.msra.mxu0 0
      %5397 = vmatprep.subr.bf16.mxu0 0
      %5398 = vmatpush1.bf16.msra.mxu0 0
      %5399 = vmatprep.subr.bf16.mxu0 0
      %5400 = vmatpush1.bf16.msra.mxu0 0
      %5401 = vmatprep.subr.bf16.mxu0 0
      %5402 = vmatpush1.bf16.msra.mxu0 0
      %5403 = vmatprep.subr.bf16.mxu0 0
      %5404 = vmatpush1.bf16.msra.mxu0 0
      %5405 = vmatprep.subr.bf16.mxu0 0
      %5406 = vmatpush1.bf16.msra.mxu0 %v2808
      %5407 = vmatprep.subr.bf16.mxu0 0
      %5408 = vmatpush2.bf16.msra.mxu0 0
      %5409 = vmatprep.subr.bf16.mxu0 0
      %5410 = vmatpush2.bf16.msra.mxu0 0
      %5411 = vmatprep.subr.bf16.mxu0 0
      %5412 = vmatpush2.bf16.msra.mxu0 0
      %5413 = vmatprep.subr.bf16.mxu0 0
      %5414 = vmatpush2.bf16.msra.mxu0 0
      %5415 = vmatprep.subr.bf16.mxu0 0
      %5416 = vmatpush2.bf16.msra.mxu0 0
      %5417 = vmatprep.subr.bf16.mxu0 0
      %5418 = vmatpush2.bf16.msra.mxu0 0
      %5419 = vmatprep.subr.bf16.mxu0 0
      %5420 = vmatpush2.bf16.msra.mxu0 0
      %5421 = vmatprep.subr.bf16.mxu0 0
      %5422 = vmatpush2.bf16.msra.mxu0 0
      %5423 = vmatprep.mubr.bf16.mxu0 0
      %5424 = vmatmul.mubr.bf16.gmra.mxu0 %v5368
      %v5425 = vpop.f32.mrf.mxu0
      %v5426 = vadd.f32 0.0, %v5425
      %v5427 = vpop.f32.mrf.mxu0
      %v5428 = vpop.f32.mrf.mxu0
      %v5429 = vadd.f32 0.0, %v5428
      %v5430 = vpop.f32.mrf.mxu0
      %5431 = vmatprep.mubr.bf16.mxu0 0
      %5432 = vmatmul.mubr.bf16.gmra.mxu0 %v5371
      %v5433 = vpop.f32.mrf.mxu0
      %v5434 = vadd.f32 0.0, %v5433
      %v5435 = vpop.f32.mrf.mxu0
      %v5436 = vpop.f32.mrf.mxu0
      %v5437 = vadd.f32 0.0, %v5436
      %v5438 = vpop.f32.mrf.mxu0
      %5439 = vmatprep.mubr.bf16.mxu0 0
      %5440 = vmatmul.mubr.bf16.gmra.mxu0 %v5374
      %v5441 = vpop.f32.mrf.mxu0
      %v5442 = vadd.f32 0.0, %v5441
      %v5443 = vpop.f32.mrf.mxu0
      %v5444 = vpop.f32.mrf.mxu0
      %v5445 = vadd.f32 0.0, %v5444
      %v5446 = vpop.f32.mrf.mxu0
      %5447 = vmatprep.mubr.bf16.mxu0 0
      %5448 = vmatmul.mubr.bf16.gmra.mxu0 %v5377
      %v5449 = vpop.f32.mrf.mxu0
      %v5450 = vadd.f32 0.0, %v5449
      %v5451 = vpop.f32.mrf.mxu0
      %v5452 = vpop.f32.mrf.mxu0
      %v5453 = vadd.f32 0.0, %v5452
      %v5454 = vpop.f32.mrf.mxu0
      %5455 = vmatprep.mubr.bf16.mxu0 0
      %5456 = vmatmul.mubr.bf16.gmra.mxu0 %v5380
      %v5457 = vpop.f32.mrf.mxu0
      %v5458 = vadd.f32 0.0, %v5457
      %v5459 = vpop.f32.mrf.mxu0
      %v5460 = vpop.f32.mrf.mxu0
      %v5461 = vadd.f32 0.0, %v5460
      %v5462 = vpop.f32.mrf.mxu0
      %5463 = vmatprep.mubr.bf16.mxu0 0
      %5464 = vmatmul.mubr.bf16.gmra.mxu0 %v5383
      %v5465 = vpop.f32.mrf.mxu0
      %v5466 = vadd.f32 0.0, %v5465
      %v5467 = vpop.f32.mrf.mxu0
      %v5468 = vpop.f32.mrf.mxu0
      %v5469 = vadd.f32 0.0, %v5468
      %v5470 = vpop.f32.mrf.mxu0
      %5471 = vmatprep.mubr.bf16.mxu0 0
      %5472 = vmatmul.mubr.bf16.gmra.mxu0 %v5386
      %v5473 = vpop.f32.mrf.mxu0
      %v5474 = vadd.f32 0.0, %v5473
      %v5475 = vpop.f32.mrf.mxu0
      %v5476 = vpop.f32.mrf.mxu0
      %v5477 = vadd.f32 0.0, %v5476
      %v5478 = vpop.f32.mrf.mxu0
      %5479 = vmatprep.mubr.bf16.mxu0 0
      %5480 = vmatmul.mubr.bf16.gmra.mxu0 %v5389
      %v5481 = vpop.f32.mrf.mxu0
      %v5482 = vadd.f32 0.0, %v5481
      %v5483 = vpop.f32.mrf.mxu0
      %v5484 = vpop.f32.mrf.mxu0
      %v5485 = vadd.f32 0.0, %v5484
      %v5486 = vpop.f32.mrf.mxu0
      %5487 = vdwg.mxu0
      %v5488 = vadd.f32 %v5294, %v5426
      %v5489 = vadd.f32 %v5295, %v5429
      %v5490 = vadd.f32 %v5296, %v5434
      %v5491 = vadd.f32 %v5297, %v5437
      %v5492 = vadd.f32 %v5298, %v5442
      %v5493 = vadd.f32 %v5299, %v5445
      %v5494 = vadd.f32 %v5300, %v5450
      %v5495 = vadd.f32 %v5301, %v5453
      %v5496 = vadd.f32 %v5302, %v5458
      %v5497 = vadd.f32 %v5303, %v5461
      %v5498 = vadd.f32 %v5304, %v5466
      %v5499 = vadd.f32 %v5305, %v5469
      %v5500 = vadd.f32 %v5306, %v5474
      %v5501 = vadd.f32 %v5307, %v5477
      %v5502 = vadd.f32 %v5308, %v5482
      %v5503 = vadd.f32 %v5309, %v5485
      %v5504 = vld [vmem:[%s5310] sm:$0xf]
      %v5505 = vld [vmem:[%s5310 + $0x4] sm:$0xf]
      %v5506 = vld [vmem:[%s5310 + $0x8] sm:$0x1]
      %v5507 = vld [vmem:[%s5310 + $0xc] sm:$0xf]
      %v5508 = vld [vmem:[%s5310 + $0x10] sm:$0xf]
      %v5509 = vld [vmem:[%s5310 + $0x14] sm:$0x1]
      %v5510 = vld [vmem:[%s5310 + $0x18] sm:$0xf]
      %v5511 = vld [vmem:[%s5310 + $0x1c] sm:$0xf]
      %v5512 = vld [vmem:[%s5310 + $0x20] sm:$0x1]
      %v5513 = vld [vmem:[%s5310 + $0x24] sm:$0xf]
      %v5514 = vld [vmem:[%s5310 + $0x28] sm:$0xf]
      %v5515 = vld [vmem:[%s5310 + $0x2c] sm:$0x1]
      %v5516 = vld [vmem:[%s5310 + $0x30] sm:$0xf]
      %v5517 = vld [vmem:[%s5310 + $0x34] sm:$0xf]
      %v5518 = vld [vmem:[%s5310 + $0x38] sm:$0x1]
      %v5519 = vld [vmem:[%s5310 + $0x3c] sm:$0xf]
      %v5520 = vld [vmem:[%s5310 + $0x40] sm:$0xf]
      %v5521 = vld [vmem:[%s5310 + $0x44] sm:$0x1]
      %v5522 = vld [vmem:[%s5310 + $0x48] sm:$0xf]
      %v5523 = vld [vmem:[%s5310 + $0x4c] sm:$0xf]
      %v5524 = vld [vmem:[%s5310 + $0x50] sm:$0x1]
      %v5525 = vld [vmem:[%s5310 + $0x54] sm:$0xf]
      %v5526 = vld [vmem:[%s5310 + $0x58] sm:$0xf]
      %v5527 = vld [vmem:[%s5310 + $0x5c] sm:$0x1]
      %v5529 = vshrl.u32 %v5504, 16
      %v5531 = vrot.slane %v5529, 4
      %v5532 = vshll.u32 %v5504, 16
      %v5534 = vrot.slane %v5532, 5
      %v5535 = vor.u32 %v5531, %v5534
      %v5536 = vrot.slane %v5535, 4
      %v5538 = vshll.u32 %v5505, 16
      %v5540 = vrot.slane %v5538, 5
      %v5541 = vsel %vm1144, %v5536, %v5540
      %v5542 = vshrl.u32 %v5505, 16
      %v5544 = vrot.slane %v5542, 4
      %v5545 = vor.u32 %v5544, %v5540
      %v5546 = vrot.slane %v5545, 4
      %v5548 = vshll.u32 %v5506, 16
      %v5550 = vrot.slane %v5548, 5
      %v5551 = vsel %vm1144, %v5546, %v5550
      %v5553 = vshrl.u32 %v5507, 16
      %v5555 = vrot.slane %v5553, 4
      %v5556 = vshll.u32 %v5507, 16
      %v5558 = vrot.slane %v5556, 5
      %v5559 = vor.u32 %v5555, %v5558
      %v5560 = vrot.slane %v5559, 4
      %v5562 = vshll.u32 %v5508, 16
      %v5564 = vrot.slane %v5562, 5
      %v5565 = vsel %vm1144, %v5560, %v5564
      %v5566 = vshrl.u32 %v5508, 16
      %v5568 = vrot.slane %v5566, 4
      %v5569 = vor.u32 %v5568, %v5564
      %v5570 = vrot.slane %v5569, 4
      %v5572 = vshll.u32 %v5509, 16
      %v5574 = vrot.slane %v5572, 5
      %v5575 = vsel %vm1144, %v5570, %v5574
      %v5577 = vshrl.u32 %v5510, 16
      %v5579 = vrot.slane %v5577, 4
      %v5580 = vshll.u32 %v5510, 16
      %v5582 = vrot.slane %v5580, 5
      %v5583 = vor.u32 %v5579, %v5582
      %v5584 = vrot.slane %v5583, 4
      %v5586 = vshll.u32 %v5511, 16
      %v5588 = vrot.slane %v5586, 5
      %v5589 = vsel %vm1144, %v5584, %v5588
      %v5590 = vshrl.u32 %v5511, 16
      %v5592 = vrot.slane %v5590, 4
      %v5593 = vor.u32 %v5592, %v5588
      %v5594 = vrot.slane %v5593, 4
      %v5596 = vshll.u32 %v5512, 16
      %v5598 = vrot.slane %v5596, 5
      %v5599 = vsel %vm1144, %v5594, %v5598
      %v5601 = vshrl.u32 %v5513, 16
      %v5603 = vrot.slane %v5601, 4
      %v5604 = vshll.u32 %v5513, 16
      %v5606 = vrot.slane %v5604, 5
      %v5607 = vor.u32 %v5603, %v5606
      %v5608 = vrot.slane %v5607, 4
      %v5610 = vshll.u32 %v5514, 16
      %v5612 = vrot.slane %v5610, 5
      %v5613 = vsel %vm1144, %v5608, %v5612
      %v5614 = vshrl.u32 %v5514, 16
      %v5616 = vrot.slane %v5614, 4
      %v5617 = vor.u32 %v5616, %v5612
      %v5618 = vrot.slane %v5617, 4
      %v5620 = vshll.u32 %v5515, 16
      %v5622 = vrot.slane %v5620, 5
      %v5623 = vsel %vm1144, %v5618, %v5622
      %v5625 = vshrl.u32 %v5516, 16
      %v5627 = vrot.slane %v5625, 4
      %v5628 = vshll.u32 %v5516, 16
      %v5630 = vrot.slane %v5628, 5
      %v5631 = vor.u32 %v5627, %v5630
      %v5632 = vrot.slane %v5631, 4
      %v5634 = vshll.u32 %v5517, 16
      %v5636 = vrot.slane %v5634, 5
      %v5637 = vsel %vm1144, %v5632, %v5636
      %v5638 = vshrl.u32 %v5517, 16
      %v5640 = vrot.slane %v5638, 4
      %v5641 = vor.u32 %v5640, %v5636
      %v5642 = vrot.slane %v5641, 4
      %v5644 = vshll.u32 %v5518, 16
      %v5646 = vrot.slane %v5644, 5
      %v5647 = vsel %vm1144, %v5642, %v5646
      %v5649 = vshrl.u32 %v5519, 16
      %v5651 = vrot.slane %v5649, 4
      %v5652 = vshll.u32 %v5519, 16
      %v5654 = vrot.slane %v5652, 5
      %v5655 = vor.u32 %v5651, %v5654
      %v5656 = vrot.slane %v5655, 4
      %v5658 = vshll.u32 %v5520, 16
      %v5660 = vrot.slane %v5658, 5
      %v5661 = vsel %vm1144, %v5656, %v5660
      %v5662 = vshrl.u32 %v5520, 16
      %v5664 = vrot.slane %v5662, 4
      %v5665 = vor.u32 %v5664, %v5660
      %v5666 = vrot.slane %v5665, 4
      %v5668 = vshll.u32 %v5521, 16
      %v5670 = vrot.slane %v5668, 5
      %v5671 = vsel %vm1144, %v5666, %v5670
      %v5673 = vshrl.u32 %v5522, 16
      %v5675 = vrot.slane %v5673, 4
      %v5676 = vshll.u32 %v5522, 16
      %v5678 = vrot.slane %v5676, 5
      %v5679 = vor.u32 %v5675, %v5678
      %v5680 = vrot.slane %v5679, 4
      %v5682 = vshll.u32 %v5523, 16
      %v5684 = vrot.slane %v5682, 5
      %v5685 = vsel %vm1144, %v5680, %v5684
      %v5686 = vshrl.u32 %v5523, 16
      %v5688 = vrot.slane %v5686, 4
      %v5689 = vor.u32 %v5688, %v5684
      %v5690 = vrot.slane %v5689, 4
      %v5692 = vshll.u32 %v5524, 16
      %v5694 = vrot.slane %v5692, 5
      %v5695 = vsel %vm1144, %v5690, %v5694
      %v5697 = vshrl.u32 %v5525, 16
      %v5699 = vrot.slane %v5697, 4
      %v5700 = vshll.u32 %v5525, 16
      %v5702 = vrot.slane %v5700, 5
      %v5703 = vor.u32 %v5699, %v5702
      %v5704 = vrot.slane %v5703, 4
      %v5706 = vshll.u32 %v5526, 16
      %v5708 = vrot.slane %v5706, 5
      %v5709 = vsel %vm1144, %v5704, %v5708
      %v5710 = vshrl.u32 %v5526, 16
      %v5712 = vrot.slane %v5710, 4
      %v5713 = vor.u32 %v5712, %v5708
      %v5714 = vrot.slane %v5713, 4
      %v5716 = vshll.u32 %v5527, 16
      %v5718 = vrot.slane %v5716, 5
      %v5719 = vsel %vm1144, %v5714, %v5718
      %v5720 = vunpack.c.l.b16 %v5541
      %v5721 = vunpack.c.l.b16 %v5551
      %v5722 = vunpack.c.l.b16 %v5565
      %v5723 = vunpack.c.l.b16 %v5575
      %v5724 = vunpack.c.l.b16 %v5589
      %v5725 = vunpack.c.l.b16 %v5599
      %v5726 = vunpack.c.l.b16 %v5613
      %v5727 = vunpack.c.l.b16 %v5623
      %v5728 = vunpack.c.l.b16 %v5637
      %v5729 = vunpack.c.l.b16 %v5647
      %v5730 = vunpack.c.l.b16 %v5661
      %v5731 = vunpack.c.l.b16 %v5671
      %v5732 = vunpack.c.l.b16 %v5685
      %v5733 = vunpack.c.l.b16 %v5695
      %v5734 = vunpack.c.l.b16 %v5709
      %v5735 = vunpack.c.l.b16 %v5719
      %v5736 = vpack.c.b16 %v5721, %v5720
      %v5737 = vpack.c.b16 %v5723, %v5722
      %v5738 = vpack.c.b16 %v5725, %v5724
      %v5739 = vpack.c.b16 %v5727, %v5726
      %v5740 = vpack.c.b16 %v5729, %v5728
      %v5741 = vpack.c.b16 %v5731, %v5730
      %v5742 = vpack.c.b16 %v5733, %v5732
      %v5743 = vpack.c.b16 %v5735, %v5734
      %v5745 = vsel %vm1361, %v5736, 0
      %v5748 = vsel %vm1361, %v5737, 0
      %v5751 = vsel %vm1361, %v5738, 0
      %v5754 = vsel %vm1361, %v5739, 0
      %v5757 = vsel %vm1361, %v5740, 0
      %v5760 = vsel %vm1361, %v5741, 0
      %v5763 = vsel %vm1361, %v5742, 0
      %v5766 = vsel %vm1361, %v5743, 0
      %5768 = vmatprep.subr.bf16.mxu0 0
      %5769 = vmatpush1.bf16.msra.mxu0 0
      %5770 = vmatprep.subr.bf16.mxu0 0
      %5771 = vmatpush1.bf16.msra.mxu0 0
      %5772 = vmatprep.subr.bf16.mxu0 0
      %5773 = vmatpush1.bf16.msra.mxu0 0
      %5774 = vmatprep.subr.bf16.mxu0 0
      %5775 = vmatpush1.bf16.msra.mxu0 0
      %5776 = vmatprep.subr.bf16.mxu0 0
      %5777 = vmatpush1.bf16.msra.mxu0 0
      %5778 = vmatprep.subr.bf16.mxu0 0
      %5779 = vmatpush1.bf16.msra.mxu0 0
      %5780 = vmatprep.subr.bf16.mxu0 0
      %5781 = vmatpush1.bf16.msra.mxu0 0
      %5782 = vmatprep.subr.bf16.mxu0 0
      %5783 = vmatpush1.bf16.msra.mxu0 %v3188
      %5784 = vmatprep.subr.bf16.mxu0 0
      %5785 = vmatpush2.bf16.msra.mxu0 0
      %5786 = vmatprep.subr.bf16.mxu0 0
      %5787 = vmatpush2.bf16.msra.mxu0 0
      %5788 = vmatprep.subr.bf16.mxu0 0
      %5789 = vmatpush2.bf16.msra.mxu0 0
      %5790 = vmatprep.subr.bf16.mxu0 0
      %5791 = vmatpush2.bf16.msra.mxu0 0
      %5792 = vmatprep.subr.bf16.mxu0 0
      %5793 = vmatpush2.bf16.msra.mxu0 0
      %5794 = vmatprep.subr.bf16.mxu0 0
      %5795 = vmatpush2.bf16.msra.mxu0 0
      %5796 = vmatprep.subr.bf16.mxu0 0
      %5797 = vmatpush2.bf16.msra.mxu0 0
      %5798 = vmatprep.subr.bf16.mxu0 0
      %5799 = vmatpush2.bf16.msra.mxu0 0
      %5800 = vmatprep.mubr.bf16.mxu0 0
      %5801 = vmatmul.mubr.bf16.gmra.mxu0 %v5745
      %v5802 = vpop.f32.mrf.mxu0
      %v5803 = vadd.f32 0.0, %v5802
      %v5804 = vpop.f32.mrf.mxu0
      %v5805 = vpop.f32.mrf.mxu0
      %v5806 = vadd.f32 0.0, %v5805
      %v5807 = vpop.f32.mrf.mxu0
      %5808 = vmatprep.mubr.bf16.mxu0 0
      %5809 = vmatmul.mubr.bf16.gmra.mxu0 %v5748
      %v5810 = vpop.f32.mrf.mxu0
      %v5811 = vadd.f32 0.0, %v5810
      %v5812 = vpop.f32.mrf.mxu0
      %v5813 = vpop.f32.mrf.mxu0
      %v5814 = vadd.f32 0.0, %v5813
      %v5815 = vpop.f32.mrf.mxu0
      %5816 = vmatprep.mubr.bf16.mxu0 0
      %5817 = vmatmul.mubr.bf16.gmra.mxu0 %v5751
      %v5818 = vpop.f32.mrf.mxu0
      %v5819 = vadd.f32 0.0, %v5818
      %v5820 = vpop.f32.mrf.mxu0
      %v5821 = vpop.f32.mrf.mxu0
      %v5822 = vadd.f32 0.0, %v5821
      %v5823 = vpop.f32.mrf.mxu0
      %5824 = vmatprep.mubr.bf16.mxu0 0
      %5825 = vmatmul.mubr.bf16.gmra.mxu0 %v5754
      %v5826 = vpop.f32.mrf.mxu0
      %v5827 = vadd.f32 0.0, %v5826
      %v5828 = vpop.f32.mrf.mxu0
      %v5829 = vpop.f32.mrf.mxu0
      %v5830 = vadd.f32 0.0, %v5829
      %v5831 = vpop.f32.mrf.mxu0
      %5832 = vmatprep.mubr.bf16.mxu0 0
      %5833 = vmatmul.mubr.bf16.gmra.mxu0 %v5757
      %v5834 = vpop.f32.mrf.mxu0
      %v5835 = vadd.f32 0.0, %v5834
      %v5836 = vpop.f32.mrf.mxu0
      %v5837 = vpop.f32.mrf.mxu0
      %v5838 = vadd.f32 0.0, %v5837
      %v5839 = vpop.f32.mrf.mxu0
      %5840 = vmatprep.mubr.bf16.mxu0 0
      %5841 = vmatmul.mubr.bf16.gmra.mxu0 %v5760
      %v5842 = vpop.f32.mrf.mxu0
      %v5843 = vadd.f32 0.0, %v5842
      %v5844 = vpop.f32.mrf.mxu0
      %v5845 = vpop.f32.mrf.mxu0
      %v5846 = vadd.f32 0.0, %v5845
      %v5847 = vpop.f32.mrf.mxu0
      %5848 = vmatprep.mubr.bf16.mxu0 0
      %5849 = vmatmul.mubr.bf16.gmra.mxu0 %v5763
      %v5850 = vpop.f32.mrf.mxu0
      %v5851 = vadd.f32 0.0, %v5850
      %v5852 = vpop.f32.mrf.mxu0
      %v5853 = vpop.f32.mrf.mxu0
      %v5854 = vadd.f32 0.0, %v5853
      %v5855 = vpop.f32.mrf.mxu0
      %5856 = vmatprep.mubr.bf16.mxu0 0
      %5857 = vmatmul.mubr.bf16.gmra.mxu0 %v5766
      %v5858 = vpop.f32.mrf.mxu0
      %v5859 = vadd.f32 0.0, %v5858
      %v5860 = vpop.f32.mrf.mxu0
      %v5861 = vpop.f32.mrf.mxu0
      %v5862 = vadd.f32 0.0, %v5861
      %v5863 = vpop.f32.mrf.mxu0
      %5864 = vdwg.mxu0
      %v5865 = vadd.f32 %v5488, %v5803
      %v5866 = vadd.f32 %v5489, %v5806
      %v5867 = vadd.f32 %v5490, %v5811
      %v5868 = vadd.f32 %v5491, %v5814
      %v5869 = vadd.f32 %v5492, %v5819
      %v5870 = vadd.f32 %v5493, %v5822
      %v5871 = vadd.f32 %v5494, %v5827
      %v5872 = vadd.f32 %v5495, %v5830
      %v5873 = vadd.f32 %v5496, %v5835
      %v5874 = vadd.f32 %v5497, %v5838
      %v5875 = vadd.f32 %v5498, %v5843
      %v5876 = vadd.f32 %v5499, %v5846
      %v5877 = vadd.f32 %v5500, %v5851
      %v5878 = vadd.f32 %v5501, %v5854
      %v5879 = vadd.f32 %v5502, %v5859
      %v5880 = vadd.f32 %v5503, %v5862
      %v5881 = vld [vmem:[%s5310] sm:$0xe]
      %v5882 = vld [vmem:[%s5310 + $0xc] sm:$0xe]
      %v5883 = vld [vmem:[%s5310 + $0x18] sm:$0xe]
      %v5884 = vld [vmem:[%s5310 + $0x24] sm:$0xe]
      %v5885 = vld [vmem:[%s5310 + $0x30] sm:$0xe]
      %v5886 = vld [vmem:[%s5310 + $0x3c] sm:$0xe]
      %v5887 = vld [vmem:[%s5310 + $0x48] sm:$0xe]
      %v5888 = vld [vmem:[%s5310 + $0x54] sm:$0xe]
      %v5913 = vrot.slane %v5881, 5
      %v5914 = vrot.slane %v5913, 4
      %v5915 = vrot.slane %v5505, 5
      %v5916 = vsel %vm1677, %v5914, %v5915
      %v5917 = vrot.slane %v5915, 4
      %v5918 = vrot.slane %v5506, 5
      %v5919 = vsel %vm1677, %v5917, %v5918
      %v5920 = vrot.slane %v5882, 5
      %v5921 = vrot.slane %v5920, 4
      %v5922 = vrot.slane %v5508, 5
      %v5923 = vsel %vm1677, %v5921, %v5922
      %v5924 = vrot.slane %v5922, 4
      %v5925 = vrot.slane %v5509, 5
      %v5926 = vsel %vm1677, %v5924, %v5925
      %v5927 = vrot.slane %v5883, 5
      %v5928 = vrot.slane %v5927, 4
      %v5929 = vrot.slane %v5511, 5
      %v5930 = vsel %vm1677, %v5928, %v5929
      %v5931 = vrot.slane %v5929, 4
      %v5932 = vrot.slane %v5512, 5
      %v5933 = vsel %vm1677, %v5931, %v5932
      %v5934 = vrot.slane %v5884, 5
      %v5935 = vrot.slane %v5934, 4
      %v5936 = vrot.slane %v5514, 5
      %v5937 = vsel %vm1677, %v5935, %v5936
      %v5938 = vrot.slane %v5936, 4
      %v5939 = vrot.slane %v5515, 5
      %v5940 = vsel %vm1677, %v5938, %v5939
      %v5941 = vrot.slane %v5885, 5
      %v5942 = vrot.slane %v5941, 4
      %v5943 = vrot.slane %v5517, 5
      %v5944 = vsel %vm1677, %v5942, %v5943
      %v5945 = vrot.slane %v5943, 4
      %v5946 = vrot.slane %v5518, 5
      %v5947 = vsel %vm1677, %v5945, %v5946
      %v5948 = vrot.slane %v5886, 5
      %v5949 = vrot.slane %v5948, 4
      %v5950 = vrot.slane %v5520, 5
      %v5951 = vsel %vm1677, %v5949, %v5950
      %v5952 = vrot.slane %v5950, 4
      %v5953 = vrot.slane %v5521, 5
      %v5954 = vsel %vm1677, %v5952, %v5953
      %v5955 = vrot.slane %v5887, 5
      %v5956 = vrot.slane %v5955, 4
      %v5957 = vrot.slane %v5523, 5
      %v5958 = vsel %vm1677, %v5956, %v5957
      %v5959 = vrot.slane %v5957, 4
      %v5960 = vrot.slane %v5524, 5
      %v5961 = vsel %vm1677, %v5959, %v5960
      %v5962 = vrot.slane %v5888, 5
      %v5963 = vrot.slane %v5962, 4
      %v5964 = vrot.slane %v5526, 5
      %v5965 = vsel %vm1677, %v5963, %v5964
      %v5966 = vrot.slane %v5964, 4
      %v5967 = vrot.slane %v5527, 5
      %v5968 = vsel %vm1677, %v5966, %v5967
      %v5969 = vunpack.c.l.b16 %v5916
      %v5970 = vunpack.c.l.b16 %v5919
      %v5971 = vunpack.c.l.b16 %v5923
      %v5972 = vunpack.c.l.b16 %v5926
      %v5973 = vunpack.c.l.b16 %v5930
      %v5974 = vunpack.c.l.b16 %v5933
      %v5975 = vunpack.c.l.b16 %v5937
      %v5976 = vunpack.c.l.b16 %v5940
      %v5977 = vunpack.c.l.b16 %v5944
      %v5978 = vunpack.c.l.b16 %v5947
      %v5979 = vunpack.c.l.b16 %v5951
      %v5980 = vunpack.c.l.b16 %v5954
      %v5981 = vunpack.c.l.b16 %v5958
      %v5982 = vunpack.c.l.b16 %v5961
      %v5983 = vunpack.c.l.b16 %v5965
      %v5984 = vunpack.c.l.b16 %v5968
      %v5985 = vpack.c.b16 %v5970, %v5969
      %v5986 = vpack.c.b16 %v5972, %v5971
      %v5987 = vpack.c.b16 %v5974, %v5973
      %v5988 = vpack.c.b16 %v5976, %v5975
      %v5989 = vpack.c.b16 %v5978, %v5977
      %v5990 = vpack.c.b16 %v5980, %v5979
      %v5991 = vpack.c.b16 %v5982, %v5981
      %v5992 = vpack.c.b16 %v5984, %v5983
      %v5994 = vsel %vm1361, %v5985, 0
      %v5997 = vsel %vm1361, %v5986, 0
      %v6000 = vsel %vm1361, %v5987, 0
      %v6003 = vsel %vm1361, %v5988, 0
      %v6006 = vsel %vm1361, %v5989, 0
      %v6009 = vsel %vm1361, %v5990, 0
      %v6012 = vsel %vm1361, %v5991, 0
      %v6015 = vsel %vm1361, %v5992, 0
      %6017 = vmatprep.subr.bf16.mxu0 0
      %6018 = vmatpush1.bf16.msra.mxu0 0
      %6019 = vmatprep.subr.bf16.mxu0 0
      %6020 = vmatpush1.bf16.msra.mxu0 0
      %6021 = vmatprep.subr.bf16.mxu0 0
      %6022 = vmatpush1.bf16.msra.mxu0 0
      %6023 = vmatprep.subr.bf16.mxu0 0
      %6024 = vmatpush1.bf16.msra.mxu0 0
      %6025 = vmatprep.subr.bf16.mxu0 0
      %6026 = vmatpush1.bf16.msra.mxu0 0
      %6027 = vmatprep.subr.bf16.mxu0 0
      %6028 = vmatpush1.bf16.msra.mxu0 0
      %6029 = vmatprep.subr.bf16.mxu0 0
      %6030 = vmatpush1.bf16.msra.mxu0 0
      %6031 = vmatprep.subr.bf16.mxu0 0
      %6032 = vmatpush1.bf16.msra.mxu0 %v3440
      %6033 = vmatprep.subr.bf16.mxu0 0
      %6034 = vmatpush2.bf16.msra.mxu0 0
      %6035 = vmatprep.subr.bf16.mxu0 0
      %6036 = vmatpush2.bf16.msra.mxu0 0
      %6037 = vmatprep.subr.bf16.mxu0 0
      %6038 = vmatpush2.bf16.msra.mxu0 0
      %6039 = vmatprep.subr.bf16.mxu0 0
      %6040 = vmatpush2.bf16.msra.mxu0 0
      %6041 = vmatprep.subr.bf16.mxu0 0
      %6042 = vmatpush2.bf16.msra.mxu0 0
      %6043 = vmatprep.subr.bf16.mxu0 0
      %6044 = vmatpush2.bf16.msra.mxu0 0
      %6045 = vmatprep.subr.bf16.mxu0 0
      %6046 = vmatpush2.bf16.msra.mxu0 0
      %6047 = vmatprep.subr.bf16.mxu0 0
      %6048 = vmatpush2.bf16.msra.mxu0 0
      %6049 = vmatprep.mubr.bf16.mxu0 0
      %6050 = vmatmul.mubr.bf16.gmra.mxu0 %v5994
      %v6051 = vpop.f32.mrf.mxu0
      %v6052 = vadd.f32 0.0, %v6051
      %v6053 = vpop.f32.mrf.mxu0
      %v6054 = vpop.f32.mrf.mxu0
      %v6055 = vadd.f32 0.0, %v6054
      %v6056 = vpop.f32.mrf.mxu0
      %6057 = vmatprep.mubr.bf16.mxu0 0
      %6058 = vmatmul.mubr.bf16.gmra.mxu0 %v5997
      %v6059 = vpop.f32.mrf.mxu0
      %v6060 = vadd.f32 0.0, %v6059
      %v6061 = vpop.f32.mrf.mxu0
      %v6062 = vpop.f32.mrf.mxu0
      %v6063 = vadd.f32 0.0, %v6062
      %v6064 = vpop.f32.mrf.mxu0
      %6065 = vmatprep.mubr.bf16.mxu0 0
      %6066 = vmatmul.mubr.bf16.gmra.mxu0 %v6000
      %v6067 = vpop.f32.mrf.mxu0
      %v6068 = vadd.f32 0.0, %v6067
      %v6069 = vpop.f32.mrf.mxu0
      %v6070 = vpop.f32.mrf.mxu0
      %v6071 = vadd.f32 0.0, %v6070
      %v6072 = vpop.f32.mrf.mxu0
      %6073 = vmatprep.mubr.bf16.mxu0 0
      %6074 = vmatmul.mubr.bf16.gmra.mxu0 %v6003
      %v6075 = vpop.f32.mrf.mxu0
      %v6076 = vadd.f32 0.0, %v6075
      %v6077 = vpop.f32.mrf.mxu0
      %v6078 = vpop.f32.mrf.mxu0
      %v6079 = vadd.f32 0.0, %v6078
      %v6080 = vpop.f32.mrf.mxu0
      %6081 = vmatprep.mubr.bf16.mxu0 0
      %6082 = vmatmul.mubr.bf16.gmra.mxu0 %v6006
      %v6083 = vpop.f32.mrf.mxu0
      %v6084 = vadd.f32 0.0, %v6083
      %v6085 = vpop.f32.mrf.mxu0
      %v6086 = vpop.f32.mrf.mxu0
      %v6087 = vadd.f32 0.0, %v6086
      %v6088 = vpop.f32.mrf.mxu0
      %6089 = vmatprep.mubr.bf16.mxu0 0
      %6090 = vmatmul.mubr.bf16.gmra.mxu0 %v6009
      %v6091 = vpop.f32.mrf.mxu0
      %v6092 = vadd.f32 0.0, %v6091
      %v6093 = vpop.f32.mrf.mxu0
      %v6094 = vpop.f32.mrf.mxu0
      %v6095 = vadd.f32 0.0, %v6094
      %v6096 = vpop.f32.mrf.mxu0
      %6097 = vmatprep.mubr.bf16.mxu0 0
      %6098 = vmatmul.mubr.bf16.gmra.mxu0 %v6012
      %v6099 = vpop.f32.mrf.mxu0
      %v6100 = vadd.f32 0.0, %v6099
      %v6101 = vpop.f32.mrf.mxu0
      %v6102 = vpop.f32.mrf.mxu0
      %v6103 = vadd.f32 0.0, %v6102
      %v6104 = vpop.f32.mrf.mxu0
      %6105 = vmatprep.mubr.bf16.mxu0 0
      %6106 = vmatmul.mubr.bf16.gmra.mxu0 %v6015
      %v6107 = vpop.f32.mrf.mxu0
      %v6108 = vadd.f32 0.0, %v6107
      %v6109 = vpop.f32.mrf.mxu0
      %v6110 = vpop.f32.mrf.mxu0
      %v6111 = vadd.f32 0.0, %v6110
      %v6112 = vpop.f32.mrf.mxu0
      %6113 = vdwg.mxu0
      %v6114 = vadd.f32 %v5865, %v6052
      %v6115 = vadd.f32 %v5866, %v6055
      %v6116 = vadd.f32 %v5867, %v6060
      %v6117 = vadd.f32 %v5868, %v6063
      %v6118 = vadd.f32 %v5869, %v6068
      %v6119 = vadd.f32 %v5870, %v6071
      %v6120 = vadd.f32 %v5871, %v6076
      %v6121 = vadd.f32 %v5872, %v6079
      %v6122 = vadd.f32 %v5873, %v6084
      %v6123 = vadd.f32 %v5874, %v6087
      %v6124 = vadd.f32 %v5875, %v6092
      %v6125 = vadd.f32 %v5876, %v6095
      %v6126 = vadd.f32 %v5877, %v6100
      %v6127 = vadd.f32 %v5878, %v6103
      %v6128 = vadd.f32 %v5879, %v6108
      %v6129 = vadd.f32 %v5880, %v6111
      %v6130 = vsel %vm1361, %v6114, 0.0
      %v6131 = vsel %vm1361, %v6115, 0.0
      %v6132 = vadd.f32 %v6130, %v6131
      %v6133 = vsel %vm1361, %v6116, 0.0
      %v6134 = vadd.f32 %v6132, %v6133
      %v6135 = vsel %vm1361, %v6117, 0.0
      %v6136 = vadd.f32 %v6134, %v6135
      %v6137 = vsel %vm1361, %v6118, 0.0
      %v6138 = vadd.f32 %v6136, %v6137
      %v6139 = vsel %vm1361, %v6119, 0.0
      %v6140 = vadd.f32 %v6138, %v6139
      %v6141 = vsel %vm1361, %v6120, 0.0
      %v6142 = vadd.f32 %v6140, %v6141
      %v6143 = vsel %vm1361, %v6121, 0.0
      %v6144 = vadd.f32 %v6142, %v6143
      %v6145 = vsel %vm1361, %v6122, 0.0
      %v6146 = vadd.f32 %v6144, %v6145
      %v6147 = vsel %vm1361, %v6123, 0.0
      %v6148 = vadd.f32 %v6146, %v6147
      %v6149 = vsel %vm1361, %v6124, 0.0
      %v6150 = vadd.f32 %v6148, %v6149
      %v6151 = vsel %vm1361, %v6125, 0.0
      %v6152 = vadd.f32 %v6150, %v6151
      %v6153 = vsel %vm1361, %v6126, 0.0
      %v6154 = vadd.f32 %v6152, %v6153
      %v6155 = vsel %vm1361, %v6127, 0.0
      %v6156 = vadd.f32 %v6154, %v6155
      %v6157 = vsel %vm1361, %v6128, 0.0
      %v6158 = vadd.f32 %v6156, %v6157
      %v6159 = vsel %vm1361, %v6129, 0.0
      %v6160 = vadd.f32 %v6158, %v6159
      %v6161 = vrot.slane %v6160, 4
      %v6162 = vadd.f32 %v6160, %v6161
      %v6163 = vrot.slane %v6162, 2
      %v6164 = vadd.f32 %v6162, %v6163
      %v6165 = vrot.slane %v6164, 1
      %v6166 = vadd.f32 %v6164, %v6165
      %v6167 = vadd.f32 %v3592, %v6166
      %v6168 = vmul.f32 %v6114, %v6114
      %v6169 = vmul.f32 %v6115, %v6115
      %v6170 = vmul.f32 %v6116, %v6116
      %v6171 = vmul.f32 %v6117, %v6117
      %v6172 = vmul.f32 %v6118, %v6118
      %v6173 = vmul.f32 %v6119, %v6119
      %v6174 = vmul.f32 %v6120, %v6120
      %v6175 = vmul.f32 %v6121, %v6121
      %v6176 = vmul.f32 %v6122, %v6122
      %v6177 = vmul.f32 %v6123, %v6123
      %v6178 = vmul.f32 %v6124, %v6124
      %v6179 = vmul.f32 %v6125, %v6125
      %v6180 = vmul.f32 %v6126, %v6126
      %v6181 = vmul.f32 %v6127, %v6127
      %v6182 = vmul.f32 %v6128, %v6128
      %v6183 = vmul.f32 %v6129, %v6129
      %v6184 = vsel %vm1361, %v6168, 0.0
      %v6185 = vsel %vm1361, %v6169, 0.0
      %v6186 = vadd.f32 %v6184, %v6185
      %v6187 = vsel %vm1361, %v6170, 0.0
      %v6188 = vadd.f32 %v6186, %v6187
      %v6189 = vsel %vm1361, %v6171, 0.0
      %v6190 = vadd.f32 %v6188, %v6189
      %v6191 = vsel %vm1361, %v6172, 0.0
      %v6192 = vadd.f32 %v6190, %v6191
      %v6193 = vsel %vm1361, %v6173, 0.0
      %v6194 = vadd.f32 %v6192, %v6193
      %v6195 = vsel %vm1361, %v6174, 0.0
      %v6196 = vadd.f32 %v6194, %v6195
      %v6197 = vsel %vm1361, %v6175, 0.0
      %v6198 = vadd.f32 %v6196, %v6197
      %v6199 = vsel %vm1361, %v6176, 0.0
      %v6200 = vadd.f32 %v6198, %v6199
      %v6201 = vsel %vm1361, %v6177, 0.0
      %v6202 = vadd.f32 %v6200, %v6201
      %v6203 = vsel %vm1361, %v6178, 0.0
      %v6204 = vadd.f32 %v6202, %v6203
      %v6205 = vsel %vm1361, %v6179, 0.0
      %v6206 = vadd.f32 %v6204, %v6205
      %v6207 = vsel %vm1361, %v6180, 0.0
      %v6208 = vadd.f32 %v6206, %v6207
      %v6209 = vsel %vm1361, %v6181, 0.0
      %v6210 = vadd.f32 %v6208, %v6209
      %v6211 = vsel %vm1361, %v6182, 0.0
      %v6212 = vadd.f32 %v6210, %v6211
      %v6213 = vsel %vm1361, %v6183, 0.0
      %v6214 = vadd.f32 %v6212, %v6213
      %v6215 = vrot.slane %v6214, 4
      %v6216 = vadd.f32 %v6214, %v6215
      %v6217 = vrot.slane %v6216, 2
      %v6218 = vadd.f32 %v6216, %v6217
      %v6219 = vrot.slane %v6218, 1
      %v6220 = vadd.f32 %v6218, %v6219
      %v6221 = vadd.f32 %v3646, %v6220
      %v6222 = vpack.c.bf16 %v6115, %v6114
      %v6223 = vpack.c.bf16 %v6117, %v6116
      %v6224 = vpack.c.bf16 %v6119, %v6118
      %v6225 = vpack.c.bf16 %v6121, %v6120
      %v6226 = vpack.c.bf16 %v6123, %v6122
      %v6227 = vpack.c.bf16 %v6125, %v6124
      %v6228 = vpack.c.bf16 %v6127, %v6126
      %v6229 = vpack.c.bf16 %v6129, %v6128
      %v6238 = vunpack.c.l.b16 %v6222
      %v6239 = vunpack.c.h.b16 %v6222
      %v6240 = vunpack.c.l.b16 %v6223
      %v6241 = vunpack.c.h.b16 %v6223
      %v6242 = vunpack.c.l.b16 %v6224
      %v6243 = vunpack.c.h.b16 %v6224
      %v6244 = vunpack.c.l.b16 %v6225
      %v6245 = vunpack.c.h.b16 %v6225
      %v6246 = vunpack.c.l.b16 %v6226
      %v6247 = vunpack.c.h.b16 %v6226
      %v6248 = vunpack.c.l.b16 %v6227
      %v6249 = vunpack.c.h.b16 %v6227
      %v6250 = vunpack.c.l.b16 %v6228
      %v6251 = vunpack.c.h.b16 %v6228
      %v6252 = vunpack.c.l.b16 %v6229
      %v6253 = vunpack.c.h.b16 %v6229
      %v6254 = vpack.c.b16 %v6238, %v6238
      %v6255 = vpack.c.b16 %v6239, %v6239
      %v6256 = vpack.c.b16 %v6240, %v6240
      %v6257 = vpack.c.b16 %v6241, %v6241
      %v6258 = vpack.c.b16 %v6242, %v6242
      %v6259 = vpack.c.b16 %v6243, %v6243
      %v6260 = vpack.c.b16 %v6244, %v6244
      %v6261 = vpack.c.b16 %v6245, %v6245
      %v6262 = vpack.c.b16 %v6246, %v6246
      %v6263 = vpack.c.b16 %v6247, %v6247
      %v6264 = vpack.c.b16 %v6248, %v6248
      %v6265 = vpack.c.b16 %v6249, %v6249
      %v6266 = vpack.c.b16 %v6250, %v6250
      %v6267 = vpack.c.b16 %v6251, %v6251
      %v6268 = vpack.c.b16 %v6252, %v6252
      %v6269 = vpack.c.b16 %v6253, %v6253
      %s6286 = scalar_lea.vmem %s262, 64
      %6287 = vst.msk [vmem:[%s6286] sm:$0xf] %vm289, %v6254
      %6288 = vst.msk [vmem:[%s6286 + $0x4] sm:$0xf] %vm289, %v6255
      %6289 = vst.msk [vmem:[%s6286 + $0x8] sm:$0xf] %vm289, %v6256
      %6290 = vst.msk [vmem:[%s6286 + $0xc] sm:$0xf] %vm289, %v6257
      %6291 = vst.msk [vmem:[%s6286 + $0x10] sm:$0xf] %vm289, %v6258
      %6292 = vst.msk [vmem:[%s6286 + $0x14] sm:$0xf] %vm289, %v6259
      %6293 = vst.msk [vmem:[%s6286 + $0x18] sm:$0xf] %vm289, %v6260
      %6294 = vst.msk [vmem:[%s6286 + $0x1c] sm:$0xf] %vm289, %v6261
      %6295 = vst.msk [vmem:[%s6286 + $0x20] sm:$0xf] %vm289, %v6262
      %6296 = vst.msk [vmem:[%s6286 + $0x24] sm:$0xf] %vm289, %v6263
      %6297 = vst.msk [vmem:[%s6286 + $0x28] sm:$0xf] %vm289, %v6264
      %6298 = vst.msk [vmem:[%s6286 + $0x2c] sm:$0xf] %vm289, %v6265
      %6299 = vst.msk [vmem:[%s6286 + $0x30] sm:$0xf] %vm289, %v6266
      %6300 = vst.msk [vmem:[%s6286 + $0x34] sm:$0xf] %vm289, %v6267
      %6301 = vst.msk [vmem:[%s6286 + $0x38] sm:$0xf] %vm289, %v6268
      %6302 = vst.msk [vmem:[%s6286 + $0x3c] sm:$0xf] %vm289, %v6269
      %6303 = vst.msk [vmem:[%s265] sm:$0x1] %vm292, %v6167
      %6304 = vst.msk [vmem:[%s268] sm:$0x1] %vm292, %v6221
      %p6305 = scmp.lt.s32.totalorder %s18, 1
      %s6306 = scalar_select %p6305, %s18, 1
      %s6307 = smul.addr %s6306, 32
      %s6308 = smul.addr %s6307, 4
      %s6309 = scalar_lea.vmem %s4, %s6308
      %p6310 = scmp.lt.s32.totalorder %s18, 1
      %s6311 = scalar_select %p6310, %s18, 1
      %s6312 = scalar_lea.vmem %s5, %s6311
      %p6313 = scmp.lt.s32.totalorder %s18, 1
      %s6314 = scalar_select %p6313, %s18, 1
      %s6315 = scalar_lea.vmem %s6, %s6314
      // Predicated region
      $region37: #{bottleneck_forward.4} parent=35 // pred_check
        %p6316 = pneg %p125
      $region38: #{bottleneck_forward.4} parent=35 // pred_check_branch
        %6318 = sbr.rel (%p6316) target = $region40
      $region39: #{bottleneck_forward.4} parent=35 // pred_region
        _
      $region40: #{bottleneck_forward.4} parent=35 // pred_fallthru
        _
      // Predicated region
      $region41: #{bottleneck_forward.4} parent=35 // pred_check
        %p6319 = pneg %p151
      $region42: #{bottleneck_forward.4} parent=35 // pred_check_branch
        %6321 = sbr.rel (%p6319) target = $region44
      $region43: #{bottleneck_forward.4} parent=35 // pred_region
        _
      $region44: #{bottleneck_forward.4} parent=35 // pred_fallthru
        _
      // Predicated region
      $region45: #{bottleneck_forward.4} parent=35 // pred_check
        %p6322 = pneg %p177
      $region46: #{bottleneck_forward.4} parent=35 // pred_check_branch
        %6324 = sbr.rel (%p6322) target = $region48
      $region47: #{bottleneck_forward.4} parent=35 // pred_region
        _
      $region48: #{bottleneck_forward.4} parent=35 // pred_fallthru
        _
    $region36: #{bottleneck_forward.4} parent=5 // pred_fallthru
      _
    %p6325 = scmp.le.s32.totalorder 2, %s13
    // Predicated region
    $region49: #{bottleneck_forward.4} parent=5 // pred_check
      %p6326 = pneg %p6325
    $region50: #{bottleneck_forward.4} parent=5 // pred_check_branch
      %6328 = sbr.rel (%p6326) target = $region52
    $region51: #{bottleneck_forward.4} parent=5 // pred_region
      %s6329 = ssub.s32 %s13, 2
      // Predicated region
      $region53: #{bottleneck_forward.4} parent=51 // pred_check
        %p6330 = pneg %p131
      $region54: #{bottleneck_forward.4} parent=51 // pred_check_branch
        %6332 = sbr.rel (%p6330) target = $region56
      $region55: #{bottleneck_forward.4} parent=51 // pred_region
        %p6333 = scmp.lt.s32.totalorder %s19, 1
        %s6334 = scalar_select %p6333, %s19, 1
        %s6335 = smul.addr %s6334, 32
        %s6336 = smul.addr %s6335, 4
        %s6337 = scalar_lea.vmem %s4, %s6336
      $region56: #{bottleneck_forward.4} parent=51 // pred_fallthru
        _
      // Predicated region
      $region57: #{bottleneck_forward.4} parent=51 // pred_check
        %p6338 = pneg %p157
      $region58: #{bottleneck_forward.4} parent=51 // pred_check_branch
        %6340 = sbr.rel (%p6338) target = $region60
      $region59: #{bottleneck_forward.4} parent=51 // pred_region
        %p6341 = scmp.lt.s32.totalorder %s19, 1
        %s6342 = scalar_select %p6341, %s19, 1
        %s6343 = scalar_lea.vmem %s5, %s6342
      $region60: #{bottleneck_forward.4} parent=51 // pred_fallthru
        _
      // Predicated region
      $region61: #{bottleneck_forward.4} parent=51 // pred_check
        %p6344 = pneg %p183
      $region62: #{bottleneck_forward.4} parent=51 // pred_check_branch
        %6346 = sbr.rel (%p6344) target = $region64
      $region63: #{bottleneck_forward.4} parent=51 // pred_region
        %p6347 = scmp.lt.s32.totalorder %s19, 1
        %s6348 = scalar_select %p6347, %s19, 1
        %s6349 = scalar_lea.vmem %s6, %s6348
      $region64: #{bottleneck_forward.4} parent=51 // pred_fallthru
        _
    $region52: #{bottleneck_forward.4} parent=5 // pred_fallthru
      _
  $region6: #{bottleneck_forward.4} parent=0 // loop_footer
    %s17 = sadd.s32 1, %s13
  $region7: #{bottleneck_forward.4} parent=0 // loop_footer_branch
    %12 = sbr.rel target = $region3
  $region8: #{bottleneck_forward.4} parent=0 // loop_exit
    _

</llo_original>
